<compile_context>
chip_gen: v6e
topology: v6e:2x2x1
jax: 0.10.0
libtpu: 0.0.40
codegen_flags: <defaults>
</compile_context>

<pallas_src>
import functools

import jax
import jax.numpy as jnp
from jax.experimental import pallas as pl
from jax.experimental.pallas import tpu as pltpu

KS = 7
PAD = (KS - 1) // 2
BN_EPS = 1e-5


# ---------------------------------------------------------------------------
# In-kernel helper: 7x7 'same' conv (2 -> 1 channel) on small (Nb, R, S) f32
# maps.  Zero padding is built in registers (concat) once per call; the dy
# band is sliced once per row and every dx tap is accumulated immediately so
# at most two bands + the accumulator are live (no strip spills).
# transpose_kernel=True convolves with the spatially transposed weights
# (used for the hc branch, which is computed in (C, H) orientation).
# ---------------------------------------------------------------------------
def _conv7_2d(mx, mn, w_ref, w_base, transpose_kernel):
    Nb, R, S = mx.shape
    zr = jnp.zeros((Nb, PAD, S), jnp.float32)
    zc = jnp.zeros((Nb, R + 2 * PAD, PAD), jnp.float32)

    def pad2(p):
        p = jnp.concatenate([zr, p, zr], axis=1)
        return jnp.concatenate([zc, p, zc], axis=2)          # (Nb, R+6, S+6)

    pmx = pad2(mx)
    pmn = pad2(mn)

    acc = jnp.zeros((Nb, R, S), jnp.float32)
    for dy in range(KS):
        band_mx = pmx[:, dy:dy + R, :]                       # (Nb, R, S+6)
        band_mn = pmn[:, dy:dy + R, :]
        for dx in range(KS):
            widx = (dx * KS + dy) if transpose_kernel else (dy * KS + dx)
            w_mx = w_ref[w_base + widx]                      # max plane weight
            w_mn = w_ref[w_base + KS * KS + widx]            # mean plane weight
            acc = (acc
                   + w_mx * band_mx[:, :, dx:dx + S]
                   + w_mn * band_mn[:, :, dx:dx + S])
    return acc


# ---------------------------------------------------------------------------
# Fused TripletAttention kernel: all three gates on one resident block.
# ---------------------------------------------------------------------------
def _triplet_kernel(w_ref, bn_ref, x_ref, o_ref, *, H, W):
    f32 = jnp.float32
    xv = x_ref[...]                              # (Nb, C, H*W), lane-dense
    Nb, C, _ = xv.shape

    inv_C = 1.0 / C
    inv_H = 1.0 / H
    inv_W = 1.0 / W

    # ---- single pass over the H rows: build all three ZPools ---------------
    # TODO(synk): replace this per-row lane slicing with one in-register
    # reshape of xv to (Nb, C, H, W) + axis reductions once Mosaic reshape
    # support for lane-splitting minor dims is guaranteed on all targets.
    mx_cw = None
    sm_cw = None
    hw_mx_rows = []
    hw_sm_rows = []
    hc_mx_cols = []
    hc_sm_cols = []
    for h in range(H):
        seg = xv[:, :, h * W:(h + 1) * W]                    # (Nb, C, W)
        seg32 = seg.astype(f32)
        mx_cw = seg if mx_cw is None else jnp.maximum(mx_cw, seg)
        sm_cw = seg32 if sm_cw is None else sm_cw + seg32
        hw_mx_rows.append(jnp.max(seg, axis=1, keepdims=True))   # (Nb, 1, W)
        hw_sm_rows.append(jnp.sum(seg32, axis=1, keepdims=True))
        hc_mx_cols.append(jnp.max(seg, axis=2, keepdims=True))   # (Nb, C, 1)
        hc_sm_cols.append(jnp.sum(seg32, axis=2, keepdims=True))

    mx_cw = mx_cw.astype(f32)                                    # (Nb, C, W)
    mn_cw = sm_cw * inv_H
    mx_hw = jnp.concatenate(hw_mx_rows, axis=1).astype(f32)      # (Nb, H, W)
    mn_hw = jnp.concatenate(hw_sm_rows, axis=1) * inv_C
    mx_hc = jnp.concatenate(hc_mx_cols, axis=2).astype(f32)      # (Nb, C, H)
    mn_hc = jnp.concatenate(hc_sm_cols, axis=2) * inv_W

    # ---- 7x7 conv (register-padded 2-D) + folded inference BN + sigmoid ----
    third = 1.0 / 3.0
    a_hw = _conv7_2d(mx_hw, mn_hw, w_ref, 0 * 2 * KS * KS, False)
    s_hw = jax.nn.sigmoid(a_hw * bn_ref[0] + bn_ref[1]) * third  # (Nb, H, W)

    a_cw = _conv7_2d(mx_cw, mn_cw, w_ref, 1 * 2 * KS * KS, False)
    s_cw = jax.nn.sigmoid(a_cw * bn_ref[2] + bn_ref[3]) * third  # (Nb, C, W)

    a_hc = _conv7_2d(mx_hc, mn_hc, w_ref, 2 * 2 * KS * KS, True)
    s_hc = jax.nn.sigmoid(a_hc * bn_ref[4] + bn_ref[5]) * third  # (Nb, C, H)

    # ---- combined gate: single full-size f32 intermediate, one concat ------
    gate_rows = []
    for h in range(H):
        gate_rows.append(s_hw[:, h:h + 1, :]       # broadcast over C
                         + s_cw                    # (Nb, C, W)
                         + s_hc[:, :, h:h + 1])    # broadcast over W
    gate = jnp.concatenate(gate_rows, axis=2)                    # (Nb, C, H*W)

    # Multiply in f32 (matches the reference), single lane-dense store.
    o_ref[...] = (xv * gate).astype(o_ref.dtype)


# ---------------------------------------------------------------------------
# Wrapper
# ---------------------------------------------------------------------------
def _pick_batch_block(N, C, HW, itemsize, budget_bytes=24 * 1024 * 1024):
    """Batch-block size from the real per-sample live set:
       2x double-buffered input + 2x double-buffered output (native dtype)
       + ~3 full-size f32 equivalents (gate, gated product, cast slack)
       + small pooled/conv temporaries."""
    per_sample = C * HW * (4 * itemsize + 3 * 4) + 64 * 1024
    nb = max(1, min(N, budget_bytes // max(per_sample, 1)))
    if N >= 2:
        # >= 2 grid steps so the "parallel" batch axis shards across v7x's
        # two TensorCores (no-op on single-TC v5e/v6e).
        nb = min(nb, max(1, N // 2))
    while N % nb:
        nb -= 1
    return nb


def triplet_attention(x, params):
    """Fused TripletAttention forward.  x: (N, C, H, W) -> (N, C, H, W)."""
    N, C, H, W = x.shape
    HW = H * W
    w_all = jnp.concatenate(
        [params["hw"][0], params["cw"][0], params["hc"][0]]).astype(jnp.float32)
    bn_all = jnp.concatenate(
        [params["hw"][1], params["cw"][1], params["hc"][1]]).astype(jnp.float32)

    # Lane-dense view: last dim H*W (a multiple of 128 for this feature map).
    # TODO(synk): for H*W not a multiple of 128 (e.g. 56x56), pad the flattened
    # lane dim to the next multiple of 128 around the pallas_call so the output
    # store stays an unmasked full-lane vst.
    x_flat = x.reshape(N, C, HW)
    nb = _pick_batch_block(N, C, HW, x.dtype.itemsize)

    kernel = functools.partial(_triplet_kernel, H=H, W=W)
    out_flat = pl.pallas_call(
        kernel,
        out_shape=jax.ShapeDtypeStruct((N, C, HW), x.dtype),
        grid=(N // nb,),
        in_specs=[
            pl.BlockSpec(memory_space=pltpu.MemorySpace.SMEM),   # conv weights
            pl.BlockSpec(memory_space=pltpu.MemorySpace.SMEM),   # folded BN
            pl.BlockSpec((nb, C, HW), lambda n: (n, 0, 0)),
        ],
        out_specs=pl.BlockSpec((nb, C, HW), lambda n: (n, 0, 0)),
        compiler_params=pltpu.CompilerParams(
            dimension_semantics=("parallel",),        # batch blocks independent
            vmem_limit_bytes=48 * 1024 * 1024),       # > v5e/v6e defaults, < v7x 64 MiB
    )(w_all, bn_all, x_flat)
    return out_flat.reshape(N, C, H, W)


# ---------------------------------------------------------------------------
# Pure-JAX reference (for correctness check)
# ---------------------------------------------------------------------------
def _gate_ref(x, w_flat, bn_params):
    w = w_flat.reshape(1, 2, KS, KS)
    mx = jnp.max(x, axis=1, keepdims=True)
    mn = jnp.mean(x, axis=1, keepdims=True)
    pooled = jnp.concatenate([mx, mn], axis=1)
    conv = jax.lax.conv_general_dilated(
        pooled, w, window_strides=(1, 1), padding=((PAD, PAD), (PAD, PAD)),
        dimension_numbers=("NCHW", "OIHW", "NCHW"))
    scale = jax.nn.sigmoid(conv[:, 0] * bn_params[0] + bn_params[1])
    return x * scale[:, None, :, :]


def triplet_attention_ref(x, params):
    x_out = _gate_ref(x, *params["hw"])
    xp1 = jnp.transpose(x, (0, 2, 1, 3))
    x_out11 = jnp.transpose(_gate_ref(xp1, *params["cw"]), (0, 2, 1, 3))
    xp2 = jnp.transpose(x, (0, 3, 2, 1))
    x_out21 = jnp.transpose(_gate_ref(xp2, *params["hc"]), (0, 3, 2, 1))
    return (1.0 / 3.0) * (x_out + x_out11 + x_out21)


# ---------------------------------------------------------------------------
# Deterministic parameter init (matches nn.Conv2d kaiming-uniform bound and
# nn.BatchNorm2d default init: gamma=1, beta=0, running_mean=0, running_var=1)
# ---------------------------------------------------------------------------
def init_gate_params(key):
    fan_in = 2 * KS * KS
    bound = 1.0 / float(jnp.sqrt(fan_in))
    w = jax.random.uniform(key, (1, 2, KS, KS), jnp.float32, -bound, bound)
    gamma = jnp.ones((1,), jnp.float32)
    beta = jnp.zeros((1,), jnp.float32)
    rmean = jnp.zeros((1,), jnp.float32)
    rvar = jnp.ones((1,), jnp.float32)
    bn_scale = gamma / jnp.sqrt(rvar + BN_EPS)
    bn_shift = beta - rmean * bn_scale
    w_flat = w.reshape(-1)
    bn_params = jnp.concatenate([bn_scale, bn_shift]).astype(jnp.float32)
    return w_flat, bn_params


if __name__ == "__main__":
    key = jax.random.PRNGKey(0)
    kx, kcw, khc, khw = jax.random.split(key, 4)
    # Input layout matches PyTorch NCHW: (batch=2, channels=4, H=16, W=16).
    x = jax.random.normal(kx, (2, 4, 16, 16), jnp.float32)
    params = {
        "cw": init_gate_params(kcw),
        "hc": init_gate_params(khc),
        "hw": init_gate_params(khw),
    }

    out = jax.block_until_ready(triplet_attention(x, params))
    ref = jax.block_until_ready(triplet_attention_ref(x, params))

    err = float(jnp.max(jnp.abs(out - ref)))
    assert jnp.allclose(out, ref, atol=1e-4, rtol=1e-4), f"max abs err {err}"
    print("KERNEL_OK")
</pallas_src>

<mosaic_0001>
module attributes {stable_mosaic.version = 11 : i64} {
  func.func @_triplet_kernel(%arg0: i32, %arg1: memref<294xf32, #tpu.memory_space<smem>>, %arg2: memref<6xf32, #tpu.memory_space<smem>>, %arg3: memref<1x4x256xf32, #tpu.memory_space<vmem>>, %arg4: memref<1x4x256xf32, #tpu.memory_space<vmem>>) attributes {dimension_semantics = [#tpu.dimension_semantics<parallel>], iteration_bounds = array<i64: 2>, scalar_prefetch = 0 : i64, scratch_operands = 0 : i64, tpu.core_type = #tpu.core_type<tc>, window_params = [{transform_indices = @transform_0, window_bounds = array<i64: 294>}, {transform_indices = @transform_1, window_bounds = array<i64: 6>}, {transform_indices = @transform_2, window_bounds = array<i64: 1, 4, 256>}, {transform_indices = @transform_3, window_bounds = array<i64: 1, 4, 256>}]} {
    %c0 = arith.constant 0 : index
    %c0_0 = arith.constant 0 : index
    %c0_1 = arith.constant 0 : index
    %0 = vector.load %arg3[%c0, %c0_0, %c0_1] : memref<1x4x256xf32, #tpu.memory_space<vmem>>, vector<1x4x256xf32>
    %1 = vector.extract_strided_slice %0 {offsets = [0, 0, 0], sizes = [1, 4, 16], strides = [1, 1, 1]} : vector<1x4x256xf32> to vector<1x4x16xf32>
    %cst = arith.constant dense<0xFF800000> : vector<1x16xf32>
    %2 = vector.multi_reduction <maximumf>, %1, %cst [1] : vector<1x4x16xf32> to vector<1x16xf32>
    %3 = vector.shape_cast %2 : vector<1x16xf32> to vector<1x1x16xf32>
    %cst_2 = arith.constant dense<0.000000e+00> : vector<1x16xf32>
    %4 = vector.multi_reduction <add>, %1, %cst_2 [1] : vector<1x4x16xf32> to vector<1x16xf32>
    %5 = vector.shape_cast %4 : vector<1x16xf32> to vector<1x1x16xf32>
    %cst_3 = arith.constant dense<0xFF800000> : vector<1x4xf32>
    %6 = vector.multi_reduction <maximumf>, %1, %cst_3 [2] : vector<1x4x16xf32> to vector<1x4xf32>
    %7 = vector.shape_cast %6 : vector<1x4xf32> to vector<1x4x1xf32>
    %cst_4 = arith.constant dense<0.000000e+00> : vector<1x4xf32>
    %8 = vector.multi_reduction <add>, %1, %cst_4 [2] : vector<1x4x16xf32> to vector<1x4xf32>
    %9 = vector.shape_cast %8 : vector<1x4xf32> to vector<1x4x1xf32>
    %10 = vector.extract_strided_slice %0 {offsets = [0, 0, 16], sizes = [1, 4, 16], strides = [1, 1, 1]} : vector<1x4x256xf32> to vector<1x4x16xf32>
    %11 = arith.maximumf %1, %10 : vector<1x4x16xf32>
    %12 = arith.addf %1, %10 : vector<1x4x16xf32>
    %cst_5 = arith.constant dense<0xFF800000> : vector<1x16xf32>
    %13 = vector.multi_reduction <maximumf>, %10, %cst_5 [1] : vector<1x4x16xf32> to vector<1x16xf32>
    %14 = vector.shape_cast %13 : vector<1x16xf32> to vector<1x1x16xf32>
    %cst_6 = arith.constant dense<0.000000e+00> : vector<1x16xf32>
    %15 = vector.multi_reduction <add>, %10, %cst_6 [1] : vector<1x4x16xf32> to vector<1x16xf32>
    %16 = vector.shape_cast %15 : vector<1x16xf32> to vector<1x1x16xf32>
    %cst_7 = arith.constant dense<0xFF800000> : vector<1x4xf32>
    %17 = vector.multi_reduction <maximumf>, %10, %cst_7 [2] : vector<1x4x16xf32> to vector<1x4xf32>
    %18 = vector.shape_cast %17 : vector<1x4xf32> to vector<1x4x1xf32>
    %cst_8 = arith.constant dense<0.000000e+00> : vector<1x4xf32>
    %19 = vector.multi_reduction <add>, %10, %cst_8 [2] : vector<1x4x16xf32> to vector<1x4xf32>
    %20 = vector.shape_cast %19 : vector<1x4xf32> to vector<1x4x1xf32>
    %21 = vector.extract_strided_slice %0 {offsets = [0, 0, 32], sizes = [1, 4, 16], strides = [1, 1, 1]} : vector<1x4x256xf32> to vector<1x4x16xf32>
    %22 = arith.maximumf %11, %21 : vector<1x4x16xf32>
    %23 = arith.addf %12, %21 : vector<1x4x16xf32>
    %cst_9 = arith.constant dense<0xFF800000> : vector<1x16xf32>
    %24 = vector.multi_reduction <maximumf>, %21, %cst_9 [1] : vector<1x4x16xf32> to vector<1x16xf32>
    %25 = vector.shape_cast %24 : vector<1x16xf32> to vector<1x1x16xf32>
    %cst_10 = arith.constant dense<0.000000e+00> : vector<1x16xf32>
    %26 = vector.multi_reduction <add>, %21, %cst_10 [1] : vector<1x4x16xf32> to vector<1x16xf32>
    %27 = vector.shape_cast %26 : vector<1x16xf32> to vector<1x1x16xf32>
    %cst_11 = arith.constant dense<0xFF800000> : vector<1x4xf32>
    %28 = vector.multi_reduction <maximumf>, %21, %cst_11 [2] : vector<1x4x16xf32> to vector<1x4xf32>
    %29 = vector.shape_cast %28 : vector<1x4xf32> to vector<1x4x1xf32>
    %cst_12 = arith.constant dense<0.000000e+00> : vector<1x4xf32>
    %30 = vector.multi_reduction <add>, %21, %cst_12 [2] : vector<1x4x16xf32> to vector<1x4xf32>
    %31 = vector.shape_cast %30 : vector<1x4xf32> to vector<1x4x1xf32>
    %32 = vector.extract_strided_slice %0 {offsets = [0, 0, 48], sizes = [1, 4, 16], strides = [1, 1, 1]} : vector<1x4x256xf32> to vector<1x4x16xf32>
    %33 = arith.maximumf %22, %32 : vector<1x4x16xf32>
    %34 = arith.addf %23, %32 : vector<1x4x16xf32>
    %cst_13 = arith.constant dense<0xFF800000> : vector<1x16xf32>
    %35 = vector.multi_reduction <maximumf>, %32, %cst_13 [1] : vector<1x4x16xf32> to vector<1x16xf32>
    %36 = vector.shape_cast %35 : vector<1x16xf32> to vector<1x1x16xf32>
    %cst_14 = arith.constant dense<0.000000e+00> : vector<1x16xf32>
    %37 = vector.multi_reduction <add>, %32, %cst_14 [1] : vector<1x4x16xf32> to vector<1x16xf32>
    %38 = vector.shape_cast %37 : vector<1x16xf32> to vector<1x1x16xf32>
    %cst_15 = arith.constant dense<0xFF800000> : vector<1x4xf32>
    %39 = vector.multi_reduction <maximumf>, %32, %cst_15 [2] : vector<1x4x16xf32> to vector<1x4xf32>
    %40 = vector.shape_cast %39 : vector<1x4xf32> to vector<1x4x1xf32>
    %cst_16 = arith.constant dense<0.000000e+00> : vector<1x4xf32>
    %41 = vector.multi_reduction <add>, %32, %cst_16 [2] : vector<1x4x16xf32> to vector<1x4xf32>
    %42 = vector.shape_cast %41 : vector<1x4xf32> to vector<1x4x1xf32>
    %43 = vector.extract_strided_slice %0 {offsets = [0, 0, 64], sizes = [1, 4, 16], strides = [1, 1, 1]} : vector<1x4x256xf32> to vector<1x4x16xf32>
    %44 = arith.maximumf %33, %43 : vector<1x4x16xf32>
    %45 = arith.addf %34, %43 : vector<1x4x16xf32>
    %cst_17 = arith.constant dense<0xFF800000> : vector<1x16xf32>
    %46 = vector.multi_reduction <maximumf>, %43, %cst_17 [1] : vector<1x4x16xf32> to vector<1x16xf32>
    %47 = vector.shape_cast %46 : vector<1x16xf32> to vector<1x1x16xf32>
    %cst_18 = arith.constant dense<0.000000e+00> : vector<1x16xf32>
    %48 = vector.multi_reduction <add>, %43, %cst_18 [1] : vector<1x4x16xf32> to vector<1x16xf32>
    %49 = vector.shape_cast %48 : vector<1x16xf32> to vector<1x1x16xf32>
    %cst_19 = arith.constant dense<0xFF800000> : vector<1x4xf32>
    %50 = vector.multi_reduction <maximumf>, %43, %cst_19 [2] : vector<1x4x16xf32> to vector<1x4xf32>
    %51 = vector.shape_cast %50 : vector<1x4xf32> to vector<1x4x1xf32>
    %cst_20 = arith.constant dense<0.000000e+00> : vector<1x4xf32>
    %52 = vector.multi_reduction <add>, %43, %cst_20 [2] : vector<1x4x16xf32> to vector<1x4xf32>
    %53 = vector.shape_cast %52 : vector<1x4xf32> to vector<1x4x1xf32>
    %54 = vector.extract_strided_slice %0 {offsets = [0, 0, 80], sizes = [1, 4, 16], strides = [1, 1, 1]} : vector<1x4x256xf32> to vector<1x4x16xf32>
    %55 = arith.maximumf %44, %54 : vector<1x4x16xf32>
    %56 = arith.addf %45, %54 : vector<1x4x16xf32>
    %cst_21 = arith.constant dense<0xFF800000> : vector<1x16xf32>
    %57 = vector.multi_reduction <maximumf>, %54, %cst_21 [1] : vector<1x4x16xf32> to vector<1x16xf32>
    %58 = vector.shape_cast %57 : vector<1x16xf32> to vector<1x1x16xf32>
    %cst_22 = arith.constant dense<0.000000e+00> : vector<1x16xf32>
    %59 = vector.multi_reduction <add>, %54, %cst_22 [1] : vector<1x4x16xf32> to vector<1x16xf32>
    %60 = vector.shape_cast %59 : vector<1x16xf32> to vector<1x1x16xf32>
    %cst_23 = arith.constant dense<0xFF800000> : vector<1x4xf32>
    %61 = vector.multi_reduction <maximumf>, %54, %cst_23 [2] : vector<1x4x16xf32> to vector<1x4xf32>
    %62 = vector.shape_cast %61 : vector<1x4xf32> to vector<1x4x1xf32>
    %cst_24 = arith.constant dense<0.000000e+00> : vector<1x4xf32>
    %63 = vector.multi_reduction <add>, %54, %cst_24 [2] : vector<1x4x16xf32> to vector<1x4xf32>
    %64 = vector.shape_cast %63 : vector<1x4xf32> to vector<1x4x1xf32>
    %65 = vector.extract_strided_slice %0 {offsets = [0, 0, 96], sizes = [1, 4, 16], strides = [1, 1, 1]} : vector<1x4x256xf32> to vector<1x4x16xf32>
    %66 = arith.maximumf %55, %65 : vector<1x4x16xf32>
    %67 = arith.addf %56, %65 : vector<1x4x16xf32>
    %cst_25 = arith.constant dense<0xFF800000> : vector<1x16xf32>
    %68 = vector.multi_reduction <maximumf>, %65, %cst_25 [1] : vector<1x4x16xf32> to vector<1x16xf32>
    %69 = vector.shape_cast %68 : vector<1x16xf32> to vector<1x1x16xf32>
    %cst_26 = arith.constant dense<0.000000e+00> : vector<1x16xf32>
    %70 = vector.multi_reduction <add>, %65, %cst_26 [1] : vector<1x4x16xf32> to vector<1x16xf32>
    %71 = vector.shape_cast %70 : vector<1x16xf32> to vector<1x1x16xf32>
    %cst_27 = arith.constant dense<0xFF800000> : vector<1x4xf32>
    %72 = vector.multi_reduction <maximumf>, %65, %cst_27 [2] : vector<1x4x16xf32> to vector<1x4xf32>
    %73 = vector.shape_cast %72 : vector<1x4xf32> to vector<1x4x1xf32>
    %cst_28 = arith.constant dense<0.000000e+00> : vector<1x4xf32>
    %74 = vector.multi_reduction <add>, %65, %cst_28 [2] : vector<1x4x16xf32> to vector<1x4xf32>
    %75 = vector.shape_cast %74 : vector<1x4xf32> to vector<1x4x1xf32>
    %76 = vector.extract_strided_slice %0 {offsets = [0, 0, 112], sizes = [1, 4, 16], strides = [1, 1, 1]} : vector<1x4x256xf32> to vector<1x4x16xf32>
    %77 = arith.maximumf %66, %76 : vector<1x4x16xf32>
    %78 = arith.addf %67, %76 : vector<1x4x16xf32>
    %cst_29 = arith.constant dense<0xFF800000> : vector<1x16xf32>
    %79 = vector.multi_reduction <maximumf>, %76, %cst_29 [1] : vector<1x4x16xf32> to vector<1x16xf32>
    %80 = vector.shape_cast %79 : vector<1x16xf32> to vector<1x1x16xf32>
    %cst_30 = arith.constant dense<0.000000e+00> : vector<1x16xf32>
    %81 = vector.multi_reduction <add>, %76, %cst_30 [1] : vector<1x4x16xf32> to vector<1x16xf32>
    %82 = vector.shape_cast %81 : vector<1x16xf32> to vector<1x1x16xf32>
    %cst_31 = arith.constant dense<0xFF800000> : vector<1x4xf32>
    %83 = vector.multi_reduction <maximumf>, %76, %cst_31 [2] : vector<1x4x16xf32> to vector<1x4xf32>
    %84 = vector.shape_cast %83 : vector<1x4xf32> to vector<1x4x1xf32>
    %cst_32 = arith.constant dense<0.000000e+00> : vector<1x4xf32>
    %85 = vector.multi_reduction <add>, %76, %cst_32 [2] : vector<1x4x16xf32> to vector<1x4xf32>
    %86 = vector.shape_cast %85 : vector<1x4xf32> to vector<1x4x1xf32>
    %87 = vector.extract_strided_slice %0 {offsets = [0, 0, 128], sizes = [1, 4, 16], strides = [1, 1, 1]} : vector<1x4x256xf32> to vector<1x4x16xf32>
    %88 = arith.maximumf %77, %87 : vector<1x4x16xf32>
    %89 = arith.addf %78, %87 : vector<1x4x16xf32>
    %cst_33 = arith.constant dense<0xFF800000> : vector<1x16xf32>
    %90 = vector.multi_reduction <maximumf>, %87, %cst_33 [1] : vector<1x4x16xf32> to vector<1x16xf32>
    %91 = vector.shape_cast %90 : vector<1x16xf32> to vector<1x1x16xf32>
    %cst_34 = arith.constant dense<0.000000e+00> : vector<1x16xf32>
    %92 = vector.multi_reduction <add>, %87, %cst_34 [1] : vector<1x4x16xf32> to vector<1x16xf32>
    %93 = vector.shape_cast %92 : vector<1x16xf32> to vector<1x1x16xf32>
    %cst_35 = arith.constant dense<0xFF800000> : vector<1x4xf32>
    %94 = vector.multi_reduction <maximumf>, %87, %cst_35 [2] : vector<1x4x16xf32> to vector<1x4xf32>
    %95 = vector.shape_cast %94 : vector<1x4xf32> to vector<1x4x1xf32>
    %cst_36 = arith.constant dense<0.000000e+00> : vector<1x4xf32>
    %96 = vector.multi_reduction <add>, %87, %cst_36 [2] : vector<1x4x16xf32> to vector<1x4xf32>
    %97 = vector.shape_cast %96 : vector<1x4xf32> to vector<1x4x1xf32>
    %98 = vector.extract_strided_slice %0 {offsets = [0, 0, 144], sizes = [1, 4, 16], strides = [1, 1, 1]} : vector<1x4x256xf32> to vector<1x4x16xf32>
    %99 = arith.maximumf %88, %98 : vector<1x4x16xf32>
    %100 = arith.addf %89, %98 : vector<1x4x16xf32>
    %cst_37 = arith.constant dense<0xFF800000> : vector<1x16xf32>
    %101 = vector.multi_reduction <maximumf>, %98, %cst_37 [1] : vector<1x4x16xf32> to vector<1x16xf32>
    %102 = vector.shape_cast %101 : vector<1x16xf32> to vector<1x1x16xf32>
    %cst_38 = arith.constant dense<0.000000e+00> : vector<1x16xf32>
    %103 = vector.multi_reduction <add>, %98, %cst_38 [1] : vector<1x4x16xf32> to vector<1x16xf32>
    %104 = vector.shape_cast %103 : vector<1x16xf32> to vector<1x1x16xf32>
    %cst_39 = arith.constant dense<0xFF800000> : vector<1x4xf32>
    %105 = vector.multi_reduction <maximumf>, %98, %cst_39 [2] : vector<1x4x16xf32> to vector<1x4xf32>
    %106 = vector.shape_cast %105 : vector<1x4xf32> to vector<1x4x1xf32>
    %cst_40 = arith.constant dense<0.000000e+00> : vector<1x4xf32>
    %107 = vector.multi_reduction <add>, %98, %cst_40 [2] : vector<1x4x16xf32> to vector<1x4xf32>
    %108 = vector.shape_cast %107 : vector<1x4xf32> to vector<1x4x1xf32>
    %109 = vector.extract_strided_slice %0 {offsets = [0, 0, 160], sizes = [1, 4, 16], strides = [1, 1, 1]} : vector<1x4x256xf32> to vector<1x4x16xf32>
    %110 = arith.maximumf %99, %109 : vector<1x4x16xf32>
    %111 = arith.addf %100, %109 : vector<1x4x16xf32>
    %cst_41 = arith.constant dense<0xFF800000> : vector<1x16xf32>
    %112 = vector.multi_reduction <maximumf>, %109, %cst_41 [1] : vector<1x4x16xf32> to vector<1x16xf32>
    %113 = vector.shape_cast %112 : vector<1x16xf32> to vector<1x1x16xf32>
    %cst_42 = arith.constant dense<0.000000e+00> : vector<1x16xf32>
    %114 = vector.multi_reduction <add>, %109, %cst_42 [1] : vector<1x4x16xf32> to vector<1x16xf32>
    %115 = vector.shape_cast %114 : vector<1x16xf32> to vector<1x1x16xf32>
    %cst_43 = arith.constant dense<0xFF800000> : vector<1x4xf32>
    %116 = vector.multi_reduction <maximumf>, %109, %cst_43 [2] : vector<1x4x16xf32> to vector<1x4xf32>
    %117 = vector.shape_cast %116 : vector<1x4xf32> to vector<1x4x1xf32>
    %cst_44 = arith.constant dense<0.000000e+00> : vector<1x4xf32>
    %118 = vector.multi_reduction <add>, %109, %cst_44 [2] : vector<1x4x16xf32> to vector<1x4xf32>
    %119 = vector.shape_cast %118 : vector<1x4xf32> to vector<1x4x1xf32>
    %120 = vector.extract_strided_slice %0 {offsets = [0, 0, 176], sizes = [1, 4, 16], strides = [1, 1, 1]} : vector<1x4x256xf32> to vector<1x4x16xf32>
    %121 = arith.maximumf %110, %120 : vector<1x4x16xf32>
    %122 = arith.addf %111, %120 : vector<1x4x16xf32>
    %cst_45 = arith.constant dense<0xFF800000> : vector<1x16xf32>
    %123 = vector.multi_reduction <maximumf>, %120, %cst_45 [1] : vector<1x4x16xf32> to vector<1x16xf32>
    %124 = vector.shape_cast %123 : vector<1x16xf32> to vector<1x1x16xf32>
    %cst_46 = arith.constant dense<0.000000e+00> : vector<1x16xf32>
    %125 = vector.multi_reduction <add>, %120, %cst_46 [1] : vector<1x4x16xf32> to vector<1x16xf32>
    %126 = vector.shape_cast %125 : vector<1x16xf32> to vector<1x1x16xf32>
    %cst_47 = arith.constant dense<0xFF800000> : vector<1x4xf32>
    %127 = vector.multi_reduction <maximumf>, %120, %cst_47 [2] : vector<1x4x16xf32> to vector<1x4xf32>
    %128 = vector.shape_cast %127 : vector<1x4xf32> to vector<1x4x1xf32>
    %cst_48 = arith.constant dense<0.000000e+00> : vector<1x4xf32>
    %129 = vector.multi_reduction <add>, %120, %cst_48 [2] : vector<1x4x16xf32> to vector<1x4xf32>
    %130 = vector.shape_cast %129 : vector<1x4xf32> to vector<1x4x1xf32>
    %131 = vector.extract_strided_slice %0 {offsets = [0, 0, 192], sizes = [1, 4, 16], strides = [1, 1, 1]} : vector<1x4x256xf32> to vector<1x4x16xf32>
    %132 = arith.maximumf %121, %131 : vector<1x4x16xf32>
    %133 = arith.addf %122, %131 : vector<1x4x16xf32>
    %cst_49 = arith.constant dense<0xFF800000> : vector<1x16xf32>
    %134 = vector.multi_reduction <maximumf>, %131, %cst_49 [1] : vector<1x4x16xf32> to vector<1x16xf32>
    %135 = vector.shape_cast %134 : vector<1x16xf32> to vector<1x1x16xf32>
    %cst_50 = arith.constant dense<0.000000e+00> : vector<1x16xf32>
    %136 = vector.multi_reduction <add>, %131, %cst_50 [1] : vector<1x4x16xf32> to vector<1x16xf32>
    %137 = vector.shape_cast %136 : vector<1x16xf32> to vector<1x1x16xf32>
    %cst_51 = arith.constant dense<0xFF800000> : vector<1x4xf32>
    %138 = vector.multi_reduction <maximumf>, %131, %cst_51 [2] : vector<1x4x16xf32> to vector<1x4xf32>
    %139 = vector.shape_cast %138 : vector<1x4xf32> to vector<1x4x1xf32>
    %cst_52 = arith.constant dense<0.000000e+00> : vector<1x4xf32>
    %140 = vector.multi_reduction <add>, %131, %cst_52 [2] : vector<1x4x16xf32> to vector<1x4xf32>
    %141 = vector.shape_cast %140 : vector<1x4xf32> to vector<1x4x1xf32>
    %142 = vector.extract_strided_slice %0 {offsets = [0, 0, 208], sizes = [1, 4, 16], strides = [1, 1, 1]} : vector<1x4x256xf32> to vector<1x4x16xf32>
    %143 = arith.maximumf %132, %142 : vector<1x4x16xf32>
    %144 = arith.addf %133, %142 : vector<1x4x16xf32>
    %cst_53 = arith.constant dense<0xFF800000> : vector<1x16xf32>
    %145 = vector.multi_reduction <maximumf>, %142, %cst_53 [1] : vector<1x4x16xf32> to vector<1x16xf32>
    %146 = vector.shape_cast %145 : vector<1x16xf32> to vector<1x1x16xf32>
    %cst_54 = arith.constant dense<0.000000e+00> : vector<1x16xf32>
    %147 = vector.multi_reduction <add>, %142, %cst_54 [1] : vector<1x4x16xf32> to vector<1x16xf32>
    %148 = vector.shape_cast %147 : vector<1x16xf32> to vector<1x1x16xf32>
    %cst_55 = arith.constant dense<0xFF800000> : vector<1x4xf32>
    %149 = vector.multi_reduction <maximumf>, %142, %cst_55 [2] : vector<1x4x16xf32> to vector<1x4xf32>
    %150 = vector.shape_cast %149 : vector<1x4xf32> to vector<1x4x1xf32>
    %cst_56 = arith.constant dense<0.000000e+00> : vector<1x4xf32>
    %151 = vector.multi_reduction <add>, %142, %cst_56 [2] : vector<1x4x16xf32> to vector<1x4xf32>
    %152 = vector.shape_cast %151 : vector<1x4xf32> to vector<1x4x1xf32>
    %153 = vector.extract_strided_slice %0 {offsets = [0, 0, 224], sizes = [1, 4, 16], strides = [1, 1, 1]} : vector<1x4x256xf32> to vector<1x4x16xf32>
    %154 = arith.maximumf %143, %153 : vector<1x4x16xf32>
    %155 = arith.addf %144, %153 : vector<1x4x16xf32>
    %cst_57 = arith.constant dense<0xFF800000> : vector<1x16xf32>
    %156 = vector.multi_reduction <maximumf>, %153, %cst_57 [1] : vector<1x4x16xf32> to vector<1x16xf32>
    %157 = vector.shape_cast %156 : vector<1x16xf32> to vector<1x1x16xf32>
    %cst_58 = arith.constant dense<0.000000e+00> : vector<1x16xf32>
    %158 = vector.multi_reduction <add>, %153, %cst_58 [1] : vector<1x4x16xf32> to vector<1x16xf32>
    %159 = vector.shape_cast %158 : vector<1x16xf32> to vector<1x1x16xf32>
    %cst_59 = arith.constant dense<0xFF800000> : vector<1x4xf32>
    %160 = vector.multi_reduction <maximumf>, %153, %cst_59 [2] : vector<1x4x16xf32> to vector<1x4xf32>
    %161 = vector.shape_cast %160 : vector<1x4xf32> to vector<1x4x1xf32>
    %cst_60 = arith.constant dense<0.000000e+00> : vector<1x4xf32>
    %162 = vector.multi_reduction <add>, %153, %cst_60 [2] : vector<1x4x16xf32> to vector<1x4xf32>
    %163 = vector.shape_cast %162 : vector<1x4xf32> to vector<1x4x1xf32>
    %164 = vector.extract_strided_slice %0 {offsets = [0, 0, 240], sizes = [1, 4, 16], strides = [1, 1, 1]} : vector<1x4x256xf32> to vector<1x4x16xf32>
    %165 = arith.maximumf %154, %164 : vector<1x4x16xf32>
    %166 = arith.addf %155, %164 : vector<1x4x16xf32>
    %cst_61 = arith.constant dense<0xFF800000> : vector<1x16xf32>
    %167 = vector.multi_reduction <maximumf>, %164, %cst_61 [1] : vector<1x4x16xf32> to vector<1x16xf32>
    %168 = vector.shape_cast %167 : vector<1x16xf32> to vector<1x1x16xf32>
    %cst_62 = arith.constant dense<0.000000e+00> : vector<1x16xf32>
    %169 = vector.multi_reduction <add>, %164, %cst_62 [1] : vector<1x4x16xf32> to vector<1x16xf32>
    %170 = vector.shape_cast %169 : vector<1x16xf32> to vector<1x1x16xf32>
    %cst_63 = arith.constant dense<0xFF800000> : vector<1x4xf32>
    %171 = vector.multi_reduction <maximumf>, %164, %cst_63 [2] : vector<1x4x16xf32> to vector<1x4xf32>
    %172 = vector.shape_cast %171 : vector<1x4xf32> to vector<1x4x1xf32>
    %cst_64 = arith.constant dense<0.000000e+00> : vector<1x4xf32>
    %173 = vector.multi_reduction <add>, %164, %cst_64 [2] : vector<1x4x16xf32> to vector<1x4xf32>
    %174 = vector.shape_cast %173 : vector<1x4xf32> to vector<1x4x1xf32>
    %cst_65 = arith.constant 6.250000e-02 : f32
    %175 = vector.broadcast %cst_65 : f32 to vector<1x4x16xf32>
    %176 = arith.mulf %166, %175 : vector<1x4x16xf32>
    %177 = tpu.concatenate %3, %14, %25, %36, %47, %58, %69, %80, %91, %102, %113, %124, %135, %146, %157, %168 in 1 : vector<1x1x16xf32>, vector<1x1x16xf32>, vector<1x1x16xf32>, vector<1x1x16xf32>, vector<1x1x16xf32>, vector<1x1x16xf32>, vector<1x1x16xf32>, vector<1x1x16xf32>, vector<1x1x16xf32>, vector<1x1x16xf32>, vector<1x1x16xf32>, vector<1x1x16xf32>, vector<1x1x16xf32>, vector<1x1x16xf32>, vector<1x1x16xf32>, vector<1x1x16xf32> -> vector<1x16x16xf32>
    %178 = tpu.concatenate %5, %16, %27, %38, %49, %60, %71, %82, %93, %104, %115, %126, %137, %148, %159, %170 in 1 : vector<1x1x16xf32>, vector<1x1x16xf32>, vector<1x1x16xf32>, vector<1x1x16xf32>, vector<1x1x16xf32>, vector<1x1x16xf32>, vector<1x1x16xf32>, vector<1x1x16xf32>, vector<1x1x16xf32>, vector<1x1x16xf32>, vector<1x1x16xf32>, vector<1x1x16xf32>, vector<1x1x16xf32>, vector<1x1x16xf32>, vector<1x1x16xf32>, vector<1x1x16xf32> -> vector<1x16x16xf32>
    %cst_66 = arith.constant 2.500000e-01 : f32
    %179 = vector.broadcast %cst_66 : f32 to vector<1x16x16xf32>
    %180 = arith.mulf %178, %179 : vector<1x16x16xf32>
    %181 = tpu.concatenate %7, %18, %29, %40, %51, %62, %73, %84, %95, %106, %117, %128, %139, %150, %161, %172 in 2 : vector<1x4x1xf32>, vector<1x4x1xf32>, vector<1x4x1xf32>, vector<1x4x1xf32>, vector<1x4x1xf32>, vector<1x4x1xf32>, vector<1x4x1xf32>, vector<1x4x1xf32>, vector<1x4x1xf32>, vector<1x4x1xf32>, vector<1x4x1xf32>, vector<1x4x1xf32>, vector<1x4x1xf32>, vector<1x4x1xf32>, vector<1x4x1xf32>, vector<1x4x1xf32> -> vector<1x4x16xf32>
    %182 = tpu.concatenate %9, %20, %31, %42, %53, %64, %75, %86, %97, %108, %119, %130, %141, %152, %163, %174 in 2 : vector<1x4x1xf32>, vector<1x4x1xf32>, vector<1x4x1xf32>, vector<1x4x1xf32>, vector<1x4x1xf32>, vector<1x4x1xf32>, vector<1x4x1xf32>, vector<1x4x1xf32>, vector<1x4x1xf32>, vector<1x4x1xf32>, vector<1x4x1xf32>, vector<1x4x1xf32>, vector<1x4x1xf32>, vector<1x4x1xf32>, vector<1x4x1xf32>, vector<1x4x1xf32> -> vector<1x4x16xf32>
    %cst_67 = arith.constant 6.250000e-02 : f32
    %183 = vector.broadcast %cst_67 : f32 to vector<1x4x16xf32>
    %184 = arith.mulf %182, %183 : vector<1x4x16xf32>
    %cst_68 = arith.constant 0.000000e+00 : f32
    %185 = vector.broadcast %cst_68 : f32 to vector<1x3x16xf32>
    %cst_69 = arith.constant 0.000000e+00 : f32
    %186 = vector.broadcast %cst_69 : f32 to vector<1x22x3xf32>
    %187 = tpu.concatenate %185, %177, %185 in 1 : vector<1x3x16xf32>, vector<1x16x16xf32>, vector<1x3x16xf32> -> vector<1x22x16xf32>
    %188 = tpu.concatenate %186, %187, %186 in 2 : vector<1x22x3xf32>, vector<1x22x16xf32>, vector<1x22x3xf32> -> vector<1x22x22xf32>
    %189 = tpu.concatenate %185, %180, %185 in 1 : vector<1x3x16xf32>, vector<1x16x16xf32>, vector<1x3x16xf32> -> vector<1x22x16xf32>
    %190 = tpu.concatenate %186, %189, %186 in 2 : vector<1x22x3xf32>, vector<1x22x16xf32>, vector<1x22x3xf32> -> vector<1x22x22xf32>
    %cst_70 = arith.constant 0.000000e+00 : f32
    %191 = vector.broadcast %cst_70 : f32 to vector<1x16x16xf32>
    %192 = vector.extract_strided_slice %188 {offsets = [0, 0, 0], sizes = [1, 16, 22], strides = [1, 1, 1]} : vector<1x22x22xf32> to vector<1x16x22xf32>
    %193 = vector.extract_strided_slice %190 {offsets = [0, 0, 0], sizes = [1, 16, 22], strides = [1, 1, 1]} : vector<1x22x22xf32> to vector<1x16x22xf32>
    %c0_71 = arith.constant 0 : index
    %194 = memref.load %arg1[%c0_71] : memref<294xf32, #tpu.memory_space<smem>>
    %c49 = arith.constant 49 : index
    %195 = memref.load %arg1[%c49] : memref<294xf32, #tpu.memory_space<smem>>
    %196 = vector.extract_strided_slice %192 {offsets = [0, 0, 0], sizes = [1, 16, 16], strides = [1, 1, 1]} : vector<1x16x22xf32> to vector<1x16x16xf32>
    %197 = vector.broadcast %194 : f32 to vector<1x16x16xf32>
    %198 = arith.mulf %197, %196 : vector<1x16x16xf32>
    %199 = arith.addf %191, %198 : vector<1x16x16xf32>
    %200 = vector.extract_strided_slice %193 {offsets = [0, 0, 0], sizes = [1, 16, 16], strides = [1, 1, 1]} : vector<1x16x22xf32> to vector<1x16x16xf32>
    %201 = vector.broadcast %195 : f32 to vector<1x16x16xf32>
    %202 = arith.mulf %201, %200 : vector<1x16x16xf32>
    %203 = arith.addf %199, %202 : vector<1x16x16xf32>
    %c1 = arith.constant 1 : index
    %204 = memref.load %arg1[%c1] : memref<294xf32, #tpu.memory_space<smem>>
    %c50 = arith.constant 50 : index
    %205 = memref.load %arg1[%c50] : memref<294xf32, #tpu.memory_space<smem>>
    %206 = vector.extract_strided_slice %192 {offsets = [0, 0, 1], sizes = [1, 16, 16], strides = [1, 1, 1]} : vector<1x16x22xf32> to vector<1x16x16xf32>
    %207 = vector.broadcast %204 : f32 to vector<1x16x16xf32>
    %208 = arith.mulf %207, %206 : vector<1x16x16xf32>
    %209 = arith.addf %203, %208 : vector<1x16x16xf32>
    %210 = vector.extract_strided_slice %193 {offsets = [0, 0, 1], sizes = [1, 16, 16], strides = [1, 1, 1]} : vector<1x16x22xf32> to vector<1x16x16xf32>
    %211 = vector.broadcast %205 : f32 to vector<1x16x16xf32>
    %212 = arith.mulf %211, %210 : vector<1x16x16xf32>
    %213 = arith.addf %209, %212 : vector<1x16x16xf32>
    %c2 = arith.constant 2 : index
    %214 = memref.load %arg1[%c2] : memref<294xf32, #tpu.memory_space<smem>>
    %c51 = arith.constant 51 : index
    %215 = memref.load %arg1[%c51] : memref<294xf32, #tpu.memory_space<smem>>
    %216 = vector.extract_strided_slice %192 {offsets = [0, 0, 2], sizes = [1, 16, 16], strides = [1, 1, 1]} : vector<1x16x22xf32> to vector<1x16x16xf32>
    %217 = vector.broadcast %214 : f32 to vector<1x16x16xf32>
    %218 = arith.mulf %217, %216 : vector<1x16x16xf32>
    %219 = arith.addf %213, %218 : vector<1x16x16xf32>
    %220 = vector.extract_strided_slice %193 {offsets = [0, 0, 2], sizes = [1, 16, 16], strides = [1, 1, 1]} : vector<1x16x22xf32> to vector<1x16x16xf32>
    %221 = vector.broadcast %215 : f32 to vector<1x16x16xf32>
    %222 = arith.mulf %221, %220 : vector<1x16x16xf32>
    %223 = arith.addf %219, %222 : vector<1x16x16xf32>
    %c3 = arith.constant 3 : index
    %224 = memref.load %arg1[%c3] : memref<294xf32, #tpu.memory_space<smem>>
    %c52 = arith.constant 52 : index
    %225 = memref.load %arg1[%c52] : memref<294xf32, #tpu.memory_space<smem>>
    %226 = vector.extract_strided_slice %192 {offsets = [0, 0, 3], sizes = [1, 16, 16], strides = [1, 1, 1]} : vector<1x16x22xf32> to vector<1x16x16xf32>
    %227 = vector.broadcast %224 : f32 to vector<1x16x16xf32>
    %228 = arith.mulf %227, %226 : vector<1x16x16xf32>
    %229 = arith.addf %223, %228 : vector<1x16x16xf32>
    %230 = vector.extract_strided_slice %193 {offsets = [0, 0, 3], sizes = [1, 16, 16], strides = [1, 1, 1]} : vector<1x16x22xf32> to vector<1x16x16xf32>
    %231 = vector.broadcast %225 : f32 to vector<1x16x16xf32>
    %232 = arith.mulf %231, %230 : vector<1x16x16xf32>
    %233 = arith.addf %229, %232 : vector<1x16x16xf32>
    %c4 = arith.constant 4 : index
    %234 = memref.load %arg1[%c4] : memref<294xf32, #tpu.memory_space<smem>>
    %c53 = arith.constant 53 : index
    %235 = memref.load %arg1[%c53] : memref<294xf32, #tpu.memory_space<smem>>
    %236 = vector.extract_strided_slice %192 {offsets = [0, 0, 4], sizes = [1, 16, 16], strides = [1, 1, 1]} : vector<1x16x22xf32> to vector<1x16x16xf32>
    %237 = vector.broadcast %234 : f32 to vector<1x16x16xf32>
    %238 = arith.mulf %237, %236 : vector<1x16x16xf32>
    %239 = arith.addf %233, %238 : vector<1x16x16xf32>
    %240 = vector.extract_strided_slice %193 {offsets = [0, 0, 4], sizes = [1, 16, 16], strides = [1, 1, 1]} : vector<1x16x22xf32> to vector<1x16x16xf32>
    %241 = vector.broadcast %235 : f32 to vector<1x16x16xf32>
    %242 = arith.mulf %241, %240 : vector<1x16x16xf32>
    %243 = arith.addf %239, %242 : vector<1x16x16xf32>
    %c5 = arith.constant 5 : index
    %244 = memref.load %arg1[%c5] : memref<294xf32, #tpu.memory_space<smem>>
    %c54 = arith.constant 54 : index
    %245 = memref.load %arg1[%c54] : memref<294xf32, #tpu.memory_space<smem>>
    %246 = vector.extract_strided_slice %192 {offsets = [0, 0, 5], sizes = [1, 16, 16], strides = [1, 1, 1]} : vector<1x16x22xf32> to vector<1x16x16xf32>
    %247 = vector.broadcast %244 : f32 to vector<1x16x16xf32>
    %248 = arith.mulf %247, %246 : vector<1x16x16xf32>
    %249 = arith.addf %243, %248 : vector<1x16x16xf32>
    %250 = vector.extract_strided_slice %193 {offsets = [0, 0, 5], sizes = [1, 16, 16], strides = [1, 1, 1]} : vector<1x16x22xf32> to vector<1x16x16xf32>
    %251 = vector.broadcast %245 : f32 to vector<1x16x16xf32>
    %252 = arith.mulf %251, %250 : vector<1x16x16xf32>
    %253 = arith.addf %249, %252 : vector<1x16x16xf32>
    %c6 = arith.constant 6 : index
    %254 = memref.load %arg1[%c6] : memref<294xf32, #tpu.memory_space<smem>>
    %c55 = arith.constant 55 : index
    %255 = memref.load %arg1[%c55] : memref<294xf32, #tpu.memory_space<smem>>
    %256 = vector.extract_strided_slice %192 {offsets = [0, 0, 6], sizes = [1, 16, 16], strides = [1, 1, 1]} : vector<1x16x22xf32> to vector<1x16x16xf32>
    %257 = vector.broadcast %254 : f32 to vector<1x16x16xf32>
    %258 = arith.mulf %257, %256 : vector<1x16x16xf32>
    %259 = arith.addf %253, %258 : vector<1x16x16xf32>
    %260 = vector.extract_strided_slice %193 {offsets = [0, 0, 6], sizes = [1, 16, 16], strides = [1, 1, 1]} : vector<1x16x22xf32> to vector<1x16x16xf32>
    %261 = vector.broadcast %255 : f32 to vector<1x16x16xf32>
    %262 = arith.mulf %261, %260 : vector<1x16x16xf32>
    %263 = arith.addf %259, %262 : vector<1x16x16xf32>
    %264 = vector.extract_strided_slice %188 {offsets = [0, 1, 0], sizes = [1, 16, 22], strides = [1, 1, 1]} : vector<1x22x22xf32> to vector<1x16x22xf32>
    %265 = vector.extract_strided_slice %190 {offsets = [0, 1, 0], sizes = [1, 16, 22], strides = [1, 1, 1]} : vector<1x22x22xf32> to vector<1x16x22xf32>
    %c7 = arith.constant 7 : index
    %266 = memref.load %arg1[%c7] : memref<294xf32, #tpu.memory_space<smem>>
    %c56 = arith.constant 56 : index
    %267 = memref.load %arg1[%c56] : memref<294xf32, #tpu.memory_space<smem>>
    %268 = vector.extract_strided_slice %264 {offsets = [0, 0, 0], sizes = [1, 16, 16], strides = [1, 1, 1]} : vector<1x16x22xf32> to vector<1x16x16xf32>
    %269 = vector.broadcast %266 : f32 to vector<1x16x16xf32>
    %270 = arith.mulf %269, %268 : vector<1x16x16xf32>
    %271 = arith.addf %263, %270 : vector<1x16x16xf32>
    %272 = vector.extract_strided_slice %265 {offsets = [0, 0, 0], sizes = [1, 16, 16], strides = [1, 1, 1]} : vector<1x16x22xf32> to vector<1x16x16xf32>
    %273 = vector.broadcast %267 : f32 to vector<1x16x16xf32>
    %274 = arith.mulf %273, %272 : vector<1x16x16xf32>
    %275 = arith.addf %271, %274 : vector<1x16x16xf32>
    %c8 = arith.constant 8 : index
    %276 = memref.load %arg1[%c8] : memref<294xf32, #tpu.memory_space<smem>>
    %c57 = arith.constant 57 : index
    %277 = memref.load %arg1[%c57] : memref<294xf32, #tpu.memory_space<smem>>
    %278 = vector.extract_strided_slice %264 {offsets = [0, 0, 1], sizes = [1, 16, 16], strides = [1, 1, 1]} : vector<1x16x22xf32> to vector<1x16x16xf32>
    %279 = vector.broadcast %276 : f32 to vector<1x16x16xf32>
    %280 = arith.mulf %279, %278 : vector<1x16x16xf32>
    %281 = arith.addf %275, %280 : vector<1x16x16xf32>
    %282 = vector.extract_strided_slice %265 {offsets = [0, 0, 1], sizes = [1, 16, 16], strides = [1, 1, 1]} : vector<1x16x22xf32> to vector<1x16x16xf32>
    %283 = vector.broadcast %277 : f32 to vector<1x16x16xf32>
    %284 = arith.mulf %283, %282 : vector<1x16x16xf32>
    %285 = arith.addf %281, %284 : vector<1x16x16xf32>
    %c9 = arith.constant 9 : index
    %286 = memref.load %arg1[%c9] : memref<294xf32, #tpu.memory_space<smem>>
    %c58 = arith.constant 58 : index
    %287 = memref.load %arg1[%c58] : memref<294xf32, #tpu.memory_space<smem>>
    %288 = vector.extract_strided_slice %264 {offsets = [0, 0, 2], sizes = [1, 16, 16], strides = [1, 1, 1]} : vector<1x16x22xf32> to vector<1x16x16xf32>
    %289 = vector.broadcast %286 : f32 to vector<1x16x16xf32>
    %290 = arith.mulf %289, %288 : vector<1x16x16xf32>
    %291 = arith.addf %285, %290 : vector<1x16x16xf32>
    %292 = vector.extract_strided_slice %265 {offsets = [0, 0, 2], sizes = [1, 16, 16], strides = [1, 1, 1]} : vector<1x16x22xf32> to vector<1x16x16xf32>
    %293 = vector.broadcast %287 : f32 to vector<1x16x16xf32>
    %294 = arith.mulf %293, %292 : vector<1x16x16xf32>
    %295 = arith.addf %291, %294 : vector<1x16x16xf32>
    %c10 = arith.constant 10 : index
    %296 = memref.load %arg1[%c10] : memref<294xf32, #tpu.memory_space<smem>>
    %c59 = arith.constant 59 : index
    %297 = memref.load %arg1[%c59] : memref<294xf32, #tpu.memory_space<smem>>
    %298 = vector.extract_strided_slice %264 {offsets = [0, 0, 3], sizes = [1, 16, 16], strides = [1, 1, 1]} : vector<1x16x22xf32> to vector<1x16x16xf32>
    %299 = vector.broadcast %296 : f32 to vector<1x16x16xf32>
    %300 = arith.mulf %299, %298 : vector<1x16x16xf32>
    %301 = arith.addf %295, %300 : vector<1x16x16xf32>
    %302 = vector.extract_strided_slice %265 {offsets = [0, 0, 3], sizes = [1, 16, 16], strides = [1, 1, 1]} : vector<1x16x22xf32> to vector<1x16x16xf32>
    %303 = vector.broadcast %297 : f32 to vector<1x16x16xf32>
    %304 = arith.mulf %303, %302 : vector<1x16x16xf32>
    %305 = arith.addf %301, %304 : vector<1x16x16xf32>
    %c11 = arith.constant 11 : index
    %306 = memref.load %arg1[%c11] : memref<294xf32, #tpu.memory_space<smem>>
    %c60 = arith.constant 60 : index
    %307 = memref.load %arg1[%c60] : memref<294xf32, #tpu.memory_space<smem>>
    %308 = vector.extract_strided_slice %264 {offsets = [0, 0, 4], sizes = [1, 16, 16], strides = [1, 1, 1]} : vector<1x16x22xf32> to vector<1x16x16xf32>
    %309 = vector.broadcast %306 : f32 to vector<1x16x16xf32>
    %310 = arith.mulf %309, %308 : vector<1x16x16xf32>
    %311 = arith.addf %305, %310 : vector<1x16x16xf32>
    %312 = vector.extract_strided_slice %265 {offsets = [0, 0, 4], sizes = [1, 16, 16], strides = [1, 1, 1]} : vector<1x16x22xf32> to vector<1x16x16xf32>
    %313 = vector.broadcast %307 : f32 to vector<1x16x16xf32>
    %314 = arith.mulf %313, %312 : vector<1x16x16xf32>
    %315 = arith.addf %311, %314 : vector<1x16x16xf32>
    %c12 = arith.constant 12 : index
    %316 = memref.load %arg1[%c12] : memref<294xf32, #tpu.memory_space<smem>>
    %c61 = arith.constant 61 : index
    %317 = memref.load %arg1[%c61] : memref<294xf32, #tpu.memory_space<smem>>
    %318 = vector.extract_strided_slice %264 {offsets = [0, 0, 5], sizes = [1, 16, 16], strides = [1, 1, 1]} : vector<1x16x22xf32> to vector<1x16x16xf32>
    %319 = vector.broadcast %316 : f32 to vector<1x16x16xf32>
    %320 = arith.mulf %319, %318 : vector<1x16x16xf32>
    %321 = arith.addf %315, %320 : vector<1x16x16xf32>
    %322 = vector.extract_strided_slice %265 {offsets = [0, 0, 5], sizes = [1, 16, 16], strides = [1, 1, 1]} : vector<1x16x22xf32> to vector<1x16x16xf32>
    %323 = vector.broadcast %317 : f32 to vector<1x16x16xf32>
    %324 = arith.mulf %323, %322 : vector<1x16x16xf32>
    %325 = arith.addf %321, %324 : vector<1x16x16xf32>
    %c13 = arith.constant 13 : index
    %326 = memref.load %arg1[%c13] : memref<294xf32, #tpu.memory_space<smem>>
    %c62 = arith.constant 62 : index
    %327 = memref.load %arg1[%c62] : memref<294xf32, #tpu.memory_space<smem>>
    %328 = vector.extract_strided_slice %264 {offsets = [0, 0, 6], sizes = [1, 16, 16], strides = [1, 1, 1]} : vector<1x16x22xf32> to vector<1x16x16xf32>
    %329 = vector.broadcast %326 : f32 to vector<1x16x16xf32>
    %330 = arith.mulf %329, %328 : vector<1x16x16xf32>
    %331 = arith.addf %325, %330 : vector<1x16x16xf32>
    %332 = vector.extract_strided_slice %265 {offsets = [0, 0, 6], sizes = [1, 16, 16], strides = [1, 1, 1]} : vector<1x16x22xf32> to vector<1x16x16xf32>
    %333 = vector.broadcast %327 : f32 to vector<1x16x16xf32>
    %334 = arith.mulf %333, %332 : vector<1x16x16xf32>
    %335 = arith.addf %331, %334 : vector<1x16x16xf32>
    %336 = vector.extract_strided_slice %188 {offsets = [0, 2, 0], sizes = [1, 16, 22], strides = [1, 1, 1]} : vector<1x22x22xf32> to vector<1x16x22xf32>
    %337 = vector.extract_strided_slice %190 {offsets = [0, 2, 0], sizes = [1, 16, 22], strides = [1, 1, 1]} : vector<1x22x22xf32> to vector<1x16x22xf32>
    %c14 = arith.constant 14 : index
    %338 = memref.load %arg1[%c14] : memref<294xf32, #tpu.memory_space<smem>>
    %c63 = arith.constant 63 : index
    %339 = memref.load %arg1[%c63] : memref<294xf32, #tpu.memory_space<smem>>
    %340 = vector.extract_strided_slice %336 {offsets = [0, 0, 0], sizes = [1, 16, 16], strides = [1, 1, 1]} : vector<1x16x22xf32> to vector<1x16x16xf32>
    %341 = vector.broadcast %338 : f32 to vector<1x16x16xf32>
    %342 = arith.mulf %341, %340 : vector<1x16x16xf32>
    %343 = arith.addf %335, %342 : vector<1x16x16xf32>
    %344 = vector.extract_strided_slice %337 {offsets = [0, 0, 0], sizes = [1, 16, 16], strides = [1, 1, 1]} : vector<1x16x22xf32> to vector<1x16x16xf32>
    %345 = vector.broadcast %339 : f32 to vector<1x16x16xf32>
    %346 = arith.mulf %345, %344 : vector<1x16x16xf32>
    %347 = arith.addf %343, %346 : vector<1x16x16xf32>
    %c15 = arith.constant 15 : index
    %348 = memref.load %arg1[%c15] : memref<294xf32, #tpu.memory_space<smem>>
    %c64 = arith.constant 64 : index
    %349 = memref.load %arg1[%c64] : memref<294xf32, #tpu.memory_space<smem>>
    %350 = vector.extract_strided_slice %336 {offsets = [0, 0, 1], sizes = [1, 16, 16], strides = [1, 1, 1]} : vector<1x16x22xf32> to vector<1x16x16xf32>
    %351 = vector.broadcast %348 : f32 to vector<1x16x16xf32>
    %352 = arith.mulf %351, %350 : vector<1x16x16xf32>
    %353 = arith.addf %347, %352 : vector<1x16x16xf32>
    %354 = vector.extract_strided_slice %337 {offsets = [0, 0, 1], sizes = [1, 16, 16], strides = [1, 1, 1]} : vector<1x16x22xf32> to vector<1x16x16xf32>
    %355 = vector.broadcast %349 : f32 to vector<1x16x16xf32>
    %356 = arith.mulf %355, %354 : vector<1x16x16xf32>
    %357 = arith.addf %353, %356 : vector<1x16x16xf32>
    %c16 = arith.constant 16 : index
    %358 = memref.load %arg1[%c16] : memref<294xf32, #tpu.memory_space<smem>>
    %c65 = arith.constant 65 : index
    %359 = memref.load %arg1[%c65] : memref<294xf32, #tpu.memory_space<smem>>
    %360 = vector.extract_strided_slice %336 {offsets = [0, 0, 2], sizes = [1, 16, 16], strides = [1, 1, 1]} : vector<1x16x22xf32> to vector<1x16x16xf32>
    %361 = vector.broadcast %358 : f32 to vector<1x16x16xf32>
    %362 = arith.mulf %361, %360 : vector<1x16x16xf32>
    %363 = arith.addf %357, %362 : vector<1x16x16xf32>
    %364 = vector.extract_strided_slice %337 {offsets = [0, 0, 2], sizes = [1, 16, 16], strides = [1, 1, 1]} : vector<1x16x22xf32> to vector<1x16x16xf32>
    %365 = vector.broadcast %359 : f32 to vector<1x16x16xf32>
    %366 = arith.mulf %365, %364 : vector<1x16x16xf32>
    %367 = arith.addf %363, %366 : vector<1x16x16xf32>
    %c17 = arith.constant 17 : index
    %368 = memref.load %arg1[%c17] : memref<294xf32, #tpu.memory_space<smem>>
    %c66 = arith.constant 66 : index
    %369 = memref.load %arg1[%c66] : memref<294xf32, #tpu.memory_space<smem>>
    %370 = vector.extract_strided_slice %336 {offsets = [0, 0, 3], sizes = [1, 16, 16], strides = [1, 1, 1]} : vector<1x16x22xf32> to vector<1x16x16xf32>
    %371 = vector.broadcast %368 : f32 to vector<1x16x16xf32>
    %372 = arith.mulf %371, %370 : vector<1x16x16xf32>
    %373 = arith.addf %367, %372 : vector<1x16x16xf32>
    %374 = vector.extract_strided_slice %337 {offsets = [0, 0, 3], sizes = [1, 16, 16], strides = [1, 1, 1]} : vector<1x16x22xf32> to vector<1x16x16xf32>
    %375 = vector.broadcast %369 : f32 to vector<1x16x16xf32>
    %376 = arith.mulf %375, %374 : vector<1x16x16xf32>
    %377 = arith.addf %373, %376 : vector<1x16x16xf32>
    %c18 = arith.constant 18 : index
    %378 = memref.load %arg1[%c18] : memref<294xf32, #tpu.memory_space<smem>>
    %c67 = arith.constant 67 : index
    %379 = memref.load %arg1[%c67] : memref<294xf32, #tpu.memory_space<smem>>
    %380 = vector.extract_strided_slice %336 {offsets = [0, 0, 4], sizes = [1, 16, 16], strides = [1, 1, 1]} : vector<1x16x22xf32> to vector<1x16x16xf32>
    %381 = vector.broadcast %378 : f32 to vector<1x16x16xf32>
    %382 = arith.mulf %381, %380 : vector<1x16x16xf32>
    %383 = arith.addf %377, %382 : vector<1x16x16xf32>
    %384 = vector.extract_strided_slice %337 {offsets = [0, 0, 4], sizes = [1, 16, 16], strides = [1, 1, 1]} : vector<1x16x22xf32> to vector<1x16x16xf32>
    %385 = vector.broadcast %379 : f32 to vector<1x16x16xf32>
    %386 = arith.mulf %385, %384 : vector<1x16x16xf32>
    %387 = arith.addf %383, %386 : vector<1x16x16xf32>
    %c19 = arith.constant 19 : index
    %388 = memref.load %arg1[%c19] : memref<294xf32, #tpu.memory_space<smem>>
    %c68 = arith.constant 68 : index
    %389 = memref.load %arg1[%c68] : memref<294xf32, #tpu.memory_space<smem>>
    %390 = vector.extract_strided_slice %336 {offsets = [0, 0, 5], sizes = [1, 16, 16], strides = [1, 1, 1]} : vector<1x16x22xf32> to vector<1x16x16xf32>
    %391 = vector.broadcast %388 : f32 to vector<1x16x16xf32>
    %392 = arith.mulf %391, %390 : vector<1x16x16xf32>
    %393 = arith.addf %387, %392 : vector<1x16x16xf32>
    %394 = vector.extract_strided_slice %337 {offsets = [0, 0, 5], sizes = [1, 16, 16], strides = [1, 1, 1]} : vector<1x16x22xf32> to vector<1x16x16xf32>
    %395 = vector.broadcast %389 : f32 to vector<1x16x16xf32>
    %396 = arith.mulf %395, %394 : vector<1x16x16xf32>
    %397 = arith.addf %393, %396 : vector<1x16x16xf32>
    %c20 = arith.constant 20 : index
    %398 = memref.load %arg1[%c20] : memref<294xf32, #tpu.memory_space<smem>>
    %c69 = arith.constant 69 : index
    %399 = memref.load %arg1[%c69] : memref<294xf32, #tpu.memory_space<smem>>
    %400 = vector.extract_strided_slice %336 {offsets = [0, 0, 6], sizes = [1, 16, 16], strides = [1, 1, 1]} : vector<1x16x22xf32> to vector<1x16x16xf32>
    %401 = vector.broadcast %398 : f32 to vector<1x16x16xf32>
    %402 = arith.mulf %401, %400 : vector<1x16x16xf32>
    %403 = arith.addf %397, %402 : vector<1x16x16xf32>
    %404 = vector.extract_strided_slice %337 {offsets = [0, 0, 6], sizes = [1, 16, 16], strides = [1, 1, 1]} : vector<1x16x22xf32> to vector<1x16x16xf32>
    %405 = vector.broadcast %399 : f32 to vector<1x16x16xf32>
    %406 = arith.mulf %405, %404 : vector<1x16x16xf32>
    %407 = arith.addf %403, %406 : vector<1x16x16xf32>
    %408 = vector.extract_strided_slice %188 {offsets = [0, 3, 0], sizes = [1, 16, 22], strides = [1, 1, 1]} : vector<1x22x22xf32> to vector<1x16x22xf32>
    %409 = vector.extract_strided_slice %190 {offsets = [0, 3, 0], sizes = [1, 16, 22], strides = [1, 1, 1]} : vector<1x22x22xf32> to vector<1x16x22xf32>
    %c21 = arith.constant 21 : index
    %410 = memref.load %arg1[%c21] : memref<294xf32, #tpu.memory_space<smem>>
    %c70 = arith.constant 70 : index
    %411 = memref.load %arg1[%c70] : memref<294xf32, #tpu.memory_space<smem>>
    %412 = vector.extract_strided_slice %408 {offsets = [0, 0, 0], sizes = [1, 16, 16], strides = [1, 1, 1]} : vector<1x16x22xf32> to vector<1x16x16xf32>
    %413 = vector.broadcast %410 : f32 to vector<1x16x16xf32>
    %414 = arith.mulf %413, %412 : vector<1x16x16xf32>
    %415 = arith.addf %407, %414 : vector<1x16x16xf32>
    %416 = vector.extract_strided_slice %409 {offsets = [0, 0, 0], sizes = [1, 16, 16], strides = [1, 1, 1]} : vector<1x16x22xf32> to vector<1x16x16xf32>
    %417 = vector.broadcast %411 : f32 to vector<1x16x16xf32>
    %418 = arith.mulf %417, %416 : vector<1x16x16xf32>
    %419 = arith.addf %415, %418 : vector<1x16x16xf32>
    %c22 = arith.constant 22 : index
    %420 = memref.load %arg1[%c22] : memref<294xf32, #tpu.memory_space<smem>>
    %c71 = arith.constant 71 : index
    %421 = memref.load %arg1[%c71] : memref<294xf32, #tpu.memory_space<smem>>
    %422 = vector.extract_strided_slice %408 {offsets = [0, 0, 1], sizes = [1, 16, 16], strides = [1, 1, 1]} : vector<1x16x22xf32> to vector<1x16x16xf32>
    %423 = vector.broadcast %420 : f32 to vector<1x16x16xf32>
    %424 = arith.mulf %423, %422 : vector<1x16x16xf32>
    %425 = arith.addf %419, %424 : vector<1x16x16xf32>
    %426 = vector.extract_strided_slice %409 {offsets = [0, 0, 1], sizes = [1, 16, 16], strides = [1, 1, 1]} : vector<1x16x22xf32> to vector<1x16x16xf32>
    %427 = vector.broadcast %421 : f32 to vector<1x16x16xf32>
    %428 = arith.mulf %427, %426 : vector<1x16x16xf32>
    %429 = arith.addf %425, %428 : vector<1x16x16xf32>
    %c23 = arith.constant 23 : index
    %430 = memref.load %arg1[%c23] : memref<294xf32, #tpu.memory_space<smem>>
    %c72 = arith.constant 72 : index
    %431 = memref.load %arg1[%c72] : memref<294xf32, #tpu.memory_space<smem>>
    %432 = vector.extract_strided_slice %408 {offsets = [0, 0, 2], sizes = [1, 16, 16], strides = [1, 1, 1]} : vector<1x16x22xf32> to vector<1x16x16xf32>
    %433 = vector.broadcast %430 : f32 to vector<1x16x16xf32>
    %434 = arith.mulf %433, %432 : vector<1x16x16xf32>
    %435 = arith.addf %429, %434 : vector<1x16x16xf32>
    %436 = vector.extract_strided_slice %409 {offsets = [0, 0, 2], sizes = [1, 16, 16], strides = [1, 1, 1]} : vector<1x16x22xf32> to vector<1x16x16xf32>
    %437 = vector.broadcast %431 : f32 to vector<1x16x16xf32>
    %438 = arith.mulf %437, %436 : vector<1x16x16xf32>
    %439 = arith.addf %435, %438 : vector<1x16x16xf32>
    %c24 = arith.constant 24 : index
    %440 = memref.load %arg1[%c24] : memref<294xf32, #tpu.memory_space<smem>>
    %c73 = arith.constant 73 : index
    %441 = memref.load %arg1[%c73] : memref<294xf32, #tpu.memory_space<smem>>
    %442 = vector.extract_strided_slice %408 {offsets = [0, 0, 3], sizes = [1, 16, 16], strides = [1, 1, 1]} : vector<1x16x22xf32> to vector<1x16x16xf32>
    %443 = vector.broadcast %440 : f32 to vector<1x16x16xf32>
    %444 = arith.mulf %443, %442 : vector<1x16x16xf32>
    %445 = arith.addf %439, %444 : vector<1x16x16xf32>
    %446 = vector.extract_strided_slice %409 {offsets = [0, 0, 3], sizes = [1, 16, 16], strides = [1, 1, 1]} : vector<1x16x22xf32> to vector<1x16x16xf32>
    %447 = vector.broadcast %441 : f32 to vector<1x16x16xf32>
    %448 = arith.mulf %447, %446 : vector<1x16x16xf32>
    %449 = arith.addf %445, %448 : vector<1x16x16xf32>
    %c25 = arith.constant 25 : index
    %450 = memref.load %arg1[%c25] : memref<294xf32, #tpu.memory_space<smem>>
    %c74 = arith.constant 74 : index
    %451 = memref.load %arg1[%c74] : memref<294xf32, #tpu.memory_space<smem>>
    %452 = vector.extract_strided_slice %408 {offsets = [0, 0, 4], sizes = [1, 16, 16], strides = [1, 1, 1]} : vector<1x16x22xf32> to vector<1x16x16xf32>
    %453 = vector.broadcast %450 : f32 to vector<1x16x16xf32>
    %454 = arith.mulf %453, %452 : vector<1x16x16xf32>
    %455 = arith.addf %449, %454 : vector<1x16x16xf32>
    %456 = vector.extract_strided_slice %409 {offsets = [0, 0, 4], sizes = [1, 16, 16], strides = [1, 1, 1]} : vector<1x16x22xf32> to vector<1x16x16xf32>
    %457 = vector.broadcast %451 : f32 to vector<1x16x16xf32>
    %458 = arith.mulf %457, %456 : vector<1x16x16xf32>
    %459 = arith.addf %455, %458 : vector<1x16x16xf32>
    %c26 = arith.constant 26 : index
    %460 = memref.load %arg1[%c26] : memref<294xf32, #tpu.memory_space<smem>>
    %c75 = arith.constant 75 : index
    %461 = memref.load %arg1[%c75] : memref<294xf32, #tpu.memory_space<smem>>
    %462 = vector.extract_strided_slice %408 {offsets = [0, 0, 5], sizes = [1, 16, 16], strides = [1, 1, 1]} : vector<1x16x22xf32> to vector<1x16x16xf32>
    %463 = vector.broadcast %460 : f32 to vector<1x16x16xf32>
    %464 = arith.mulf %463, %462 : vector<1x16x16xf32>
    %465 = arith.addf %459, %464 : vector<1x16x16xf32>
    %466 = vector.extract_strided_slice %409 {offsets = [0, 0, 5], sizes = [1, 16, 16], strides = [1, 1, 1]} : vector<1x16x22xf32> to vector<1x16x16xf32>
    %467 = vector.broadcast %461 : f32 to vector<1x16x16xf32>
    %468 = arith.mulf %467, %466 : vector<1x16x16xf32>
    %469 = arith.addf %465, %468 : vector<1x16x16xf32>
    %c27 = arith.constant 27 : index
    %470 = memref.load %arg1[%c27] : memref<294xf32, #tpu.memory_space<smem>>
    %c76 = arith.constant 76 : index
    %471 = memref.load %arg1[%c76] : memref<294xf32, #tpu.memory_space<smem>>
    %472 = vector.extract_strided_slice %408 {offsets = [0, 0, 6], sizes = [1, 16, 16], strides = [1, 1, 1]} : vector<1x16x22xf32> to vector<1x16x16xf32>
    %473 = vector.broadcast %470 : f32 to vector<1x16x16xf32>
    %474 = arith.mulf %473, %472 : vector<1x16x16xf32>
    %475 = arith.addf %469, %474 : vector<1x16x16xf32>
    %476 = vector.extract_strided_slice %409 {offsets = [0, 0, 6], sizes = [1, 16, 16], strides = [1, 1, 1]} : vector<1x16x22xf32> to vector<1x16x16xf32>
    %477 = vector.broadcast %471 : f32 to vector<1x16x16xf32>
    %478 = arith.mulf %477, %476 : vector<1x16x16xf32>
    %479 = arith.addf %475, %478 : vector<1x16x16xf32>
    %480 = vector.extract_strided_slice %188 {offsets = [0, 4, 0], sizes = [1, 16, 22], strides = [1, 1, 1]} : vector<1x22x22xf32> to vector<1x16x22xf32>
    %481 = vector.extract_strided_slice %190 {offsets = [0, 4, 0], sizes = [1, 16, 22], strides = [1, 1, 1]} : vector<1x22x22xf32> to vector<1x16x22xf32>
    %c28 = arith.constant 28 : index
    %482 = memref.load %arg1[%c28] : memref<294xf32, #tpu.memory_space<smem>>
    %c77 = arith.constant 77 : index
    %483 = memref.load %arg1[%c77] : memref<294xf32, #tpu.memory_space<smem>>
    %484 = vector.extract_strided_slice %480 {offsets = [0, 0, 0], sizes = [1, 16, 16], strides = [1, 1, 1]} : vector<1x16x22xf32> to vector<1x16x16xf32>
    %485 = vector.broadcast %482 : f32 to vector<1x16x16xf32>
    %486 = arith.mulf %485, %484 : vector<1x16x16xf32>
    %487 = arith.addf %479, %486 : vector<1x16x16xf32>
    %488 = vector.extract_strided_slice %481 {offsets = [0, 0, 0], sizes = [1, 16, 16], strides = [1, 1, 1]} : vector<1x16x22xf32> to vector<1x16x16xf32>
    %489 = vector.broadcast %483 : f32 to vector<1x16x16xf32>
    %490 = arith.mulf %489, %488 : vector<1x16x16xf32>
    %491 = arith.addf %487, %490 : vector<1x16x16xf32>
    %c29 = arith.constant 29 : index
    %492 = memref.load %arg1[%c29] : memref<294xf32, #tpu.memory_space<smem>>
    %c78 = arith.constant 78 : index
    %493 = memref.load %arg1[%c78] : memref<294xf32, #tpu.memory_space<smem>>
    %494 = vector.extract_strided_slice %480 {offsets = [0, 0, 1], sizes = [1, 16, 16], strides = [1, 1, 1]} : vector<1x16x22xf32> to vector<1x16x16xf32>
    %495 = vector.broadcast %492 : f32 to vector<1x16x16xf32>
    %496 = arith.mulf %495, %494 : vector<1x16x16xf32>
    %497 = arith.addf %491, %496 : vector<1x16x16xf32>
    %498 = vector.extract_strided_slice %481 {offsets = [0, 0, 1], sizes = [1, 16, 16], strides = [1, 1, 1]} : vector<1x16x22xf32> to vector<1x16x16xf32>
    %499 = vector.broadcast %493 : f32 to vector<1x16x16xf32>
    %500 = arith.mulf %499, %498 : vector<1x16x16xf32>
    %501 = arith.addf %497, %500 : vector<1x16x16xf32>
    %c30 = arith.constant 30 : index
    %502 = memref.load %arg1[%c30] : memref<294xf32, #tpu.memory_space<smem>>
    %c79 = arith.constant 79 : index
    %503 = memref.load %arg1[%c79] : memref<294xf32, #tpu.memory_space<smem>>
    %504 = vector.extract_strided_slice %480 {offsets = [0, 0, 2], sizes = [1, 16, 16], strides = [1, 1, 1]} : vector<1x16x22xf32> to vector<1x16x16xf32>
    %505 = vector.broadcast %502 : f32 to vector<1x16x16xf32>
    %506 = arith.mulf %505, %504 : vector<1x16x16xf32>
    %507 = arith.addf %501, %506 : vector<1x16x16xf32>
    %508 = vector.extract_strided_slice %481 {offsets = [0, 0, 2], sizes = [1, 16, 16], strides = [1, 1, 1]} : vector<1x16x22xf32> to vector<1x16x16xf32>
    %509 = vector.broadcast %503 : f32 to vector<1x16x16xf32>
    %510 = arith.mulf %509, %508 : vector<1x16x16xf32>
    %511 = arith.addf %507, %510 : vector<1x16x16xf32>
    %c31 = arith.constant 31 : index
    %512 = memref.load %arg1[%c31] : memref<294xf32, #tpu.memory_space<smem>>
    %c80 = arith.constant 80 : index
    %513 = memref.load %arg1[%c80] : memref<294xf32, #tpu.memory_space<smem>>
    %514 = vector.extract_strided_slice %480 {offsets = [0, 0, 3], sizes = [1, 16, 16], strides = [1, 1, 1]} : vector<1x16x22xf32> to vector<1x16x16xf32>
    %515 = vector.broadcast %512 : f32 to vector<1x16x16xf32>
    %516 = arith.mulf %515, %514 : vector<1x16x16xf32>
    %517 = arith.addf %511, %516 : vector<1x16x16xf32>
    %518 = vector.extract_strided_slice %481 {offsets = [0, 0, 3], sizes = [1, 16, 16], strides = [1, 1, 1]} : vector<1x16x22xf32> to vector<1x16x16xf32>
    %519 = vector.broadcast %513 : f32 to vector<1x16x16xf32>
    %520 = arith.mulf %519, %518 : vector<1x16x16xf32>
    %521 = arith.addf %517, %520 : vector<1x16x16xf32>
    %c32 = arith.constant 32 : index
    %522 = memref.load %arg1[%c32] : memref<294xf32, #tpu.memory_space<smem>>
    %c81 = arith.constant 81 : index
    %523 = memref.load %arg1[%c81] : memref<294xf32, #tpu.memory_space<smem>>
    %524 = vector.extract_strided_slice %480 {offsets = [0, 0, 4], sizes = [1, 16, 16], strides = [1, 1, 1]} : vector<1x16x22xf32> to vector<1x16x16xf32>
    %525 = vector.broadcast %522 : f32 to vector<1x16x16xf32>
    %526 = arith.mulf %525, %524 : vector<1x16x16xf32>
    %527 = arith.addf %521, %526 : vector<1x16x16xf32>
    %528 = vector.extract_strided_slice %481 {offsets = [0, 0, 4], sizes = [1, 16, 16], strides = [1, 1, 1]} : vector<1x16x22xf32> to vector<1x16x16xf32>
    %529 = vector.broadcast %523 : f32 to vector<1x16x16xf32>
    %530 = arith.mulf %529, %528 : vector<1x16x16xf32>
    %531 = arith.addf %527, %530 : vector<1x16x16xf32>
    %c33 = arith.constant 33 : index
    %532 = memref.load %arg1[%c33] : memref<294xf32, #tpu.memory_space<smem>>
    %c82 = arith.constant 82 : index
    %533 = memref.load %arg1[%c82] : memref<294xf32, #tpu.memory_space<smem>>
    %534 = vector.extract_strided_slice %480 {offsets = [0, 0, 5], sizes = [1, 16, 16], strides = [1, 1, 1]} : vector<1x16x22xf32> to vector<1x16x16xf32>
    %535 = vector.broadcast %532 : f32 to vector<1x16x16xf32>
    %536 = arith.mulf %535, %534 : vector<1x16x16xf32>
    %537 = arith.addf %531, %536 : vector<1x16x16xf32>
    %538 = vector.extract_strided_slice %481 {offsets = [0, 0, 5], sizes = [1, 16, 16], strides = [1, 1, 1]} : vector<1x16x22xf32> to vector<1x16x16xf32>
    %539 = vector.broadcast %533 : f32 to vector<1x16x16xf32>
    %540 = arith.mulf %539, %538 : vector<1x16x16xf32>
    %541 = arith.addf %537, %540 : vector<1x16x16xf32>
    %c34 = arith.constant 34 : index
    %542 = memref.load %arg1[%c34] : memref<294xf32, #tpu.memory_space<smem>>
    %c83 = arith.constant 83 : index
    %543 = memref.load %arg1[%c83] : memref<294xf32, #tpu.memory_space<smem>>
    %544 = vector.extract_strided_slice %480 {offsets = [0, 0, 6], sizes = [1, 16, 16], strides = [1, 1, 1]} : vector<1x16x22xf32> to vector<1x16x16xf32>
    %545 = vector.broadcast %542 : f32 to vector<1x16x16xf32>
    %546 = arith.mulf %545, %544 : vector<1x16x16xf32>
    %547 = arith.addf %541, %546 : vector<1x16x16xf32>
    %548 = vector.extract_strided_slice %481 {offsets = [0, 0, 6], sizes = [1, 16, 16], strides = [1, 1, 1]} : vector<1x16x22xf32> to vector<1x16x16xf32>
    %549 = vector.broadcast %543 : f32 to vector<1x16x16xf32>
    %550 = arith.mulf %549, %548 : vector<1x16x16xf32>
    %551 = arith.addf %547, %550 : vector<1x16x16xf32>
    %552 = vector.extract_strided_slice %188 {offsets = [0, 5, 0], sizes = [1, 16, 22], strides = [1, 1, 1]} : vector<1x22x22xf32> to vector<1x16x22xf32>
    %553 = vector.extract_strided_slice %190 {offsets = [0, 5, 0], sizes = [1, 16, 22], strides = [1, 1, 1]} : vector<1x22x22xf32> to vector<1x16x22xf32>
    %c35 = arith.constant 35 : index
    %554 = memref.load %arg1[%c35] : memref<294xf32, #tpu.memory_space<smem>>
    %c84 = arith.constant 84 : index
    %555 = memref.load %arg1[%c84] : memref<294xf32, #tpu.memory_space<smem>>
    %556 = vector.extract_strided_slice %552 {offsets = [0, 0, 0], sizes = [1, 16, 16], strides = [1, 1, 1]} : vector<1x16x22xf32> to vector<1x16x16xf32>
    %557 = vector.broadcast %554 : f32 to vector<1x16x16xf32>
    %558 = arith.mulf %557, %556 : vector<1x16x16xf32>
    %559 = arith.addf %551, %558 : vector<1x16x16xf32>
    %560 = vector.extract_strided_slice %553 {offsets = [0, 0, 0], sizes = [1, 16, 16], strides = [1, 1, 1]} : vector<1x16x22xf32> to vector<1x16x16xf32>
    %561 = vector.broadcast %555 : f32 to vector<1x16x16xf32>
    %562 = arith.mulf %561, %560 : vector<1x16x16xf32>
    %563 = arith.addf %559, %562 : vector<1x16x16xf32>
    %c36 = arith.constant 36 : index
    %564 = memref.load %arg1[%c36] : memref<294xf32, #tpu.memory_space<smem>>
    %c85 = arith.constant 85 : index
    %565 = memref.load %arg1[%c85] : memref<294xf32, #tpu.memory_space<smem>>
    %566 = vector.extract_strided_slice %552 {offsets = [0, 0, 1], sizes = [1, 16, 16], strides = [1, 1, 1]} : vector<1x16x22xf32> to vector<1x16x16xf32>
    %567 = vector.broadcast %564 : f32 to vector<1x16x16xf32>
    %568 = arith.mulf %567, %566 : vector<1x16x16xf32>
    %569 = arith.addf %563, %568 : vector<1x16x16xf32>
    %570 = vector.extract_strided_slice %553 {offsets = [0, 0, 1], sizes = [1, 16, 16], strides = [1, 1, 1]} : vector<1x16x22xf32> to vector<1x16x16xf32>
    %571 = vector.broadcast %565 : f32 to vector<1x16x16xf32>
    %572 = arith.mulf %571, %570 : vector<1x16x16xf32>
    %573 = arith.addf %569, %572 : vector<1x16x16xf32>
    %c37 = arith.constant 37 : index
    %574 = memref.load %arg1[%c37] : memref<294xf32, #tpu.memory_space<smem>>
    %c86 = arith.constant 86 : index
    %575 = memref.load %arg1[%c86] : memref<294xf32, #tpu.memory_space<smem>>
    %576 = vector.extract_strided_slice %552 {offsets = [0, 0, 2], sizes = [1, 16, 16], strides = [1, 1, 1]} : vector<1x16x22xf32> to vector<1x16x16xf32>
    %577 = vector.broadcast %574 : f32 to vector<1x16x16xf32>
    %578 = arith.mulf %577, %576 : vector<1x16x16xf32>
    %579 = arith.addf %573, %578 : vector<1x16x16xf32>
    %580 = vector.extract_strided_slice %553 {offsets = [0, 0, 2], sizes = [1, 16, 16], strides = [1, 1, 1]} : vector<1x16x22xf32> to vector<1x16x16xf32>
    %581 = vector.broadcast %575 : f32 to vector<1x16x16xf32>
    %582 = arith.mulf %581, %580 : vector<1x16x16xf32>
    %583 = arith.addf %579, %582 : vector<1x16x16xf32>
    %c38 = arith.constant 38 : index
    %584 = memref.load %arg1[%c38] : memref<294xf32, #tpu.memory_space<smem>>
    %c87 = arith.constant 87 : index
    %585 = memref.load %arg1[%c87] : memref<294xf32, #tpu.memory_space<smem>>
    %586 = vector.extract_strided_slice %552 {offsets = [0, 0, 3], sizes = [1, 16, 16], strides = [1, 1, 1]} : vector<1x16x22xf32> to vector<1x16x16xf32>
    %587 = vector.broadcast %584 : f32 to vector<1x16x16xf32>
    %588 = arith.mulf %587, %586 : vector<1x16x16xf32>
    %589 = arith.addf %583, %588 : vector<1x16x16xf32>
    %590 = vector.extract_strided_slice %553 {offsets = [0, 0, 3], sizes = [1, 16, 16], strides = [1, 1, 1]} : vector<1x16x22xf32> to vector<1x16x16xf32>
    %591 = vector.broadcast %585 : f32 to vector<1x16x16xf32>
    %592 = arith.mulf %591, %590 : vector<1x16x16xf32>
    %593 = arith.addf %589, %592 : vector<1x16x16xf32>
    %c39 = arith.constant 39 : index
    %594 = memref.load %arg1[%c39] : memref<294xf32, #tpu.memory_space<smem>>
    %c88 = arith.constant 88 : index
    %595 = memref.load %arg1[%c88] : memref<294xf32, #tpu.memory_space<smem>>
    %596 = vector.extract_strided_slice %552 {offsets = [0, 0, 4], sizes = [1, 16, 16], strides = [1, 1, 1]} : vector<1x16x22xf32> to vector<1x16x16xf32>
    %597 = vector.broadcast %594 : f32 to vector<1x16x16xf32>
    %598 = arith.mulf %597, %596 : vector<1x16x16xf32>
    %599 = arith.addf %593, %598 : vector<1x16x16xf32>
    %600 = vector.extract_strided_slice %553 {offsets = [0, 0, 4], sizes = [1, 16, 16], strides = [1, 1, 1]} : vector<1x16x22xf32> to vector<1x16x16xf32>
    %601 = vector.broadcast %595 : f32 to vector<1x16x16xf32>
    %602 = arith.mulf %601, %600 : vector<1x16x16xf32>
    %603 = arith.addf %599, %602 : vector<1x16x16xf32>
    %c40 = arith.constant 40 : index
    %604 = memref.load %arg1[%c40] : memref<294xf32, #tpu.memory_space<smem>>
    %c89 = arith.constant 89 : index
    %605 = memref.load %arg1[%c89] : memref<294xf32, #tpu.memory_space<smem>>
    %606 = vector.extract_strided_slice %552 {offsets = [0, 0, 5], sizes = [1, 16, 16], strides = [1, 1, 1]} : vector<1x16x22xf32> to vector<1x16x16xf32>
    %607 = vector.broadcast %604 : f32 to vector<1x16x16xf32>
    %608 = arith.mulf %607, %606 : vector<1x16x16xf32>
    %609 = arith.addf %603, %608 : vector<1x16x16xf32>
    %610 = vector.extract_strided_slice %553 {offsets = [0, 0, 5], sizes = [1, 16, 16], strides = [1, 1, 1]} : vector<1x16x22xf32> to vector<1x16x16xf32>
    %611 = vector.broadcast %605 : f32 to vector<1x16x16xf32>
    %612 = arith.mulf %611, %610 : vector<1x16x16xf32>
    %613 = arith.addf %609, %612 : vector<1x16x16xf32>
    %c41 = arith.constant 41 : index
    %614 = memref.load %arg1[%c41] : memref<294xf32, #tpu.memory_space<smem>>
    %c90 = arith.constant 90 : index
    %615 = memref.load %arg1[%c90] : memref<294xf32, #tpu.memory_space<smem>>
    %616 = vector.extract_strided_slice %552 {offsets = [0, 0, 6], sizes = [1, 16, 16], strides = [1, 1, 1]} : vector<1x16x22xf32> to vector<1x16x16xf32>
    %617 = vector.broadcast %614 : f32 to vector<1x16x16xf32>
    %618 = arith.mulf %617, %616 : vector<1x16x16xf32>
    %619 = arith.addf %613, %618 : vector<1x16x16xf32>
    %620 = vector.extract_strided_slice %553 {offsets = [0, 0, 6], sizes = [1, 16, 16], strides = [1, 1, 1]} : vector<1x16x22xf32> to vector<1x16x16xf32>
    %621 = vector.broadcast %615 : f32 to vector<1x16x16xf32>
    %622 = arith.mulf %621, %620 : vector<1x16x16xf32>
    %623 = arith.addf %619, %622 : vector<1x16x16xf32>
    %624 = vector.extract_strided_slice %188 {offsets = [0, 6, 0], sizes = [1, 16, 22], strides = [1, 1, 1]} : vector<1x22x22xf32> to vector<1x16x22xf32>
    %625 = vector.extract_strided_slice %190 {offsets = [0, 6, 0], sizes = [1, 16, 22], strides = [1, 1, 1]} : vector<1x22x22xf32> to vector<1x16x22xf32>
    %c42 = arith.constant 42 : index
    %626 = memref.load %arg1[%c42] : memref<294xf32, #tpu.memory_space<smem>>
    %c91 = arith.constant 91 : index
    %627 = memref.load %arg1[%c91] : memref<294xf32, #tpu.memory_space<smem>>
    %628 = vector.extract_strided_slice %624 {offsets = [0, 0, 0], sizes = [1, 16, 16], strides = [1, 1, 1]} : vector<1x16x22xf32> to vector<1x16x16xf32>
    %629 = vector.broadcast %626 : f32 to vector<1x16x16xf32>
    %630 = arith.mulf %629, %628 : vector<1x16x16xf32>
    %631 = arith.addf %623, %630 : vector<1x16x16xf32>
    %632 = vector.extract_strided_slice %625 {offsets = [0, 0, 0], sizes = [1, 16, 16], strides = [1, 1, 1]} : vector<1x16x22xf32> to vector<1x16x16xf32>
    %633 = vector.broadcast %627 : f32 to vector<1x16x16xf32>
    %634 = arith.mulf %633, %632 : vector<1x16x16xf32>
    %635 = arith.addf %631, %634 : vector<1x16x16xf32>
    %c43 = arith.constant 43 : index
    %636 = memref.load %arg1[%c43] : memref<294xf32, #tpu.memory_space<smem>>
    %c92 = arith.constant 92 : index
    %637 = memref.load %arg1[%c92] : memref<294xf32, #tpu.memory_space<smem>>
    %638 = vector.extract_strided_slice %624 {offsets = [0, 0, 1], sizes = [1, 16, 16], strides = [1, 1, 1]} : vector<1x16x22xf32> to vector<1x16x16xf32>
    %639 = vector.broadcast %636 : f32 to vector<1x16x16xf32>
    %640 = arith.mulf %639, %638 : vector<1x16x16xf32>
    %641 = arith.addf %635, %640 : vector<1x16x16xf32>
    %642 = vector.extract_strided_slice %625 {offsets = [0, 0, 1], sizes = [1, 16, 16], strides = [1, 1, 1]} : vector<1x16x22xf32> to vector<1x16x16xf32>
    %643 = vector.broadcast %637 : f32 to vector<1x16x16xf32>
    %644 = arith.mulf %643, %642 : vector<1x16x16xf32>
    %645 = arith.addf %641, %644 : vector<1x16x16xf32>
    %c44 = arith.constant 44 : index
    %646 = memref.load %arg1[%c44] : memref<294xf32, #tpu.memory_space<smem>>
    %c93 = arith.constant 93 : index
    %647 = memref.load %arg1[%c93] : memref<294xf32, #tpu.memory_space<smem>>
    %648 = vector.extract_strided_slice %624 {offsets = [0, 0, 2], sizes = [1, 16, 16], strides = [1, 1, 1]} : vector<1x16x22xf32> to vector<1x16x16xf32>
    %649 = vector.broadcast %646 : f32 to vector<1x16x16xf32>
    %650 = arith.mulf %649, %648 : vector<1x16x16xf32>
    %651 = arith.addf %645, %650 : vector<1x16x16xf32>
    %652 = vector.extract_strided_slice %625 {offsets = [0, 0, 2], sizes = [1, 16, 16], strides = [1, 1, 1]} : vector<1x16x22xf32> to vector<1x16x16xf32>
    %653 = vector.broadcast %647 : f32 to vector<1x16x16xf32>
    %654 = arith.mulf %653, %652 : vector<1x16x16xf32>
    %655 = arith.addf %651, %654 : vector<1x16x16xf32>
    %c45 = arith.constant 45 : index
    %656 = memref.load %arg1[%c45] : memref<294xf32, #tpu.memory_space<smem>>
    %c94 = arith.constant 94 : index
    %657 = memref.load %arg1[%c94] : memref<294xf32, #tpu.memory_space<smem>>
    %658 = vector.extract_strided_slice %624 {offsets = [0, 0, 3], sizes = [1, 16, 16], strides = [1, 1, 1]} : vector<1x16x22xf32> to vector<1x16x16xf32>
    %659 = vector.broadcast %656 : f32 to vector<1x16x16xf32>
    %660 = arith.mulf %659, %658 : vector<1x16x16xf32>
    %661 = arith.addf %655, %660 : vector<1x16x16xf32>
    %662 = vector.extract_strided_slice %625 {offsets = [0, 0, 3], sizes = [1, 16, 16], strides = [1, 1, 1]} : vector<1x16x22xf32> to vector<1x16x16xf32>
    %663 = vector.broadcast %657 : f32 to vector<1x16x16xf32>
    %664 = arith.mulf %663, %662 : vector<1x16x16xf32>
    %665 = arith.addf %661, %664 : vector<1x16x16xf32>
    %c46 = arith.constant 46 : index
    %666 = memref.load %arg1[%c46] : memref<294xf32, #tpu.memory_space<smem>>
    %c95 = arith.constant 95 : index
    %667 = memref.load %arg1[%c95] : memref<294xf32, #tpu.memory_space<smem>>
    %668 = vector.extract_strided_slice %624 {offsets = [0, 0, 4], sizes = [1, 16, 16], strides = [1, 1, 1]} : vector<1x16x22xf32> to vector<1x16x16xf32>
    %669 = vector.broadcast %666 : f32 to vector<1x16x16xf32>
    %670 = arith.mulf %669, %668 : vector<1x16x16xf32>
    %671 = arith.addf %665, %670 : vector<1x16x16xf32>
    %672 = vector.extract_strided_slice %625 {offsets = [0, 0, 4], sizes = [1, 16, 16], strides = [1, 1, 1]} : vector<1x16x22xf32> to vector<1x16x16xf32>
    %673 = vector.broadcast %667 : f32 to vector<1x16x16xf32>
    %674 = arith.mulf %673, %672 : vector<1x16x16xf32>
    %675 = arith.addf %671, %674 : vector<1x16x16xf32>
    %c47 = arith.constant 47 : index
    %676 = memref.load %arg1[%c47] : memref<294xf32, #tpu.memory_space<smem>>
    %c96 = arith.constant 96 : index
    %677 = memref.load %arg1[%c96] : memref<294xf32, #tpu.memory_space<smem>>
    %678 = vector.extract_strided_slice %624 {offsets = [0, 0, 5], sizes = [1, 16, 16], strides = [1, 1, 1]} : vector<1x16x22xf32> to vector<1x16x16xf32>
    %679 = vector.broadcast %676 : f32 to vector<1x16x16xf32>
    %680 = arith.mulf %679, %678 : vector<1x16x16xf32>
    %681 = arith.addf %675, %680 : vector<1x16x16xf32>
    %682 = vector.extract_strided_slice %625 {offsets = [0, 0, 5], sizes = [1, 16, 16], strides = [1, 1, 1]} : vector<1x16x22xf32> to vector<1x16x16xf32>
    %683 = vector.broadcast %677 : f32 to vector<1x16x16xf32>
    %684 = arith.mulf %683, %682 : vector<1x16x16xf32>
    %685 = arith.addf %681, %684 : vector<1x16x16xf32>
    %c48 = arith.constant 48 : index
    %686 = memref.load %arg1[%c48] : memref<294xf32, #tpu.memory_space<smem>>
    %c97 = arith.constant 97 : index
    %687 = memref.load %arg1[%c97] : memref<294xf32, #tpu.memory_space<smem>>
    %688 = vector.extract_strided_slice %624 {offsets = [0, 0, 6], sizes = [1, 16, 16], strides = [1, 1, 1]} : vector<1x16x22xf32> to vector<1x16x16xf32>
    %689 = vector.broadcast %686 : f32 to vector<1x16x16xf32>
    %690 = arith.mulf %689, %688 : vector<1x16x16xf32>
    %691 = arith.addf %685, %690 : vector<1x16x16xf32>
    %692 = vector.extract_strided_slice %625 {offsets = [0, 0, 6], sizes = [1, 16, 16], strides = [1, 1, 1]} : vector<1x16x22xf32> to vector<1x16x16xf32>
    %693 = vector.broadcast %687 : f32 to vector<1x16x16xf32>
    %694 = arith.mulf %693, %692 : vector<1x16x16xf32>
    %695 = arith.addf %691, %694 : vector<1x16x16xf32>
    %c0_72 = arith.constant 0 : index
    %696 = memref.load %arg2[%c0_72] : memref<6xf32, #tpu.memory_space<smem>>
    %697 = vector.broadcast %696 : f32 to vector<1x16x16xf32>
    %698 = arith.mulf %695, %697 : vector<1x16x16xf32>
    %c1_73 = arith.constant 1 : index
    %699 = memref.load %arg2[%c1_73] : memref<6xf32, #tpu.memory_space<smem>>
    %700 = vector.broadcast %699 : f32 to vector<1x16x16xf32>
    %701 = arith.addf %698, %700 : vector<1x16x16xf32>
    %702 = arith.negf %701 : vector<1x16x16xf32>
    %703 = math.exp %702 : vector<1x16x16xf32>
    %cst_74 = arith.constant 1.000000e+00 : f32
    %704 = vector.broadcast %cst_74 : f32 to vector<1x16x16xf32>
    %705 = arith.addf %704, %703 : vector<1x16x16xf32>
    %706 = arith.divf %704, %705 : vector<1x16x16xf32>
    %cst_75 = arith.constant 0.333333343 : f32
    %707 = vector.broadcast %cst_75 : f32 to vector<1x16x16xf32>
    %708 = arith.mulf %706, %707 : vector<1x16x16xf32>
    %cst_76 = arith.constant 0.000000e+00 : f32
    %709 = vector.broadcast %cst_76 : f32 to vector<1x3x16xf32>
    %cst_77 = arith.constant 0.000000e+00 : f32
    %710 = vector.broadcast %cst_77 : f32 to vector<1x10x3xf32>
    %711 = tpu.concatenate %709, %165, %709 in 1 : vector<1x3x16xf32>, vector<1x4x16xf32>, vector<1x3x16xf32> -> vector<1x10x16xf32>
    %712 = tpu.concatenate %710, %711, %710 in 2 : vector<1x10x3xf32>, vector<1x10x16xf32>, vector<1x10x3xf32> -> vector<1x10x22xf32>
    %713 = tpu.concatenate %709, %176, %709 in 1 : vector<1x3x16xf32>, vector<1x4x16xf32>, vector<1x3x16xf32> -> vector<1x10x16xf32>
    %714 = tpu.concatenate %710, %713, %710 in 2 : vector<1x10x3xf32>, vector<1x10x16xf32>, vector<1x10x3xf32> -> vector<1x10x22xf32>
    %cst_78 = arith.constant 0.000000e+00 : f32
    %715 = vector.broadcast %cst_78 : f32 to vector<1x4x16xf32>
    %716 = vector.extract_strided_slice %712 {offsets = [0, 0, 0], sizes = [1, 4, 22], strides = [1, 1, 1]} : vector<1x10x22xf32> to vector<1x4x22xf32>
    %717 = vector.extract_strided_slice %714 {offsets = [0, 0, 0], sizes = [1, 4, 22], strides = [1, 1, 1]} : vector<1x10x22xf32> to vector<1x4x22xf32>
    %c98 = arith.constant 98 : index
    %718 = memref.load %arg1[%c98] : memref<294xf32, #tpu.memory_space<smem>>
    %c147 = arith.constant 147 : index
    %719 = memref.load %arg1[%c147] : memref<294xf32, #tpu.memory_space<smem>>
    %720 = vector.extract_strided_slice %716 {offsets = [0, 0, 0], sizes = [1, 4, 16], strides = [1, 1, 1]} : vector<1x4x22xf32> to vector<1x4x16xf32>
    %721 = vector.broadcast %718 : f32 to vector<1x4x16xf32>
    %722 = arith.mulf %721, %720 : vector<1x4x16xf32>
    %723 = arith.addf %715, %722 : vector<1x4x16xf32>
    %724 = vector.extract_strided_slice %717 {offsets = [0, 0, 0], sizes = [1, 4, 16], strides = [1, 1, 1]} : vector<1x4x22xf32> to vector<1x4x16xf32>
    %725 = vector.broadcast %719 : f32 to vector<1x4x16xf32>
    %726 = arith.mulf %725, %724 : vector<1x4x16xf32>
    %727 = arith.addf %723, %726 : vector<1x4x16xf32>
    %c99 = arith.constant 99 : index
    %728 = memref.load %arg1[%c99] : memref<294xf32, #tpu.memory_space<smem>>
    %c148 = arith.constant 148 : index
    %729 = memref.load %arg1[%c148] : memref<294xf32, #tpu.memory_space<smem>>
    %730 = vector.extract_strided_slice %716 {offsets = [0, 0, 1], sizes = [1, 4, 16], strides = [1, 1, 1]} : vector<1x4x22xf32> to vector<1x4x16xf32>
    %731 = vector.broadcast %728 : f32 to vector<1x4x16xf32>
    %732 = arith.mulf %731, %730 : vector<1x4x16xf32>
    %733 = arith.addf %727, %732 : vector<1x4x16xf32>
    %734 = vector.extract_strided_slice %717 {offsets = [0, 0, 1], sizes = [1, 4, 16], strides = [1, 1, 1]} : vector<1x4x22xf32> to vector<1x4x16xf32>
    %735 = vector.broadcast %729 : f32 to vector<1x4x16xf32>
    %736 = arith.mulf %735, %734 : vector<1x4x16xf32>
    %737 = arith.addf %733, %736 : vector<1x4x16xf32>
    %c100 = arith.constant 100 : index
    %738 = memref.load %arg1[%c100] : memref<294xf32, #tpu.memory_space<smem>>
    %c149 = arith.constant 149 : index
    %739 = memref.load %arg1[%c149] : memref<294xf32, #tpu.memory_space<smem>>
    %740 = vector.extract_strided_slice %716 {offsets = [0, 0, 2], sizes = [1, 4, 16], strides = [1, 1, 1]} : vector<1x4x22xf32> to vector<1x4x16xf32>
    %741 = vector.broadcast %738 : f32 to vector<1x4x16xf32>
    %742 = arith.mulf %741, %740 : vector<1x4x16xf32>
    %743 = arith.addf %737, %742 : vector<1x4x16xf32>
    %744 = vector.extract_strided_slice %717 {offsets = [0, 0, 2], sizes = [1, 4, 16], strides = [1, 1, 1]} : vector<1x4x22xf32> to vector<1x4x16xf32>
    %745 = vector.broadcast %739 : f32 to vector<1x4x16xf32>
    %746 = arith.mulf %745, %744 : vector<1x4x16xf32>
    %747 = arith.addf %743, %746 : vector<1x4x16xf32>
    %c101 = arith.constant 101 : index
    %748 = memref.load %arg1[%c101] : memref<294xf32, #tpu.memory_space<smem>>
    %c150 = arith.constant 150 : index
    %749 = memref.load %arg1[%c150] : memref<294xf32, #tpu.memory_space<smem>>
    %750 = vector.extract_strided_slice %716 {offsets = [0, 0, 3], sizes = [1, 4, 16], strides = [1, 1, 1]} : vector<1x4x22xf32> to vector<1x4x16xf32>
    %751 = vector.broadcast %748 : f32 to vector<1x4x16xf32>
    %752 = arith.mulf %751, %750 : vector<1x4x16xf32>
    %753 = arith.addf %747, %752 : vector<1x4x16xf32>
    %754 = vector.extract_strided_slice %717 {offsets = [0, 0, 3], sizes = [1, 4, 16], strides = [1, 1, 1]} : vector<1x4x22xf32> to vector<1x4x16xf32>
    %755 = vector.broadcast %749 : f32 to vector<1x4x16xf32>
    %756 = arith.mulf %755, %754 : vector<1x4x16xf32>
    %757 = arith.addf %753, %756 : vector<1x4x16xf32>
    %c102 = arith.constant 102 : index
    %758 = memref.load %arg1[%c102] : memref<294xf32, #tpu.memory_space<smem>>
    %c151 = arith.constant 151 : index
    %759 = memref.load %arg1[%c151] : memref<294xf32, #tpu.memory_space<smem>>
    %760 = vector.extract_strided_slice %716 {offsets = [0, 0, 4], sizes = [1, 4, 16], strides = [1, 1, 1]} : vector<1x4x22xf32> to vector<1x4x16xf32>
    %761 = vector.broadcast %758 : f32 to vector<1x4x16xf32>
    %762 = arith.mulf %761, %760 : vector<1x4x16xf32>
    %763 = arith.addf %757, %762 : vector<1x4x16xf32>
    %764 = vector.extract_strided_slice %717 {offsets = [0, 0, 4], sizes = [1, 4, 16], strides = [1, 1, 1]} : vector<1x4x22xf32> to vector<1x4x16xf32>
    %765 = vector.broadcast %759 : f32 to vector<1x4x16xf32>
    %766 = arith.mulf %765, %764 : vector<1x4x16xf32>
    %767 = arith.addf %763, %766 : vector<1x4x16xf32>
    %c103 = arith.constant 103 : index
    %768 = memref.load %arg1[%c103] : memref<294xf32, #tpu.memory_space<smem>>
    %c152 = arith.constant 152 : index
    %769 = memref.load %arg1[%c152] : memref<294xf32, #tpu.memory_space<smem>>
    %770 = vector.extract_strided_slice %716 {offsets = [0, 0, 5], sizes = [1, 4, 16], strides = [1, 1, 1]} : vector<1x4x22xf32> to vector<1x4x16xf32>
    %771 = vector.broadcast %768 : f32 to vector<1x4x16xf32>
    %772 = arith.mulf %771, %770 : vector<1x4x16xf32>
    %773 = arith.addf %767, %772 : vector<1x4x16xf32>
    %774 = vector.extract_strided_slice %717 {offsets = [0, 0, 5], sizes = [1, 4, 16], strides = [1, 1, 1]} : vector<1x4x22xf32> to vector<1x4x16xf32>
    %775 = vector.broadcast %769 : f32 to vector<1x4x16xf32>
    %776 = arith.mulf %775, %774 : vector<1x4x16xf32>
    %777 = arith.addf %773, %776 : vector<1x4x16xf32>
    %c104 = arith.constant 104 : index
    %778 = memref.load %arg1[%c104] : memref<294xf32, #tpu.memory_space<smem>>
    %c153 = arith.constant 153 : index
    %779 = memref.load %arg1[%c153] : memref<294xf32, #tpu.memory_space<smem>>
    %780 = vector.extract_strided_slice %716 {offsets = [0, 0, 6], sizes = [1, 4, 16], strides = [1, 1, 1]} : vector<1x4x22xf32> to vector<1x4x16xf32>
    %781 = vector.broadcast %778 : f32 to vector<1x4x16xf32>
    %782 = arith.mulf %781, %780 : vector<1x4x16xf32>
    %783 = arith.addf %777, %782 : vector<1x4x16xf32>
    %784 = vector.extract_strided_slice %717 {offsets = [0, 0, 6], sizes = [1, 4, 16], strides = [1, 1, 1]} : vector<1x4x22xf32> to vector<1x4x16xf32>
    %785 = vector.broadcast %779 : f32 to vector<1x4x16xf32>
    %786 = arith.mulf %785, %784 : vector<1x4x16xf32>
    %787 = arith.addf %783, %786 : vector<1x4x16xf32>
    %788 = vector.extract_strided_slice %712 {offsets = [0, 1, 0], sizes = [1, 4, 22], strides = [1, 1, 1]} : vector<1x10x22xf32> to vector<1x4x22xf32>
    %789 = vector.extract_strided_slice %714 {offsets = [0, 1, 0], sizes = [1, 4, 22], strides = [1, 1, 1]} : vector<1x10x22xf32> to vector<1x4x22xf32>
    %c105 = arith.constant 105 : index
    %790 = memref.load %arg1[%c105] : memref<294xf32, #tpu.memory_space<smem>>
    %c154 = arith.constant 154 : index
    %791 = memref.load %arg1[%c154] : memref<294xf32, #tpu.memory_space<smem>>
    %792 = vector.extract_strided_slice %788 {offsets = [0, 0, 0], sizes = [1, 4, 16], strides = [1, 1, 1]} : vector<1x4x22xf32> to vector<1x4x16xf32>
    %793 = vector.broadcast %790 : f32 to vector<1x4x16xf32>
    %794 = arith.mulf %793, %792 : vector<1x4x16xf32>
    %795 = arith.addf %787, %794 : vector<1x4x16xf32>
    %796 = vector.extract_strided_slice %789 {offsets = [0, 0, 0], sizes = [1, 4, 16], strides = [1, 1, 1]} : vector<1x4x22xf32> to vector<1x4x16xf32>
    %797 = vector.broadcast %791 : f32 to vector<1x4x16xf32>
    %798 = arith.mulf %797, %796 : vector<1x4x16xf32>
    %799 = arith.addf %795, %798 : vector<1x4x16xf32>
    %c106 = arith.constant 106 : index
    %800 = memref.load %arg1[%c106] : memref<294xf32, #tpu.memory_space<smem>>
    %c155 = arith.constant 155 : index
    %801 = memref.load %arg1[%c155] : memref<294xf32, #tpu.memory_space<smem>>
    %802 = vector.extract_strided_slice %788 {offsets = [0, 0, 1], sizes = [1, 4, 16], strides = [1, 1, 1]} : vector<1x4x22xf32> to vector<1x4x16xf32>
    %803 = vector.broadcast %800 : f32 to vector<1x4x16xf32>
    %804 = arith.mulf %803, %802 : vector<1x4x16xf32>
    %805 = arith.addf %799, %804 : vector<1x4x16xf32>
    %806 = vector.extract_strided_slice %789 {offsets = [0, 0, 1], sizes = [1, 4, 16], strides = [1, 1, 1]} : vector<1x4x22xf32> to vector<1x4x16xf32>
    %807 = vector.broadcast %801 : f32 to vector<1x4x16xf32>
    %808 = arith.mulf %807, %806 : vector<1x4x16xf32>
    %809 = arith.addf %805, %808 : vector<1x4x16xf32>
    %c107 = arith.constant 107 : index
    %810 = memref.load %arg1[%c107] : memref<294xf32, #tpu.memory_space<smem>>
    %c156 = arith.constant 156 : index
    %811 = memref.load %arg1[%c156] : memref<294xf32, #tpu.memory_space<smem>>
    %812 = vector.extract_strided_slice %788 {offsets = [0, 0, 2], sizes = [1, 4, 16], strides = [1, 1, 1]} : vector<1x4x22xf32> to vector<1x4x16xf32>
    %813 = vector.broadcast %810 : f32 to vector<1x4x16xf32>
    %814 = arith.mulf %813, %812 : vector<1x4x16xf32>
    %815 = arith.addf %809, %814 : vector<1x4x16xf32>
    %816 = vector.extract_strided_slice %789 {offsets = [0, 0, 2], sizes = [1, 4, 16], strides = [1, 1, 1]} : vector<1x4x22xf32> to vector<1x4x16xf32>
    %817 = vector.broadcast %811 : f32 to vector<1x4x16xf32>
    %818 = arith.mulf %817, %816 : vector<1x4x16xf32>
    %819 = arith.addf %815, %818 : vector<1x4x16xf32>
    %c108 = arith.constant 108 : index
    %820 = memref.load %arg1[%c108] : memref<294xf32, #tpu.memory_space<smem>>
    %c157 = arith.constant 157 : index
    %821 = memref.load %arg1[%c157] : memref<294xf32, #tpu.memory_space<smem>>
    %822 = vector.extract_strided_slice %788 {offsets = [0, 0, 3], sizes = [1, 4, 16], strides = [1, 1, 1]} : vector<1x4x22xf32> to vector<1x4x16xf32>
    %823 = vector.broadcast %820 : f32 to vector<1x4x16xf32>
    %824 = arith.mulf %823, %822 : vector<1x4x16xf32>
    %825 = arith.addf %819, %824 : vector<1x4x16xf32>
    %826 = vector.extract_strided_slice %789 {offsets = [0, 0, 3], sizes = [1, 4, 16], strides = [1, 1, 1]} : vector<1x4x22xf32> to vector<1x4x16xf32>
    %827 = vector.broadcast %821 : f32 to vector<1x4x16xf32>
    %828 = arith.mulf %827, %826 : vector<1x4x16xf32>
    %829 = arith.addf %825, %828 : vector<1x4x16xf32>
    %c109 = arith.constant 109 : index
    %830 = memref.load %arg1[%c109] : memref<294xf32, #tpu.memory_space<smem>>
    %c158 = arith.constant 158 : index
    %831 = memref.load %arg1[%c158] : memref<294xf32, #tpu.memory_space<smem>>
    %832 = vector.extract_strided_slice %788 {offsets = [0, 0, 4], sizes = [1, 4, 16], strides = [1, 1, 1]} : vector<1x4x22xf32> to vector<1x4x16xf32>
    %833 = vector.broadcast %830 : f32 to vector<1x4x16xf32>
    %834 = arith.mulf %833, %832 : vector<1x4x16xf32>
    %835 = arith.addf %829, %834 : vector<1x4x16xf32>
    %836 = vector.extract_strided_slice %789 {offsets = [0, 0, 4], sizes = [1, 4, 16], strides = [1, 1, 1]} : vector<1x4x22xf32> to vector<1x4x16xf32>
    %837 = vector.broadcast %831 : f32 to vector<1x4x16xf32>
    %838 = arith.mulf %837, %836 : vector<1x4x16xf32>
    %839 = arith.addf %835, %838 : vector<1x4x16xf32>
    %c110 = arith.constant 110 : index
    %840 = memref.load %arg1[%c110] : memref<294xf32, #tpu.memory_space<smem>>
    %c159 = arith.constant 159 : index
    %841 = memref.load %arg1[%c159] : memref<294xf32, #tpu.memory_space<smem>>
    %842 = vector.extract_strided_slice %788 {offsets = [0, 0, 5], sizes = [1, 4, 16], strides = [1, 1, 1]} : vector<1x4x22xf32> to vector<1x4x16xf32>
    %843 = vector.broadcast %840 : f32 to vector<1x4x16xf32>
    %844 = arith.mulf %843, %842 : vector<1x4x16xf32>
    %845 = arith.addf %839, %844 : vector<1x4x16xf32>
    %846 = vector.extract_strided_slice %789 {offsets = [0, 0, 5], sizes = [1, 4, 16], strides = [1, 1, 1]} : vector<1x4x22xf32> to vector<1x4x16xf32>
    %847 = vector.broadcast %841 : f32 to vector<1x4x16xf32>
    %848 = arith.mulf %847, %846 : vector<1x4x16xf32>
    %849 = arith.addf %845, %848 : vector<1x4x16xf32>
    %c111 = arith.constant 111 : index
    %850 = memref.load %arg1[%c111] : memref<294xf32, #tpu.memory_space<smem>>
    %c160 = arith.constant 160 : index
    %851 = memref.load %arg1[%c160] : memref<294xf32, #tpu.memory_space<smem>>
    %852 = vector.extract_strided_slice %788 {offsets = [0, 0, 6], sizes = [1, 4, 16], strides = [1, 1, 1]} : vector<1x4x22xf32> to vector<1x4x16xf32>
    %853 = vector.broadcast %850 : f32 to vector<1x4x16xf32>
    %854 = arith.mulf %853, %852 : vector<1x4x16xf32>
    %855 = arith.addf %849, %854 : vector<1x4x16xf32>
    %856 = vector.extract_strided_slice %789 {offsets = [0, 0, 6], sizes = [1, 4, 16], strides = [1, 1, 1]} : vector<1x4x22xf32> to vector<1x4x16xf32>
    %857 = vector.broadcast %851 : f32 to vector<1x4x16xf32>
    %858 = arith.mulf %857, %856 : vector<1x4x16xf32>
    %859 = arith.addf %855, %858 : vector<1x4x16xf32>
    %860 = vector.extract_strided_slice %712 {offsets = [0, 2, 0], sizes = [1, 4, 22], strides = [1, 1, 1]} : vector<1x10x22xf32> to vector<1x4x22xf32>
    %861 = vector.extract_strided_slice %714 {offsets = [0, 2, 0], sizes = [1, 4, 22], strides = [1, 1, 1]} : vector<1x10x22xf32> to vector<1x4x22xf32>
    %c112 = arith.constant 112 : index
    %862 = memref.load %arg1[%c112] : memref<294xf32, #tpu.memory_space<smem>>
    %c161 = arith.constant 161 : index
    %863 = memref.load %arg1[%c161] : memref<294xf32, #tpu.memory_space<smem>>
    %864 = vector.extract_strided_slice %860 {offsets = [0, 0, 0], sizes = [1, 4, 16], strides = [1, 1, 1]} : vector<1x4x22xf32> to vector<1x4x16xf32>
    %865 = vector.broadcast %862 : f32 to vector<1x4x16xf32>
    %866 = arith.mulf %865, %864 : vector<1x4x16xf32>
    %867 = arith.addf %859, %866 : vector<1x4x16xf32>
    %868 = vector.extract_strided_slice %861 {offsets = [0, 0, 0], sizes = [1, 4, 16], strides = [1, 1, 1]} : vector<1x4x22xf32> to vector<1x4x16xf32>
    %869 = vector.broadcast %863 : f32 to vector<1x4x16xf32>
    %870 = arith.mulf %869, %868 : vector<1x4x16xf32>
    %871 = arith.addf %867, %870 : vector<1x4x16xf32>
    %c113 = arith.constant 113 : index
    %872 = memref.load %arg1[%c113] : memref<294xf32, #tpu.memory_space<smem>>
    %c162 = arith.constant 162 : index
    %873 = memref.load %arg1[%c162] : memref<294xf32, #tpu.memory_space<smem>>
    %874 = vector.extract_strided_slice %860 {offsets = [0, 0, 1], sizes = [1, 4, 16], strides = [1, 1, 1]} : vector<1x4x22xf32> to vector<1x4x16xf32>
    %875 = vector.broadcast %872 : f32 to vector<1x4x16xf32>
    %876 = arith.mulf %875, %874 : vector<1x4x16xf32>
    %877 = arith.addf %871, %876 : vector<1x4x16xf32>
    %878 = vector.extract_strided_slice %861 {offsets = [0, 0, 1], sizes = [1, 4, 16], strides = [1, 1, 1]} : vector<1x4x22xf32> to vector<1x4x16xf32>
    %879 = vector.broadcast %873 : f32 to vector<1x4x16xf32>
    %880 = arith.mulf %879, %878 : vector<1x4x16xf32>
    %881 = arith.addf %877, %880 : vector<1x4x16xf32>
    %c114 = arith.constant 114 : index
    %882 = memref.load %arg1[%c114] : memref<294xf32, #tpu.memory_space<smem>>
    %c163 = arith.constant 163 : index
    %883 = memref.load %arg1[%c163] : memref<294xf32, #tpu.memory_space<smem>>
    %884 = vector.extract_strided_slice %860 {offsets = [0, 0, 2], sizes = [1, 4, 16], strides = [1, 1, 1]} : vector<1x4x22xf32> to vector<1x4x16xf32>
    %885 = vector.broadcast %882 : f32 to vector<1x4x16xf32>
    %886 = arith.mulf %885, %884 : vector<1x4x16xf32>
    %887 = arith.addf %881, %886 : vector<1x4x16xf32>
    %888 = vector.extract_strided_slice %861 {offsets = [0, 0, 2], sizes = [1, 4, 16], strides = [1, 1, 1]} : vector<1x4x22xf32> to vector<1x4x16xf32>
    %889 = vector.broadcast %883 : f32 to vector<1x4x16xf32>
    %890 = arith.mulf %889, %888 : vector<1x4x16xf32>
    %891 = arith.addf %887, %890 : vector<1x4x16xf32>
    %c115 = arith.constant 115 : index
    %892 = memref.load %arg1[%c115] : memref<294xf32, #tpu.memory_space<smem>>
    %c164 = arith.constant 164 : index
    %893 = memref.load %arg1[%c164] : memref<294xf32, #tpu.memory_space<smem>>
    %894 = vector.extract_strided_slice %860 {offsets = [0, 0, 3], sizes = [1, 4, 16], strides = [1, 1, 1]} : vector<1x4x22xf32> to vector<1x4x16xf32>
    %895 = vector.broadcast %892 : f32 to vector<1x4x16xf32>
    %896 = arith.mulf %895, %894 : vector<1x4x16xf32>
    %897 = arith.addf %891, %896 : vector<1x4x16xf32>
    %898 = vector.extract_strided_slice %861 {offsets = [0, 0, 3], sizes = [1, 4, 16], strides = [1, 1, 1]} : vector<1x4x22xf32> to vector<1x4x16xf32>
    %899 = vector.broadcast %893 : f32 to vector<1x4x16xf32>
    %900 = arith.mulf %899, %898 : vector<1x4x16xf32>
    %901 = arith.addf %897, %900 : vector<1x4x16xf32>
    %c116 = arith.constant 116 : index
    %902 = memref.load %arg1[%c116] : memref<294xf32, #tpu.memory_space<smem>>
    %c165 = arith.constant 165 : index
    %903 = memref.load %arg1[%c165] : memref<294xf32, #tpu.memory_space<smem>>
    %904 = vector.extract_strided_slice %860 {offsets = [0, 0, 4], sizes = [1, 4, 16], strides = [1, 1, 1]} : vector<1x4x22xf32> to vector<1x4x16xf32>
    %905 = vector.broadcast %902 : f32 to vector<1x4x16xf32>
    %906 = arith.mulf %905, %904 : vector<1x4x16xf32>
    %907 = arith.addf %901, %906 : vector<1x4x16xf32>
    %908 = vector.extract_strided_slice %861 {offsets = [0, 0, 4], sizes = [1, 4, 16], strides = [1, 1, 1]} : vector<1x4x22xf32> to vector<1x4x16xf32>
    %909 = vector.broadcast %903 : f32 to vector<1x4x16xf32>
    %910 = arith.mulf %909, %908 : vector<1x4x16xf32>
    %911 = arith.addf %907, %910 : vector<1x4x16xf32>
    %c117 = arith.constant 117 : index
    %912 = memref.load %arg1[%c117] : memref<294xf32, #tpu.memory_space<smem>>
    %c166 = arith.constant 166 : index
    %913 = memref.load %arg1[%c166] : memref<294xf32, #tpu.memory_space<smem>>
    %914 = vector.extract_strided_slice %860 {offsets = [0, 0, 5], sizes = [1, 4, 16], strides = [1, 1, 1]} : vector<1x4x22xf32> to vector<1x4x16xf32>
    %915 = vector.broadcast %912 : f32 to vector<1x4x16xf32>
    %916 = arith.mulf %915, %914 : vector<1x4x16xf32>
    %917 = arith.addf %911, %916 : vector<1x4x16xf32>
    %918 = vector.extract_strided_slice %861 {offsets = [0, 0, 5], sizes = [1, 4, 16], strides = [1, 1, 1]} : vector<1x4x22xf32> to vector<1x4x16xf32>
    %919 = vector.broadcast %913 : f32 to vector<1x4x16xf32>
    %920 = arith.mulf %919, %918 : vector<1x4x16xf32>
    %921 = arith.addf %917, %920 : vector<1x4x16xf32>
    %c118 = arith.constant 118 : index
    %922 = memref.load %arg1[%c118] : memref<294xf32, #tpu.memory_space<smem>>
    %c167 = arith.constant 167 : index
    %923 = memref.load %arg1[%c167] : memref<294xf32, #tpu.memory_space<smem>>
    %924 = vector.extract_strided_slice %860 {offsets = [0, 0, 6], sizes = [1, 4, 16], strides = [1, 1, 1]} : vector<1x4x22xf32> to vector<1x4x16xf32>
    %925 = vector.broadcast %922 : f32 to vector<1x4x16xf32>
    %926 = arith.mulf %925, %924 : vector<1x4x16xf32>
    %927 = arith.addf %921, %926 : vector<1x4x16xf32>
    %928 = vector.extract_strided_slice %861 {offsets = [0, 0, 6], sizes = [1, 4, 16], strides = [1, 1, 1]} : vector<1x4x22xf32> to vector<1x4x16xf32>
    %929 = vector.broadcast %923 : f32 to vector<1x4x16xf32>
    %930 = arith.mulf %929, %928 : vector<1x4x16xf32>
    %931 = arith.addf %927, %930 : vector<1x4x16xf32>
    %932 = vector.extract_strided_slice %712 {offsets = [0, 3, 0], sizes = [1, 4, 22], strides = [1, 1, 1]} : vector<1x10x22xf32> to vector<1x4x22xf32>
    %933 = vector.extract_strided_slice %714 {offsets = [0, 3, 0], sizes = [1, 4, 22], strides = [1, 1, 1]} : vector<1x10x22xf32> to vector<1x4x22xf32>
    %c119 = arith.constant 119 : index
    %934 = memref.load %arg1[%c119] : memref<294xf32, #tpu.memory_space<smem>>
    %c168 = arith.constant 168 : index
    %935 = memref.load %arg1[%c168] : memref<294xf32, #tpu.memory_space<smem>>
    %936 = vector.extract_strided_slice %932 {offsets = [0, 0, 0], sizes = [1, 4, 16], strides = [1, 1, 1]} : vector<1x4x22xf32> to vector<1x4x16xf32>
    %937 = vector.broadcast %934 : f32 to vector<1x4x16xf32>
    %938 = arith.mulf %937, %936 : vector<1x4x16xf32>
    %939 = arith.addf %931, %938 : vector<1x4x16xf32>
    %940 = vector.extract_strided_slice %933 {offsets = [0, 0, 0], sizes = [1, 4, 16], strides = [1, 1, 1]} : vector<1x4x22xf32> to vector<1x4x16xf32>
    %941 = vector.broadcast %935 : f32 to vector<1x4x16xf32>
    %942 = arith.mulf %941, %940 : vector<1x4x16xf32>
    %943 = arith.addf %939, %942 : vector<1x4x16xf32>
    %c120 = arith.constant 120 : index
    %944 = memref.load %arg1[%c120] : memref<294xf32, #tpu.memory_space<smem>>
    %c169 = arith.constant 169 : index
    %945 = memref.load %arg1[%c169] : memref<294xf32, #tpu.memory_space<smem>>
    %946 = vector.extract_strided_slice %932 {offsets = [0, 0, 1], sizes = [1, 4, 16], strides = [1, 1, 1]} : vector<1x4x22xf32> to vector<1x4x16xf32>
    %947 = vector.broadcast %944 : f32 to vector<1x4x16xf32>
    %948 = arith.mulf %947, %946 : vector<1x4x16xf32>
    %949 = arith.addf %943, %948 : vector<1x4x16xf32>
    %950 = vector.extract_strided_slice %933 {offsets = [0, 0, 1], sizes = [1, 4, 16], strides = [1, 1, 1]} : vector<1x4x22xf32> to vector<1x4x16xf32>
    %951 = vector.broadcast %945 : f32 to vector<1x4x16xf32>
    %952 = arith.mulf %951, %950 : vector<1x4x16xf32>
    %953 = arith.addf %949, %952 : vector<1x4x16xf32>
    %c121 = arith.constant 121 : index
    %954 = memref.load %arg1[%c121] : memref<294xf32, #tpu.memory_space<smem>>
    %c170 = arith.constant 170 : index
    %955 = memref.load %arg1[%c170] : memref<294xf32, #tpu.memory_space<smem>>
    %956 = vector.extract_strided_slice %932 {offsets = [0, 0, 2], sizes = [1, 4, 16], strides = [1, 1, 1]} : vector<1x4x22xf32> to vector<1x4x16xf32>
    %957 = vector.broadcast %954 : f32 to vector<1x4x16xf32>
    %958 = arith.mulf %957, %956 : vector<1x4x16xf32>
    %959 = arith.addf %953, %958 : vector<1x4x16xf32>
    %960 = vector.extract_strided_slice %933 {offsets = [0, 0, 2], sizes = [1, 4, 16], strides = [1, 1, 1]} : vector<1x4x22xf32> to vector<1x4x16xf32>
    %961 = vector.broadcast %955 : f32 to vector<1x4x16xf32>
    %962 = arith.mulf %961, %960 : vector<1x4x16xf32>
    %963 = arith.addf %959, %962 : vector<1x4x16xf32>
    %c122 = arith.constant 122 : index
    %964 = memref.load %arg1[%c122] : memref<294xf32, #tpu.memory_space<smem>>
    %c171 = arith.constant 171 : index
    %965 = memref.load %arg1[%c171] : memref<294xf32, #tpu.memory_space<smem>>
    %966 = vector.extract_strided_slice %932 {offsets = [0, 0, 3], sizes = [1, 4, 16], strides = [1, 1, 1]} : vector<1x4x22xf32> to vector<1x4x16xf32>
    %967 = vector.broadcast %964 : f32 to vector<1x4x16xf32>
    %968 = arith.mulf %967, %966 : vector<1x4x16xf32>
    %969 = arith.addf %963, %968 : vector<1x4x16xf32>
    %970 = vector.extract_strided_slice %933 {offsets = [0, 0, 3], sizes = [1, 4, 16], strides = [1, 1, 1]} : vector<1x4x22xf32> to vector<1x4x16xf32>
    %971 = vector.broadcast %965 : f32 to vector<1x4x16xf32>
    %972 = arith.mulf %971, %970 : vector<1x4x16xf32>
    %973 = arith.addf %969, %972 : vector<1x4x16xf32>
    %c123 = arith.constant 123 : index
    %974 = memref.load %arg1[%c123] : memref<294xf32, #tpu.memory_space<smem>>
    %c172 = arith.constant 172 : index
    %975 = memref.load %arg1[%c172] : memref<294xf32, #tpu.memory_space<smem>>
    %976 = vector.extract_strided_slice %932 {offsets = [0, 0, 4], sizes = [1, 4, 16], strides = [1, 1, 1]} : vector<1x4x22xf32> to vector<1x4x16xf32>
    %977 = vector.broadcast %974 : f32 to vector<1x4x16xf32>
    %978 = arith.mulf %977, %976 : vector<1x4x16xf32>
    %979 = arith.addf %973, %978 : vector<1x4x16xf32>
    %980 = vector.extract_strided_slice %933 {offsets = [0, 0, 4], sizes = [1, 4, 16], strides = [1, 1, 1]} : vector<1x4x22xf32> to vector<1x4x16xf32>
    %981 = vector.broadcast %975 : f32 to vector<1x4x16xf32>
    %982 = arith.mulf %981, %980 : vector<1x4x16xf32>
    %983 = arith.addf %979, %982 : vector<1x4x16xf32>
    %c124 = arith.constant 124 : index
    %984 = memref.load %arg1[%c124] : memref<294xf32, #tpu.memory_space<smem>>
    %c173 = arith.constant 173 : index
    %985 = memref.load %arg1[%c173] : memref<294xf32, #tpu.memory_space<smem>>
    %986 = vector.extract_strided_slice %932 {offsets = [0, 0, 5], sizes = [1, 4, 16], strides = [1, 1, 1]} : vector<1x4x22xf32> to vector<1x4x16xf32>
    %987 = vector.broadcast %984 : f32 to vector<1x4x16xf32>
    %988 = arith.mulf %987, %986 : vector<1x4x16xf32>
    %989 = arith.addf %983, %988 : vector<1x4x16xf32>
    %990 = vector.extract_strided_slice %933 {offsets = [0, 0, 5], sizes = [1, 4, 16], strides = [1, 1, 1]} : vector<1x4x22xf32> to vector<1x4x16xf32>
    %991 = vector.broadcast %985 : f32 to vector<1x4x16xf32>
    %992 = arith.mulf %991, %990 : vector<1x4x16xf32>
    %993 = arith.addf %989, %992 : vector<1x4x16xf32>
    %c125 = arith.constant 125 : index
    %994 = memref.load %arg1[%c125] : memref<294xf32, #tpu.memory_space<smem>>
    %c174 = arith.constant 174 : index
    %995 = memref.load %arg1[%c174] : memref<294xf32, #tpu.memory_space<smem>>
    %996 = vector.extract_strided_slice %932 {offsets = [0, 0, 6], sizes = [1, 4, 16], strides = [1, 1, 1]} : vector<1x4x22xf32> to vector<1x4x16xf32>
    %997 = vector.broadcast %994 : f32 to vector<1x4x16xf32>
    %998 = arith.mulf %997, %996 : vector<1x4x16xf32>
    %999 = arith.addf %993, %998 : vector<1x4x16xf32>
    %1000 = vector.extract_strided_slice %933 {offsets = [0, 0, 6], sizes = [1, 4, 16], strides = [1, 1, 1]} : vector<1x4x22xf32> to vector<1x4x16xf32>
    %1001 = vector.broadcast %995 : f32 to vector<1x4x16xf32>
    %1002 = arith.mulf %1001, %1000 : vector<1x4x16xf32>
    %1003 = arith.addf %999, %1002 : vector<1x4x16xf32>
    %1004 = vector.extract_strided_slice %712 {offsets = [0, 4, 0], sizes = [1, 4, 22], strides = [1, 1, 1]} : vector<1x10x22xf32> to vector<1x4x22xf32>
    %1005 = vector.extract_strided_slice %714 {offsets = [0, 4, 0], sizes = [1, 4, 22], strides = [1, 1, 1]} : vector<1x10x22xf32> to vector<1x4x22xf32>
    %c126 = arith.constant 126 : index
    %1006 = memref.load %arg1[%c126] : memref<294xf32, #tpu.memory_space<smem>>
    %c175 = arith.constant 175 : index
    %1007 = memref.load %arg1[%c175] : memref<294xf32, #tpu.memory_space<smem>>
    %1008 = vector.extract_strided_slice %1004 {offsets = [0, 0, 0], sizes = [1, 4, 16], strides = [1, 1, 1]} : vector<1x4x22xf32> to vector<1x4x16xf32>
    %1009 = vector.broadcast %1006 : f32 to vector<1x4x16xf32>
    %1010 = arith.mulf %1009, %1008 : vector<1x4x16xf32>
    %1011 = arith.addf %1003, %1010 : vector<1x4x16xf32>
    %1012 = vector.extract_strided_slice %1005 {offsets = [0, 0, 0], sizes = [1, 4, 16], strides = [1, 1, 1]} : vector<1x4x22xf32> to vector<1x4x16xf32>
    %1013 = vector.broadcast %1007 : f32 to vector<1x4x16xf32>
    %1014 = arith.mulf %1013, %1012 : vector<1x4x16xf32>
    %1015 = arith.addf %1011, %1014 : vector<1x4x16xf32>
    %c127 = arith.constant 127 : index
    %1016 = memref.load %arg1[%c127] : memref<294xf32, #tpu.memory_space<smem>>
    %c176 = arith.constant 176 : index
    %1017 = memref.load %arg1[%c176] : memref<294xf32, #tpu.memory_space<smem>>
    %1018 = vector.extract_strided_slice %1004 {offsets = [0, 0, 1], sizes = [1, 4, 16], strides = [1, 1, 1]} : vector<1x4x22xf32> to vector<1x4x16xf32>
    %1019 = vector.broadcast %1016 : f32 to vector<1x4x16xf32>
    %1020 = arith.mulf %1019, %1018 : vector<1x4x16xf32>
    %1021 = arith.addf %1015, %1020 : vector<1x4x16xf32>
    %1022 = vector.extract_strided_slice %1005 {offsets = [0, 0, 1], sizes = [1, 4, 16], strides = [1, 1, 1]} : vector<1x4x22xf32> to vector<1x4x16xf32>
    %1023 = vector.broadcast %1017 : f32 to vector<1x4x16xf32>
    %1024 = arith.mulf %1023, %1022 : vector<1x4x16xf32>
    %1025 = arith.addf %1021, %1024 : vector<1x4x16xf32>
    %c128 = arith.constant 128 : index
    %1026 = memref.load %arg1[%c128] : memref<294xf32, #tpu.memory_space<smem>>
    %c177 = arith.constant 177 : index
    %1027 = memref.load %arg1[%c177] : memref<294xf32, #tpu.memory_space<smem>>
    %1028 = vector.extract_strided_slice %1004 {offsets = [0, 0, 2], sizes = [1, 4, 16], strides = [1, 1, 1]} : vector<1x4x22xf32> to vector<1x4x16xf32>
    %1029 = vector.broadcast %1026 : f32 to vector<1x4x16xf32>
    %1030 = arith.mulf %1029, %1028 : vector<1x4x16xf32>
    %1031 = arith.addf %1025, %1030 : vector<1x4x16xf32>
    %1032 = vector.extract_strided_slice %1005 {offsets = [0, 0, 2], sizes = [1, 4, 16], strides = [1, 1, 1]} : vector<1x4x22xf32> to vector<1x4x16xf32>
    %1033 = vector.broadcast %1027 : f32 to vector<1x4x16xf32>
    %1034 = arith.mulf %1033, %1032 : vector<1x4x16xf32>
    %1035 = arith.addf %1031, %1034 : vector<1x4x16xf32>
    %c129 = arith.constant 129 : index
    %1036 = memref.load %arg1[%c129] : memref<294xf32, #tpu.memory_space<smem>>
    %c178 = arith.constant 178 : index
    %1037 = memref.load %arg1[%c178] : memref<294xf32, #tpu.memory_space<smem>>
    %1038 = vector.extract_strided_slice %1004 {offsets = [0, 0, 3], sizes = [1, 4, 16], strides = [1, 1, 1]} : vector<1x4x22xf32> to vector<1x4x16xf32>
    %1039 = vector.broadcast %1036 : f32 to vector<1x4x16xf32>
    %1040 = arith.mulf %1039, %1038 : vector<1x4x16xf32>
    %1041 = arith.addf %1035, %1040 : vector<1x4x16xf32>
    %1042 = vector.extract_strided_slice %1005 {offsets = [0, 0, 3], sizes = [1, 4, 16], strides = [1, 1, 1]} : vector<1x4x22xf32> to vector<1x4x16xf32>
    %1043 = vector.broadcast %1037 : f32 to vector<1x4x16xf32>
    %1044 = arith.mulf %1043, %1042 : vector<1x4x16xf32>
    %1045 = arith.addf %1041, %1044 : vector<1x4x16xf32>
    %c130 = arith.constant 130 : index
    %1046 = memref.load %arg1[%c130] : memref<294xf32, #tpu.memory_space<smem>>
    %c179 = arith.constant 179 : index
    %1047 = memref.load %arg1[%c179] : memref<294xf32, #tpu.memory_space<smem>>
    %1048 = vector.extract_strided_slice %1004 {offsets = [0, 0, 4], sizes = [1, 4, 16], strides = [1, 1, 1]} : vector<1x4x22xf32> to vector<1x4x16xf32>
    %1049 = vector.broadcast %1046 : f32 to vector<1x4x16xf32>
    %1050 = arith.mulf %1049, %1048 : vector<1x4x16xf32>
    %1051 = arith.addf %1045, %1050 : vector<1x4x16xf32>
    %1052 = vector.extract_strided_slice %1005 {offsets = [0, 0, 4], sizes = [1, 4, 16], strides = [1, 1, 1]} : vector<1x4x22xf32> to vector<1x4x16xf32>
    %1053 = vector.broadcast %1047 : f32 to vector<1x4x16xf32>
    %1054 = arith.mulf %1053, %1052 : vector<1x4x16xf32>
    %1055 = arith.addf %1051, %1054 : vector<1x4x16xf32>
    %c131 = arith.constant 131 : index
    %1056 = memref.load %arg1[%c131] : memref<294xf32, #tpu.memory_space<smem>>
    %c180 = arith.constant 180 : index
    %1057 = memref.load %arg1[%c180] : memref<294xf32, #tpu.memory_space<smem>>
    %1058 = vector.extract_strided_slice %1004 {offsets = [0, 0, 5], sizes = [1, 4, 16], strides = [1, 1, 1]} : vector<1x4x22xf32> to vector<1x4x16xf32>
    %1059 = vector.broadcast %1056 : f32 to vector<1x4x16xf32>
    %1060 = arith.mulf %1059, %1058 : vector<1x4x16xf32>
    %1061 = arith.addf %1055, %1060 : vector<1x4x16xf32>
    %1062 = vector.extract_strided_slice %1005 {offsets = [0, 0, 5], sizes = [1, 4, 16], strides = [1, 1, 1]} : vector<1x4x22xf32> to vector<1x4x16xf32>
    %1063 = vector.broadcast %1057 : f32 to vector<1x4x16xf32>
    %1064 = arith.mulf %1063, %1062 : vector<1x4x16xf32>
    %1065 = arith.addf %1061, %1064 : vector<1x4x16xf32>
    %c132 = arith.constant 132 : index
    %1066 = memref.load %arg1[%c132] : memref<294xf32, #tpu.memory_space<smem>>
    %c181 = arith.constant 181 : index
    %1067 = memref.load %arg1[%c181] : memref<294xf32, #tpu.memory_space<smem>>
    %1068 = vector.extract_strided_slice %1004 {offsets = [0, 0, 6], sizes = [1, 4, 16], strides = [1, 1, 1]} : vector<1x4x22xf32> to vector<1x4x16xf32>
    %1069 = vector.broadcast %1066 : f32 to vector<1x4x16xf32>
    %1070 = arith.mulf %1069, %1068 : vector<1x4x16xf32>
    %1071 = arith.addf %1065, %1070 : vector<1x4x16xf32>
    %1072 = vector.extract_strided_slice %1005 {offsets = [0, 0, 6], sizes = [1, 4, 16], strides = [1, 1, 1]} : vector<1x4x22xf32> to vector<1x4x16xf32>
    %1073 = vector.broadcast %1067 : f32 to vector<1x4x16xf32>
    %1074 = arith.mulf %1073, %1072 : vector<1x4x16xf32>
    %1075 = arith.addf %1071, %1074 : vector<1x4x16xf32>
    %1076 = vector.extract_strided_slice %712 {offsets = [0, 5, 0], sizes = [1, 4, 22], strides = [1, 1, 1]} : vector<1x10x22xf32> to vector<1x4x22xf32>
    %1077 = vector.extract_strided_slice %714 {offsets = [0, 5, 0], sizes = [1, 4, 22], strides = [1, 1, 1]} : vector<1x10x22xf32> to vector<1x4x22xf32>
    %c133 = arith.constant 133 : index
    %1078 = memref.load %arg1[%c133] : memref<294xf32, #tpu.memory_space<smem>>
    %c182 = arith.constant 182 : index
    %1079 = memref.load %arg1[%c182] : memref<294xf32, #tpu.memory_space<smem>>
    %1080 = vector.extract_strided_slice %1076 {offsets = [0, 0, 0], sizes = [1, 4, 16], strides = [1, 1, 1]} : vector<1x4x22xf32> to vector<1x4x16xf32>
    %1081 = vector.broadcast %1078 : f32 to vector<1x4x16xf32>
    %1082 = arith.mulf %1081, %1080 : vector<1x4x16xf32>
    %1083 = arith.addf %1075, %1082 : vector<1x4x16xf32>
    %1084 = vector.extract_strided_slice %1077 {offsets = [0, 0, 0], sizes = [1, 4, 16], strides = [1, 1, 1]} : vector<1x4x22xf32> to vector<1x4x16xf32>
    %1085 = vector.broadcast %1079 : f32 to vector<1x4x16xf32>
    %1086 = arith.mulf %1085, %1084 : vector<1x4x16xf32>
    %1087 = arith.addf %1083, %1086 : vector<1x4x16xf32>
    %c134 = arith.constant 134 : index
    %1088 = memref.load %arg1[%c134] : memref<294xf32, #tpu.memory_space<smem>>
    %c183 = arith.constant 183 : index
    %1089 = memref.load %arg1[%c183] : memref<294xf32, #tpu.memory_space<smem>>
    %1090 = vector.extract_strided_slice %1076 {offsets = [0, 0, 1], sizes = [1, 4, 16], strides = [1, 1, 1]} : vector<1x4x22xf32> to vector<1x4x16xf32>
    %1091 = vector.broadcast %1088 : f32 to vector<1x4x16xf32>
    %1092 = arith.mulf %1091, %1090 : vector<1x4x16xf32>
    %1093 = arith.addf %1087, %1092 : vector<1x4x16xf32>
    %1094 = vector.extract_strided_slice %1077 {offsets = [0, 0, 1], sizes = [1, 4, 16], strides = [1, 1, 1]} : vector<1x4x22xf32> to vector<1x4x16xf32>
    %1095 = vector.broadcast %1089 : f32 to vector<1x4x16xf32>
    %1096 = arith.mulf %1095, %1094 : vector<1x4x16xf32>
    %1097 = arith.addf %1093, %1096 : vector<1x4x16xf32>
    %c135 = arith.constant 135 : index
    %1098 = memref.load %arg1[%c135] : memref<294xf32, #tpu.memory_space<smem>>
    %c184 = arith.constant 184 : index
    %1099 = memref.load %arg1[%c184] : memref<294xf32, #tpu.memory_space<smem>>
    %1100 = vector.extract_strided_slice %1076 {offsets = [0, 0, 2], sizes = [1, 4, 16], strides = [1, 1, 1]} : vector<1x4x22xf32> to vector<1x4x16xf32>
    %1101 = vector.broadcast %1098 : f32 to vector<1x4x16xf32>
    %1102 = arith.mulf %1101, %1100 : vector<1x4x16xf32>
    %1103 = arith.addf %1097, %1102 : vector<1x4x16xf32>
    %1104 = vector.extract_strided_slice %1077 {offsets = [0, 0, 2], sizes = [1, 4, 16], strides = [1, 1, 1]} : vector<1x4x22xf32> to vector<1x4x16xf32>
    %1105 = vector.broadcast %1099 : f32 to vector<1x4x16xf32>
    %1106 = arith.mulf %1105, %1104 : vector<1x4x16xf32>
    %1107 = arith.addf %1103, %1106 : vector<1x4x16xf32>
    %c136 = arith.constant 136 : index
    %1108 = memref.load %arg1[%c136] : memref<294xf32, #tpu.memory_space<smem>>
    %c185 = arith.constant 185 : index
    %1109 = memref.load %arg1[%c185] : memref<294xf32, #tpu.memory_space<smem>>
    %1110 = vector.extract_strided_slice %1076 {offsets = [0, 0, 3], sizes = [1, 4, 16], strides = [1, 1, 1]} : vector<1x4x22xf32> to vector<1x4x16xf32>
    %1111 = vector.broadcast %1108 : f32 to vector<1x4x16xf32>
    %1112 = arith.mulf %1111, %1110 : vector<1x4x16xf32>
    %1113 = arith.addf %1107, %1112 : vector<1x4x16xf32>
    %1114 = vector.extract_strided_slice %1077 {offsets = [0, 0, 3], sizes = [1, 4, 16], strides = [1, 1, 1]} : vector<1x4x22xf32> to vector<1x4x16xf32>
    %1115 = vector.broadcast %1109 : f32 to vector<1x4x16xf32>
    %1116 = arith.mulf %1115, %1114 : vector<1x4x16xf32>
    %1117 = arith.addf %1113, %1116 : vector<1x4x16xf32>
    %c137 = arith.constant 137 : index
    %1118 = memref.load %arg1[%c137] : memref<294xf32, #tpu.memory_space<smem>>
    %c186 = arith.constant 186 : index
    %1119 = memref.load %arg1[%c186] : memref<294xf32, #tpu.memory_space<smem>>
    %1120 = vector.extract_strided_slice %1076 {offsets = [0, 0, 4], sizes = [1, 4, 16], strides = [1, 1, 1]} : vector<1x4x22xf32> to vector<1x4x16xf32>
    %1121 = vector.broadcast %1118 : f32 to vector<1x4x16xf32>
    %1122 = arith.mulf %1121, %1120 : vector<1x4x16xf32>
    %1123 = arith.addf %1117, %1122 : vector<1x4x16xf32>
    %1124 = vector.extract_strided_slice %1077 {offsets = [0, 0, 4], sizes = [1, 4, 16], strides = [1, 1, 1]} : vector<1x4x22xf32> to vector<1x4x16xf32>
    %1125 = vector.broadcast %1119 : f32 to vector<1x4x16xf32>
    %1126 = arith.mulf %1125, %1124 : vector<1x4x16xf32>
    %1127 = arith.addf %1123, %1126 : vector<1x4x16xf32>
    %c138 = arith.constant 138 : index
    %1128 = memref.load %arg1[%c138] : memref<294xf32, #tpu.memory_space<smem>>
    %c187 = arith.constant 187 : index
    %1129 = memref.load %arg1[%c187] : memref<294xf32, #tpu.memory_space<smem>>
    %1130 = vector.extract_strided_slice %1076 {offsets = [0, 0, 5], sizes = [1, 4, 16], strides = [1, 1, 1]} : vector<1x4x22xf32> to vector<1x4x16xf32>
    %1131 = vector.broadcast %1128 : f32 to vector<1x4x16xf32>
    %1132 = arith.mulf %1131, %1130 : vector<1x4x16xf32>
    %1133 = arith.addf %1127, %1132 : vector<1x4x16xf32>
    %1134 = vector.extract_strided_slice %1077 {offsets = [0, 0, 5], sizes = [1, 4, 16], strides = [1, 1, 1]} : vector<1x4x22xf32> to vector<1x4x16xf32>
    %1135 = vector.broadcast %1129 : f32 to vector<1x4x16xf32>
    %1136 = arith.mulf %1135, %1134 : vector<1x4x16xf32>
    %1137 = arith.addf %1133, %1136 : vector<1x4x16xf32>
    %c139 = arith.constant 139 : index
    %1138 = memref.load %arg1[%c139] : memref<294xf32, #tpu.memory_space<smem>>
    %c188 = arith.constant 188 : index
    %1139 = memref.load %arg1[%c188] : memref<294xf32, #tpu.memory_space<smem>>
    %1140 = vector.extract_strided_slice %1076 {offsets = [0, 0, 6], sizes = [1, 4, 16], strides = [1, 1, 1]} : vector<1x4x22xf32> to vector<1x4x16xf32>
    %1141 = vector.broadcast %1138 : f32 to vector<1x4x16xf32>
    %1142 = arith.mulf %1141, %1140 : vector<1x4x16xf32>
    %1143 = arith.addf %1137, %1142 : vector<1x4x16xf32>
    %1144 = vector.extract_strided_slice %1077 {offsets = [0, 0, 6], sizes = [1, 4, 16], strides = [1, 1, 1]} : vector<1x4x22xf32> to vector<1x4x16xf32>
    %1145 = vector.broadcast %1139 : f32 to vector<1x4x16xf32>
    %1146 = arith.mulf %1145, %1144 : vector<1x4x16xf32>
    %1147 = arith.addf %1143, %1146 : vector<1x4x16xf32>
    %1148 = vector.extract_strided_slice %712 {offsets = [0, 6, 0], sizes = [1, 4, 22], strides = [1, 1, 1]} : vector<1x10x22xf32> to vector<1x4x22xf32>
    %1149 = vector.extract_strided_slice %714 {offsets = [0, 6, 0], sizes = [1, 4, 22], strides = [1, 1, 1]} : vector<1x10x22xf32> to vector<1x4x22xf32>
    %c140 = arith.constant 140 : index
    %1150 = memref.load %arg1[%c140] : memref<294xf32, #tpu.memory_space<smem>>
    %c189 = arith.constant 189 : index
    %1151 = memref.load %arg1[%c189] : memref<294xf32, #tpu.memory_space<smem>>
    %1152 = vector.extract_strided_slice %1148 {offsets = [0, 0, 0], sizes = [1, 4, 16], strides = [1, 1, 1]} : vector<1x4x22xf32> to vector<1x4x16xf32>
    %1153 = vector.broadcast %1150 : f32 to vector<1x4x16xf32>
    %1154 = arith.mulf %1153, %1152 : vector<1x4x16xf32>
    %1155 = arith.addf %1147, %1154 : vector<1x4x16xf32>
    %1156 = vector.extract_strided_slice %1149 {offsets = [0, 0, 0], sizes = [1, 4, 16], strides = [1, 1, 1]} : vector<1x4x22xf32> to vector<1x4x16xf32>
    %1157 = vector.broadcast %1151 : f32 to vector<1x4x16xf32>
    %1158 = arith.mulf %1157, %1156 : vector<1x4x16xf32>
    %1159 = arith.addf %1155, %1158 : vector<1x4x16xf32>
    %c141 = arith.constant 141 : index
    %1160 = memref.load %arg1[%c141] : memref<294xf32, #tpu.memory_space<smem>>
    %c190 = arith.constant 190 : index
    %1161 = memref.load %arg1[%c190] : memref<294xf32, #tpu.memory_space<smem>>
    %1162 = vector.extract_strided_slice %1148 {offsets = [0, 0, 1], sizes = [1, 4, 16], strides = [1, 1, 1]} : vector<1x4x22xf32> to vector<1x4x16xf32>
    %1163 = vector.broadcast %1160 : f32 to vector<1x4x16xf32>
    %1164 = arith.mulf %1163, %1162 : vector<1x4x16xf32>
    %1165 = arith.addf %1159, %1164 : vector<1x4x16xf32>
    %1166 = vector.extract_strided_slice %1149 {offsets = [0, 0, 1], sizes = [1, 4, 16], strides = [1, 1, 1]} : vector<1x4x22xf32> to vector<1x4x16xf32>
    %1167 = vector.broadcast %1161 : f32 to vector<1x4x16xf32>
    %1168 = arith.mulf %1167, %1166 : vector<1x4x16xf32>
    %1169 = arith.addf %1165, %1168 : vector<1x4x16xf32>
    %c142 = arith.constant 142 : index
    %1170 = memref.load %arg1[%c142] : memref<294xf32, #tpu.memory_space<smem>>
    %c191 = arith.constant 191 : index
    %1171 = memref.load %arg1[%c191] : memref<294xf32, #tpu.memory_space<smem>>
    %1172 = vector.extract_strided_slice %1148 {offsets = [0, 0, 2], sizes = [1, 4, 16], strides = [1, 1, 1]} : vector<1x4x22xf32> to vector<1x4x16xf32>
    %1173 = vector.broadcast %1170 : f32 to vector<1x4x16xf32>
    %1174 = arith.mulf %1173, %1172 : vector<1x4x16xf32>
    %1175 = arith.addf %1169, %1174 : vector<1x4x16xf32>
    %1176 = vector.extract_strided_slice %1149 {offsets = [0, 0, 2], sizes = [1, 4, 16], strides = [1, 1, 1]} : vector<1x4x22xf32> to vector<1x4x16xf32>
    %1177 = vector.broadcast %1171 : f32 to vector<1x4x16xf32>
    %1178 = arith.mulf %1177, %1176 : vector<1x4x16xf32>
    %1179 = arith.addf %1175, %1178 : vector<1x4x16xf32>
    %c143 = arith.constant 143 : index
    %1180 = memref.load %arg1[%c143] : memref<294xf32, #tpu.memory_space<smem>>
    %c192 = arith.constant 192 : index
    %1181 = memref.load %arg1[%c192] : memref<294xf32, #tpu.memory_space<smem>>
    %1182 = vector.extract_strided_slice %1148 {offsets = [0, 0, 3], sizes = [1, 4, 16], strides = [1, 1, 1]} : vector<1x4x22xf32> to vector<1x4x16xf32>
    %1183 = vector.broadcast %1180 : f32 to vector<1x4x16xf32>
    %1184 = arith.mulf %1183, %1182 : vector<1x4x16xf32>
    %1185 = arith.addf %1179, %1184 : vector<1x4x16xf32>
    %1186 = vector.extract_strided_slice %1149 {offsets = [0, 0, 3], sizes = [1, 4, 16], strides = [1, 1, 1]} : vector<1x4x22xf32> to vector<1x4x16xf32>
    %1187 = vector.broadcast %1181 : f32 to vector<1x4x16xf32>
    %1188 = arith.mulf %1187, %1186 : vector<1x4x16xf32>
    %1189 = arith.addf %1185, %1188 : vector<1x4x16xf32>
    %c144 = arith.constant 144 : index
    %1190 = memref.load %arg1[%c144] : memref<294xf32, #tpu.memory_space<smem>>
    %c193 = arith.constant 193 : index
    %1191 = memref.load %arg1[%c193] : memref<294xf32, #tpu.memory_space<smem>>
    %1192 = vector.extract_strided_slice %1148 {offsets = [0, 0, 4], sizes = [1, 4, 16], strides = [1, 1, 1]} : vector<1x4x22xf32> to vector<1x4x16xf32>
    %1193 = vector.broadcast %1190 : f32 to vector<1x4x16xf32>
    %1194 = arith.mulf %1193, %1192 : vector<1x4x16xf32>
    %1195 = arith.addf %1189, %1194 : vector<1x4x16xf32>
    %1196 = vector.extract_strided_slice %1149 {offsets = [0, 0, 4], sizes = [1, 4, 16], strides = [1, 1, 1]} : vector<1x4x22xf32> to vector<1x4x16xf32>
    %1197 = vector.broadcast %1191 : f32 to vector<1x4x16xf32>
    %1198 = arith.mulf %1197, %1196 : vector<1x4x16xf32>
    %1199 = arith.addf %1195, %1198 : vector<1x4x16xf32>
    %c145 = arith.constant 145 : index
    %1200 = memref.load %arg1[%c145] : memref<294xf32, #tpu.memory_space<smem>>
    %c194 = arith.constant 194 : index
    %1201 = memref.load %arg1[%c194] : memref<294xf32, #tpu.memory_space<smem>>
    %1202 = vector.extract_strided_slice %1148 {offsets = [0, 0, 5], sizes = [1, 4, 16], strides = [1, 1, 1]} : vector<1x4x22xf32> to vector<1x4x16xf32>
    %1203 = vector.broadcast %1200 : f32 to vector<1x4x16xf32>
    %1204 = arith.mulf %1203, %1202 : vector<1x4x16xf32>
    %1205 = arith.addf %1199, %1204 : vector<1x4x16xf32>
    %1206 = vector.extract_strided_slice %1149 {offsets = [0, 0, 5], sizes = [1, 4, 16], strides = [1, 1, 1]} : vector<1x4x22xf32> to vector<1x4x16xf32>
    %1207 = vector.broadcast %1201 : f32 to vector<1x4x16xf32>
    %1208 = arith.mulf %1207, %1206 : vector<1x4x16xf32>
    %1209 = arith.addf %1205, %1208 : vector<1x4x16xf32>
    %c146 = arith.constant 146 : index
    %1210 = memref.load %arg1[%c146] : memref<294xf32, #tpu.memory_space<smem>>
    %c195 = arith.constant 195 : index
    %1211 = memref.load %arg1[%c195] : memref<294xf32, #tpu.memory_space<smem>>
    %1212 = vector.extract_strided_slice %1148 {offsets = [0, 0, 6], sizes = [1, 4, 16], strides = [1, 1, 1]} : vector<1x4x22xf32> to vector<1x4x16xf32>
    %1213 = vector.broadcast %1210 : f32 to vector<1x4x16xf32>
    %1214 = arith.mulf %1213, %1212 : vector<1x4x16xf32>
    %1215 = arith.addf %1209, %1214 : vector<1x4x16xf32>
    %1216 = vector.extract_strided_slice %1149 {offsets = [0, 0, 6], sizes = [1, 4, 16], strides = [1, 1, 1]} : vector<1x4x22xf32> to vector<1x4x16xf32>
    %1217 = vector.broadcast %1211 : f32 to vector<1x4x16xf32>
    %1218 = arith.mulf %1217, %1216 : vector<1x4x16xf32>
    %1219 = arith.addf %1215, %1218 : vector<1x4x16xf32>
    %c2_79 = arith.constant 2 : index
    %1220 = memref.load %arg2[%c2_79] : memref<6xf32, #tpu.memory_space<smem>>
    %1221 = vector.broadcast %1220 : f32 to vector<1x4x16xf32>
    %1222 = arith.mulf %1219, %1221 : vector<1x4x16xf32>
    %c3_80 = arith.constant 3 : index
    %1223 = memref.load %arg2[%c3_80] : memref<6xf32, #tpu.memory_space<smem>>
    %1224 = vector.broadcast %1223 : f32 to vector<1x4x16xf32>
    %1225 = arith.addf %1222, %1224 : vector<1x4x16xf32>
    %1226 = arith.negf %1225 : vector<1x4x16xf32>
    %1227 = math.exp %1226 : vector<1x4x16xf32>
    %cst_81 = arith.constant 1.000000e+00 : f32
    %1228 = vector.broadcast %cst_81 : f32 to vector<1x4x16xf32>
    %1229 = arith.addf %1228, %1227 : vector<1x4x16xf32>
    %1230 = arith.divf %1228, %1229 : vector<1x4x16xf32>
    %cst_82 = arith.constant 0.333333343 : f32
    %1231 = vector.broadcast %cst_82 : f32 to vector<1x4x16xf32>
    %1232 = arith.mulf %1230, %1231 : vector<1x4x16xf32>
    %cst_83 = arith.constant 0.000000e+00 : f32
    %1233 = vector.broadcast %cst_83 : f32 to vector<1x3x16xf32>
    %cst_84 = arith.constant 0.000000e+00 : f32
    %1234 = vector.broadcast %cst_84 : f32 to vector<1x10x3xf32>
    %1235 = tpu.concatenate %1233, %181, %1233 in 1 : vector<1x3x16xf32>, vector<1x4x16xf32>, vector<1x3x16xf32> -> vector<1x10x16xf32>
    %1236 = tpu.concatenate %1234, %1235, %1234 in 2 : vector<1x10x3xf32>, vector<1x10x16xf32>, vector<1x10x3xf32> -> vector<1x10x22xf32>
    %1237 = tpu.concatenate %1233, %184, %1233 in 1 : vector<1x3x16xf32>, vector<1x4x16xf32>, vector<1x3x16xf32> -> vector<1x10x16xf32>
    %1238 = tpu.concatenate %1234, %1237, %1234 in 2 : vector<1x10x3xf32>, vector<1x10x16xf32>, vector<1x10x3xf32> -> vector<1x10x22xf32>
    %cst_85 = arith.constant 0.000000e+00 : f32
    %1239 = vector.broadcast %cst_85 : f32 to vector<1x4x16xf32>
    %1240 = vector.extract_strided_slice %1236 {offsets = [0, 0, 0], sizes = [1, 4, 22], strides = [1, 1, 1]} : vector<1x10x22xf32> to vector<1x4x22xf32>
    %1241 = vector.extract_strided_slice %1238 {offsets = [0, 0, 0], sizes = [1, 4, 22], strides = [1, 1, 1]} : vector<1x10x22xf32> to vector<1x4x22xf32>
    %c196 = arith.constant 196 : index
    %1242 = memref.load %arg1[%c196] : memref<294xf32, #tpu.memory_space<smem>>
    %c245 = arith.constant 245 : index
    %1243 = memref.load %arg1[%c245] : memref<294xf32, #tpu.memory_space<smem>>
    %1244 = vector.extract_strided_slice %1240 {offsets = [0, 0, 0], sizes = [1, 4, 16], strides = [1, 1, 1]} : vector<1x4x22xf32> to vector<1x4x16xf32>
    %1245 = vector.broadcast %1242 : f32 to vector<1x4x16xf32>
    %1246 = arith.mulf %1245, %1244 : vector<1x4x16xf32>
    %1247 = arith.addf %1239, %1246 : vector<1x4x16xf32>
    %1248 = vector.extract_strided_slice %1241 {offsets = [0, 0, 0], sizes = [1, 4, 16], strides = [1, 1, 1]} : vector<1x4x22xf32> to vector<1x4x16xf32>
    %1249 = vector.broadcast %1243 : f32 to vector<1x4x16xf32>
    %1250 = arith.mulf %1249, %1248 : vector<1x4x16xf32>
    %1251 = arith.addf %1247, %1250 : vector<1x4x16xf32>
    %c203 = arith.constant 203 : index
    %1252 = memref.load %arg1[%c203] : memref<294xf32, #tpu.memory_space<smem>>
    %c252 = arith.constant 252 : index
    %1253 = memref.load %arg1[%c252] : memref<294xf32, #tpu.memory_space<smem>>
    %1254 = vector.extract_strided_slice %1240 {offsets = [0, 0, 1], sizes = [1, 4, 16], strides = [1, 1, 1]} : vector<1x4x22xf32> to vector<1x4x16xf32>
    %1255 = vector.broadcast %1252 : f32 to vector<1x4x16xf32>
    %1256 = arith.mulf %1255, %1254 : vector<1x4x16xf32>
    %1257 = arith.addf %1251, %1256 : vector<1x4x16xf32>
    %1258 = vector.extract_strided_slice %1241 {offsets = [0, 0, 1], sizes = [1, 4, 16], strides = [1, 1, 1]} : vector<1x4x22xf32> to vector<1x4x16xf32>
    %1259 = vector.broadcast %1253 : f32 to vector<1x4x16xf32>
    %1260 = arith.mulf %1259, %1258 : vector<1x4x16xf32>
    %1261 = arith.addf %1257, %1260 : vector<1x4x16xf32>
    %c210 = arith.constant 210 : index
    %1262 = memref.load %arg1[%c210] : memref<294xf32, #tpu.memory_space<smem>>
    %c259 = arith.constant 259 : index
    %1263 = memref.load %arg1[%c259] : memref<294xf32, #tpu.memory_space<smem>>
    %1264 = vector.extract_strided_slice %1240 {offsets = [0, 0, 2], sizes = [1, 4, 16], strides = [1, 1, 1]} : vector<1x4x22xf32> to vector<1x4x16xf32>
    %1265 = vector.broadcast %1262 : f32 to vector<1x4x16xf32>
    %1266 = arith.mulf %1265, %1264 : vector<1x4x16xf32>
    %1267 = arith.addf %1261, %1266 : vector<1x4x16xf32>
    %1268 = vector.extract_strided_slice %1241 {offsets = [0, 0, 2], sizes = [1, 4, 16], strides = [1, 1, 1]} : vector<1x4x22xf32> to vector<1x4x16xf32>
    %1269 = vector.broadcast %1263 : f32 to vector<1x4x16xf32>
    %1270 = arith.mulf %1269, %1268 : vector<1x4x16xf32>
    %1271 = arith.addf %1267, %1270 : vector<1x4x16xf32>
    %c217 = arith.constant 217 : index
    %1272 = memref.load %arg1[%c217] : memref<294xf32, #tpu.memory_space<smem>>
    %c266 = arith.constant 266 : index
    %1273 = memref.load %arg1[%c266] : memref<294xf32, #tpu.memory_space<smem>>
    %1274 = vector.extract_strided_slice %1240 {offsets = [0, 0, 3], sizes = [1, 4, 16], strides = [1, 1, 1]} : vector<1x4x22xf32> to vector<1x4x16xf32>
    %1275 = vector.broadcast %1272 : f32 to vector<1x4x16xf32>
    %1276 = arith.mulf %1275, %1274 : vector<1x4x16xf32>
    %1277 = arith.addf %1271, %1276 : vector<1x4x16xf32>
    %1278 = vector.extract_strided_slice %1241 {offsets = [0, 0, 3], sizes = [1, 4, 16], strides = [1, 1, 1]} : vector<1x4x22xf32> to vector<1x4x16xf32>
    %1279 = vector.broadcast %1273 : f32 to vector<1x4x16xf32>
    %1280 = arith.mulf %1279, %1278 : vector<1x4x16xf32>
    %1281 = arith.addf %1277, %1280 : vector<1x4x16xf32>
    %c224 = arith.constant 224 : index
    %1282 = memref.load %arg1[%c224] : memref<294xf32, #tpu.memory_space<smem>>
    %c273 = arith.constant 273 : index
    %1283 = memref.load %arg1[%c273] : memref<294xf32, #tpu.memory_space<smem>>
    %1284 = vector.extract_strided_slice %1240 {offsets = [0, 0, 4], sizes = [1, 4, 16], strides = [1, 1, 1]} : vector<1x4x22xf32> to vector<1x4x16xf32>
    %1285 = vector.broadcast %1282 : f32 to vector<1x4x16xf32>
    %1286 = arith.mulf %1285, %1284 : vector<1x4x16xf32>
    %1287 = arith.addf %1281, %1286 : vector<1x4x16xf32>
    %1288 = vector.extract_strided_slice %1241 {offsets = [0, 0, 4], sizes = [1, 4, 16], strides = [1, 1, 1]} : vector<1x4x22xf32> to vector<1x4x16xf32>
    %1289 = vector.broadcast %1283 : f32 to vector<1x4x16xf32>
    %1290 = arith.mulf %1289, %1288 : vector<1x4x16xf32>
    %1291 = arith.addf %1287, %1290 : vector<1x4x16xf32>
    %c231 = arith.constant 231 : index
    %1292 = memref.load %arg1[%c231] : memref<294xf32, #tpu.memory_space<smem>>
    %c280 = arith.constant 280 : index
    %1293 = memref.load %arg1[%c280] : memref<294xf32, #tpu.memory_space<smem>>
    %1294 = vector.extract_strided_slice %1240 {offsets = [0, 0, 5], sizes = [1, 4, 16], strides = [1, 1, 1]} : vector<1x4x22xf32> to vector<1x4x16xf32>
    %1295 = vector.broadcast %1292 : f32 to vector<1x4x16xf32>
    %1296 = arith.mulf %1295, %1294 : vector<1x4x16xf32>
    %1297 = arith.addf %1291, %1296 : vector<1x4x16xf32>
    %1298 = vector.extract_strided_slice %1241 {offsets = [0, 0, 5], sizes = [1, 4, 16], strides = [1, 1, 1]} : vector<1x4x22xf32> to vector<1x4x16xf32>
    %1299 = vector.broadcast %1293 : f32 to vector<1x4x16xf32>
    %1300 = arith.mulf %1299, %1298 : vector<1x4x16xf32>
    %1301 = arith.addf %1297, %1300 : vector<1x4x16xf32>
    %c238 = arith.constant 238 : index
    %1302 = memref.load %arg1[%c238] : memref<294xf32, #tpu.memory_space<smem>>
    %c287 = arith.constant 287 : index
    %1303 = memref.load %arg1[%c287] : memref<294xf32, #tpu.memory_space<smem>>
    %1304 = vector.extract_strided_slice %1240 {offsets = [0, 0, 6], sizes = [1, 4, 16], strides = [1, 1, 1]} : vector<1x4x22xf32> to vector<1x4x16xf32>
    %1305 = vector.broadcast %1302 : f32 to vector<1x4x16xf32>
    %1306 = arith.mulf %1305, %1304 : vector<1x4x16xf32>
    %1307 = arith.addf %1301, %1306 : vector<1x4x16xf32>
    %1308 = vector.extract_strided_slice %1241 {offsets = [0, 0, 6], sizes = [1, 4, 16], strides = [1, 1, 1]} : vector<1x4x22xf32> to vector<1x4x16xf32>
    %1309 = vector.broadcast %1303 : f32 to vector<1x4x16xf32>
    %1310 = arith.mulf %1309, %1308 : vector<1x4x16xf32>
    %1311 = arith.addf %1307, %1310 : vector<1x4x16xf32>
    %1312 = vector.extract_strided_slice %1236 {offsets = [0, 1, 0], sizes = [1, 4, 22], strides = [1, 1, 1]} : vector<1x10x22xf32> to vector<1x4x22xf32>
    %1313 = vector.extract_strided_slice %1238 {offsets = [0, 1, 0], sizes = [1, 4, 22], strides = [1, 1, 1]} : vector<1x10x22xf32> to vector<1x4x22xf32>
    %c197 = arith.constant 197 : index
    %1314 = memref.load %arg1[%c197] : memref<294xf32, #tpu.memory_space<smem>>
    %c246 = arith.constant 246 : index
    %1315 = memref.load %arg1[%c246] : memref<294xf32, #tpu.memory_space<smem>>
    %1316 = vector.extract_strided_slice %1312 {offsets = [0, 0, 0], sizes = [1, 4, 16], strides = [1, 1, 1]} : vector<1x4x22xf32> to vector<1x4x16xf32>
    %1317 = vector.broadcast %1314 : f32 to vector<1x4x16xf32>
    %1318 = arith.mulf %1317, %1316 : vector<1x4x16xf32>
    %1319 = arith.addf %1311, %1318 : vector<1x4x16xf32>
    %1320 = vector.extract_strided_slice %1313 {offsets = [0, 0, 0], sizes = [1, 4, 16], strides = [1, 1, 1]} : vector<1x4x22xf32> to vector<1x4x16xf32>
    %1321 = vector.broadcast %1315 : f32 to vector<1x4x16xf32>
    %1322 = arith.mulf %1321, %1320 : vector<1x4x16xf32>
    %1323 = arith.addf %1319, %1322 : vector<1x4x16xf32>
    %c204 = arith.constant 204 : index
    %1324 = memref.load %arg1[%c204] : memref<294xf32, #tpu.memory_space<smem>>
    %c253 = arith.constant 253 : index
    %1325 = memref.load %arg1[%c253] : memref<294xf32, #tpu.memory_space<smem>>
    %1326 = vector.extract_strided_slice %1312 {offsets = [0, 0, 1], sizes = [1, 4, 16], strides = [1, 1, 1]} : vector<1x4x22xf32> to vector<1x4x16xf32>
    %1327 = vector.broadcast %1324 : f32 to vector<1x4x16xf32>
    %1328 = arith.mulf %1327, %1326 : vector<1x4x16xf32>
    %1329 = arith.addf %1323, %1328 : vector<1x4x16xf32>
    %1330 = vector.extract_strided_slice %1313 {offsets = [0, 0, 1], sizes = [1, 4, 16], strides = [1, 1, 1]} : vector<1x4x22xf32> to vector<1x4x16xf32>
    %1331 = vector.broadcast %1325 : f32 to vector<1x4x16xf32>
    %1332 = arith.mulf %1331, %1330 : vector<1x4x16xf32>
    %1333 = arith.addf %1329, %1332 : vector<1x4x16xf32>
    %c211 = arith.constant 211 : index
    %1334 = memref.load %arg1[%c211] : memref<294xf32, #tpu.memory_space<smem>>
    %c260 = arith.constant 260 : index
    %1335 = memref.load %arg1[%c260] : memref<294xf32, #tpu.memory_space<smem>>
    %1336 = vector.extract_strided_slice %1312 {offsets = [0, 0, 2], sizes = [1, 4, 16], strides = [1, 1, 1]} : vector<1x4x22xf32> to vector<1x4x16xf32>
    %1337 = vector.broadcast %1334 : f32 to vector<1x4x16xf32>
    %1338 = arith.mulf %1337, %1336 : vector<1x4x16xf32>
    %1339 = arith.addf %1333, %1338 : vector<1x4x16xf32>
    %1340 = vector.extract_strided_slice %1313 {offsets = [0, 0, 2], sizes = [1, 4, 16], strides = [1, 1, 1]} : vector<1x4x22xf32> to vector<1x4x16xf32>
    %1341 = vector.broadcast %1335 : f32 to vector<1x4x16xf32>
    %1342 = arith.mulf %1341, %1340 : vector<1x4x16xf32>
    %1343 = arith.addf %1339, %1342 : vector<1x4x16xf32>
    %c218 = arith.constant 218 : index
    %1344 = memref.load %arg1[%c218] : memref<294xf32, #tpu.memory_space<smem>>
    %c267 = arith.constant 267 : index
    %1345 = memref.load %arg1[%c267] : memref<294xf32, #tpu.memory_space<smem>>
    %1346 = vector.extract_strided_slice %1312 {offsets = [0, 0, 3], sizes = [1, 4, 16], strides = [1, 1, 1]} : vector<1x4x22xf32> to vector<1x4x16xf32>
    %1347 = vector.broadcast %1344 : f32 to vector<1x4x16xf32>
    %1348 = arith.mulf %1347, %1346 : vector<1x4x16xf32>
    %1349 = arith.addf %1343, %1348 : vector<1x4x16xf32>
    %1350 = vector.extract_strided_slice %1313 {offsets = [0, 0, 3], sizes = [1, 4, 16], strides = [1, 1, 1]} : vector<1x4x22xf32> to vector<1x4x16xf32>
    %1351 = vector.broadcast %1345 : f32 to vector<1x4x16xf32>
    %1352 = arith.mulf %1351, %1350 : vector<1x4x16xf32>
    %1353 = arith.addf %1349, %1352 : vector<1x4x16xf32>
    %c225 = arith.constant 225 : index
    %1354 = memref.load %arg1[%c225] : memref<294xf32, #tpu.memory_space<smem>>
    %c274 = arith.constant 274 : index
    %1355 = memref.load %arg1[%c274] : memref<294xf32, #tpu.memory_space<smem>>
    %1356 = vector.extract_strided_slice %1312 {offsets = [0, 0, 4], sizes = [1, 4, 16], strides = [1, 1, 1]} : vector<1x4x22xf32> to vector<1x4x16xf32>
    %1357 = vector.broadcast %1354 : f32 to vector<1x4x16xf32>
    %1358 = arith.mulf %1357, %1356 : vector<1x4x16xf32>
    %1359 = arith.addf %1353, %1358 : vector<1x4x16xf32>
    %1360 = vector.extract_strided_slice %1313 {offsets = [0, 0, 4], sizes = [1, 4, 16], strides = [1, 1, 1]} : vector<1x4x22xf32> to vector<1x4x16xf32>
    %1361 = vector.broadcast %1355 : f32 to vector<1x4x16xf32>
    %1362 = arith.mulf %1361, %1360 : vector<1x4x16xf32>
    %1363 = arith.addf %1359, %1362 : vector<1x4x16xf32>
    %c232 = arith.constant 232 : index
    %1364 = memref.load %arg1[%c232] : memref<294xf32, #tpu.memory_space<smem>>
    %c281 = arith.constant 281 : index
    %1365 = memref.load %arg1[%c281] : memref<294xf32, #tpu.memory_space<smem>>
    %1366 = vector.extract_strided_slice %1312 {offsets = [0, 0, 5], sizes = [1, 4, 16], strides = [1, 1, 1]} : vector<1x4x22xf32> to vector<1x4x16xf32>
    %1367 = vector.broadcast %1364 : f32 to vector<1x4x16xf32>
    %1368 = arith.mulf %1367, %1366 : vector<1x4x16xf32>
    %1369 = arith.addf %1363, %1368 : vector<1x4x16xf32>
    %1370 = vector.extract_strided_slice %1313 {offsets = [0, 0, 5], sizes = [1, 4, 16], strides = [1, 1, 1]} : vector<1x4x22xf32> to vector<1x4x16xf32>
    %1371 = vector.broadcast %1365 : f32 to vector<1x4x16xf32>
    %1372 = arith.mulf %1371, %1370 : vector<1x4x16xf32>
    %1373 = arith.addf %1369, %1372 : vector<1x4x16xf32>
    %c239 = arith.constant 239 : index
    %1374 = memref.load %arg1[%c239] : memref<294xf32, #tpu.memory_space<smem>>
    %c288 = arith.constant 288 : index
    %1375 = memref.load %arg1[%c288] : memref<294xf32, #tpu.memory_space<smem>>
    %1376 = vector.extract_strided_slice %1312 {offsets = [0, 0, 6], sizes = [1, 4, 16], strides = [1, 1, 1]} : vector<1x4x22xf32> to vector<1x4x16xf32>
    %1377 = vector.broadcast %1374 : f32 to vector<1x4x16xf32>
    %1378 = arith.mulf %1377, %1376 : vector<1x4x16xf32>
    %1379 = arith.addf %1373, %1378 : vector<1x4x16xf32>
    %1380 = vector.extract_strided_slice %1313 {offsets = [0, 0, 6], sizes = [1, 4, 16], strides = [1, 1, 1]} : vector<1x4x22xf32> to vector<1x4x16xf32>
    %1381 = vector.broadcast %1375 : f32 to vector<1x4x16xf32>
    %1382 = arith.mulf %1381, %1380 : vector<1x4x16xf32>
    %1383 = arith.addf %1379, %1382 : vector<1x4x16xf32>
    %1384 = vector.extract_strided_slice %1236 {offsets = [0, 2, 0], sizes = [1, 4, 22], strides = [1, 1, 1]} : vector<1x10x22xf32> to vector<1x4x22xf32>
    %1385 = vector.extract_strided_slice %1238 {offsets = [0, 2, 0], sizes = [1, 4, 22], strides = [1, 1, 1]} : vector<1x10x22xf32> to vector<1x4x22xf32>
    %c198 = arith.constant 198 : index
    %1386 = memref.load %arg1[%c198] : memref<294xf32, #tpu.memory_space<smem>>
    %c247 = arith.constant 247 : index
    %1387 = memref.load %arg1[%c247] : memref<294xf32, #tpu.memory_space<smem>>
    %1388 = vector.extract_strided_slice %1384 {offsets = [0, 0, 0], sizes = [1, 4, 16], strides = [1, 1, 1]} : vector<1x4x22xf32> to vector<1x4x16xf32>
    %1389 = vector.broadcast %1386 : f32 to vector<1x4x16xf32>
    %1390 = arith.mulf %1389, %1388 : vector<1x4x16xf32>
    %1391 = arith.addf %1383, %1390 : vector<1x4x16xf32>
    %1392 = vector.extract_strided_slice %1385 {offsets = [0, 0, 0], sizes = [1, 4, 16], strides = [1, 1, 1]} : vector<1x4x22xf32> to vector<1x4x16xf32>
    %1393 = vector.broadcast %1387 : f32 to vector<1x4x16xf32>
    %1394 = arith.mulf %1393, %1392 : vector<1x4x16xf32>
    %1395 = arith.addf %1391, %1394 : vector<1x4x16xf32>
    %c205 = arith.constant 205 : index
    %1396 = memref.load %arg1[%c205] : memref<294xf32, #tpu.memory_space<smem>>
    %c254 = arith.constant 254 : index
    %1397 = memref.load %arg1[%c254] : memref<294xf32, #tpu.memory_space<smem>>
    %1398 = vector.extract_strided_slice %1384 {offsets = [0, 0, 1], sizes = [1, 4, 16], strides = [1, 1, 1]} : vector<1x4x22xf32> to vector<1x4x16xf32>
    %1399 = vector.broadcast %1396 : f32 to vector<1x4x16xf32>
    %1400 = arith.mulf %1399, %1398 : vector<1x4x16xf32>
    %1401 = arith.addf %1395, %1400 : vector<1x4x16xf32>
    %1402 = vector.extract_strided_slice %1385 {offsets = [0, 0, 1], sizes = [1, 4, 16], strides = [1, 1, 1]} : vector<1x4x22xf32> to vector<1x4x16xf32>
    %1403 = vector.broadcast %1397 : f32 to vector<1x4x16xf32>
    %1404 = arith.mulf %1403, %1402 : vector<1x4x16xf32>
    %1405 = arith.addf %1401, %1404 : vector<1x4x16xf32>
    %c212 = arith.constant 212 : index
    %1406 = memref.load %arg1[%c212] : memref<294xf32, #tpu.memory_space<smem>>
    %c261 = arith.constant 261 : index
    %1407 = memref.load %arg1[%c261] : memref<294xf32, #tpu.memory_space<smem>>
    %1408 = vector.extract_strided_slice %1384 {offsets = [0, 0, 2], sizes = [1, 4, 16], strides = [1, 1, 1]} : vector<1x4x22xf32> to vector<1x4x16xf32>
    %1409 = vector.broadcast %1406 : f32 to vector<1x4x16xf32>
    %1410 = arith.mulf %1409, %1408 : vector<1x4x16xf32>
    %1411 = arith.addf %1405, %1410 : vector<1x4x16xf32>
    %1412 = vector.extract_strided_slice %1385 {offsets = [0, 0, 2], sizes = [1, 4, 16], strides = [1, 1, 1]} : vector<1x4x22xf32> to vector<1x4x16xf32>
    %1413 = vector.broadcast %1407 : f32 to vector<1x4x16xf32>
    %1414 = arith.mulf %1413, %1412 : vector<1x4x16xf32>
    %1415 = arith.addf %1411, %1414 : vector<1x4x16xf32>
    %c219 = arith.constant 219 : index
    %1416 = memref.load %arg1[%c219] : memref<294xf32, #tpu.memory_space<smem>>
    %c268 = arith.constant 268 : index
    %1417 = memref.load %arg1[%c268] : memref<294xf32, #tpu.memory_space<smem>>
    %1418 = vector.extract_strided_slice %1384 {offsets = [0, 0, 3], sizes = [1, 4, 16], strides = [1, 1, 1]} : vector<1x4x22xf32> to vector<1x4x16xf32>
    %1419 = vector.broadcast %1416 : f32 to vector<1x4x16xf32>
    %1420 = arith.mulf %1419, %1418 : vector<1x4x16xf32>
    %1421 = arith.addf %1415, %1420 : vector<1x4x16xf32>
    %1422 = vector.extract_strided_slice %1385 {offsets = [0, 0, 3], sizes = [1, 4, 16], strides = [1, 1, 1]} : vector<1x4x22xf32> to vector<1x4x16xf32>
    %1423 = vector.broadcast %1417 : f32 to vector<1x4x16xf32>
    %1424 = arith.mulf %1423, %1422 : vector<1x4x16xf32>
    %1425 = arith.addf %1421, %1424 : vector<1x4x16xf32>
    %c226 = arith.constant 226 : index
    %1426 = memref.load %arg1[%c226] : memref<294xf32, #tpu.memory_space<smem>>
    %c275 = arith.constant 275 : index
    %1427 = memref.load %arg1[%c275] : memref<294xf32, #tpu.memory_space<smem>>
    %1428 = vector.extract_strided_slice %1384 {offsets = [0, 0, 4], sizes = [1, 4, 16], strides = [1, 1, 1]} : vector<1x4x22xf32> to vector<1x4x16xf32>
    %1429 = vector.broadcast %1426 : f32 to vector<1x4x16xf32>
    %1430 = arith.mulf %1429, %1428 : vector<1x4x16xf32>
    %1431 = arith.addf %1425, %1430 : vector<1x4x16xf32>
    %1432 = vector.extract_strided_slice %1385 {offsets = [0, 0, 4], sizes = [1, 4, 16], strides = [1, 1, 1]} : vector<1x4x22xf32> to vector<1x4x16xf32>
    %1433 = vector.broadcast %1427 : f32 to vector<1x4x16xf32>
    %1434 = arith.mulf %1433, %1432 : vector<1x4x16xf32>
    %1435 = arith.addf %1431, %1434 : vector<1x4x16xf32>
    %c233 = arith.constant 233 : index
    %1436 = memref.load %arg1[%c233] : memref<294xf32, #tpu.memory_space<smem>>
    %c282 = arith.constant 282 : index
    %1437 = memref.load %arg1[%c282] : memref<294xf32, #tpu.memory_space<smem>>
    %1438 = vector.extract_strided_slice %1384 {offsets = [0, 0, 5], sizes = [1, 4, 16], strides = [1, 1, 1]} : vector<1x4x22xf32> to vector<1x4x16xf32>
    %1439 = vector.broadcast %1436 : f32 to vector<1x4x16xf32>
    %1440 = arith.mulf %1439, %1438 : vector<1x4x16xf32>
    %1441 = arith.addf %1435, %1440 : vector<1x4x16xf32>
    %1442 = vector.extract_strided_slice %1385 {offsets = [0, 0, 5], sizes = [1, 4, 16], strides = [1, 1, 1]} : vector<1x4x22xf32> to vector<1x4x16xf32>
    %1443 = vector.broadcast %1437 : f32 to vector<1x4x16xf32>
    %1444 = arith.mulf %1443, %1442 : vector<1x4x16xf32>
    %1445 = arith.addf %1441, %1444 : vector<1x4x16xf32>
    %c240 = arith.constant 240 : index
    %1446 = memref.load %arg1[%c240] : memref<294xf32, #tpu.memory_space<smem>>
    %c289 = arith.constant 289 : index
    %1447 = memref.load %arg1[%c289] : memref<294xf32, #tpu.memory_space<smem>>
    %1448 = vector.extract_strided_slice %1384 {offsets = [0, 0, 6], sizes = [1, 4, 16], strides = [1, 1, 1]} : vector<1x4x22xf32> to vector<1x4x16xf32>
    %1449 = vector.broadcast %1446 : f32 to vector<1x4x16xf32>
    %1450 = arith.mulf %1449, %1448 : vector<1x4x16xf32>
    %1451 = arith.addf %1445, %1450 : vector<1x4x16xf32>
    %1452 = vector.extract_strided_slice %1385 {offsets = [0, 0, 6], sizes = [1, 4, 16], strides = [1, 1, 1]} : vector<1x4x22xf32> to vector<1x4x16xf32>
    %1453 = vector.broadcast %1447 : f32 to vector<1x4x16xf32>
    %1454 = arith.mulf %1453, %1452 : vector<1x4x16xf32>
    %1455 = arith.addf %1451, %1454 : vector<1x4x16xf32>
    %1456 = vector.extract_strided_slice %1236 {offsets = [0, 3, 0], sizes = [1, 4, 22], strides = [1, 1, 1]} : vector<1x10x22xf32> to vector<1x4x22xf32>
    %1457 = vector.extract_strided_slice %1238 {offsets = [0, 3, 0], sizes = [1, 4, 22], strides = [1, 1, 1]} : vector<1x10x22xf32> to vector<1x4x22xf32>
    %c199 = arith.constant 199 : index
    %1458 = memref.load %arg1[%c199] : memref<294xf32, #tpu.memory_space<smem>>
    %c248 = arith.constant 248 : index
    %1459 = memref.load %arg1[%c248] : memref<294xf32, #tpu.memory_space<smem>>
    %1460 = vector.extract_strided_slice %1456 {offsets = [0, 0, 0], sizes = [1, 4, 16], strides = [1, 1, 1]} : vector<1x4x22xf32> to vector<1x4x16xf32>
    %1461 = vector.broadcast %1458 : f32 to vector<1x4x16xf32>
    %1462 = arith.mulf %1461, %1460 : vector<1x4x16xf32>
    %1463 = arith.addf %1455, %1462 : vector<1x4x16xf32>
    %1464 = vector.extract_strided_slice %1457 {offsets = [0, 0, 0], sizes = [1, 4, 16], strides = [1, 1, 1]} : vector<1x4x22xf32> to vector<1x4x16xf32>
    %1465 = vector.broadcast %1459 : f32 to vector<1x4x16xf32>
    %1466 = arith.mulf %1465, %1464 : vector<1x4x16xf32>
    %1467 = arith.addf %1463, %1466 : vector<1x4x16xf32>
    %c206 = arith.constant 206 : index
    %1468 = memref.load %arg1[%c206] : memref<294xf32, #tpu.memory_space<smem>>
    %c255 = arith.constant 255 : index
    %1469 = memref.load %arg1[%c255] : memref<294xf32, #tpu.memory_space<smem>>
    %1470 = vector.extract_strided_slice %1456 {offsets = [0, 0, 1], sizes = [1, 4, 16], strides = [1, 1, 1]} : vector<1x4x22xf32> to vector<1x4x16xf32>
    %1471 = vector.broadcast %1468 : f32 to vector<1x4x16xf32>
    %1472 = arith.mulf %1471, %1470 : vector<1x4x16xf32>
    %1473 = arith.addf %1467, %1472 : vector<1x4x16xf32>
    %1474 = vector.extract_strided_slice %1457 {offsets = [0, 0, 1], sizes = [1, 4, 16], strides = [1, 1, 1]} : vector<1x4x22xf32> to vector<1x4x16xf32>
    %1475 = vector.broadcast %1469 : f32 to vector<1x4x16xf32>
    %1476 = arith.mulf %1475, %1474 : vector<1x4x16xf32>
    %1477 = arith.addf %1473, %1476 : vector<1x4x16xf32>
    %c213 = arith.constant 213 : index
    %1478 = memref.load %arg1[%c213] : memref<294xf32, #tpu.memory_space<smem>>
    %c262 = arith.constant 262 : index
    %1479 = memref.load %arg1[%c262] : memref<294xf32, #tpu.memory_space<smem>>
    %1480 = vector.extract_strided_slice %1456 {offsets = [0, 0, 2], sizes = [1, 4, 16], strides = [1, 1, 1]} : vector<1x4x22xf32> to vector<1x4x16xf32>
    %1481 = vector.broadcast %1478 : f32 to vector<1x4x16xf32>
    %1482 = arith.mulf %1481, %1480 : vector<1x4x16xf32>
    %1483 = arith.addf %1477, %1482 : vector<1x4x16xf32>
    %1484 = vector.extract_strided_slice %1457 {offsets = [0, 0, 2], sizes = [1, 4, 16], strides = [1, 1, 1]} : vector<1x4x22xf32> to vector<1x4x16xf32>
    %1485 = vector.broadcast %1479 : f32 to vector<1x4x16xf32>
    %1486 = arith.mulf %1485, %1484 : vector<1x4x16xf32>
    %1487 = arith.addf %1483, %1486 : vector<1x4x16xf32>
    %c220 = arith.constant 220 : index
    %1488 = memref.load %arg1[%c220] : memref<294xf32, #tpu.memory_space<smem>>
    %c269 = arith.constant 269 : index
    %1489 = memref.load %arg1[%c269] : memref<294xf32, #tpu.memory_space<smem>>
    %1490 = vector.extract_strided_slice %1456 {offsets = [0, 0, 3], sizes = [1, 4, 16], strides = [1, 1, 1]} : vector<1x4x22xf32> to vector<1x4x16xf32>
    %1491 = vector.broadcast %1488 : f32 to vector<1x4x16xf32>
    %1492 = arith.mulf %1491, %1490 : vector<1x4x16xf32>
    %1493 = arith.addf %1487, %1492 : vector<1x4x16xf32>
    %1494 = vector.extract_strided_slice %1457 {offsets = [0, 0, 3], sizes = [1, 4, 16], strides = [1, 1, 1]} : vector<1x4x22xf32> to vector<1x4x16xf32>
    %1495 = vector.broadcast %1489 : f32 to vector<1x4x16xf32>
    %1496 = arith.mulf %1495, %1494 : vector<1x4x16xf32>
    %1497 = arith.addf %1493, %1496 : vector<1x4x16xf32>
    %c227 = arith.constant 227 : index
    %1498 = memref.load %arg1[%c227] : memref<294xf32, #tpu.memory_space<smem>>
    %c276 = arith.constant 276 : index
    %1499 = memref.load %arg1[%c276] : memref<294xf32, #tpu.memory_space<smem>>
    %1500 = vector.extract_strided_slice %1456 {offsets = [0, 0, 4], sizes = [1, 4, 16], strides = [1, 1, 1]} : vector<1x4x22xf32> to vector<1x4x16xf32>
    %1501 = vector.broadcast %1498 : f32 to vector<1x4x16xf32>
    %1502 = arith.mulf %1501, %1500 : vector<1x4x16xf32>
    %1503 = arith.addf %1497, %1502 : vector<1x4x16xf32>
    %1504 = vector.extract_strided_slice %1457 {offsets = [0, 0, 4], sizes = [1, 4, 16], strides = [1, 1, 1]} : vector<1x4x22xf32> to vector<1x4x16xf32>
    %1505 = vector.broadcast %1499 : f32 to vector<1x4x16xf32>
    %1506 = arith.mulf %1505, %1504 : vector<1x4x16xf32>
    %1507 = arith.addf %1503, %1506 : vector<1x4x16xf32>
    %c234 = arith.constant 234 : index
    %1508 = memref.load %arg1[%c234] : memref<294xf32, #tpu.memory_space<smem>>
    %c283 = arith.constant 283 : index
    %1509 = memref.load %arg1[%c283] : memref<294xf32, #tpu.memory_space<smem>>
    %1510 = vector.extract_strided_slice %1456 {offsets = [0, 0, 5], sizes = [1, 4, 16], strides = [1, 1, 1]} : vector<1x4x22xf32> to vector<1x4x16xf32>
    %1511 = vector.broadcast %1508 : f32 to vector<1x4x16xf32>
    %1512 = arith.mulf %1511, %1510 : vector<1x4x16xf32>
    %1513 = arith.addf %1507, %1512 : vector<1x4x16xf32>
    %1514 = vector.extract_strided_slice %1457 {offsets = [0, 0, 5], sizes = [1, 4, 16], strides = [1, 1, 1]} : vector<1x4x22xf32> to vector<1x4x16xf32>
    %1515 = vector.broadcast %1509 : f32 to vector<1x4x16xf32>
    %1516 = arith.mulf %1515, %1514 : vector<1x4x16xf32>
    %1517 = arith.addf %1513, %1516 : vector<1x4x16xf32>
    %c241 = arith.constant 241 : index
    %1518 = memref.load %arg1[%c241] : memref<294xf32, #tpu.memory_space<smem>>
    %c290 = arith.constant 290 : index
    %1519 = memref.load %arg1[%c290] : memref<294xf32, #tpu.memory_space<smem>>
    %1520 = vector.extract_strided_slice %1456 {offsets = [0, 0, 6], sizes = [1, 4, 16], strides = [1, 1, 1]} : vector<1x4x22xf32> to vector<1x4x16xf32>
    %1521 = vector.broadcast %1518 : f32 to vector<1x4x16xf32>
    %1522 = arith.mulf %1521, %1520 : vector<1x4x16xf32>
    %1523 = arith.addf %1517, %1522 : vector<1x4x16xf32>
    %1524 = vector.extract_strided_slice %1457 {offsets = [0, 0, 6], sizes = [1, 4, 16], strides = [1, 1, 1]} : vector<1x4x22xf32> to vector<1x4x16xf32>
    %1525 = vector.broadcast %1519 : f32 to vector<1x4x16xf32>
    %1526 = arith.mulf %1525, %1524 : vector<1x4x16xf32>
    %1527 = arith.addf %1523, %1526 : vector<1x4x16xf32>
    %1528 = vector.extract_strided_slice %1236 {offsets = [0, 4, 0], sizes = [1, 4, 22], strides = [1, 1, 1]} : vector<1x10x22xf32> to vector<1x4x22xf32>
    %1529 = vector.extract_strided_slice %1238 {offsets = [0, 4, 0], sizes = [1, 4, 22], strides = [1, 1, 1]} : vector<1x10x22xf32> to vector<1x4x22xf32>
    %c200 = arith.constant 200 : index
    %1530 = memref.load %arg1[%c200] : memref<294xf32, #tpu.memory_space<smem>>
    %c249 = arith.constant 249 : index
    %1531 = memref.load %arg1[%c249] : memref<294xf32, #tpu.memory_space<smem>>
    %1532 = vector.extract_strided_slice %1528 {offsets = [0, 0, 0], sizes = [1, 4, 16], strides = [1, 1, 1]} : vector<1x4x22xf32> to vector<1x4x16xf32>
    %1533 = vector.broadcast %1530 : f32 to vector<1x4x16xf32>
    %1534 = arith.mulf %1533, %1532 : vector<1x4x16xf32>
    %1535 = arith.addf %1527, %1534 : vector<1x4x16xf32>
    %1536 = vector.extract_strided_slice %1529 {offsets = [0, 0, 0], sizes = [1, 4, 16], strides = [1, 1, 1]} : vector<1x4x22xf32> to vector<1x4x16xf32>
    %1537 = vector.broadcast %1531 : f32 to vector<1x4x16xf32>
    %1538 = arith.mulf %1537, %1536 : vector<1x4x16xf32>
    %1539 = arith.addf %1535, %1538 : vector<1x4x16xf32>
    %c207 = arith.constant 207 : index
    %1540 = memref.load %arg1[%c207] : memref<294xf32, #tpu.memory_space<smem>>
    %c256 = arith.constant 256 : index
    %1541 = memref.load %arg1[%c256] : memref<294xf32, #tpu.memory_space<smem>>
    %1542 = vector.extract_strided_slice %1528 {offsets = [0, 0, 1], sizes = [1, 4, 16], strides = [1, 1, 1]} : vector<1x4x22xf32> to vector<1x4x16xf32>
    %1543 = vector.broadcast %1540 : f32 to vector<1x4x16xf32>
    %1544 = arith.mulf %1543, %1542 : vector<1x4x16xf32>
    %1545 = arith.addf %1539, %1544 : vector<1x4x16xf32>
    %1546 = vector.extract_strided_slice %1529 {offsets = [0, 0, 1], sizes = [1, 4, 16], strides = [1, 1, 1]} : vector<1x4x22xf32> to vector<1x4x16xf32>
    %1547 = vector.broadcast %1541 : f32 to vector<1x4x16xf32>
    %1548 = arith.mulf %1547, %1546 : vector<1x4x16xf32>
    %1549 = arith.addf %1545, %1548 : vector<1x4x16xf32>
    %c214 = arith.constant 214 : index
    %1550 = memref.load %arg1[%c214] : memref<294xf32, #tpu.memory_space<smem>>
    %c263 = arith.constant 263 : index
    %1551 = memref.load %arg1[%c263] : memref<294xf32, #tpu.memory_space<smem>>
    %1552 = vector.extract_strided_slice %1528 {offsets = [0, 0, 2], sizes = [1, 4, 16], strides = [1, 1, 1]} : vector<1x4x22xf32> to vector<1x4x16xf32>
    %1553 = vector.broadcast %1550 : f32 to vector<1x4x16xf32>
    %1554 = arith.mulf %1553, %1552 : vector<1x4x16xf32>
    %1555 = arith.addf %1549, %1554 : vector<1x4x16xf32>
    %1556 = vector.extract_strided_slice %1529 {offsets = [0, 0, 2], sizes = [1, 4, 16], strides = [1, 1, 1]} : vector<1x4x22xf32> to vector<1x4x16xf32>
    %1557 = vector.broadcast %1551 : f32 to vector<1x4x16xf32>
    %1558 = arith.mulf %1557, %1556 : vector<1x4x16xf32>
    %1559 = arith.addf %1555, %1558 : vector<1x4x16xf32>
    %c221 = arith.constant 221 : index
    %1560 = memref.load %arg1[%c221] : memref<294xf32, #tpu.memory_space<smem>>
    %c270 = arith.constant 270 : index
    %1561 = memref.load %arg1[%c270] : memref<294xf32, #tpu.memory_space<smem>>
    %1562 = vector.extract_strided_slice %1528 {offsets = [0, 0, 3], sizes = [1, 4, 16], strides = [1, 1, 1]} : vector<1x4x22xf32> to vector<1x4x16xf32>
    %1563 = vector.broadcast %1560 : f32 to vector<1x4x16xf32>
    %1564 = arith.mulf %1563, %1562 : vector<1x4x16xf32>
    %1565 = arith.addf %1559, %1564 : vector<1x4x16xf32>
    %1566 = vector.extract_strided_slice %1529 {offsets = [0, 0, 3], sizes = [1, 4, 16], strides = [1, 1, 1]} : vector<1x4x22xf32> to vector<1x4x16xf32>
    %1567 = vector.broadcast %1561 : f32 to vector<1x4x16xf32>
    %1568 = arith.mulf %1567, %1566 : vector<1x4x16xf32>
    %1569 = arith.addf %1565, %1568 : vector<1x4x16xf32>
    %c228 = arith.constant 228 : index
    %1570 = memref.load %arg1[%c228] : memref<294xf32, #tpu.memory_space<smem>>
    %c277 = arith.constant 277 : index
    %1571 = memref.load %arg1[%c277] : memref<294xf32, #tpu.memory_space<smem>>
    %1572 = vector.extract_strided_slice %1528 {offsets = [0, 0, 4], sizes = [1, 4, 16], strides = [1, 1, 1]} : vector<1x4x22xf32> to vector<1x4x16xf32>
    %1573 = vector.broadcast %1570 : f32 to vector<1x4x16xf32>
    %1574 = arith.mulf %1573, %1572 : vector<1x4x16xf32>
    %1575 = arith.addf %1569, %1574 : vector<1x4x16xf32>
    %1576 = vector.extract_strided_slice %1529 {offsets = [0, 0, 4], sizes = [1, 4, 16], strides = [1, 1, 1]} : vector<1x4x22xf32> to vector<1x4x16xf32>
    %1577 = vector.broadcast %1571 : f32 to vector<1x4x16xf32>
    %1578 = arith.mulf %1577, %1576 : vector<1x4x16xf32>
    %1579 = arith.addf %1575, %1578 : vector<1x4x16xf32>
    %c235 = arith.constant 235 : index
    %1580 = memref.load %arg1[%c235] : memref<294xf32, #tpu.memory_space<smem>>
    %c284 = arith.constant 284 : index
    %1581 = memref.load %arg1[%c284] : memref<294xf32, #tpu.memory_space<smem>>
    %1582 = vector.extract_strided_slice %1528 {offsets = [0, 0, 5], sizes = [1, 4, 16], strides = [1, 1, 1]} : vector<1x4x22xf32> to vector<1x4x16xf32>
    %1583 = vector.broadcast %1580 : f32 to vector<1x4x16xf32>
    %1584 = arith.mulf %1583, %1582 : vector<1x4x16xf32>
    %1585 = arith.addf %1579, %1584 : vector<1x4x16xf32>
    %1586 = vector.extract_strided_slice %1529 {offsets = [0, 0, 5], sizes = [1, 4, 16], strides = [1, 1, 1]} : vector<1x4x22xf32> to vector<1x4x16xf32>
    %1587 = vector.broadcast %1581 : f32 to vector<1x4x16xf32>
    %1588 = arith.mulf %1587, %1586 : vector<1x4x16xf32>
    %1589 = arith.addf %1585, %1588 : vector<1x4x16xf32>
    %c242 = arith.constant 242 : index
    %1590 = memref.load %arg1[%c242] : memref<294xf32, #tpu.memory_space<smem>>
    %c291 = arith.constant 291 : index
    %1591 = memref.load %arg1[%c291] : memref<294xf32, #tpu.memory_space<smem>>
    %1592 = vector.extract_strided_slice %1528 {offsets = [0, 0, 6], sizes = [1, 4, 16], strides = [1, 1, 1]} : vector<1x4x22xf32> to vector<1x4x16xf32>
    %1593 = vector.broadcast %1590 : f32 to vector<1x4x16xf32>
    %1594 = arith.mulf %1593, %1592 : vector<1x4x16xf32>
    %1595 = arith.addf %1589, %1594 : vector<1x4x16xf32>
    %1596 = vector.extract_strided_slice %1529 {offsets = [0, 0, 6], sizes = [1, 4, 16], strides = [1, 1, 1]} : vector<1x4x22xf32> to vector<1x4x16xf32>
    %1597 = vector.broadcast %1591 : f32 to vector<1x4x16xf32>
    %1598 = arith.mulf %1597, %1596 : vector<1x4x16xf32>
    %1599 = arith.addf %1595, %1598 : vector<1x4x16xf32>
    %1600 = vector.extract_strided_slice %1236 {offsets = [0, 5, 0], sizes = [1, 4, 22], strides = [1, 1, 1]} : vector<1x10x22xf32> to vector<1x4x22xf32>
    %1601 = vector.extract_strided_slice %1238 {offsets = [0, 5, 0], sizes = [1, 4, 22], strides = [1, 1, 1]} : vector<1x10x22xf32> to vector<1x4x22xf32>
    %c201 = arith.constant 201 : index
    %1602 = memref.load %arg1[%c201] : memref<294xf32, #tpu.memory_space<smem>>
    %c250 = arith.constant 250 : index
    %1603 = memref.load %arg1[%c250] : memref<294xf32, #tpu.memory_space<smem>>
    %1604 = vector.extract_strided_slice %1600 {offsets = [0, 0, 0], sizes = [1, 4, 16], strides = [1, 1, 1]} : vector<1x4x22xf32> to vector<1x4x16xf32>
    %1605 = vector.broadcast %1602 : f32 to vector<1x4x16xf32>
    %1606 = arith.mulf %1605, %1604 : vector<1x4x16xf32>
    %1607 = arith.addf %1599, %1606 : vector<1x4x16xf32>
    %1608 = vector.extract_strided_slice %1601 {offsets = [0, 0, 0], sizes = [1, 4, 16], strides = [1, 1, 1]} : vector<1x4x22xf32> to vector<1x4x16xf32>
    %1609 = vector.broadcast %1603 : f32 to vector<1x4x16xf32>
    %1610 = arith.mulf %1609, %1608 : vector<1x4x16xf32>
    %1611 = arith.addf %1607, %1610 : vector<1x4x16xf32>
    %c208 = arith.constant 208 : index
    %1612 = memref.load %arg1[%c208] : memref<294xf32, #tpu.memory_space<smem>>
    %c257 = arith.constant 257 : index
    %1613 = memref.load %arg1[%c257] : memref<294xf32, #tpu.memory_space<smem>>
    %1614 = vector.extract_strided_slice %1600 {offsets = [0, 0, 1], sizes = [1, 4, 16], strides = [1, 1, 1]} : vector<1x4x22xf32> to vector<1x4x16xf32>
    %1615 = vector.broadcast %1612 : f32 to vector<1x4x16xf32>
    %1616 = arith.mulf %1615, %1614 : vector<1x4x16xf32>
    %1617 = arith.addf %1611, %1616 : vector<1x4x16xf32>
    %1618 = vector.extract_strided_slice %1601 {offsets = [0, 0, 1], sizes = [1, 4, 16], strides = [1, 1, 1]} : vector<1x4x22xf32> to vector<1x4x16xf32>
    %1619 = vector.broadcast %1613 : f32 to vector<1x4x16xf32>
    %1620 = arith.mulf %1619, %1618 : vector<1x4x16xf32>
    %1621 = arith.addf %1617, %1620 : vector<1x4x16xf32>
    %c215 = arith.constant 215 : index
    %1622 = memref.load %arg1[%c215] : memref<294xf32, #tpu.memory_space<smem>>
    %c264 = arith.constant 264 : index
    %1623 = memref.load %arg1[%c264] : memref<294xf32, #tpu.memory_space<smem>>
    %1624 = vector.extract_strided_slice %1600 {offsets = [0, 0, 2], sizes = [1, 4, 16], strides = [1, 1, 1]} : vector<1x4x22xf32> to vector<1x4x16xf32>
    %1625 = vector.broadcast %1622 : f32 to vector<1x4x16xf32>
    %1626 = arith.mulf %1625, %1624 : vector<1x4x16xf32>
    %1627 = arith.addf %1621, %1626 : vector<1x4x16xf32>
    %1628 = vector.extract_strided_slice %1601 {offsets = [0, 0, 2], sizes = [1, 4, 16], strides = [1, 1, 1]} : vector<1x4x22xf32> to vector<1x4x16xf32>
    %1629 = vector.broadcast %1623 : f32 to vector<1x4x16xf32>
    %1630 = arith.mulf %1629, %1628 : vector<1x4x16xf32>
    %1631 = arith.addf %1627, %1630 : vector<1x4x16xf32>
    %c222 = arith.constant 222 : index
    %1632 = memref.load %arg1[%c222] : memref<294xf32, #tpu.memory_space<smem>>
    %c271 = arith.constant 271 : index
    %1633 = memref.load %arg1[%c271] : memref<294xf32, #tpu.memory_space<smem>>
    %1634 = vector.extract_strided_slice %1600 {offsets = [0, 0, 3], sizes = [1, 4, 16], strides = [1, 1, 1]} : vector<1x4x22xf32> to vector<1x4x16xf32>
    %1635 = vector.broadcast %1632 : f32 to vector<1x4x16xf32>
    %1636 = arith.mulf %1635, %1634 : vector<1x4x16xf32>
    %1637 = arith.addf %1631, %1636 : vector<1x4x16xf32>
    %1638 = vector.extract_strided_slice %1601 {offsets = [0, 0, 3], sizes = [1, 4, 16], strides = [1, 1, 1]} : vector<1x4x22xf32> to vector<1x4x16xf32>
    %1639 = vector.broadcast %1633 : f32 to vector<1x4x16xf32>
    %1640 = arith.mulf %1639, %1638 : vector<1x4x16xf32>
    %1641 = arith.addf %1637, %1640 : vector<1x4x16xf32>
    %c229 = arith.constant 229 : index
    %1642 = memref.load %arg1[%c229] : memref<294xf32, #tpu.memory_space<smem>>
    %c278 = arith.constant 278 : index
    %1643 = memref.load %arg1[%c278] : memref<294xf32, #tpu.memory_space<smem>>
    %1644 = vector.extract_strided_slice %1600 {offsets = [0, 0, 4], sizes = [1, 4, 16], strides = [1, 1, 1]} : vector<1x4x22xf32> to vector<1x4x16xf32>
    %1645 = vector.broadcast %1642 : f32 to vector<1x4x16xf32>
    %1646 = arith.mulf %1645, %1644 : vector<1x4x16xf32>
    %1647 = arith.addf %1641, %1646 : vector<1x4x16xf32>
    %1648 = vector.extract_strided_slice %1601 {offsets = [0, 0, 4], sizes = [1, 4, 16], strides = [1, 1, 1]} : vector<1x4x22xf32> to vector<1x4x16xf32>
    %1649 = vector.broadcast %1643 : f32 to vector<1x4x16xf32>
    %1650 = arith.mulf %1649, %1648 : vector<1x4x16xf32>
    %1651 = arith.addf %1647, %1650 : vector<1x4x16xf32>
    %c236 = arith.constant 236 : index
    %1652 = memref.load %arg1[%c236] : memref<294xf32, #tpu.memory_space<smem>>
    %c285 = arith.constant 285 : index
    %1653 = memref.load %arg1[%c285] : memref<294xf32, #tpu.memory_space<smem>>
    %1654 = vector.extract_strided_slice %1600 {offsets = [0, 0, 5], sizes = [1, 4, 16], strides = [1, 1, 1]} : vector<1x4x22xf32> to vector<1x4x16xf32>
    %1655 = vector.broadcast %1652 : f32 to vector<1x4x16xf32>
    %1656 = arith.mulf %1655, %1654 : vector<1x4x16xf32>
    %1657 = arith.addf %1651, %1656 : vector<1x4x16xf32>
    %1658 = vector.extract_strided_slice %1601 {offsets = [0, 0, 5], sizes = [1, 4, 16], strides = [1, 1, 1]} : vector<1x4x22xf32> to vector<1x4x16xf32>
    %1659 = vector.broadcast %1653 : f32 to vector<1x4x16xf32>
    %1660 = arith.mulf %1659, %1658 : vector<1x4x16xf32>
    %1661 = arith.addf %1657, %1660 : vector<1x4x16xf32>
    %c243 = arith.constant 243 : index
    %1662 = memref.load %arg1[%c243] : memref<294xf32, #tpu.memory_space<smem>>
    %c292 = arith.constant 292 : index
    %1663 = memref.load %arg1[%c292] : memref<294xf32, #tpu.memory_space<smem>>
    %1664 = vector.extract_strided_slice %1600 {offsets = [0, 0, 6], sizes = [1, 4, 16], strides = [1, 1, 1]} : vector<1x4x22xf32> to vector<1x4x16xf32>
    %1665 = vector.broadcast %1662 : f32 to vector<1x4x16xf32>
    %1666 = arith.mulf %1665, %1664 : vector<1x4x16xf32>
    %1667 = arith.addf %1661, %1666 : vector<1x4x16xf32>
    %1668 = vector.extract_strided_slice %1601 {offsets = [0, 0, 6], sizes = [1, 4, 16], strides = [1, 1, 1]} : vector<1x4x22xf32> to vector<1x4x16xf32>
    %1669 = vector.broadcast %1663 : f32 to vector<1x4x16xf32>
    %1670 = arith.mulf %1669, %1668 : vector<1x4x16xf32>
    %1671 = arith.addf %1667, %1670 : vector<1x4x16xf32>
    %1672 = vector.extract_strided_slice %1236 {offsets = [0, 6, 0], sizes = [1, 4, 22], strides = [1, 1, 1]} : vector<1x10x22xf32> to vector<1x4x22xf32>
    %1673 = vector.extract_strided_slice %1238 {offsets = [0, 6, 0], sizes = [1, 4, 22], strides = [1, 1, 1]} : vector<1x10x22xf32> to vector<1x4x22xf32>
    %c202 = arith.constant 202 : index
    %1674 = memref.load %arg1[%c202] : memref<294xf32, #tpu.memory_space<smem>>
    %c251 = arith.constant 251 : index
    %1675 = memref.load %arg1[%c251] : memref<294xf32, #tpu.memory_space<smem>>
    %1676 = vector.extract_strided_slice %1672 {offsets = [0, 0, 0], sizes = [1, 4, 16], strides = [1, 1, 1]} : vector<1x4x22xf32> to vector<1x4x16xf32>
    %1677 = vector.broadcast %1674 : f32 to vector<1x4x16xf32>
    %1678 = arith.mulf %1677, %1676 : vector<1x4x16xf32>
    %1679 = arith.addf %1671, %1678 : vector<1x4x16xf32>
    %1680 = vector.extract_strided_slice %1673 {offsets = [0, 0, 0], sizes = [1, 4, 16], strides = [1, 1, 1]} : vector<1x4x22xf32> to vector<1x4x16xf32>
    %1681 = vector.broadcast %1675 : f32 to vector<1x4x16xf32>
    %1682 = arith.mulf %1681, %1680 : vector<1x4x16xf32>
    %1683 = arith.addf %1679, %1682 : vector<1x4x16xf32>
    %c209 = arith.constant 209 : index
    %1684 = memref.load %arg1[%c209] : memref<294xf32, #tpu.memory_space<smem>>
    %c258 = arith.constant 258 : index
    %1685 = memref.load %arg1[%c258] : memref<294xf32, #tpu.memory_space<smem>>
    %1686 = vector.extract_strided_slice %1672 {offsets = [0, 0, 1], sizes = [1, 4, 16], strides = [1, 1, 1]} : vector<1x4x22xf32> to vector<1x4x16xf32>
    %1687 = vector.broadcast %1684 : f32 to vector<1x4x16xf32>
    %1688 = arith.mulf %1687, %1686 : vector<1x4x16xf32>
    %1689 = arith.addf %1683, %1688 : vector<1x4x16xf32>
    %1690 = vector.extract_strided_slice %1673 {offsets = [0, 0, 1], sizes = [1, 4, 16], strides = [1, 1, 1]} : vector<1x4x22xf32> to vector<1x4x16xf32>
    %1691 = vector.broadcast %1685 : f32 to vector<1x4x16xf32>
    %1692 = arith.mulf %1691, %1690 : vector<1x4x16xf32>
    %1693 = arith.addf %1689, %1692 : vector<1x4x16xf32>
    %c216 = arith.constant 216 : index
    %1694 = memref.load %arg1[%c216] : memref<294xf32, #tpu.memory_space<smem>>
    %c265 = arith.constant 265 : index
    %1695 = memref.load %arg1[%c265] : memref<294xf32, #tpu.memory_space<smem>>
    %1696 = vector.extract_strided_slice %1672 {offsets = [0, 0, 2], sizes = [1, 4, 16], strides = [1, 1, 1]} : vector<1x4x22xf32> to vector<1x4x16xf32>
    %1697 = vector.broadcast %1694 : f32 to vector<1x4x16xf32>
    %1698 = arith.mulf %1697, %1696 : vector<1x4x16xf32>
    %1699 = arith.addf %1693, %1698 : vector<1x4x16xf32>
    %1700 = vector.extract_strided_slice %1673 {offsets = [0, 0, 2], sizes = [1, 4, 16], strides = [1, 1, 1]} : vector<1x4x22xf32> to vector<1x4x16xf32>
    %1701 = vector.broadcast %1695 : f32 to vector<1x4x16xf32>
    %1702 = arith.mulf %1701, %1700 : vector<1x4x16xf32>
    %1703 = arith.addf %1699, %1702 : vector<1x4x16xf32>
    %c223 = arith.constant 223 : index
    %1704 = memref.load %arg1[%c223] : memref<294xf32, #tpu.memory_space<smem>>
    %c272 = arith.constant 272 : index
    %1705 = memref.load %arg1[%c272] : memref<294xf32, #tpu.memory_space<smem>>
    %1706 = vector.extract_strided_slice %1672 {offsets = [0, 0, 3], sizes = [1, 4, 16], strides = [1, 1, 1]} : vector<1x4x22xf32> to vector<1x4x16xf32>
    %1707 = vector.broadcast %1704 : f32 to vector<1x4x16xf32>
    %1708 = arith.mulf %1707, %1706 : vector<1x4x16xf32>
    %1709 = arith.addf %1703, %1708 : vector<1x4x16xf32>
    %1710 = vector.extract_strided_slice %1673 {offsets = [0, 0, 3], sizes = [1, 4, 16], strides = [1, 1, 1]} : vector<1x4x22xf32> to vector<1x4x16xf32>
    %1711 = vector.broadcast %1705 : f32 to vector<1x4x16xf32>
    %1712 = arith.mulf %1711, %1710 : vector<1x4x16xf32>
    %1713 = arith.addf %1709, %1712 : vector<1x4x16xf32>
    %c230 = arith.constant 230 : index
    %1714 = memref.load %arg1[%c230] : memref<294xf32, #tpu.memory_space<smem>>
    %c279 = arith.constant 279 : index
    %1715 = memref.load %arg1[%c279] : memref<294xf32, #tpu.memory_space<smem>>
    %1716 = vector.extract_strided_slice %1672 {offsets = [0, 0, 4], sizes = [1, 4, 16], strides = [1, 1, 1]} : vector<1x4x22xf32> to vector<1x4x16xf32>
    %1717 = vector.broadcast %1714 : f32 to vector<1x4x16xf32>
    %1718 = arith.mulf %1717, %1716 : vector<1x4x16xf32>
    %1719 = arith.addf %1713, %1718 : vector<1x4x16xf32>
    %1720 = vector.extract_strided_slice %1673 {offsets = [0, 0, 4], sizes = [1, 4, 16], strides = [1, 1, 1]} : vector<1x4x22xf32> to vector<1x4x16xf32>
    %1721 = vector.broadcast %1715 : f32 to vector<1x4x16xf32>
    %1722 = arith.mulf %1721, %1720 : vector<1x4x16xf32>
    %1723 = arith.addf %1719, %1722 : vector<1x4x16xf32>
    %c237 = arith.constant 237 : index
    %1724 = memref.load %arg1[%c237] : memref<294xf32, #tpu.memory_space<smem>>
    %c286 = arith.constant 286 : index
    %1725 = memref.load %arg1[%c286] : memref<294xf32, #tpu.memory_space<smem>>
    %1726 = vector.extract_strided_slice %1672 {offsets = [0, 0, 5], sizes = [1, 4, 16], strides = [1, 1, 1]} : vector<1x4x22xf32> to vector<1x4x16xf32>
    %1727 = vector.broadcast %1724 : f32 to vector<1x4x16xf32>
    %1728 = arith.mulf %1727, %1726 : vector<1x4x16xf32>
    %1729 = arith.addf %1723, %1728 : vector<1x4x16xf32>
    %1730 = vector.extract_strided_slice %1673 {offsets = [0, 0, 5], sizes = [1, 4, 16], strides = [1, 1, 1]} : vector<1x4x22xf32> to vector<1x4x16xf32>
    %1731 = vector.broadcast %1725 : f32 to vector<1x4x16xf32>
    %1732 = arith.mulf %1731, %1730 : vector<1x4x16xf32>
    %1733 = arith.addf %1729, %1732 : vector<1x4x16xf32>
    %c244 = arith.constant 244 : index
    %1734 = memref.load %arg1[%c244] : memref<294xf32, #tpu.memory_space<smem>>
    %c293 = arith.constant 293 : index
    %1735 = memref.load %arg1[%c293] : memref<294xf32, #tpu.memory_space<smem>>
    %1736 = vector.extract_strided_slice %1672 {offsets = [0, 0, 6], sizes = [1, 4, 16], strides = [1, 1, 1]} : vector<1x4x22xf32> to vector<1x4x16xf32>
    %1737 = vector.broadcast %1734 : f32 to vector<1x4x16xf32>
    %1738 = arith.mulf %1737, %1736 : vector<1x4x16xf32>
    %1739 = arith.addf %1733, %1738 : vector<1x4x16xf32>
    %1740 = vector.extract_strided_slice %1673 {offsets = [0, 0, 6], sizes = [1, 4, 16], strides = [1, 1, 1]} : vector<1x4x22xf32> to vector<1x4x16xf32>
    %1741 = vector.broadcast %1735 : f32 to vector<1x4x16xf32>
    %1742 = arith.mulf %1741, %1740 : vector<1x4x16xf32>
    %1743 = arith.addf %1739, %1742 : vector<1x4x16xf32>
    %c4_86 = arith.constant 4 : index
    %1744 = memref.load %arg2[%c4_86] : memref<6xf32, #tpu.memory_space<smem>>
    %1745 = vector.broadcast %1744 : f32 to vector<1x4x16xf32>
    %1746 = arith.mulf %1743, %1745 : vector<1x4x16xf32>
    %c5_87 = arith.constant 5 : index
    %1747 = memref.load %arg2[%c5_87] : memref<6xf32, #tpu.memory_space<smem>>
    %1748 = vector.broadcast %1747 : f32 to vector<1x4x16xf32>
    %1749 = arith.addf %1746, %1748 : vector<1x4x16xf32>
    %1750 = arith.negf %1749 : vector<1x4x16xf32>
    %1751 = math.exp %1750 : vector<1x4x16xf32>
    %cst_88 = arith.constant 1.000000e+00 : f32
    %1752 = vector.broadcast %cst_88 : f32 to vector<1x4x16xf32>
    %1753 = arith.addf %1752, %1751 : vector<1x4x16xf32>
    %1754 = arith.divf %1752, %1753 : vector<1x4x16xf32>
    %cst_89 = arith.constant 0.333333343 : f32
    %1755 = vector.broadcast %cst_89 : f32 to vector<1x4x16xf32>
    %1756 = arith.mulf %1754, %1755 : vector<1x4x16xf32>
    %1757 = vector.extract_strided_slice %708 {offsets = [0, 0, 0], sizes = [1, 1, 16], strides = [1, 1, 1]} : vector<1x16x16xf32> to vector<1x1x16xf32>
    %1758 = vector.broadcast %1757 : vector<1x1x16xf32> to vector<1x4x16xf32>
    %1759 = arith.addf %1758, %1232 : vector<1x4x16xf32>
    %1760 = vector.extract_strided_slice %1756 {offsets = [0, 0, 0], sizes = [1, 4, 1], strides = [1, 1, 1]} : vector<1x4x16xf32> to vector<1x4x1xf32>
    %1761 = vector.broadcast %1760 : vector<1x4x1xf32> to vector<1x4x16xf32>
    %1762 = arith.addf %1759, %1761 : vector<1x4x16xf32>
    %1763 = vector.extract_strided_slice %708 {offsets = [0, 1, 0], sizes = [1, 1, 16], strides = [1, 1, 1]} : vector<1x16x16xf32> to vector<1x1x16xf32>
    %1764 = vector.broadcast %1763 : vector<1x1x16xf32> to vector<1x4x16xf32>
    %1765 = arith.addf %1764, %1232 : vector<1x4x16xf32>
    %1766 = vector.extract_strided_slice %1756 {offsets = [0, 0, 1], sizes = [1, 4, 1], strides = [1, 1, 1]} : vector<1x4x16xf32> to vector<1x4x1xf32>
    %1767 = vector.broadcast %1766 : vector<1x4x1xf32> to vector<1x4x16xf32>
    %1768 = arith.addf %1765, %1767 : vector<1x4x16xf32>
    %1769 = vector.extract_strided_slice %708 {offsets = [0, 2, 0], sizes = [1, 1, 16], strides = [1, 1, 1]} : vector<1x16x16xf32> to vector<1x1x16xf32>
    %1770 = vector.broadcast %1769 : vector<1x1x16xf32> to vector<1x4x16xf32>
    %1771 = arith.addf %1770, %1232 : vector<1x4x16xf32>
    %1772 = vector.extract_strided_slice %1756 {offsets = [0, 0, 2], sizes = [1, 4, 1], strides = [1, 1, 1]} : vector<1x4x16xf32> to vector<1x4x1xf32>
    %1773 = vector.broadcast %1772 : vector<1x4x1xf32> to vector<1x4x16xf32>
    %1774 = arith.addf %1771, %1773 : vector<1x4x16xf32>
    %1775 = vector.extract_strided_slice %708 {offsets = [0, 3, 0], sizes = [1, 1, 16], strides = [1, 1, 1]} : vector<1x16x16xf32> to vector<1x1x16xf32>
    %1776 = vector.broadcast %1775 : vector<1x1x16xf32> to vector<1x4x16xf32>
    %1777 = arith.addf %1776, %1232 : vector<1x4x16xf32>
    %1778 = vector.extract_strided_slice %1756 {offsets = [0, 0, 3], sizes = [1, 4, 1], strides = [1, 1, 1]} : vector<1x4x16xf32> to vector<1x4x1xf32>
    %1779 = vector.broadcast %1778 : vector<1x4x1xf32> to vector<1x4x16xf32>
    %1780 = arith.addf %1777, %1779 : vector<1x4x16xf32>
    %1781 = vector.extract_strided_slice %708 {offsets = [0, 4, 0], sizes = [1, 1, 16], strides = [1, 1, 1]} : vector<1x16x16xf32> to vector<1x1x16xf32>
    %1782 = vector.broadcast %1781 : vector<1x1x16xf32> to vector<1x4x16xf32>
    %1783 = arith.addf %1782, %1232 : vector<1x4x16xf32>
    %1784 = vector.extract_strided_slice %1756 {offsets = [0, 0, 4], sizes = [1, 4, 1], strides = [1, 1, 1]} : vector<1x4x16xf32> to vector<1x4x1xf32>
    %1785 = vector.broadcast %1784 : vector<1x4x1xf32> to vector<1x4x16xf32>
    %1786 = arith.addf %1783, %1785 : vector<1x4x16xf32>
    %1787 = vector.extract_strided_slice %708 {offsets = [0, 5, 0], sizes = [1, 1, 16], strides = [1, 1, 1]} : vector<1x16x16xf32> to vector<1x1x16xf32>
    %1788 = vector.broadcast %1787 : vector<1x1x16xf32> to vector<1x4x16xf32>
    %1789 = arith.addf %1788, %1232 : vector<1x4x16xf32>
    %1790 = vector.extract_strided_slice %1756 {offsets = [0, 0, 5], sizes = [1, 4, 1], strides = [1, 1, 1]} : vector<1x4x16xf32> to vector<1x4x1xf32>
    %1791 = vector.broadcast %1790 : vector<1x4x1xf32> to vector<1x4x16xf32>
    %1792 = arith.addf %1789, %1791 : vector<1x4x16xf32>
    %1793 = vector.extract_strided_slice %708 {offsets = [0, 6, 0], sizes = [1, 1, 16], strides = [1, 1, 1]} : vector<1x16x16xf32> to vector<1x1x16xf32>
    %1794 = vector.broadcast %1793 : vector<1x1x16xf32> to vector<1x4x16xf32>
    %1795 = arith.addf %1794, %1232 : vector<1x4x16xf32>
    %1796 = vector.extract_strided_slice %1756 {offsets = [0, 0, 6], sizes = [1, 4, 1], strides = [1, 1, 1]} : vector<1x4x16xf32> to vector<1x4x1xf32>
    %1797 = vector.broadcast %1796 : vector<1x4x1xf32> to vector<1x4x16xf32>
    %1798 = arith.addf %1795, %1797 : vector<1x4x16xf32>
    %1799 = vector.extract_strided_slice %708 {offsets = [0, 7, 0], sizes = [1, 1, 16], strides = [1, 1, 1]} : vector<1x16x16xf32> to vector<1x1x16xf32>
    %1800 = vector.broadcast %1799 : vector<1x1x16xf32> to vector<1x4x16xf32>
    %1801 = arith.addf %1800, %1232 : vector<1x4x16xf32>
    %1802 = vector.extract_strided_slice %1756 {offsets = [0, 0, 7], sizes = [1, 4, 1], strides = [1, 1, 1]} : vector<1x4x16xf32> to vector<1x4x1xf32>
    %1803 = vector.broadcast %1802 : vector<1x4x1xf32> to vector<1x4x16xf32>
    %1804 = arith.addf %1801, %1803 : vector<1x4x16xf32>
    %1805 = vector.extract_strided_slice %708 {offsets = [0, 8, 0], sizes = [1, 1, 16], strides = [1, 1, 1]} : vector<1x16x16xf32> to vector<1x1x16xf32>
    %1806 = vector.broadcast %1805 : vector<1x1x16xf32> to vector<1x4x16xf32>
    %1807 = arith.addf %1806, %1232 : vector<1x4x16xf32>
    %1808 = vector.extract_strided_slice %1756 {offsets = [0, 0, 8], sizes = [1, 4, 1], strides = [1, 1, 1]} : vector<1x4x16xf32> to vector<1x4x1xf32>
    %1809 = vector.broadcast %1808 : vector<1x4x1xf32> to vector<1x4x16xf32>
    %1810 = arith.addf %1807, %1809 : vector<1x4x16xf32>
    %1811 = vector.extract_strided_slice %708 {offsets = [0, 9, 0], sizes = [1, 1, 16], strides = [1, 1, 1]} : vector<1x16x16xf32> to vector<1x1x16xf32>
    %1812 = vector.broadcast %1811 : vector<1x1x16xf32> to vector<1x4x16xf32>
    %1813 = arith.addf %1812, %1232 : vector<1x4x16xf32>
    %1814 = vector.extract_strided_slice %1756 {offsets = [0, 0, 9], sizes = [1, 4, 1], strides = [1, 1, 1]} : vector<1x4x16xf32> to vector<1x4x1xf32>
    %1815 = vector.broadcast %1814 : vector<1x4x1xf32> to vector<1x4x16xf32>
    %1816 = arith.addf %1813, %1815 : vector<1x4x16xf32>
    %1817 = vector.extract_strided_slice %708 {offsets = [0, 10, 0], sizes = [1, 1, 16], strides = [1, 1, 1]} : vector<1x16x16xf32> to vector<1x1x16xf32>
    %1818 = vector.broadcast %1817 : vector<1x1x16xf32> to vector<1x4x16xf32>
    %1819 = arith.addf %1818, %1232 : vector<1x4x16xf32>
    %1820 = vector.extract_strided_slice %1756 {offsets = [0, 0, 10], sizes = [1, 4, 1], strides = [1, 1, 1]} : vector<1x4x16xf32> to vector<1x4x1xf32>
    %1821 = vector.broadcast %1820 : vector<1x4x1xf32> to vector<1x4x16xf32>
    %1822 = arith.addf %1819, %1821 : vector<1x4x16xf32>
    %1823 = vector.extract_strided_slice %708 {offsets = [0, 11, 0], sizes = [1, 1, 16], strides = [1, 1, 1]} : vector<1x16x16xf32> to vector<1x1x16xf32>
    %1824 = vector.broadcast %1823 : vector<1x1x16xf32> to vector<1x4x16xf32>
    %1825 = arith.addf %1824, %1232 : vector<1x4x16xf32>
    %1826 = vector.extract_strided_slice %1756 {offsets = [0, 0, 11], sizes = [1, 4, 1], strides = [1, 1, 1]} : vector<1x4x16xf32> to vector<1x4x1xf32>
    %1827 = vector.broadcast %1826 : vector<1x4x1xf32> to vector<1x4x16xf32>
    %1828 = arith.addf %1825, %1827 : vector<1x4x16xf32>
    %1829 = vector.extract_strided_slice %708 {offsets = [0, 12, 0], sizes = [1, 1, 16], strides = [1, 1, 1]} : vector<1x16x16xf32> to vector<1x1x16xf32>
    %1830 = vector.broadcast %1829 : vector<1x1x16xf32> to vector<1x4x16xf32>
    %1831 = arith.addf %1830, %1232 : vector<1x4x16xf32>
    %1832 = vector.extract_strided_slice %1756 {offsets = [0, 0, 12], sizes = [1, 4, 1], strides = [1, 1, 1]} : vector<1x4x16xf32> to vector<1x4x1xf32>
    %1833 = vector.broadcast %1832 : vector<1x4x1xf32> to vector<1x4x16xf32>
    %1834 = arith.addf %1831, %1833 : vector<1x4x16xf32>
    %1835 = vector.extract_strided_slice %708 {offsets = [0, 13, 0], sizes = [1, 1, 16], strides = [1, 1, 1]} : vector<1x16x16xf32> to vector<1x1x16xf32>
    %1836 = vector.broadcast %1835 : vector<1x1x16xf32> to vector<1x4x16xf32>
    %1837 = arith.addf %1836, %1232 : vector<1x4x16xf32>
    %1838 = vector.extract_strided_slice %1756 {offsets = [0, 0, 13], sizes = [1, 4, 1], strides = [1, 1, 1]} : vector<1x4x16xf32> to vector<1x4x1xf32>
    %1839 = vector.broadcast %1838 : vector<1x4x1xf32> to vector<1x4x16xf32>
    %1840 = arith.addf %1837, %1839 : vector<1x4x16xf32>
    %1841 = vector.extract_strided_slice %708 {offsets = [0, 14, 0], sizes = [1, 1, 16], strides = [1, 1, 1]} : vector<1x16x16xf32> to vector<1x1x16xf32>
    %1842 = vector.broadcast %1841 : vector<1x1x16xf32> to vector<1x4x16xf32>
    %1843 = arith.addf %1842, %1232 : vector<1x4x16xf32>
    %1844 = vector.extract_strided_slice %1756 {offsets = [0, 0, 14], sizes = [1, 4, 1], strides = [1, 1, 1]} : vector<1x4x16xf32> to vector<1x4x1xf32>
    %1845 = vector.broadcast %1844 : vector<1x4x1xf32> to vector<1x4x16xf32>
    %1846 = arith.addf %1843, %1845 : vector<1x4x16xf32>
    %1847 = vector.extract_strided_slice %708 {offsets = [0, 15, 0], sizes = [1, 1, 16], strides = [1, 1, 1]} : vector<1x16x16xf32> to vector<1x1x16xf32>
    %1848 = vector.broadcast %1847 : vector<1x1x16xf32> to vector<1x4x16xf32>
    %1849 = arith.addf %1848, %1232 : vector<1x4x16xf32>
    %1850 = vector.extract_strided_slice %1756 {offsets = [0, 0, 15], sizes = [1, 4, 1], strides = [1, 1, 1]} : vector<1x4x16xf32> to vector<1x4x1xf32>
    %1851 = vector.broadcast %1850 : vector<1x4x1xf32> to vector<1x4x16xf32>
    %1852 = arith.addf %1849, %1851 : vector<1x4x16xf32>
    %1853 = tpu.concatenate %1762, %1768, %1774, %1780, %1786, %1792, %1798, %1804, %1810, %1816, %1822, %1828, %1834, %1840, %1846, %1852 in 2 : vector<1x4x16xf32>, vector<1x4x16xf32>, vector<1x4x16xf32>, vector<1x4x16xf32>, vector<1x4x16xf32>, vector<1x4x16xf32>, vector<1x4x16xf32>, vector<1x4x16xf32>, vector<1x4x16xf32>, vector<1x4x16xf32>, vector<1x4x16xf32>, vector<1x4x16xf32>, vector<1x4x16xf32>, vector<1x4x16xf32>, vector<1x4x16xf32>, vector<1x4x16xf32> -> vector<1x4x256xf32>
    %1854 = arith.mulf %0, %1853 : vector<1x4x256xf32>
    %c0_90 = arith.constant 0 : index
    %c0_91 = arith.constant 0 : index
    %c0_92 = arith.constant 0 : index
    %1855 = vector.load %arg4[%c0_90, %c0_91, %c0_92] : memref<1x4x256xf32, #tpu.memory_space<vmem>>, vector<1x4x256xf32>
    tpu.vector_store %arg4[%c0_90, %c0_91, %c0_92], %1854 {strides = array<i32>} : memref<1x4x256xf32, #tpu.memory_space<vmem>>, vector<1x4x256xf32>,
    return
  }
  func.func @transform_0(%arg0: i32) -> i32 {
    %c0_i32 = arith.constant 0 : i32
    %c0_i32_0 = arith.constant 0 : i32
    return %c0_i32 : i32
  }
  func.func @transform_1(%arg0: i32) -> i32 {
    %c0_i32 = arith.constant 0 : i32
    %c0_i32_0 = arith.constant 0 : i32
    return %c0_i32 : i32
  }
  func.func @transform_2(%arg0: i32) -> (i32, i32, i32) {
    %c0_i32 = arith.constant 0 : i32
    %c0_i32_0 = arith.constant 0 : i32
    %c0_i32_1 = arith.constant 0 : i32
    return %arg0, %c0_i32, %c0_i32_0 : i32, i32, i32
  }
  func.func @transform_3(%arg0: i32) -> (i32, i32, i32) {
    %c0_i32 = arith.constant 0 : i32
    %c0_i32_0 = arith.constant 0 : i32
    %c0_i32_1 = arith.constant 0 : i32
    return %arg0, %c0_i32, %c0_i32_0 : i32, i32, i32
  }
}

</mosaic_0001>

<llo_original>
// kernel: tpu_custom_call.1
$region0: #{tpu_custom_call.1}
  #allocation0 [shape = 'u32[]', space=smem, size = 0x4, offset = 0x4, fixed_abs, tag = 'smem constant byte address 0x4 - core index']
  #allocation1 [shape = 'u32[144,128]{1,0:T(1,128)}', space=vmem, size = 0x12000, scoped, tag = 'internal scratch']
  %s0 = inlined_call_operand.hbm [shape: f32[294], index: 0, kind: input, shape index: {}]
  %s1 = inlined_call_operand.vmem [shape: f32[6], index: 1, kind: input, shape index: {}]
  %s2 = inlined_call_operand.hbm [shape: f32[2,4,256], index: 2, kind: input, shape index: {}]
  %s3 = inlined_call_operand.hbm [shape: f32[2,4,256], index: 3, kind: output, shape index: {}]
  %s4 = sld [smem:[#allocation0]]
  $region57: #{tpu_custom_call.1} parent=0
    _
  %s6 = ssub.s32 1, %s4
  %s7 = scalar_select 0, %s6, %s4
  $region1: #{tpu_custom_call.1} parent=0
    #allocation2 [shape = 'u8[1536]{0}', space=smem, size = 0x600, scoped, tag = 'input window, operand 0, single buffered']
    #allocation3 [shape = 's32[2]{0}', space=sflag, size = 0x8, scoped, tag = 'scoped memory for tpu_custom_call.1']
    #allocation4 [shape = 's32[2]{0}', space=sflag, size = 0x8, scoped, tag = 'scoped memory for tpu_custom_call.1']
    #allocation5 [shape = 's32[2]{0}', space=sflag, size = 0x8, scoped, tag = 'scoped memory for tpu_custom_call.1']
    #allocation6 [shape = 's32[2]{0}', space=sflag, size = 0x8, scoped, tag = 'scoped memory for tpu_custom_call.1']
    #allocation7 [shape = 'u8[512]{0}', space=smem, size = 0x200, scoped, tag = 'input window, operand 1, single buffered']
    #allocation8 [shape = 'u8[8192]{0}', space=vmem, size = 0x2000, scoped, tag = 'input window, operand 2']
    #allocation9 [shape = 'u8[8192]{0}', space=vmem, size = 0x2000, scoped, tag = 'output window, operand 0']
    %8 = vsyncpa [#allocation5], 0
    %9 = vsyncpa [#allocation6], 0
    %10 = vsyncpa [#allocation3], 0
    %s11 = scalar_lea.sflag [#allocation3], 1
    %12 = vsyncpa %s11, 0
    %13 = vsyncpa [#allocation4], 0
    %s14 = scalar_lea.sflag [#allocation4], 1
    %15 = vsyncpa %s14, 0
    loop: start=0, step=1, limit=4
    $region2: #{tpu_custom_call.1} parent=1 // loop_pre_header
      _
    $region3: #{tpu_custom_call.1} parent=1 // loop_header
      %s17 = sphi 0, %s21
      %p18 = scmp.ge.s32.totalorder %s17, 4
      %s25 = sphi 0, %s25
      %s27 = sphi 0, %s25
      %s28 = sphi 0, %s27
      %s42 = sphi 0, %s28
      %s46 = sphi 0, %s46
      %s48 = sphi 0, %s46
      %s49 = sphi 0, %s48
      %s63 = sphi 0, %s49
      %s69 = sphi 0, %s71
      %s72 = sphi 0, %s69
      %s73 = sphi 0, %s72
      %s89 = sphi 0, %s73
      %s95 = sphi 0, %s97
      %s98 = sphi 0, %s95
      %s99 = sphi 0, %s98
      %s115 = sphi 0, %s99
    $region4: #{tpu_custom_call.1} parent=1 // loop_header_branch
      %20 = sbr.rel (%p18) target = $region8
    $region5: #{tpu_custom_call.1} parent=1 // loop_body
      %s22 = ssub.s32 %s17, 1
      %s23 = ssub.s32 %s17, 2
      %s24 = sadd.s32 %s17, 1
      %s26 = sadd.s32 %s25, 1
      %p29 = scmp.eq.s32.totalorder %s17, 1
      %p30 = scmp.ne.s32.totalorder %s25, %s27
      %p31 = scmp.eq.s32.totalorder %s17, 0
      %p32 = por %p30, %p31
      %p33 = scmp.ne.s32.totalorder %s25, %s27
      %p34 = scmp.eq.s32.totalorder %s22, 1
      %p35 = por %p33, %p34
      %p36 = scmp.ne.s32.totalorder %s27, %s28
      %p37 = scmp.eq.s32.totalorder %s22, 0
      %p38 = por %p36, %p37
      %p39 = scmp.ne.s32.totalorder %s27, %s28
      %p40 = scmp.eq.s32.totalorder %s23, 1
      %p41 = por %p39, %p40
      %p43 = scmp.ne.s32.totalorder %s28, %s42
      %p44 = scmp.eq.s32.totalorder %s23, 0
      %p45 = por %p43, %p44
      %s47 = sadd.s32 %s46, 1
      %p50 = scmp.eq.s32.totalorder %s17, 1
      %p51 = scmp.ne.s32.totalorder %s46, %s48
      %p52 = scmp.eq.s32.totalorder %s17, 0
      %p53 = por %p51, %p52
      %p54 = scmp.ne.s32.totalorder %s46, %s48
      %p55 = scmp.eq.s32.totalorder %s22, 1
      %p56 = por %p54, %p55
      %p57 = scmp.ne.s32.totalorder %s48, %s49
      %p58 = scmp.eq.s32.totalorder %s22, 0
      %p59 = por %p57, %p58
      %p60 = scmp.ne.s32.totalorder %s48, %s49
      %p61 = scmp.eq.s32.totalorder %s23, 1
      %p62 = por %p60, %p61
      %p64 = scmp.ne.s32.totalorder %s49, %s63
      %p65 = scmp.eq.s32.totalorder %s23, 0
      %p66 = por %p64, %p65
      %s67 = ssub.s32 %s17, %s24
      %p68 = scmp.eq.s32.totalorder %s67, 0
      %s70 = sadd.s32 %s69, 1
      %s71 = scalar_select %p68, %s69, %s70
      %p74 = pneg %p68
      %p75 = scmp.eq.s32.totalorder %s17, 1
      %p76 = por %p74, %p75
      %p77 = scmp.ne.s32.totalorder %s69, %s72
      %p78 = scmp.eq.s32.totalorder %s17, 0
      %p79 = por %p77, %p78
      %p80 = scmp.ne.s32.totalorder %s69, %s72
      %p81 = scmp.eq.s32.totalorder %s22, 1
      %p82 = por %p80, %p81
      %p83 = scmp.ne.s32.totalorder %s72, %s73
      %p84 = scmp.eq.s32.totalorder %s22, 0
      %p85 = por %p83, %p84
      %p86 = scmp.ne.s32.totalorder %s72, %s73
      %p87 = scmp.eq.s32.totalorder %s23, 1
      %p88 = por %p86, %p87
      %p90 = scmp.ne.s32.totalorder %s73, %s89
      %p91 = scmp.eq.s32.totalorder %s23, 0
      %p92 = por %p90, %p91
      %s93 = ssub.s32 %s17, %s24
      %p94 = scmp.eq.s32.totalorder %s93, 0
      %s96 = sadd.s32 %s95, 1
      %s97 = scalar_select %p94, %s95, %s96
      %p100 = pneg %p94
      %p101 = scmp.eq.s32.totalorder %s17, 1
      %p102 = por %p100, %p101
      %p103 = scmp.ne.s32.totalorder %s95, %s98
      %p104 = scmp.eq.s32.totalorder %s17, 0
      %p105 = por %p103, %p104
      %p106 = scmp.ne.s32.totalorder %s95, %s98
      %p107 = scmp.eq.s32.totalorder %s22, 1
      %p108 = por %p106, %p107
      %p109 = scmp.ne.s32.totalorder %s98, %s99
      %p110 = scmp.eq.s32.totalorder %s22, 0
      %p111 = por %p109, %p110
      %p112 = scmp.ne.s32.totalorder %s98, %s99
      %p113 = scmp.eq.s32.totalorder %s23, 1
      %p114 = por %p112, %p113
      %p116 = scmp.ne.s32.totalorder %s99, %s115
      %p117 = scmp.eq.s32.totalorder %s23, 0
      %p118 = por %p116, %p117
      %p119 = scmp.le.s32.totalorder 1, %s17
      %p120 = scmp.lt.s32.totalorder %s17, 3
      %p121 = pnand %p119, %p120
      %p122 = pneg %p121
      // Predicated region
      $region9: #{tpu_custom_call.1} parent=5 // pred_check
        _
      $region10: #{tpu_custom_call.1} parent=5 // pred_check_branch
        %124 = sbr.rel (%p121) target = $region12
      $region11: #{tpu_custom_call.1} parent=5 // pred_region
        %s125 = ssub.s32 %s17, 1
        // Predicated region
        $region13: #{tpu_custom_call.1} parent=11 // pred_check
          %p126 = pneg %p38
        $region14: #{tpu_custom_call.1} parent=11 // pred_check_branch
          %128 = sbr.rel (%p126) target = $region16
        $region15: #{tpu_custom_call.1} parent=11 // pred_region
          %s130 = ssub.s32 48, 48
          %131 = vsyncadd [#allocation5], %s130
          %134 = dma.hbm_to_smem %s0, 48, [#allocation2], [#allocation5]
        $region16: #{tpu_custom_call.1} parent=11 // pred_fallthru
          _
        // Predicated region
        $region17: #{tpu_custom_call.1} parent=11 // pred_check
          %p135 = pneg %p59
        $region18: #{tpu_custom_call.1} parent=11 // pred_check_branch
          %137 = sbr.rel (%p135) target = $region20
        $region19: #{tpu_custom_call.1} parent=11 // pred_region
          %s139 = ssub.s32 16, 16
          %140 = vsyncadd [#allocation6], %s139
          %s142 = sshll.u32 %s1, 4
          %s143 = int_to_ptr.vmem [resolvable:$true] %s142
          %145 = dma.vmem_to_smem %s143, 16, [#allocation7], [#allocation6]
        $region20: #{tpu_custom_call.1} parent=11 // pred_fallthru
          _
      $region12: #{tpu_custom_call.1} parent=5 // pred_fallthru
        _
      %p146 = scmp.lt.s32.totalorder %s17, 2
      // Predicated region
      $region21: #{tpu_custom_call.1} parent=5 // pred_check
        %p147 = pneg %p146
      $region22: #{tpu_custom_call.1} parent=5 // pred_check_branch
        %149 = sbr.rel (%p147) target = $region24
      $region23: #{tpu_custom_call.1} parent=5 // pred_region
        // Predicated region
        $region25: #{tpu_custom_call.1} parent=23 // pred_check
          %p150 = pneg %p79
        $region26: #{tpu_custom_call.1} parent=23 // pred_check_branch
          %152 = sbr.rel (%p150) target = $region28
        $region27: #{tpu_custom_call.1} parent=23 // pred_region
          %s153 = sand.u32 %s69, 1
          %s154 = scalar_lea.sflag [#allocation3], %s153
          %s155 = sand.u32 %s69, 1
          %s156 = smul.addr %s155, 8
          %s157 = scalar_lea.vmem [#allocation8], %s156
          %s159 = ssub.s32 128, 128
          %160 = vsyncadd %s154, %s159
          %s161 = smul.addr %s17, 2
          %s162 = smul.addr %s161, 64
          %s163 = scalar_lea.hbm %s2, %s162
          %s165 = sshll.u32 %s157, 4
          %s166 = int_to_ptr.vmem [resolvable:$true] %s165
          %168 = dma.hbm_to_vmem [thread:$0]  %s163, 128, %s166, %s154
        $region28: #{tpu_custom_call.1} parent=23 // pred_fallthru
          _
      $region24: #{tpu_custom_call.1} parent=5 // pred_fallthru
        _
      %p169 = scmp.le.s32.totalorder 1, %s17
      %p170 = scmp.lt.s32.totalorder %s17, 3
      %p171 = pnand %p169, %p170
      %p172 = pneg %p171
      // Predicated region
      $region29: #{tpu_custom_call.1} parent=5 // pred_check
        _
      $region30: #{tpu_custom_call.1} parent=5 // pred_check_branch
        %174 = sbr.rel (%p171) target = $region32
      $region31: #{tpu_custom_call.1} parent=5 // pred_region
        %s175 = ssub.s32 %s17, 1
        // Predicated region
        $region33: #{tpu_custom_call.1} parent=31 // pred_check
          %p176 = pneg %p38
        $region34: #{tpu_custom_call.1} parent=31 // pred_check_branch
          %178 = sbr.rel (%p176) target = $region36
        $region35: #{tpu_custom_call.1} parent=31 // pred_region
          %179 = dma.done [#allocation5], 48
        $region36: #{tpu_custom_call.1} parent=31 // pred_fallthru
          _
        // Predicated region
        $region37: #{tpu_custom_call.1} parent=31 // pred_check
          %p180 = pneg %p59
        $region38: #{tpu_custom_call.1} parent=31 // pred_check_branch
          %182 = sbr.rel (%p180) target = $region40
        $region39: #{tpu_custom_call.1} parent=31 // pred_region
          %183 = dma.done [#allocation6], 16
        $region40: #{tpu_custom_call.1} parent=31 // pred_fallthru
          _
        %s184 = sand.u32 %s72, 1
        %s185 = scalar_lea.sflag [#allocation3], %s184
        %s186 = sand.u32 %s72, 1
        %s187 = smul.addr %s186, 8
        %s188 = scalar_lea.vmem [#allocation8], %s187
        // Predicated region
        $region41: #{tpu_custom_call.1} parent=31 // pred_check
          %p189 = pneg %p85
        $region42: #{tpu_custom_call.1} parent=31 // pred_check_branch
          %191 = sbr.rel (%p189) target = $region44
        $region43: #{tpu_custom_call.1} parent=31 // pred_region
          %192 = dma.done %s185, 128
        $region44: #{tpu_custom_call.1} parent=31 // pred_fallthru
          _
        %193 = sfence
        %p194 = pneg %p38
        %p195 = pneg %p35
        %p196 = pneg %p59
        %p197 = pneg %p56
        %s198 = sand.u32 %s72, 1
        %s199 = scalar_lea.sflag [#allocation3], %s198
        %s200 = sand.u32 %s72, 1
        %s201 = smul.addr %s200, 8
        %s202 = scalar_lea.vmem [#allocation8], %s201
        %p203 = pneg %p85
        %p204 = pneg %p82
        %p205 = pneg %p111
        %p206 = pneg %p108
        %s207 = sand.u32 %s98, 1
        %s208 = scalar_lea.sflag [#allocation4], %s207
        %s209 = sand.u32 %s98, 1
        %s210 = smul.addr %s209, 8
        %s211 = scalar_lea.vmem [#allocation9], %s210
        %v212 = vld [vmem:[%s188] sm:$0xff]
        %vm213 = vcmask 125952
        %v214 = vsel %vm213, %v212, -inf
        %v215 = vrot.slane %v214, 4
        %v216 = vmax.f32 %v214, %v215
        %v217 = vrot.slane %v216, 2
        %v218 = vmax.f32 %v216, %v217
        %v219 = vrot.slane %v218, 1
        %v220 = vmax.f32 %v218, %v219
        %v221 = vsel %vm213, %v212, 0.0
        %v222 = vrot.slane %v221, 4
        %v223 = vadd.f32 %v221, %v222
        %v224 = vrot.slane %v223, 2
        %v225 = vadd.f32 %v223, %v224
        %v226 = vrot.slane %v225, 1
        %v227 = vadd.f32 %v225, %v226
        %228 = vmax.xlane.f32.xlu0 %v214
        %v229 = vpop.xlane.xlu0 %228
        %230 = vadd.xlane.f32.xlu0 %v221
        %v231 = vpop.xlane.xlu0 %230
        %233 = vrot.lane.b32.xlu0 %v212, 112
        %v234 = vpop.permute.xlu0 %233
        %v236 = vmax.f32 %v212, %v234
        %v237 = vadd.f32 %v212, %v234
        %vm238 = vcmask 257152
        %v239 = vsel %vm238, %v212, -inf
        %v240 = vrot.slane %v239, 4
        %v241 = vmax.f32 %v239, %v240
        %v242 = vrot.slane %v241, 2
        %v243 = vmax.f32 %v241, %v242
        %v244 = vrot.slane %v243, 1
        %v245 = vmax.f32 %v243, %v244
        %v246 = vsel %vm238, %v212, 0.0
        %v247 = vrot.slane %v246, 4
        %v248 = vadd.f32 %v246, %v247
        %v249 = vrot.slane %v248, 2
        %v250 = vadd.f32 %v248, %v249
        %v251 = vrot.slane %v250, 1
        %v252 = vadd.f32 %v250, %v251
        %253 = vmax.xlane.f32.xlu0 %v239
        %v254 = vpop.xlane.xlu0 %253
        %v255 = vsel %vm213, %v234, 0.0
        %256 = vadd.xlane.f32.xlu0 %v255
        %v257 = vpop.xlane.xlu0 %256
        %258 = vrot.lane.b32.xlu0 %v212, 96
        %v259 = vpop.permute.xlu0 %258
        %v261 = vmax.f32 %v236, %v259
        %v262 = vadd.f32 %v237, %v259
        %vm263 = vcmask 388352
        %v264 = vsel %vm263, %v212, -inf
        %v265 = vrot.slane %v264, 4
        %v266 = vmax.f32 %v264, %v265
        %v267 = vrot.slane %v266, 2
        %v268 = vmax.f32 %v266, %v267
        %v269 = vrot.slane %v268, 1
        %v270 = vmax.f32 %v268, %v269
        %v271 = vsel %vm263, %v212, 0.0
        %v272 = vrot.slane %v271, 4
        %v273 = vadd.f32 %v271, %v272
        %v274 = vrot.slane %v273, 2
        %v275 = vadd.f32 %v273, %v274
        %v276 = vrot.slane %v275, 1
        %v277 = vadd.f32 %v275, %v276
        %278 = vmax.xlane.f32.xlu0 %v264
        %v279 = vpop.xlane.xlu0 %278
        %v280 = vsel %vm213, %v259, 0.0
        %281 = vadd.xlane.f32.xlu0 %v280
        %v282 = vpop.xlane.xlu0 %281
        %283 = vrot.lane.b32.xlu0 %v212, 80
        %v284 = vpop.permute.xlu0 %283
        %v286 = vmax.f32 %v261, %v284
        %v287 = vadd.f32 %v262, %v284
        %vm288 = vcmask 519552
        %v289 = vsel %vm288, %v212, -inf
        %v290 = vrot.slane %v289, 4
        %v291 = vmax.f32 %v289, %v290
        %v292 = vrot.slane %v291, 2
        %v293 = vmax.f32 %v291, %v292
        %v294 = vrot.slane %v293, 1
        %v295 = vmax.f32 %v293, %v294
        %v296 = vsel %vm288, %v212, 0.0
        %v297 = vrot.slane %v296, 4
        %v298 = vadd.f32 %v296, %v297
        %v299 = vrot.slane %v298, 2
        %v300 = vadd.f32 %v298, %v299
        %v301 = vrot.slane %v300, 1
        %v302 = vadd.f32 %v300, %v301
        %303 = vmax.xlane.f32.xlu0 %v289
        %v304 = vpop.xlane.xlu0 %303
        %v305 = vsel %vm213, %v284, 0.0
        %306 = vadd.xlane.f32.xlu0 %v305
        %v307 = vpop.xlane.xlu0 %306
        %308 = vrot.lane.b32.xlu0 %v212, 64
        %v309 = vpop.permute.xlu0 %308
        %v311 = vmax.f32 %v286, %v309
        %v312 = vadd.f32 %v287, %v309
        %vm313 = vcmask 650752
        %v314 = vsel %vm313, %v212, -inf
        %v315 = vrot.slane %v314, 4
        %v316 = vmax.f32 %v314, %v315
        %v317 = vrot.slane %v316, 2
        %v318 = vmax.f32 %v316, %v317
        %v319 = vrot.slane %v318, 1
        %v320 = vmax.f32 %v318, %v319
        %v321 = vsel %vm313, %v212, 0.0
        %v322 = vrot.slane %v321, 4
        %v323 = vadd.f32 %v321, %v322
        %v324 = vrot.slane %v323, 2
        %v325 = vadd.f32 %v323, %v324
        %v326 = vrot.slane %v325, 1
        %v327 = vadd.f32 %v325, %v326
        %328 = vmax.xlane.f32.xlu0 %v314
        %v329 = vpop.xlane.xlu0 %328
        %v330 = vsel %vm213, %v309, 0.0
        %331 = vadd.xlane.f32.xlu0 %v330
        %v332 = vpop.xlane.xlu0 %331
        %333 = vrot.lane.b32.xlu0 %v212, 48
        %v334 = vpop.permute.xlu0 %333
        %v336 = vmax.f32 %v311, %v334
        %v337 = vadd.f32 %v312, %v334
        %vm338 = vcmask 781952
        %v339 = vsel %vm338, %v212, -inf
        %v340 = vrot.slane %v339, 4
        %v341 = vmax.f32 %v339, %v340
        %v342 = vrot.slane %v341, 2
        %v343 = vmax.f32 %v341, %v342
        %v344 = vrot.slane %v343, 1
        %v345 = vmax.f32 %v343, %v344
        %v346 = vsel %vm338, %v212, 0.0
        %v347 = vrot.slane %v346, 4
        %v348 = vadd.f32 %v346, %v347
        %v349 = vrot.slane %v348, 2
        %v350 = vadd.f32 %v348, %v349
        %v351 = vrot.slane %v350, 1
        %v352 = vadd.f32 %v350, %v351
        %353 = vmax.xlane.f32.xlu0 %v339
        %v354 = vpop.xlane.xlu0 %353
        %v355 = vsel %vm213, %v334, 0.0
        %356 = vadd.xlane.f32.xlu0 %v355
        %v357 = vpop.xlane.xlu0 %356
        %358 = vrot.lane.b32.xlu0 %v212, 32
        %v359 = vpop.permute.xlu0 %358
        %v361 = vmax.f32 %v336, %v359
        %v362 = vadd.f32 %v337, %v359
        %vm363 = vcmask 913152
        %v364 = vsel %vm363, %v212, -inf
        %v365 = vrot.slane %v364, 4
        %v366 = vmax.f32 %v364, %v365
        %v367 = vrot.slane %v366, 2
        %v368 = vmax.f32 %v366, %v367
        %v369 = vrot.slane %v368, 1
        %v370 = vmax.f32 %v368, %v369
        %v371 = vsel %vm363, %v212, 0.0
        %v372 = vrot.slane %v371, 4
        %v373 = vadd.f32 %v371, %v372
        %v374 = vrot.slane %v373, 2
        %v375 = vadd.f32 %v373, %v374
        %v376 = vrot.slane %v375, 1
        %v377 = vadd.f32 %v375, %v376
        %378 = vmax.xlane.f32.xlu0 %v364
        %v379 = vpop.xlane.xlu0 %378
        %v380 = vsel %vm213, %v359, 0.0
        %381 = vadd.xlane.f32.xlu0 %v380
        %v382 = vpop.xlane.xlu0 %381
        %383 = vrot.lane.b32.xlu0 %v212, 16
        %v384 = vpop.permute.xlu0 %383
        %v386 = vmax.f32 %v361, %v384
        %v387 = vadd.f32 %v362, %v384
        %vm388 = vcmask 1044352
        %v389 = vsel %vm388, %v212, -inf
        %v390 = vrot.slane %v389, 4
        %v391 = vmax.f32 %v389, %v390
        %v392 = vrot.slane %v391, 2
        %v393 = vmax.f32 %v391, %v392
        %v394 = vrot.slane %v393, 1
        %v395 = vmax.f32 %v393, %v394
        %v396 = vsel %vm388, %v212, 0.0
        %v397 = vrot.slane %v396, 4
        %v398 = vadd.f32 %v396, %v397
        %v399 = vrot.slane %v398, 2
        %v400 = vadd.f32 %v398, %v399
        %v401 = vrot.slane %v400, 1
        %v402 = vadd.f32 %v400, %v401
        %403 = vmax.xlane.f32.xlu0 %v389
        %v404 = vpop.xlane.xlu0 %403
        %v405 = vsel %vm213, %v384, 0.0
        %406 = vadd.xlane.f32.xlu0 %v405
        %v407 = vpop.xlane.xlu0 %406
        %v408 = vrot.slane %v212, 4
        %v410 = vmax.f32 %v386, %v408
        %v411 = vadd.f32 %v387, %v408
        %v412 = vcombine.high %v212, %v212
        %v414 = vsel %vm213, %v412, -inf
        %v415 = vrot.slane %v414, 4
        %v416 = vmax.f32 %v414, %v415
        %v417 = vrot.slane %v416, 2
        %v418 = vmax.f32 %v416, %v417
        %v419 = vrot.slane %v418, 1
        %v420 = vmax.f32 %v418, %v419
        %v421 = vsel %vm213, %v412, 0.0
        %v422 = vrot.slane %v421, 4
        %v423 = vadd.f32 %v421, %v422
        %v424 = vrot.slane %v423, 2
        %v425 = vadd.f32 %v423, %v424
        %v426 = vrot.slane %v425, 1
        %v427 = vadd.f32 %v425, %v426
        %428 = vmax.xlane.f32.xlu0 %v414
        %v429 = vpop.xlane.xlu0 %428
        %430 = vadd.xlane.f32.xlu0 %v421
        %v431 = vpop.xlane.xlu0 %430
        %v432 = vrot.slane %v234, 4
        %v434 = vmax.f32 %v410, %v432
        %v435 = vadd.f32 %v411, %v432
        %436 = vrot.lane.b32.xlu0 %v412, 112
        %v437 = vpop.permute.xlu0 %436
        %v439 = vsel %vm213, %v437, -inf
        %v440 = vrot.slane %v439, 4
        %v441 = vmax.f32 %v439, %v440
        %v442 = vrot.slane %v441, 2
        %v443 = vmax.f32 %v441, %v442
        %v444 = vrot.slane %v443, 1
        %v445 = vmax.f32 %v443, %v444
        %v446 = vsel %vm213, %v437, 0.0
        %v447 = vrot.slane %v446, 4
        %v448 = vadd.f32 %v446, %v447
        %v449 = vrot.slane %v448, 2
        %v450 = vadd.f32 %v448, %v449
        %v451 = vrot.slane %v450, 1
        %v452 = vadd.f32 %v450, %v451
        %453 = vmax.xlane.f32.xlu0 %v439
        %v454 = vpop.xlane.xlu0 %453
        %455 = vadd.xlane.f32.xlu0 %v446
        %v456 = vpop.xlane.xlu0 %455
        %v457 = vrot.slane %v259, 4
        %v459 = vmax.f32 %v434, %v457
        %v460 = vadd.f32 %v435, %v457
        %461 = vrot.lane.b32.xlu0 %v412, 96
        %v462 = vpop.permute.xlu0 %461
        %v464 = vsel %vm213, %v462, -inf
        %v465 = vrot.slane %v464, 4
        %v466 = vmax.f32 %v464, %v465
        %v467 = vrot.slane %v466, 2
        %v468 = vmax.f32 %v466, %v467
        %v469 = vrot.slane %v468, 1
        %v470 = vmax.f32 %v468, %v469
        %v471 = vsel %vm213, %v462, 0.0
        %v472 = vrot.slane %v471, 4
        %v473 = vadd.f32 %v471, %v472
        %v474 = vrot.slane %v473, 2
        %v475 = vadd.f32 %v473, %v474
        %v476 = vrot.slane %v475, 1
        %v477 = vadd.f32 %v475, %v476
        %478 = vmax.xlane.f32.xlu0 %v464
        %v479 = vpop.xlane.xlu0 %478
        %480 = vadd.xlane.f32.xlu0 %v471
        %v481 = vpop.xlane.xlu0 %480
        %v482 = vrot.slane %v284, 4
        %v484 = vmax.f32 %v459, %v482
        %v485 = vadd.f32 %v460, %v482
        %486 = vrot.lane.b32.xlu0 %v412, 80
        %v487 = vpop.permute.xlu0 %486
        %v489 = vsel %vm213, %v487, -inf
        %v490 = vrot.slane %v489, 4
        %v491 = vmax.f32 %v489, %v490
        %v492 = vrot.slane %v491, 2
        %v493 = vmax.f32 %v491, %v492
        %v494 = vrot.slane %v493, 1
        %v495 = vmax.f32 %v493, %v494
        %v496 = vsel %vm213, %v487, 0.0
        %v497 = vrot.slane %v496, 4
        %v498 = vadd.f32 %v496, %v497
        %v499 = vrot.slane %v498, 2
        %v500 = vadd.f32 %v498, %v499
        %v501 = vrot.slane %v500, 1
        %v502 = vadd.f32 %v500, %v501
        %503 = vmax.xlane.f32.xlu0 %v489
        %v504 = vpop.xlane.xlu0 %503
        %505 = vadd.xlane.f32.xlu0 %v496
        %v506 = vpop.xlane.xlu0 %505
        %v507 = vrot.slane %v309, 4
        %v509 = vmax.f32 %v484, %v507
        %v510 = vadd.f32 %v485, %v507
        %511 = vrot.lane.b32.xlu0 %v412, 64
        %v512 = vpop.permute.xlu0 %511
        %v514 = vsel %vm213, %v512, -inf
        %v515 = vrot.slane %v514, 4
        %v516 = vmax.f32 %v514, %v515
        %v517 = vrot.slane %v516, 2
        %v518 = vmax.f32 %v516, %v517
        %v519 = vrot.slane %v518, 1
        %v520 = vmax.f32 %v518, %v519
        %v521 = vsel %vm213, %v512, 0.0
        %v522 = vrot.slane %v521, 4
        %v523 = vadd.f32 %v521, %v522
        %v524 = vrot.slane %v523, 2
        %v525 = vadd.f32 %v523, %v524
        %v526 = vrot.slane %v525, 1
        %v527 = vadd.f32 %v525, %v526
        %528 = vmax.xlane.f32.xlu0 %v514
        %v529 = vpop.xlane.xlu0 %528
        %530 = vadd.xlane.f32.xlu0 %v521
        %v531 = vpop.xlane.xlu0 %530
        %v532 = vrot.slane %v334, 4
        %v534 = vmax.f32 %v509, %v532
        %v535 = vadd.f32 %v510, %v532
        %536 = vrot.lane.b32.xlu0 %v412, 48
        %v537 = vpop.permute.xlu0 %536
        %v539 = vsel %vm213, %v537, -inf
        %v540 = vrot.slane %v539, 4
        %v541 = vmax.f32 %v539, %v540
        %v542 = vrot.slane %v541, 2
        %v543 = vmax.f32 %v541, %v542
        %v544 = vrot.slane %v543, 1
        %v545 = vmax.f32 %v543, %v544
        %v546 = vsel %vm213, %v537, 0.0
        %v547 = vrot.slane %v546, 4
        %v548 = vadd.f32 %v546, %v547
        %v549 = vrot.slane %v548, 2
        %v550 = vadd.f32 %v548, %v549
        %v551 = vrot.slane %v550, 1
        %v552 = vadd.f32 %v550, %v551
        %553 = vmax.xlane.f32.xlu0 %v539
        %v554 = vpop.xlane.xlu0 %553
        %555 = vadd.xlane.f32.xlu0 %v546
        %v556 = vpop.xlane.xlu0 %555
        %v557 = vrot.slane %v359, 4
        %v559 = vmax.f32 %v534, %v557
        %v560 = vadd.f32 %v535, %v557
        %561 = vrot.lane.b32.xlu0 %v412, 32
        %v562 = vpop.permute.xlu0 %561
        %v564 = vsel %vm213, %v562, -inf
        %v565 = vrot.slane %v564, 4
        %v566 = vmax.f32 %v564, %v565
        %v567 = vrot.slane %v566, 2
        %v568 = vmax.f32 %v566, %v567
        %v569 = vrot.slane %v568, 1
        %v570 = vmax.f32 %v568, %v569
        %v571 = vsel %vm213, %v562, 0.0
        %v572 = vrot.slane %v571, 4
        %v573 = vadd.f32 %v571, %v572
        %v574 = vrot.slane %v573, 2
        %v575 = vadd.f32 %v573, %v574
        %v576 = vrot.slane %v575, 1
        %v577 = vadd.f32 %v575, %v576
        %578 = vmax.xlane.f32.xlu0 %v564
        %v579 = vpop.xlane.xlu0 %578
        %580 = vadd.xlane.f32.xlu0 %v571
        %v581 = vpop.xlane.xlu0 %580
        %v582 = vrot.slane %v384, 4
        %v584 = vmax.f32 %v559, %v582
        %v585 = vadd.f32 %v560, %v582
        %586 = vrot.lane.b32.xlu0 %v412, 16
        %v587 = vpop.permute.xlu0 %586
        %v589 = vsel %vm213, %v587, -inf
        %v590 = vrot.slane %v589, 4
        %v591 = vmax.f32 %v589, %v590
        %v592 = vrot.slane %v591, 2
        %v593 = vmax.f32 %v591, %v592
        %v594 = vrot.slane %v593, 1
        %v595 = vmax.f32 %v593, %v594
        %v596 = vsel %vm213, %v587, 0.0
        %v597 = vrot.slane %v596, 4
        %v598 = vadd.f32 %v596, %v597
        %v599 = vrot.slane %v598, 2
        %v600 = vadd.f32 %v598, %v599
        %v601 = vrot.slane %v600, 1
        %v602 = vadd.f32 %v600, %v601
        %603 = vmax.xlane.f32.xlu0 %v589
        %v604 = vpop.xlane.xlu0 %603
        %605 = vadd.xlane.f32.xlu0 %v596
        %v606 = vpop.xlane.xlu0 %605
        %v607 = vmul.f32 %v585, 0.0625
        %609 = vrot.lane.b32.xlu0 %v245, 112
        %v610 = vpop.permute.xlu0 %609
        %613 = vrot.lane.b32.xlu0 %v270, 96
        %v614 = vpop.permute.xlu0 %613
        %617 = vrot.lane.b32.xlu0 %v295, 80
        %v618 = vpop.permute.xlu0 %617
        %621 = vrot.lane.b32.xlu0 %v320, 64
        %v622 = vpop.permute.xlu0 %621
        %625 = vrot.lane.b32.xlu0 %v345, 48
        %v626 = vpop.permute.xlu0 %625
        %629 = vrot.lane.b32.xlu0 %v370, 32
        %v630 = vpop.permute.xlu0 %629
        %633 = vrot.lane.b32.xlu0 %v395, 16
        %v634 = vpop.permute.xlu0 %633
        %vm636 = vcmask 1040384
        %v637 = vsel %vm636, %v220, %v610
        %vm638 = vcmask 1041408
        %v639 = vsel %vm638, %v637, %v614
        %vm640 = vcmask 1042432
        %v641 = vsel %vm640, %v639, %v618
        %vm642 = vcmask 1043456
        %v643 = vsel %vm642, %v641, %v622
        %vm644 = vcmask 1044480
        %v645 = vsel %vm644, %v643, %v626
        %vm646 = vcmask 1045504
        %v647 = vsel %vm646, %v645, %v630
        %vm648 = vcmask 1046528
        %v649 = vsel %vm648, %v647, %v634
        %v650 = vsel %vm636, %v420, %v445
        %v651 = vsel %vm638, %v650, %v470
        %v652 = vsel %vm640, %v651, %v495
        %v653 = vsel %vm642, %v652, %v520
        %v654 = vsel %vm644, %v653, %v545
        %v655 = vsel %vm646, %v654, %v570
        %v656 = vsel %vm648, %v655, %v595
        %658 = vrot.lane.b32.xlu0 %v252, 112
        %v659 = vpop.permute.xlu0 %658
        %662 = vrot.lane.b32.xlu0 %v277, 96
        %v663 = vpop.permute.xlu0 %662
        %666 = vrot.lane.b32.xlu0 %v302, 80
        %v667 = vpop.permute.xlu0 %666
        %670 = vrot.lane.b32.xlu0 %v327, 64
        %v671 = vpop.permute.xlu0 %670
        %674 = vrot.lane.b32.xlu0 %v352, 48
        %v675 = vpop.permute.xlu0 %674
        %678 = vrot.lane.b32.xlu0 %v377, 32
        %v679 = vpop.permute.xlu0 %678
        %682 = vrot.lane.b32.xlu0 %v402, 16
        %v683 = vpop.permute.xlu0 %682
        %v685 = vsel %vm636, %v227, %v659
        %v686 = vsel %vm638, %v685, %v663
        %v687 = vsel %vm640, %v686, %v667
        %v688 = vsel %vm642, %v687, %v671
        %v689 = vsel %vm644, %v688, %v675
        %v690 = vsel %vm646, %v689, %v679
        %v691 = vsel %vm648, %v690, %v683
        %v692 = vsel %vm636, %v427, %v452
        %v693 = vsel %vm638, %v692, %v477
        %v694 = vsel %vm640, %v693, %v502
        %v695 = vsel %vm642, %v694, %v527
        %v696 = vsel %vm644, %v695, %v552
        %v697 = vsel %vm646, %v696, %v577
        %v698 = vsel %vm648, %v697, %v602
        %v699 = vmul.f32 %v691, 0.25
        %v700 = vmul.f32 %v698, 0.25
        %vm701 = vcmask 7168
        %v702 = vsel %vm701, %v229, %v254
        %vm703 = vcmask 15360
        %v704 = vsel %vm703, %v702, %v279
        %vm705 = vcmask 23552
        %v706 = vsel %vm705, %v704, %v304
        %vm707 = vcmask 31744
        %v708 = vsel %vm707, %v706, %v329
        %vm709 = vcmask 39936
        %v710 = vsel %vm709, %v708, %v354
        %vm711 = vcmask 48128
        %v712 = vsel %vm711, %v710, %v379
        %vm713 = vcmask 56320
        %v714 = vsel %vm713, %v712, %v404
        %vm715 = vcmask 64512
        %v716 = vsel %vm715, %v714, %v429
        %vm717 = vcmask 72704
        %v718 = vsel %vm717, %v716, %v454
        %vm719 = vcmask 80896
        %v720 = vsel %vm719, %v718, %v479
        %vm721 = vcmask 89088
        %v722 = vsel %vm721, %v720, %v504
        %vm723 = vcmask 97280
        %v724 = vsel %vm723, %v722, %v529
        %vm725 = vcmask 105472
        %v726 = vsel %vm725, %v724, %v554
        %vm727 = vcmask 113664
        %v728 = vsel %vm727, %v726, %v579
        %vm729 = vcmask 121856
        %v730 = vsel %vm729, %v728, %v604
        %v731 = vsel %vm701, %v231, %v257
        %v732 = vsel %vm703, %v731, %v282
        %v733 = vsel %vm705, %v732, %v307
        %v734 = vsel %vm707, %v733, %v332
        %v735 = vsel %vm709, %v734, %v357
        %v736 = vsel %vm711, %v735, %v382
        %v737 = vsel %vm713, %v736, %v407
        %v738 = vsel %vm715, %v737, %v431
        %v739 = vsel %vm717, %v738, %v456
        %v740 = vsel %vm719, %v739, %v481
        %v741 = vsel %vm721, %v740, %v506
        %v742 = vsel %vm723, %v741, %v531
        %v743 = vsel %vm725, %v742, %v556
        %v744 = vsel %vm727, %v743, %v581
        %v745 = vsel %vm729, %v744, %v606
        %v746 = vmul.f32 %v745, 0.0625
        %v749 = vrot.slane %v649, 5
        %v750 = vrot.slane %v656, 5
        %v751 = vsel %vm640, %v749, %v750
        %v754 = vsel %vm640, 0.0, %v749
        %v755 = vsel %vm640, %v750, 0.0
        %758 = vrot.lane.b32.xlu0 %v754, 3
        %v759 = vpop.permute.xlu0 %758
        %760 = vrot.lane.b32.xlu0 %v751, 3
        %v761 = vpop.permute.xlu0 %760
        %762 = vrot.lane.b32.xlu0 %v755, 3
        %v763 = vpop.permute.xlu0 %762
        %v767 = vsel %vm705, 0.0, %v759
        %v768 = vsel %vm705, 0.0, %v761
        %v769 = vsel %vm705, 0.0, %v763
        %vm770 = vcmask 154624
        %v771 = vsel %vm770, %v767, 0.0
        %v772 = vsel %vm770, %v768, 0.0
        %v773 = vsel %vm770, %v769, 0.0
        %v776 = vrot.slane %v699, 5
        %v777 = vrot.slane %v700, 5
        %v778 = vsel %vm640, %v776, %v777
        %v781 = vsel %vm640, 0.0, %v776
        %v782 = vsel %vm640, %v777, 0.0
        %785 = vrot.lane.b32.xlu0 %v781, 3
        %v786 = vpop.permute.xlu0 %785
        %787 = vrot.lane.b32.xlu0 %v778, 3
        %v788 = vpop.permute.xlu0 %787
        %789 = vrot.lane.b32.xlu0 %v782, 3
        %v790 = vpop.permute.xlu0 %789
        %v794 = vsel %vm705, 0.0, %v786
        %v795 = vsel %vm705, 0.0, %v788
        %v796 = vsel %vm705, 0.0, %v790
        %v797 = vsel %vm770, %v794, 0.0
        %v798 = vsel %vm770, %v795, 0.0
        %v799 = vsel %vm770, %v796, 0.0
        %s800 = sld [smem:[#allocation2]]
        %s801 = sld [smem:[#allocation2 + $0x31]]
        %v802 = vstv %s800
        %v803 = vmul.f32 %v802, %v771
        %v804 = vmul.f32 %v802, %v772
        %v805 = vadd.f32 %v803, 0.0
        %v806 = vadd.f32 %v804, 0.0
        %v807 = vstv %s801
        %v808 = vmul.f32 %v807, %v797
        %v809 = vmul.f32 %v807, %v798
        %v810 = vadd.f32 %v805, %v808
        %v811 = vadd.f32 %v806, %v809
        %s812 = sld [smem:[#allocation2 + $0x1]]
        %s813 = sld [smem:[#allocation2 + $0x32]]
        %v814 = vstv %s812
        %v815 = vmul.f32 %v814, %v771
        %v816 = vmul.f32 %v814, %v772
        %819 = vrot.lane.b32.xlu0 %v815, 127
        %v820 = vpop.permute.xlu0 %819
        %821 = vrot.lane.b32.xlu0 %v816, 127
        %v822 = vpop.permute.xlu0 %821
        %v825 = vadd.f32 %v810, %v820
        %v826 = vadd.f32 %v811, %v822
        %v827 = vstv %s813
        %v828 = vmul.f32 %v827, %v797
        %v829 = vmul.f32 %v827, %v798
        %832 = vrot.lane.b32.xlu0 %v828, 127
        %v833 = vpop.permute.xlu0 %832
        %834 = vrot.lane.b32.xlu0 %v829, 127
        %v835 = vpop.permute.xlu0 %834
        %v838 = vadd.f32 %v825, %v833
        %v839 = vadd.f32 %v826, %v835
        %s840 = sld [smem:[#allocation2 + $0x2]]
        %s841 = sld [smem:[#allocation2 + $0x33]]
        %v842 = vstv %s840
        %v843 = vmul.f32 %v842, %v771
        %v844 = vmul.f32 %v842, %v772
        %847 = vrot.lane.b32.xlu0 %v843, 126
        %v848 = vpop.permute.xlu0 %847
        %849 = vrot.lane.b32.xlu0 %v844, 126
        %v850 = vpop.permute.xlu0 %849
        %v853 = vadd.f32 %v838, %v848
        %v854 = vadd.f32 %v839, %v850
        %v855 = vstv %s841
        %v856 = vmul.f32 %v855, %v797
        %v857 = vmul.f32 %v855, %v798
        %860 = vrot.lane.b32.xlu0 %v856, 126
        %v861 = vpop.permute.xlu0 %860
        %862 = vrot.lane.b32.xlu0 %v857, 126
        %v863 = vpop.permute.xlu0 %862
        %v866 = vadd.f32 %v853, %v861
        %v867 = vadd.f32 %v854, %v863
        %s868 = sld [smem:[#allocation2 + $0x3]]
        %s869 = sld [smem:[#allocation2 + $0x34]]
        %v870 = vstv %s868
        %v871 = vmul.f32 %v870, %v771
        %v872 = vmul.f32 %v870, %v772
        %875 = vrot.lane.b32.xlu0 %v871, 125
        %v876 = vpop.permute.xlu0 %875
        %877 = vrot.lane.b32.xlu0 %v872, 125
        %v878 = vpop.permute.xlu0 %877
        %v881 = vadd.f32 %v866, %v876
        %v882 = vadd.f32 %v867, %v878
        %v883 = vstv %s869
        %v884 = vmul.f32 %v883, %v797
        %v885 = vmul.f32 %v883, %v798
        %888 = vrot.lane.b32.xlu0 %v884, 125
        %v889 = vpop.permute.xlu0 %888
        %890 = vrot.lane.b32.xlu0 %v885, 125
        %v891 = vpop.permute.xlu0 %890
        %v894 = vadd.f32 %v881, %v889
        %v895 = vadd.f32 %v882, %v891
        %s896 = sld [smem:[#allocation2 + $0x4]]
        %s897 = sld [smem:[#allocation2 + $0x35]]
        %v898 = vstv %s896
        %v899 = vmul.f32 %v898, %v771
        %v900 = vmul.f32 %v898, %v772
        %903 = vrot.lane.b32.xlu0 %v899, 124
        %v904 = vpop.permute.xlu0 %903
        %905 = vrot.lane.b32.xlu0 %v900, 124
        %v906 = vpop.permute.xlu0 %905
        %v909 = vadd.f32 %v894, %v904
        %v910 = vadd.f32 %v895, %v906
        %v911 = vstv %s897
        %v912 = vmul.f32 %v911, %v797
        %v913 = vmul.f32 %v911, %v798
        %916 = vrot.lane.b32.xlu0 %v912, 124
        %v917 = vpop.permute.xlu0 %916
        %918 = vrot.lane.b32.xlu0 %v913, 124
        %v919 = vpop.permute.xlu0 %918
        %v922 = vadd.f32 %v909, %v917
        %v923 = vadd.f32 %v910, %v919
        %s924 = sld [smem:[#allocation2 + $0x5]]
        %s925 = sld [smem:[#allocation2 + $0x36]]
        %v926 = vstv %s924
        %v927 = vmul.f32 %v926, %v771
        %v928 = vmul.f32 %v926, %v772
        %931 = vrot.lane.b32.xlu0 %v927, 123
        %v932 = vpop.permute.xlu0 %931
        %933 = vrot.lane.b32.xlu0 %v928, 123
        %v934 = vpop.permute.xlu0 %933
        %v937 = vadd.f32 %v922, %v932
        %v938 = vadd.f32 %v923, %v934
        %v939 = vstv %s925
        %v940 = vmul.f32 %v939, %v797
        %v941 = vmul.f32 %v939, %v798
        %944 = vrot.lane.b32.xlu0 %v940, 123
        %v945 = vpop.permute.xlu0 %944
        %946 = vrot.lane.b32.xlu0 %v941, 123
        %v947 = vpop.permute.xlu0 %946
        %v950 = vadd.f32 %v937, %v945
        %v951 = vadd.f32 %v938, %v947
        %s952 = sld [smem:[#allocation2 + $0x6]]
        %s953 = sld [smem:[#allocation2 + $0x37]]
        %v954 = vstv %s952
        %v955 = vmul.f32 %v954, %v771
        %v956 = vmul.f32 %v954, %v772
        %959 = vrot.lane.b32.xlu0 %v955, 122
        %v960 = vpop.permute.xlu0 %959
        %961 = vrot.lane.b32.xlu0 %v956, 122
        %v962 = vpop.permute.xlu0 %961
        %v965 = vadd.f32 %v950, %v960
        %v966 = vadd.f32 %v951, %v962
        %v967 = vstv %s953
        %v968 = vmul.f32 %v967, %v797
        %v969 = vmul.f32 %v967, %v798
        %972 = vrot.lane.b32.xlu0 %v968, 122
        %v973 = vpop.permute.xlu0 %972
        %974 = vrot.lane.b32.xlu0 %v969, 122
        %v975 = vpop.permute.xlu0 %974
        %v978 = vadd.f32 %v965, %v973
        %v979 = vadd.f32 %v966, %v975
        %s980 = sld [smem:[#allocation2 + $0x7]]
        %s981 = sld [smem:[#allocation2 + $0x38]]
        %v982 = vstv %s980
        %v983 = vmul.f32 %v982, %v771
        %v984 = vmul.f32 %v982, %v772
        %v985 = vmul.f32 %v982, %v773
        %v989 = vrot.slane %v983, 1
        %v990 = vrot.slane %v984, 1
        %v991 = vsel %vm648, %v989, %v990
        %v992 = vrot.slane %v985, 1
        %v993 = vsel %vm648, %v990, %v992
        %v996 = vadd.f32 %v978, %v991
        %v997 = vadd.f32 %v979, %v993
        %v998 = vstv %s981
        %v999 = vmul.f32 %v998, %v797
        %v1000 = vmul.f32 %v998, %v798
        %v1001 = vmul.f32 %v998, %v799
        %v1005 = vrot.slane %v999, 1
        %v1006 = vrot.slane %v1000, 1
        %v1007 = vsel %vm648, %v1005, %v1006
        %v1008 = vrot.slane %v1001, 1
        %v1009 = vsel %vm648, %v1006, %v1008
        %v1012 = vadd.f32 %v996, %v1007
        %v1013 = vadd.f32 %v997, %v1009
        %s1014 = sld [smem:[#allocation2 + $0x8]]
        %s1015 = sld [smem:[#allocation2 + $0x39]]
        %v1016 = vstv %s1014
        %v1017 = vmul.f32 %v1016, %v771
        %v1018 = vmul.f32 %v1016, %v772
        %v1019 = vmul.f32 %v1016, %v773
        %v1023 = vrot.slane %v1017, 1
        %v1024 = vrot.slane %v1018, 1
        %v1025 = vsel %vm648, %v1023, %v1024
        %v1026 = vrot.slane %v1019, 1
        %v1027 = vsel %vm648, %v1024, %v1026
        %1028 = vrot.lane.b32.xlu0 %v1025, 127
        %v1029 = vpop.permute.xlu0 %1028
        %1030 = vrot.lane.b32.xlu0 %v1027, 127
        %v1031 = vpop.permute.xlu0 %1030
        %v1034 = vadd.f32 %v1012, %v1029
        %v1035 = vadd.f32 %v1013, %v1031
        %v1036 = vstv %s1015
        %v1037 = vmul.f32 %v1036, %v797
        %v1038 = vmul.f32 %v1036, %v798
        %v1039 = vmul.f32 %v1036, %v799
        %v1043 = vrot.slane %v1037, 1
        %v1044 = vrot.slane %v1038, 1
        %v1045 = vsel %vm648, %v1043, %v1044
        %v1046 = vrot.slane %v1039, 1
        %v1047 = vsel %vm648, %v1044, %v1046
        %1048 = vrot.lane.b32.xlu0 %v1045, 127
        %v1049 = vpop.permute.xlu0 %1048
        %1050 = vrot.lane.b32.xlu0 %v1047, 127
        %v1051 = vpop.permute.xlu0 %1050
        %v1054 = vadd.f32 %v1034, %v1049
        %v1055 = vadd.f32 %v1035, %v1051
        %s1056 = sld [smem:[#allocation2 + $0x9]]
        %s1057 = sld [smem:[#allocation2 + $0x3a]]
        %v1058 = vstv %s1056
        %v1059 = vmul.f32 %v1058, %v771
        %v1060 = vmul.f32 %v1058, %v772
        %v1061 = vmul.f32 %v1058, %v773
        %v1065 = vrot.slane %v1059, 1
        %v1066 = vrot.slane %v1060, 1
        %v1067 = vsel %vm648, %v1065, %v1066
        %v1068 = vrot.slane %v1061, 1
        %v1069 = vsel %vm648, %v1066, %v1068
        %1070 = vrot.lane.b32.xlu0 %v1067, 126
        %v1071 = vpop.permute.xlu0 %1070
        %1072 = vrot.lane.b32.xlu0 %v1069, 126
        %v1073 = vpop.permute.xlu0 %1072
        %v1076 = vadd.f32 %v1054, %v1071
        %v1077 = vadd.f32 %v1055, %v1073
        %v1078 = vstv %s1057
        %v1079 = vmul.f32 %v1078, %v797
        %v1080 = vmul.f32 %v1078, %v798
        %v1081 = vmul.f32 %v1078, %v799
        %v1085 = vrot.slane %v1079, 1
        %v1086 = vrot.slane %v1080, 1
        %v1087 = vsel %vm648, %v1085, %v1086
        %v1088 = vrot.slane %v1081, 1
        %v1089 = vsel %vm648, %v1086, %v1088
        %1090 = vrot.lane.b32.xlu0 %v1087, 126
        %v1091 = vpop.permute.xlu0 %1090
        %1092 = vrot.lane.b32.xlu0 %v1089, 126
        %v1093 = vpop.permute.xlu0 %1092
        %v1096 = vadd.f32 %v1076, %v1091
        %v1097 = vadd.f32 %v1077, %v1093
        %s1098 = sld [smem:[#allocation2 + $0xa]]
        %s1099 = sld [smem:[#allocation2 + $0x3b]]
        %v1100 = vstv %s1098
        %v1101 = vmul.f32 %v1100, %v771
        %v1102 = vmul.f32 %v1100, %v772
        %v1103 = vmul.f32 %v1100, %v773
        %v1107 = vrot.slane %v1101, 1
        %v1108 = vrot.slane %v1102, 1
        %v1109 = vsel %vm648, %v1107, %v1108
        %v1110 = vrot.slane %v1103, 1
        %v1111 = vsel %vm648, %v1108, %v1110
        %1112 = vrot.lane.b32.xlu0 %v1109, 125
        %v1113 = vpop.permute.xlu0 %1112
        %1114 = vrot.lane.b32.xlu0 %v1111, 125
        %v1115 = vpop.permute.xlu0 %1114
        %v1118 = vadd.f32 %v1096, %v1113
        %v1119 = vadd.f32 %v1097, %v1115
        %v1120 = vstv %s1099
        %v1121 = vmul.f32 %v1120, %v797
        %v1122 = vmul.f32 %v1120, %v798
        %v1123 = vmul.f32 %v1120, %v799
        %v1127 = vrot.slane %v1121, 1
        %v1128 = vrot.slane %v1122, 1
        %v1129 = vsel %vm648, %v1127, %v1128
        %v1130 = vrot.slane %v1123, 1
        %v1131 = vsel %vm648, %v1128, %v1130
        %1132 = vrot.lane.b32.xlu0 %v1129, 125
        %v1133 = vpop.permute.xlu0 %1132
        %1134 = vrot.lane.b32.xlu0 %v1131, 125
        %v1135 = vpop.permute.xlu0 %1134
        %v1138 = vadd.f32 %v1118, %v1133
        %v1139 = vadd.f32 %v1119, %v1135
        %s1140 = sld [smem:[#allocation2 + $0xb]]
        %s1141 = sld [smem:[#allocation2 + $0x3c]]
        %v1142 = vstv %s1140
        %v1143 = vmul.f32 %v1142, %v771
        %v1144 = vmul.f32 %v1142, %v772
        %v1145 = vmul.f32 %v1142, %v773
        %v1149 = vrot.slane %v1143, 1
        %v1150 = vrot.slane %v1144, 1
        %v1151 = vsel %vm648, %v1149, %v1150
        %v1152 = vrot.slane %v1145, 1
        %v1153 = vsel %vm648, %v1150, %v1152
        %1154 = vrot.lane.b32.xlu0 %v1151, 124
        %v1155 = vpop.permute.xlu0 %1154
        %1156 = vrot.lane.b32.xlu0 %v1153, 124
        %v1157 = vpop.permute.xlu0 %1156
        %v1160 = vadd.f32 %v1138, %v1155
        %v1161 = vadd.f32 %v1139, %v1157
        %v1162 = vstv %s1141
        %v1163 = vmul.f32 %v1162, %v797
        %v1164 = vmul.f32 %v1162, %v798
        %v1165 = vmul.f32 %v1162, %v799
        %v1169 = vrot.slane %v1163, 1
        %v1170 = vrot.slane %v1164, 1
        %v1171 = vsel %vm648, %v1169, %v1170
        %v1172 = vrot.slane %v1165, 1
        %v1173 = vsel %vm648, %v1170, %v1172
        %1174 = vrot.lane.b32.xlu0 %v1171, 124
        %v1175 = vpop.permute.xlu0 %1174
        %1176 = vrot.lane.b32.xlu0 %v1173, 124
        %v1177 = vpop.permute.xlu0 %1176
        %v1180 = vadd.f32 %v1160, %v1175
        %v1181 = vadd.f32 %v1161, %v1177
        %s1182 = sld [smem:[#allocation2 + $0xc]]
        %s1183 = sld [smem:[#allocation2 + $0x3d]]
        %v1184 = vstv %s1182
        %v1185 = vmul.f32 %v1184, %v771
        %v1186 = vmul.f32 %v1184, %v772
        %v1187 = vmul.f32 %v1184, %v773
        %v1191 = vrot.slane %v1185, 1
        %v1192 = vrot.slane %v1186, 1
        %v1193 = vsel %vm648, %v1191, %v1192
        %v1194 = vrot.slane %v1187, 1
        %v1195 = vsel %vm648, %v1192, %v1194
        %1196 = vrot.lane.b32.xlu0 %v1193, 123
        %v1197 = vpop.permute.xlu0 %1196
        %1198 = vrot.lane.b32.xlu0 %v1195, 123
        %v1199 = vpop.permute.xlu0 %1198
        %v1202 = vadd.f32 %v1180, %v1197
        %v1203 = vadd.f32 %v1181, %v1199
        %v1204 = vstv %s1183
        %v1205 = vmul.f32 %v1204, %v797
        %v1206 = vmul.f32 %v1204, %v798
        %v1207 = vmul.f32 %v1204, %v799
        %v1211 = vrot.slane %v1205, 1
        %v1212 = vrot.slane %v1206, 1
        %v1213 = vsel %vm648, %v1211, %v1212
        %v1214 = vrot.slane %v1207, 1
        %v1215 = vsel %vm648, %v1212, %v1214
        %1216 = vrot.lane.b32.xlu0 %v1213, 123
        %v1217 = vpop.permute.xlu0 %1216
        %1218 = vrot.lane.b32.xlu0 %v1215, 123
        %v1219 = vpop.permute.xlu0 %1218
        %v1222 = vadd.f32 %v1202, %v1217
        %v1223 = vadd.f32 %v1203, %v1219
        %s1224 = sld [smem:[#allocation2 + $0xd]]
        %s1225 = sld [smem:[#allocation2 + $0x3e]]
        %v1226 = vstv %s1224
        %v1227 = vmul.f32 %v1226, %v771
        %v1228 = vmul.f32 %v1226, %v772
        %v1229 = vmul.f32 %v1226, %v773
        %v1233 = vrot.slane %v1227, 1
        %v1234 = vrot.slane %v1228, 1
        %v1235 = vsel %vm648, %v1233, %v1234
        %v1236 = vrot.slane %v1229, 1
        %v1237 = vsel %vm648, %v1234, %v1236
        %1238 = vrot.lane.b32.xlu0 %v1235, 122
        %v1239 = vpop.permute.xlu0 %1238
        %1240 = vrot.lane.b32.xlu0 %v1237, 122
        %v1241 = vpop.permute.xlu0 %1240
        %v1244 = vadd.f32 %v1222, %v1239
        %v1245 = vadd.f32 %v1223, %v1241
        %v1246 = vstv %s1225
        %v1247 = vmul.f32 %v1246, %v797
        %v1248 = vmul.f32 %v1246, %v798
        %v1249 = vmul.f32 %v1246, %v799
        %v1253 = vrot.slane %v1247, 1
        %v1254 = vrot.slane %v1248, 1
        %v1255 = vsel %vm648, %v1253, %v1254
        %v1256 = vrot.slane %v1249, 1
        %v1257 = vsel %vm648, %v1254, %v1256
        %1258 = vrot.lane.b32.xlu0 %v1255, 122
        %v1259 = vpop.permute.xlu0 %1258
        %1260 = vrot.lane.b32.xlu0 %v1257, 122
        %v1261 = vpop.permute.xlu0 %1260
        %v1264 = vadd.f32 %v1244, %v1259
        %v1265 = vadd.f32 %v1245, %v1261
        %s1266 = sld [smem:[#allocation2 + $0xe]]
        %s1267 = sld [smem:[#allocation2 + $0x3f]]
        %v1268 = vstv %s1266
        %v1269 = vmul.f32 %v1268, %v771
        %v1270 = vmul.f32 %v1268, %v772
        %v1271 = vmul.f32 %v1268, %v773
        %v1275 = vrot.slane %v1269, 2
        %v1276 = vrot.slane %v1270, 2
        %v1277 = vsel %vm646, %v1275, %v1276
        %v1278 = vrot.slane %v1271, 2
        %v1279 = vsel %vm646, %v1276, %v1278
        %v1282 = vadd.f32 %v1264, %v1277
        %v1283 = vadd.f32 %v1265, %v1279
        %v1284 = vstv %s1267
        %v1285 = vmul.f32 %v1284, %v797
        %v1286 = vmul.f32 %v1284, %v798
        %v1287 = vmul.f32 %v1284, %v799
        %v1291 = vrot.slane %v1285, 2
        %v1292 = vrot.slane %v1286, 2
        %v1293 = vsel %vm646, %v1291, %v1292
        %v1294 = vrot.slane %v1287, 2
        %v1295 = vsel %vm646, %v1292, %v1294
        %v1298 = vadd.f32 %v1282, %v1293
        %v1299 = vadd.f32 %v1283, %v1295
        %s1300 = sld [smem:[#allocation2 + $0xf]]
        %s1301 = sld [smem:[#allocation2 + $0x40]]
        %v1302 = vstv %s1300
        %v1303 = vmul.f32 %v1302, %v771
        %v1304 = vmul.f32 %v1302, %v772
        %v1305 = vmul.f32 %v1302, %v773
        %v1309 = vrot.slane %v1303, 2
        %v1310 = vrot.slane %v1304, 2
        %v1311 = vsel %vm646, %v1309, %v1310
        %v1312 = vrot.slane %v1305, 2
        %v1313 = vsel %vm646, %v1310, %v1312
        %1314 = vrot.lane.b32.xlu0 %v1311, 127
        %v1315 = vpop.permute.xlu0 %1314
        %1316 = vrot.lane.b32.xlu0 %v1313, 127
        %v1317 = vpop.permute.xlu0 %1316
        %v1320 = vadd.f32 %v1298, %v1315
        %v1321 = vadd.f32 %v1299, %v1317
        %v1322 = vstv %s1301
        %v1323 = vmul.f32 %v1322, %v797
        %v1324 = vmul.f32 %v1322, %v798
        %v1325 = vmul.f32 %v1322, %v799
        %v1329 = vrot.slane %v1323, 2
        %v1330 = vrot.slane %v1324, 2
        %v1331 = vsel %vm646, %v1329, %v1330
        %v1332 = vrot.slane %v1325, 2
        %v1333 = vsel %vm646, %v1330, %v1332
        %1334 = vrot.lane.b32.xlu0 %v1331, 127
        %v1335 = vpop.permute.xlu0 %1334
        %1336 = vrot.lane.b32.xlu0 %v1333, 127
        %v1337 = vpop.permute.xlu0 %1336
        %v1340 = vadd.f32 %v1320, %v1335
        %v1341 = vadd.f32 %v1321, %v1337
        %s1342 = sld [smem:[#allocation2 + $0x10]]
        %s1343 = sld [smem:[#allocation2 + $0x41]]
        %v1344 = vstv %s1342
        %v1345 = vmul.f32 %v1344, %v771
        %v1346 = vmul.f32 %v1344, %v772
        %v1347 = vmul.f32 %v1344, %v773
        %v1351 = vrot.slane %v1345, 2
        %v1352 = vrot.slane %v1346, 2
        %v1353 = vsel %vm646, %v1351, %v1352
        %v1354 = vrot.slane %v1347, 2
        %v1355 = vsel %vm646, %v1352, %v1354
        %1356 = vrot.lane.b32.xlu0 %v1353, 126
        %v1357 = vpop.permute.xlu0 %1356
        %1358 = vrot.lane.b32.xlu0 %v1355, 126
        %v1359 = vpop.permute.xlu0 %1358
        %v1362 = vadd.f32 %v1340, %v1357
        %v1363 = vadd.f32 %v1341, %v1359
        %v1364 = vstv %s1343
        %v1365 = vmul.f32 %v1364, %v797
        %v1366 = vmul.f32 %v1364, %v798
        %v1367 = vmul.f32 %v1364, %v799
        %v1371 = vrot.slane %v1365, 2
        %v1372 = vrot.slane %v1366, 2
        %v1373 = vsel %vm646, %v1371, %v1372
        %v1374 = vrot.slane %v1367, 2
        %v1375 = vsel %vm646, %v1372, %v1374
        %1376 = vrot.lane.b32.xlu0 %v1373, 126
        %v1377 = vpop.permute.xlu0 %1376
        %1378 = vrot.lane.b32.xlu0 %v1375, 126
        %v1379 = vpop.permute.xlu0 %1378
        %v1382 = vadd.f32 %v1362, %v1377
        %v1383 = vadd.f32 %v1363, %v1379
        %s1384 = sld [smem:[#allocation2 + $0x11]]
        %s1385 = sld [smem:[#allocation2 + $0x42]]
        %v1386 = vstv %s1384
        %v1387 = vmul.f32 %v1386, %v771
        %v1388 = vmul.f32 %v1386, %v772
        %v1389 = vmul.f32 %v1386, %v773
        %v1393 = vrot.slane %v1387, 2
        %v1394 = vrot.slane %v1388, 2
        %v1395 = vsel %vm646, %v1393, %v1394
        %v1396 = vrot.slane %v1389, 2
        %v1397 = vsel %vm646, %v1394, %v1396
        %1398 = vrot.lane.b32.xlu0 %v1395, 125
        %v1399 = vpop.permute.xlu0 %1398
        %1400 = vrot.lane.b32.xlu0 %v1397, 125
        %v1401 = vpop.permute.xlu0 %1400
        %v1404 = vadd.f32 %v1382, %v1399
        %v1405 = vadd.f32 %v1383, %v1401
        %v1406 = vstv %s1385
        %v1407 = vmul.f32 %v1406, %v797
        %v1408 = vmul.f32 %v1406, %v798
        %v1409 = vmul.f32 %v1406, %v799
        %v1413 = vrot.slane %v1407, 2
        %v1414 = vrot.slane %v1408, 2
        %v1415 = vsel %vm646, %v1413, %v1414
        %v1416 = vrot.slane %v1409, 2
        %v1417 = vsel %vm646, %v1414, %v1416
        %1418 = vrot.lane.b32.xlu0 %v1415, 125
        %v1419 = vpop.permute.xlu0 %1418
        %1420 = vrot.lane.b32.xlu0 %v1417, 125
        %v1421 = vpop.permute.xlu0 %1420
        %v1424 = vadd.f32 %v1404, %v1419
        %v1425 = vadd.f32 %v1405, %v1421
        %s1426 = sld [smem:[#allocation2 + $0x12]]
        %s1427 = sld [smem:[#allocation2 + $0x43]]
        %v1428 = vstv %s1426
        %v1429 = vmul.f32 %v1428, %v771
        %v1430 = vmul.f32 %v1428, %v772
        %v1431 = vmul.f32 %v1428, %v773
        %v1435 = vrot.slane %v1429, 2
        %v1436 = vrot.slane %v1430, 2
        %v1437 = vsel %vm646, %v1435, %v1436
        %v1438 = vrot.slane %v1431, 2
        %v1439 = vsel %vm646, %v1436, %v1438
        %1440 = vrot.lane.b32.xlu0 %v1437, 124
        %v1441 = vpop.permute.xlu0 %1440
        %1442 = vrot.lane.b32.xlu0 %v1439, 124
        %v1443 = vpop.permute.xlu0 %1442
        %v1446 = vadd.f32 %v1424, %v1441
        %v1447 = vadd.f32 %v1425, %v1443
        %v1448 = vstv %s1427
        %v1449 = vmul.f32 %v1448, %v797
        %v1450 = vmul.f32 %v1448, %v798
        %v1451 = vmul.f32 %v1448, %v799
        %v1455 = vrot.slane %v1449, 2
        %v1456 = vrot.slane %v1450, 2
        %v1457 = vsel %vm646, %v1455, %v1456
        %v1458 = vrot.slane %v1451, 2
        %v1459 = vsel %vm646, %v1456, %v1458
        %1460 = vrot.lane.b32.xlu0 %v1457, 124
        %v1461 = vpop.permute.xlu0 %1460
        %1462 = vrot.lane.b32.xlu0 %v1459, 124
        %v1463 = vpop.permute.xlu0 %1462
        %v1466 = vadd.f32 %v1446, %v1461
        %v1467 = vadd.f32 %v1447, %v1463
        %s1468 = sld [smem:[#allocation2 + $0x13]]
        %s1469 = sld [smem:[#allocation2 + $0x44]]
        %v1470 = vstv %s1468
        %v1471 = vmul.f32 %v1470, %v771
        %v1472 = vmul.f32 %v1470, %v772
        %v1473 = vmul.f32 %v1470, %v773
        %v1477 = vrot.slane %v1471, 2
        %v1478 = vrot.slane %v1472, 2
        %v1479 = vsel %vm646, %v1477, %v1478
        %v1480 = vrot.slane %v1473, 2
        %v1481 = vsel %vm646, %v1478, %v1480
        %1482 = vrot.lane.b32.xlu0 %v1479, 123
        %v1483 = vpop.permute.xlu0 %1482
        %1484 = vrot.lane.b32.xlu0 %v1481, 123
        %v1485 = vpop.permute.xlu0 %1484
        %v1488 = vadd.f32 %v1466, %v1483
        %v1489 = vadd.f32 %v1467, %v1485
        %v1490 = vstv %s1469
        %v1491 = vmul.f32 %v1490, %v797
        %v1492 = vmul.f32 %v1490, %v798
        %v1493 = vmul.f32 %v1490, %v799
        %v1497 = vrot.slane %v1491, 2
        %v1498 = vrot.slane %v1492, 2
        %v1499 = vsel %vm646, %v1497, %v1498
        %v1500 = vrot.slane %v1493, 2
        %v1501 = vsel %vm646, %v1498, %v1500
        %1502 = vrot.lane.b32.xlu0 %v1499, 123
        %v1503 = vpop.permute.xlu0 %1502
        %1504 = vrot.lane.b32.xlu0 %v1501, 123
        %v1505 = vpop.permute.xlu0 %1504
        %v1508 = vadd.f32 %v1488, %v1503
        %v1509 = vadd.f32 %v1489, %v1505
        %s1510 = sld [smem:[#allocation2 + $0x14]]
        %s1511 = sld [smem:[#allocation2 + $0x45]]
        %v1512 = vstv %s1510
        %v1513 = vmul.f32 %v1512, %v771
        %v1514 = vmul.f32 %v1512, %v772
        %v1515 = vmul.f32 %v1512, %v773
        %v1519 = vrot.slane %v1513, 2
        %v1520 = vrot.slane %v1514, 2
        %v1521 = vsel %vm646, %v1519, %v1520
        %v1522 = vrot.slane %v1515, 2
        %v1523 = vsel %vm646, %v1520, %v1522
        %1524 = vrot.lane.b32.xlu0 %v1521, 122
        %v1525 = vpop.permute.xlu0 %1524
        %1526 = vrot.lane.b32.xlu0 %v1523, 122
        %v1527 = vpop.permute.xlu0 %1526
        %v1530 = vadd.f32 %v1508, %v1525
        %v1531 = vadd.f32 %v1509, %v1527
        %v1532 = vstv %s1511
        %v1533 = vmul.f32 %v1532, %v797
        %v1534 = vmul.f32 %v1532, %v798
        %v1535 = vmul.f32 %v1532, %v799
        %v1539 = vrot.slane %v1533, 2
        %v1540 = vrot.slane %v1534, 2
        %v1541 = vsel %vm646, %v1539, %v1540
        %v1542 = vrot.slane %v1535, 2
        %v1543 = vsel %vm646, %v1540, %v1542
        %1544 = vrot.lane.b32.xlu0 %v1541, 122
        %v1545 = vpop.permute.xlu0 %1544
        %1546 = vrot.lane.b32.xlu0 %v1543, 122
        %v1547 = vpop.permute.xlu0 %1546
        %v1550 = vadd.f32 %v1530, %v1545
        %v1551 = vadd.f32 %v1531, %v1547
        %s1552 = sld [smem:[#allocation2 + $0x15]]
        %s1553 = sld [smem:[#allocation2 + $0x46]]
        %v1554 = vstv %s1552
        %v1555 = vmul.f32 %v1554, %v771
        %v1556 = vmul.f32 %v1554, %v772
        %v1557 = vmul.f32 %v1554, %v773
        %v1561 = vrot.slane %v1555, 3
        %v1562 = vrot.slane %v1556, 3
        %v1563 = vsel %vm644, %v1561, %v1562
        %v1564 = vrot.slane %v1557, 3
        %v1565 = vsel %vm644, %v1562, %v1564
        %v1568 = vadd.f32 %v1550, %v1563
        %v1569 = vadd.f32 %v1551, %v1565
        %v1570 = vstv %s1553
        %v1571 = vmul.f32 %v1570, %v797
        %v1572 = vmul.f32 %v1570, %v798
        %v1573 = vmul.f32 %v1570, %v799
        %v1577 = vrot.slane %v1571, 3
        %v1578 = vrot.slane %v1572, 3
        %v1579 = vsel %vm644, %v1577, %v1578
        %v1580 = vrot.slane %v1573, 3
        %v1581 = vsel %vm644, %v1578, %v1580
        %v1584 = vadd.f32 %v1568, %v1579
        %v1585 = vadd.f32 %v1569, %v1581
        %s1586 = sld [smem:[#allocation2 + $0x16]]
        %s1587 = sld [smem:[#allocation2 + $0x47]]
        %v1588 = vstv %s1586
        %v1589 = vmul.f32 %v1588, %v771
        %v1590 = vmul.f32 %v1588, %v772
        %v1591 = vmul.f32 %v1588, %v773
        %v1595 = vrot.slane %v1589, 3
        %v1596 = vrot.slane %v1590, 3
        %v1597 = vsel %vm644, %v1595, %v1596
        %v1598 = vrot.slane %v1591, 3
        %v1599 = vsel %vm644, %v1596, %v1598
        %1600 = vrot.lane.b32.xlu0 %v1597, 127
        %v1601 = vpop.permute.xlu0 %1600
        %1602 = vrot.lane.b32.xlu0 %v1599, 127
        %v1603 = vpop.permute.xlu0 %1602
        %v1606 = vadd.f32 %v1584, %v1601
        %v1607 = vadd.f32 %v1585, %v1603
        %v1608 = vstv %s1587
        %v1609 = vmul.f32 %v1608, %v797
        %v1610 = vmul.f32 %v1608, %v798
        %v1611 = vmul.f32 %v1608, %v799
        %v1615 = vrot.slane %v1609, 3
        %v1616 = vrot.slane %v1610, 3
        %v1617 = vsel %vm644, %v1615, %v1616
        %v1618 = vrot.slane %v1611, 3
        %v1619 = vsel %vm644, %v1616, %v1618
        %1620 = vrot.lane.b32.xlu0 %v1617, 127
        %v1621 = vpop.permute.xlu0 %1620
        %1622 = vrot.lane.b32.xlu0 %v1619, 127
        %v1623 = vpop.permute.xlu0 %1622
        %v1626 = vadd.f32 %v1606, %v1621
        %v1627 = vadd.f32 %v1607, %v1623
        %s1628 = sld [smem:[#allocation2 + $0x17]]
        %s1629 = sld [smem:[#allocation2 + $0x48]]
        %v1630 = vstv %s1628
        %v1631 = vmul.f32 %v1630, %v771
        %v1632 = vmul.f32 %v1630, %v772
        %v1633 = vmul.f32 %v1630, %v773
        %v1637 = vrot.slane %v1631, 3
        %v1638 = vrot.slane %v1632, 3
        %v1639 = vsel %vm644, %v1637, %v1638
        %v1640 = vrot.slane %v1633, 3
        %v1641 = vsel %vm644, %v1638, %v1640
        %1642 = vrot.lane.b32.xlu0 %v1639, 126
        %v1643 = vpop.permute.xlu0 %1642
        %1644 = vrot.lane.b32.xlu0 %v1641, 126
        %v1645 = vpop.permute.xlu0 %1644
        %v1648 = vadd.f32 %v1626, %v1643
        %v1649 = vadd.f32 %v1627, %v1645
        %v1650 = vstv %s1629
        %v1651 = vmul.f32 %v1650, %v797
        %v1652 = vmul.f32 %v1650, %v798
        %v1653 = vmul.f32 %v1650, %v799
        %v1657 = vrot.slane %v1651, 3
        %v1658 = vrot.slane %v1652, 3
        %v1659 = vsel %vm644, %v1657, %v1658
        %v1660 = vrot.slane %v1653, 3
        %v1661 = vsel %vm644, %v1658, %v1660
        %1662 = vrot.lane.b32.xlu0 %v1659, 126
        %v1663 = vpop.permute.xlu0 %1662
        %1664 = vrot.lane.b32.xlu0 %v1661, 126
        %v1665 = vpop.permute.xlu0 %1664
        %v1668 = vadd.f32 %v1648, %v1663
        %v1669 = vadd.f32 %v1649, %v1665
        %s1670 = sld [smem:[#allocation2 + $0x18]]
        %s1671 = sld [smem:[#allocation2 + $0x49]]
        %v1672 = vstv %s1670
        %v1673 = vmul.f32 %v1672, %v771
        %v1674 = vmul.f32 %v1672, %v772
        %v1675 = vmul.f32 %v1672, %v773
        %v1679 = vrot.slane %v1673, 3
        %v1680 = vrot.slane %v1674, 3
        %v1681 = vsel %vm644, %v1679, %v1680
        %v1682 = vrot.slane %v1675, 3
        %v1683 = vsel %vm644, %v1680, %v1682
        %1684 = vrot.lane.b32.xlu0 %v1681, 125
        %v1685 = vpop.permute.xlu0 %1684
        %1686 = vrot.lane.b32.xlu0 %v1683, 125
        %v1687 = vpop.permute.xlu0 %1686
        %v1690 = vadd.f32 %v1668, %v1685
        %v1691 = vadd.f32 %v1669, %v1687
        %v1692 = vstv %s1671
        %v1693 = vmul.f32 %v1692, %v797
        %v1694 = vmul.f32 %v1692, %v798
        %v1695 = vmul.f32 %v1692, %v799
        %v1699 = vrot.slane %v1693, 3
        %v1700 = vrot.slane %v1694, 3
        %v1701 = vsel %vm644, %v1699, %v1700
        %v1702 = vrot.slane %v1695, 3
        %v1703 = vsel %vm644, %v1700, %v1702
        %1704 = vrot.lane.b32.xlu0 %v1701, 125
        %v1705 = vpop.permute.xlu0 %1704
        %1706 = vrot.lane.b32.xlu0 %v1703, 125
        %v1707 = vpop.permute.xlu0 %1706
        %v1710 = vadd.f32 %v1690, %v1705
        %v1711 = vadd.f32 %v1691, %v1707
        %s1712 = sld [smem:[#allocation2 + $0x19]]
        %s1713 = sld [smem:[#allocation2 + $0x4a]]
        %v1714 = vstv %s1712
        %v1715 = vmul.f32 %v1714, %v771
        %v1716 = vmul.f32 %v1714, %v772
        %v1717 = vmul.f32 %v1714, %v773
        %v1721 = vrot.slane %v1715, 3
        %v1722 = vrot.slane %v1716, 3
        %v1723 = vsel %vm644, %v1721, %v1722
        %v1724 = vrot.slane %v1717, 3
        %v1725 = vsel %vm644, %v1722, %v1724
        %1726 = vrot.lane.b32.xlu0 %v1723, 124
        %v1727 = vpop.permute.xlu0 %1726
        %1728 = vrot.lane.b32.xlu0 %v1725, 124
        %v1729 = vpop.permute.xlu0 %1728
        %v1732 = vadd.f32 %v1710, %v1727
        %v1733 = vadd.f32 %v1711, %v1729
        %v1734 = vstv %s1713
        %v1735 = vmul.f32 %v1734, %v797
        %v1736 = vmul.f32 %v1734, %v798
        %v1737 = vmul.f32 %v1734, %v799
        %v1741 = vrot.slane %v1735, 3
        %v1742 = vrot.slane %v1736, 3
        %v1743 = vsel %vm644, %v1741, %v1742
        %v1744 = vrot.slane %v1737, 3
        %v1745 = vsel %vm644, %v1742, %v1744
        %1746 = vrot.lane.b32.xlu0 %v1743, 124
        %v1747 = vpop.permute.xlu0 %1746
        %1748 = vrot.lane.b32.xlu0 %v1745, 124
        %v1749 = vpop.permute.xlu0 %1748
        %v1752 = vadd.f32 %v1732, %v1747
        %v1753 = vadd.f32 %v1733, %v1749
        %s1754 = sld [smem:[#allocation2 + $0x1a]]
        %s1755 = sld [smem:[#allocation2 + $0x4b]]
        %v1756 = vstv %s1754
        %v1757 = vmul.f32 %v1756, %v771
        %v1758 = vmul.f32 %v1756, %v772
        %v1759 = vmul.f32 %v1756, %v773
        %v1763 = vrot.slane %v1757, 3
        %v1764 = vrot.slane %v1758, 3
        %v1765 = vsel %vm644, %v1763, %v1764
        %v1766 = vrot.slane %v1759, 3
        %v1767 = vsel %vm644, %v1764, %v1766
        %1768 = vrot.lane.b32.xlu0 %v1765, 123
        %v1769 = vpop.permute.xlu0 %1768
        %1770 = vrot.lane.b32.xlu0 %v1767, 123
        %v1771 = vpop.permute.xlu0 %1770
        %v1774 = vadd.f32 %v1752, %v1769
        %v1775 = vadd.f32 %v1753, %v1771
        %v1776 = vstv %s1755
        %v1777 = vmul.f32 %v1776, %v797
        %v1778 = vmul.f32 %v1776, %v798
        %v1779 = vmul.f32 %v1776, %v799
        %v1783 = vrot.slane %v1777, 3
        %v1784 = vrot.slane %v1778, 3
        %v1785 = vsel %vm644, %v1783, %v1784
        %v1786 = vrot.slane %v1779, 3
        %v1787 = vsel %vm644, %v1784, %v1786
        %1788 = vrot.lane.b32.xlu0 %v1785, 123
        %v1789 = vpop.permute.xlu0 %1788
        %1790 = vrot.lane.b32.xlu0 %v1787, 123
        %v1791 = vpop.permute.xlu0 %1790
        %v1794 = vadd.f32 %v1774, %v1789
        %v1795 = vadd.f32 %v1775, %v1791
        %s1796 = sld [smem:[#allocation2 + $0x1b]]
        %s1797 = sld [smem:[#allocation2 + $0x4c]]
        %v1798 = vstv %s1796
        %v1799 = vmul.f32 %v1798, %v771
        %v1800 = vmul.f32 %v1798, %v772
        %v1801 = vmul.f32 %v1798, %v773
        %v1805 = vrot.slane %v1799, 3
        %v1806 = vrot.slane %v1800, 3
        %v1807 = vsel %vm644, %v1805, %v1806
        %v1808 = vrot.slane %v1801, 3
        %v1809 = vsel %vm644, %v1806, %v1808
        %1810 = vrot.lane.b32.xlu0 %v1807, 122
        %v1811 = vpop.permute.xlu0 %1810
        %1812 = vrot.lane.b32.xlu0 %v1809, 122
        %v1813 = vpop.permute.xlu0 %1812
        %v1816 = vadd.f32 %v1794, %v1811
        %v1817 = vadd.f32 %v1795, %v1813
        %v1818 = vstv %s1797
        %v1819 = vmul.f32 %v1818, %v797
        %v1820 = vmul.f32 %v1818, %v798
        %v1821 = vmul.f32 %v1818, %v799
        %v1825 = vrot.slane %v1819, 3
        %v1826 = vrot.slane %v1820, 3
        %v1827 = vsel %vm644, %v1825, %v1826
        %v1828 = vrot.slane %v1821, 3
        %v1829 = vsel %vm644, %v1826, %v1828
        %1830 = vrot.lane.b32.xlu0 %v1827, 122
        %v1831 = vpop.permute.xlu0 %1830
        %1832 = vrot.lane.b32.xlu0 %v1829, 122
        %v1833 = vpop.permute.xlu0 %1832
        %v1836 = vadd.f32 %v1816, %v1831
        %v1837 = vadd.f32 %v1817, %v1833
        %s1838 = sld [smem:[#allocation2 + $0x1c]]
        %s1839 = sld [smem:[#allocation2 + $0x4d]]
        %v1840 = vstv %s1838
        %v1841 = vmul.f32 %v1840, %v771
        %v1842 = vmul.f32 %v1840, %v772
        %v1843 = vmul.f32 %v1840, %v773
        %v1847 = vrot.slane %v1841, 4
        %v1848 = vrot.slane %v1842, 4
        %v1849 = vsel %vm642, %v1847, %v1848
        %v1850 = vrot.slane %v1843, 4
        %v1851 = vsel %vm642, %v1848, %v1850
        %v1854 = vadd.f32 %v1836, %v1849
        %v1855 = vadd.f32 %v1837, %v1851
        %v1856 = vstv %s1839
        %v1857 = vmul.f32 %v1856, %v797
        %v1858 = vmul.f32 %v1856, %v798
        %v1859 = vmul.f32 %v1856, %v799
        %v1863 = vrot.slane %v1857, 4
        %v1864 = vrot.slane %v1858, 4
        %v1865 = vsel %vm642, %v1863, %v1864
        %v1866 = vrot.slane %v1859, 4
        %v1867 = vsel %vm642, %v1864, %v1866
        %v1870 = vadd.f32 %v1854, %v1865
        %v1871 = vadd.f32 %v1855, %v1867
        %s1872 = sld [smem:[#allocation2 + $0x1d]]
        %s1873 = sld [smem:[#allocation2 + $0x4e]]
        %v1874 = vstv %s1872
        %v1875 = vmul.f32 %v1874, %v771
        %v1876 = vmul.f32 %v1874, %v772
        %v1877 = vmul.f32 %v1874, %v773
        %v1881 = vrot.slane %v1875, 4
        %v1882 = vrot.slane %v1876, 4
        %v1883 = vsel %vm642, %v1881, %v1882
        %v1884 = vrot.slane %v1877, 4
        %v1885 = vsel %vm642, %v1882, %v1884
        %1886 = vrot.lane.b32.xlu0 %v1883, 127
        %v1887 = vpop.permute.xlu0 %1886
        %1888 = vrot.lane.b32.xlu0 %v1885, 127
        %v1889 = vpop.permute.xlu0 %1888
        %v1892 = vadd.f32 %v1870, %v1887
        %v1893 = vadd.f32 %v1871, %v1889
        %v1894 = vstv %s1873
        %v1895 = vmul.f32 %v1894, %v797
        %v1896 = vmul.f32 %v1894, %v798
        %v1897 = vmul.f32 %v1894, %v799
        %v1901 = vrot.slane %v1895, 4
        %v1902 = vrot.slane %v1896, 4
        %v1903 = vsel %vm642, %v1901, %v1902
        %v1904 = vrot.slane %v1897, 4
        %v1905 = vsel %vm642, %v1902, %v1904
        %1906 = vrot.lane.b32.xlu0 %v1903, 127
        %v1907 = vpop.permute.xlu0 %1906
        %1908 = vrot.lane.b32.xlu0 %v1905, 127
        %v1909 = vpop.permute.xlu0 %1908
        %v1912 = vadd.f32 %v1892, %v1907
        %v1913 = vadd.f32 %v1893, %v1909
        %s1914 = sld [smem:[#allocation2 + $0x1e]]
        %s1915 = sld [smem:[#allocation2 + $0x4f]]
        %v1916 = vstv %s1914
        %v1917 = vmul.f32 %v1916, %v771
        %v1918 = vmul.f32 %v1916, %v772
        %v1919 = vmul.f32 %v1916, %v773
        %v1923 = vrot.slane %v1917, 4
        %v1924 = vrot.slane %v1918, 4
        %v1925 = vsel %vm642, %v1923, %v1924
        %v1926 = vrot.slane %v1919, 4
        %v1927 = vsel %vm642, %v1924, %v1926
        %1928 = vrot.lane.b32.xlu0 %v1925, 126
        %v1929 = vpop.permute.xlu0 %1928
        %1930 = vrot.lane.b32.xlu0 %v1927, 126
        %v1931 = vpop.permute.xlu0 %1930
        %v1934 = vadd.f32 %v1912, %v1929
        %v1935 = vadd.f32 %v1913, %v1931
        %v1936 = vstv %s1915
        %v1937 = vmul.f32 %v1936, %v797
        %v1938 = vmul.f32 %v1936, %v798
        %v1939 = vmul.f32 %v1936, %v799
        %v1943 = vrot.slane %v1937, 4
        %v1944 = vrot.slane %v1938, 4
        %v1945 = vsel %vm642, %v1943, %v1944
        %v1946 = vrot.slane %v1939, 4
        %v1947 = vsel %vm642, %v1944, %v1946
        %1948 = vrot.lane.b32.xlu0 %v1945, 126
        %v1949 = vpop.permute.xlu0 %1948
        %1950 = vrot.lane.b32.xlu0 %v1947, 126
        %v1951 = vpop.permute.xlu0 %1950
        %v1954 = vadd.f32 %v1934, %v1949
        %v1955 = vadd.f32 %v1935, %v1951
        %s1956 = sld [smem:[#allocation2 + $0x1f]]
        %s1957 = sld [smem:[#allocation2 + $0x50]]
        %v1958 = vstv %s1956
        %v1959 = vmul.f32 %v1958, %v771
        %v1960 = vmul.f32 %v1958, %v772
        %v1961 = vmul.f32 %v1958, %v773
        %v1965 = vrot.slane %v1959, 4
        %v1966 = vrot.slane %v1960, 4
        %v1967 = vsel %vm642, %v1965, %v1966
        %v1968 = vrot.slane %v1961, 4
        %v1969 = vsel %vm642, %v1966, %v1968
        %1970 = vrot.lane.b32.xlu0 %v1967, 125
        %v1971 = vpop.permute.xlu0 %1970
        %1972 = vrot.lane.b32.xlu0 %v1969, 125
        %v1973 = vpop.permute.xlu0 %1972
        %v1976 = vadd.f32 %v1954, %v1971
        %v1977 = vadd.f32 %v1955, %v1973
        %v1978 = vstv %s1957
        %v1979 = vmul.f32 %v1978, %v797
        %v1980 = vmul.f32 %v1978, %v798
        %v1981 = vmul.f32 %v1978, %v799
        %v1985 = vrot.slane %v1979, 4
        %v1986 = vrot.slane %v1980, 4
        %v1987 = vsel %vm642, %v1985, %v1986
        %v1988 = vrot.slane %v1981, 4
        %v1989 = vsel %vm642, %v1986, %v1988
        %1990 = vrot.lane.b32.xlu0 %v1987, 125
        %v1991 = vpop.permute.xlu0 %1990
        %1992 = vrot.lane.b32.xlu0 %v1989, 125
        %v1993 = vpop.permute.xlu0 %1992
        %v1996 = vadd.f32 %v1976, %v1991
        %v1997 = vadd.f32 %v1977, %v1993
        %s1998 = sld [smem:[#allocation2 + $0x20]]
        %s1999 = sld [smem:[#allocation2 + $0x51]]
        %v2000 = vstv %s1998
        %v2001 = vmul.f32 %v2000, %v771
        %v2002 = vmul.f32 %v2000, %v772
        %v2003 = vmul.f32 %v2000, %v773
        %v2007 = vrot.slane %v2001, 4
        %v2008 = vrot.slane %v2002, 4
        %v2009 = vsel %vm642, %v2007, %v2008
        %v2010 = vrot.slane %v2003, 4
        %v2011 = vsel %vm642, %v2008, %v2010
        %2012 = vrot.lane.b32.xlu0 %v2009, 124
        %v2013 = vpop.permute.xlu0 %2012
        %2014 = vrot.lane.b32.xlu0 %v2011, 124
        %v2015 = vpop.permute.xlu0 %2014
        %v2018 = vadd.f32 %v1996, %v2013
        %v2019 = vadd.f32 %v1997, %v2015
        %v2020 = vstv %s1999
        %v2021 = vmul.f32 %v2020, %v797
        %v2022 = vmul.f32 %v2020, %v798
        %v2023 = vmul.f32 %v2020, %v799
        %v2027 = vrot.slane %v2021, 4
        %v2028 = vrot.slane %v2022, 4
        %v2029 = vsel %vm642, %v2027, %v2028
        %v2030 = vrot.slane %v2023, 4
        %v2031 = vsel %vm642, %v2028, %v2030
        %2032 = vrot.lane.b32.xlu0 %v2029, 124
        %v2033 = vpop.permute.xlu0 %2032
        %2034 = vrot.lane.b32.xlu0 %v2031, 124
        %v2035 = vpop.permute.xlu0 %2034
        %v2038 = vadd.f32 %v2018, %v2033
        %v2039 = vadd.f32 %v2019, %v2035
        %s2040 = sld [smem:[#allocation2 + $0x21]]
        %s2041 = sld [smem:[#allocation2 + $0x52]]
        %v2042 = vstv %s2040
        %v2043 = vmul.f32 %v2042, %v771
        %v2044 = vmul.f32 %v2042, %v772
        %v2045 = vmul.f32 %v2042, %v773
        %v2049 = vrot.slane %v2043, 4
        %v2050 = vrot.slane %v2044, 4
        %v2051 = vsel %vm642, %v2049, %v2050
        %v2052 = vrot.slane %v2045, 4
        %v2053 = vsel %vm642, %v2050, %v2052
        %2054 = vrot.lane.b32.xlu0 %v2051, 123
        %v2055 = vpop.permute.xlu0 %2054
        %2056 = vrot.lane.b32.xlu0 %v2053, 123
        %v2057 = vpop.permute.xlu0 %2056
        %v2060 = vadd.f32 %v2038, %v2055
        %v2061 = vadd.f32 %v2039, %v2057
        %v2062 = vstv %s2041
        %v2063 = vmul.f32 %v2062, %v797
        %v2064 = vmul.f32 %v2062, %v798
        %v2065 = vmul.f32 %v2062, %v799
        %v2069 = vrot.slane %v2063, 4
        %v2070 = vrot.slane %v2064, 4
        %v2071 = vsel %vm642, %v2069, %v2070
        %v2072 = vrot.slane %v2065, 4
        %v2073 = vsel %vm642, %v2070, %v2072
        %2074 = vrot.lane.b32.xlu0 %v2071, 123
        %v2075 = vpop.permute.xlu0 %2074
        %2076 = vrot.lane.b32.xlu0 %v2073, 123
        %v2077 = vpop.permute.xlu0 %2076
        %v2080 = vadd.f32 %v2060, %v2075
        %v2081 = vadd.f32 %v2061, %v2077
        %s2082 = sld [smem:[#allocation2 + $0x22]]
        %s2083 = sld [smem:[#allocation2 + $0x53]]
        %v2084 = vstv %s2082
        %v2085 = vmul.f32 %v2084, %v771
        %v2086 = vmul.f32 %v2084, %v772
        %v2087 = vmul.f32 %v2084, %v773
        %v2091 = vrot.slane %v2085, 4
        %v2092 = vrot.slane %v2086, 4
        %v2093 = vsel %vm642, %v2091, %v2092
        %v2094 = vrot.slane %v2087, 4
        %v2095 = vsel %vm642, %v2092, %v2094
        %2096 = vrot.lane.b32.xlu0 %v2093, 122
        %v2097 = vpop.permute.xlu0 %2096
        %2098 = vrot.lane.b32.xlu0 %v2095, 122
        %v2099 = vpop.permute.xlu0 %2098
        %v2102 = vadd.f32 %v2080, %v2097
        %v2103 = vadd.f32 %v2081, %v2099
        %v2104 = vstv %s2083
        %v2105 = vmul.f32 %v2104, %v797
        %v2106 = vmul.f32 %v2104, %v798
        %v2107 = vmul.f32 %v2104, %v799
        %v2111 = vrot.slane %v2105, 4
        %v2112 = vrot.slane %v2106, 4
        %v2113 = vsel %vm642, %v2111, %v2112
        %v2114 = vrot.slane %v2107, 4
        %v2115 = vsel %vm642, %v2112, %v2114
        %2116 = vrot.lane.b32.xlu0 %v2113, 122
        %v2117 = vpop.permute.xlu0 %2116
        %2118 = vrot.lane.b32.xlu0 %v2115, 122
        %v2119 = vpop.permute.xlu0 %2118
        %v2122 = vadd.f32 %v2102, %v2117
        %v2123 = vadd.f32 %v2103, %v2119
        %s2124 = sld [smem:[#allocation2 + $0x23]]
        %s2125 = sld [smem:[#allocation2 + $0x54]]
        %v2126 = vstv %s2124
        %v2127 = vmul.f32 %v2126, %v771
        %v2128 = vmul.f32 %v2126, %v772
        %v2129 = vmul.f32 %v2126, %v773
        %v2133 = vrot.slane %v2127, 5
        %v2134 = vrot.slane %v2128, 5
        %v2135 = vsel %vm640, %v2133, %v2134
        %v2136 = vrot.slane %v2129, 5
        %v2137 = vsel %vm640, %v2134, %v2136
        %v2140 = vadd.f32 %v2122, %v2135
        %v2141 = vadd.f32 %v2123, %v2137
        %v2142 = vstv %s2125
        %v2143 = vmul.f32 %v2142, %v797
        %v2144 = vmul.f32 %v2142, %v798
        %v2145 = vmul.f32 %v2142, %v799
        %v2149 = vrot.slane %v2143, 5
        %v2150 = vrot.slane %v2144, 5
        %v2151 = vsel %vm640, %v2149, %v2150
        %v2152 = vrot.slane %v2145, 5
        %v2153 = vsel %vm640, %v2150, %v2152
        %v2156 = vadd.f32 %v2140, %v2151
        %v2157 = vadd.f32 %v2141, %v2153
        %s2158 = sld [smem:[#allocation2 + $0x24]]
        %s2159 = sld [smem:[#allocation2 + $0x55]]
        %v2160 = vstv %s2158
        %v2161 = vmul.f32 %v2160, %v771
        %v2162 = vmul.f32 %v2160, %v772
        %v2163 = vmul.f32 %v2160, %v773
        %v2167 = vrot.slane %v2161, 5
        %v2168 = vrot.slane %v2162, 5
        %v2169 = vsel %vm640, %v2167, %v2168
        %v2170 = vrot.slane %v2163, 5
        %v2171 = vsel %vm640, %v2168, %v2170
        %2172 = vrot.lane.b32.xlu0 %v2169, 127
        %v2173 = vpop.permute.xlu0 %2172
        %2174 = vrot.lane.b32.xlu0 %v2171, 127
        %v2175 = vpop.permute.xlu0 %2174
        %v2178 = vadd.f32 %v2156, %v2173
        %v2179 = vadd.f32 %v2157, %v2175
        %v2180 = vstv %s2159
        %v2181 = vmul.f32 %v2180, %v797
        %v2182 = vmul.f32 %v2180, %v798
        %v2183 = vmul.f32 %v2180, %v799
        %v2187 = vrot.slane %v2181, 5
        %v2188 = vrot.slane %v2182, 5
        %v2189 = vsel %vm640, %v2187, %v2188
        %v2190 = vrot.slane %v2183, 5
        %v2191 = vsel %vm640, %v2188, %v2190
        %2192 = vrot.lane.b32.xlu0 %v2189, 127
        %v2193 = vpop.permute.xlu0 %2192
        %2194 = vrot.lane.b32.xlu0 %v2191, 127
        %v2195 = vpop.permute.xlu0 %2194
        %v2198 = vadd.f32 %v2178, %v2193
        %v2199 = vadd.f32 %v2179, %v2195
        %s2200 = sld [smem:[#allocation2 + $0x25]]
        %s2201 = sld [smem:[#allocation2 + $0x56]]
        %v2202 = vstv %s2200
        %v2203 = vmul.f32 %v2202, %v771
        %v2204 = vmul.f32 %v2202, %v772
        %v2205 = vmul.f32 %v2202, %v773
        %v2209 = vrot.slane %v2203, 5
        %v2210 = vrot.slane %v2204, 5
        %v2211 = vsel %vm640, %v2209, %v2210
        %v2212 = vrot.slane %v2205, 5
        %v2213 = vsel %vm640, %v2210, %v2212
        %2214 = vrot.lane.b32.xlu0 %v2211, 126
        %v2215 = vpop.permute.xlu0 %2214
        %2216 = vrot.lane.b32.xlu0 %v2213, 126
        %v2217 = vpop.permute.xlu0 %2216
        %v2220 = vadd.f32 %v2198, %v2215
        %v2221 = vadd.f32 %v2199, %v2217
        %v2222 = vstv %s2201
        %v2223 = vmul.f32 %v2222, %v797
        %v2224 = vmul.f32 %v2222, %v798
        %v2225 = vmul.f32 %v2222, %v799
        %v2229 = vrot.slane %v2223, 5
        %v2230 = vrot.slane %v2224, 5
        %v2231 = vsel %vm640, %v2229, %v2230
        %v2232 = vrot.slane %v2225, 5
        %v2233 = vsel %vm640, %v2230, %v2232
        %2234 = vrot.lane.b32.xlu0 %v2231, 126
        %v2235 = vpop.permute.xlu0 %2234
        %2236 = vrot.lane.b32.xlu0 %v2233, 126
        %v2237 = vpop.permute.xlu0 %2236
        %v2240 = vadd.f32 %v2220, %v2235
        %v2241 = vadd.f32 %v2221, %v2237
        %s2242 = sld [smem:[#allocation2 + $0x26]]
        %s2243 = sld [smem:[#allocation2 + $0x57]]
        %v2244 = vstv %s2242
        %v2245 = vmul.f32 %v2244, %v771
        %v2246 = vmul.f32 %v2244, %v772
        %v2247 = vmul.f32 %v2244, %v773
        %v2251 = vrot.slane %v2245, 5
        %v2252 = vrot.slane %v2246, 5
        %v2253 = vsel %vm640, %v2251, %v2252
        %v2254 = vrot.slane %v2247, 5
        %v2255 = vsel %vm640, %v2252, %v2254
        %2256 = vrot.lane.b32.xlu0 %v2253, 125
        %v2257 = vpop.permute.xlu0 %2256
        %2258 = vrot.lane.b32.xlu0 %v2255, 125
        %v2259 = vpop.permute.xlu0 %2258
        %v2262 = vadd.f32 %v2240, %v2257
        %v2263 = vadd.f32 %v2241, %v2259
        %v2264 = vstv %s2243
        %v2265 = vmul.f32 %v2264, %v797
        %v2266 = vmul.f32 %v2264, %v798
        %v2267 = vmul.f32 %v2264, %v799
        %v2271 = vrot.slane %v2265, 5
        %v2272 = vrot.slane %v2266, 5
        %v2273 = vsel %vm640, %v2271, %v2272
        %v2274 = vrot.slane %v2267, 5
        %v2275 = vsel %vm640, %v2272, %v2274
        %2276 = vrot.lane.b32.xlu0 %v2273, 125
        %v2277 = vpop.permute.xlu0 %2276
        %2278 = vrot.lane.b32.xlu0 %v2275, 125
        %v2279 = vpop.permute.xlu0 %2278
        %v2282 = vadd.f32 %v2262, %v2277
        %v2283 = vadd.f32 %v2263, %v2279
        %s2284 = sld [smem:[#allocation2 + $0x27]]
        %s2285 = sld [smem:[#allocation2 + $0x58]]
        %v2286 = vstv %s2284
        %v2287 = vmul.f32 %v2286, %v771
        %v2288 = vmul.f32 %v2286, %v772
        %v2289 = vmul.f32 %v2286, %v773
        %v2293 = vrot.slane %v2287, 5
        %v2294 = vrot.slane %v2288, 5
        %v2295 = vsel %vm640, %v2293, %v2294
        %v2296 = vrot.slane %v2289, 5
        %v2297 = vsel %vm640, %v2294, %v2296
        %2298 = vrot.lane.b32.xlu0 %v2295, 124
        %v2299 = vpop.permute.xlu0 %2298
        %2300 = vrot.lane.b32.xlu0 %v2297, 124
        %v2301 = vpop.permute.xlu0 %2300
        %v2304 = vadd.f32 %v2282, %v2299
        %v2305 = vadd.f32 %v2283, %v2301
        %v2306 = vstv %s2285
        %v2307 = vmul.f32 %v2306, %v797
        %v2308 = vmul.f32 %v2306, %v798
        %v2309 = vmul.f32 %v2306, %v799
        %v2313 = vrot.slane %v2307, 5
        %v2314 = vrot.slane %v2308, 5
        %v2315 = vsel %vm640, %v2313, %v2314
        %v2316 = vrot.slane %v2309, 5
        %v2317 = vsel %vm640, %v2314, %v2316
        %2318 = vrot.lane.b32.xlu0 %v2315, 124
        %v2319 = vpop.permute.xlu0 %2318
        %2320 = vrot.lane.b32.xlu0 %v2317, 124
        %v2321 = vpop.permute.xlu0 %2320
        %v2324 = vadd.f32 %v2304, %v2319
        %v2325 = vadd.f32 %v2305, %v2321
        %s2326 = sld [smem:[#allocation2 + $0x28]]
        %s2327 = sld [smem:[#allocation2 + $0x59]]
        %v2328 = vstv %s2326
        %v2329 = vmul.f32 %v2328, %v771
        %v2330 = vmul.f32 %v2328, %v772
        %v2331 = vmul.f32 %v2328, %v773
        %v2335 = vrot.slane %v2329, 5
        %v2336 = vrot.slane %v2330, 5
        %v2337 = vsel %vm640, %v2335, %v2336
        %v2338 = vrot.slane %v2331, 5
        %v2339 = vsel %vm640, %v2336, %v2338
        %2340 = vrot.lane.b32.xlu0 %v2337, 123
        %v2341 = vpop.permute.xlu0 %2340
        %2342 = vrot.lane.b32.xlu0 %v2339, 123
        %v2343 = vpop.permute.xlu0 %2342
        %v2346 = vadd.f32 %v2324, %v2341
        %v2347 = vadd.f32 %v2325, %v2343
        %v2348 = vstv %s2327
        %v2349 = vmul.f32 %v2348, %v797
        %v2350 = vmul.f32 %v2348, %v798
        %v2351 = vmul.f32 %v2348, %v799
        %v2355 = vrot.slane %v2349, 5
        %v2356 = vrot.slane %v2350, 5
        %v2357 = vsel %vm640, %v2355, %v2356
        %v2358 = vrot.slane %v2351, 5
        %v2359 = vsel %vm640, %v2356, %v2358
        %2360 = vrot.lane.b32.xlu0 %v2357, 123
        %v2361 = vpop.permute.xlu0 %2360
        %2362 = vrot.lane.b32.xlu0 %v2359, 123
        %v2363 = vpop.permute.xlu0 %2362
        %v2366 = vadd.f32 %v2346, %v2361
        %v2367 = vadd.f32 %v2347, %v2363
        %s2368 = sld [smem:[#allocation2 + $0x29]]
        %s2369 = sld [smem:[#allocation2 + $0x5a]]
        %v2370 = vstv %s2368
        %v2371 = vmul.f32 %v2370, %v771
        %v2372 = vmul.f32 %v2370, %v772
        %v2373 = vmul.f32 %v2370, %v773
        %v2377 = vrot.slane %v2371, 5
        %v2378 = vrot.slane %v2372, 5
        %v2379 = vsel %vm640, %v2377, %v2378
        %v2380 = vrot.slane %v2373, 5
        %v2381 = vsel %vm640, %v2378, %v2380
        %2382 = vrot.lane.b32.xlu0 %v2379, 122
        %v2383 = vpop.permute.xlu0 %2382
        %2384 = vrot.lane.b32.xlu0 %v2381, 122
        %v2385 = vpop.permute.xlu0 %2384
        %v2388 = vadd.f32 %v2366, %v2383
        %v2389 = vadd.f32 %v2367, %v2385
        %v2390 = vstv %s2369
        %v2391 = vmul.f32 %v2390, %v797
        %v2392 = vmul.f32 %v2390, %v798
        %v2393 = vmul.f32 %v2390, %v799
        %v2397 = vrot.slane %v2391, 5
        %v2398 = vrot.slane %v2392, 5
        %v2399 = vsel %vm640, %v2397, %v2398
        %v2400 = vrot.slane %v2393, 5
        %v2401 = vsel %vm640, %v2398, %v2400
        %2402 = vrot.lane.b32.xlu0 %v2399, 122
        %v2403 = vpop.permute.xlu0 %2402
        %2404 = vrot.lane.b32.xlu0 %v2401, 122
        %v2405 = vpop.permute.xlu0 %2404
        %v2408 = vadd.f32 %v2388, %v2403
        %v2409 = vadd.f32 %v2389, %v2405
        %s2410 = sld [smem:[#allocation2 + $0x2a]]
        %s2411 = sld [smem:[#allocation2 + $0x5b]]
        %v2412 = vstv %s2410
        %v2413 = vmul.f32 %v2412, %v771
        %v2414 = vmul.f32 %v2412, %v772
        %v2415 = vmul.f32 %v2412, %v773
        %v2419 = vrot.slane %v2413, 6
        %v2420 = vrot.slane %v2414, 6
        %v2421 = vsel %vm638, %v2419, %v2420
        %v2422 = vrot.slane %v2415, 6
        %v2423 = vsel %vm638, %v2420, %v2422
        %v2426 = vadd.f32 %v2408, %v2421
        %v2427 = vadd.f32 %v2409, %v2423
        %v2428 = vstv %s2411
        %v2429 = vmul.f32 %v2428, %v797
        %v2430 = vmul.f32 %v2428, %v798
        %v2431 = vmul.f32 %v2428, %v799
        %v2435 = vrot.slane %v2429, 6
        %v2436 = vrot.slane %v2430, 6
        %v2437 = vsel %vm638, %v2435, %v2436
        %v2438 = vrot.slane %v2431, 6
        %v2439 = vsel %vm638, %v2436, %v2438
        %v2442 = vadd.f32 %v2426, %v2437
        %v2443 = vadd.f32 %v2427, %v2439
        %s2444 = sld [smem:[#allocation2 + $0x2b]]
        %s2445 = sld [smem:[#allocation2 + $0x5c]]
        %v2446 = vstv %s2444
        %v2447 = vmul.f32 %v2446, %v771
        %v2448 = vmul.f32 %v2446, %v772
        %v2449 = vmul.f32 %v2446, %v773
        %v2453 = vrot.slane %v2447, 6
        %v2454 = vrot.slane %v2448, 6
        %v2455 = vsel %vm638, %v2453, %v2454
        %v2456 = vrot.slane %v2449, 6
        %v2457 = vsel %vm638, %v2454, %v2456
        %2458 = vrot.lane.b32.xlu0 %v2455, 127
        %v2459 = vpop.permute.xlu0 %2458
        %2460 = vrot.lane.b32.xlu0 %v2457, 127
        %v2461 = vpop.permute.xlu0 %2460
        %v2464 = vadd.f32 %v2442, %v2459
        %v2465 = vadd.f32 %v2443, %v2461
        %v2466 = vstv %s2445
        %v2467 = vmul.f32 %v2466, %v797
        %v2468 = vmul.f32 %v2466, %v798
        %v2469 = vmul.f32 %v2466, %v799
        %v2473 = vrot.slane %v2467, 6
        %v2474 = vrot.slane %v2468, 6
        %v2475 = vsel %vm638, %v2473, %v2474
        %v2476 = vrot.slane %v2469, 6
        %v2477 = vsel %vm638, %v2474, %v2476
        %2478 = vrot.lane.b32.xlu0 %v2475, 127
        %v2479 = vpop.permute.xlu0 %2478
        %2480 = vrot.lane.b32.xlu0 %v2477, 127
        %v2481 = vpop.permute.xlu0 %2480
        %v2484 = vadd.f32 %v2464, %v2479
        %v2485 = vadd.f32 %v2465, %v2481
        %s2486 = sld [smem:[#allocation2 + $0x2c]]
        %s2487 = sld [smem:[#allocation2 + $0x5d]]
        %v2488 = vstv %s2486
        %v2489 = vmul.f32 %v2488, %v771
        %v2490 = vmul.f32 %v2488, %v772
        %v2491 = vmul.f32 %v2488, %v773
        %v2495 = vrot.slane %v2489, 6
        %v2496 = vrot.slane %v2490, 6
        %v2497 = vsel %vm638, %v2495, %v2496
        %v2498 = vrot.slane %v2491, 6
        %v2499 = vsel %vm638, %v2496, %v2498
        %2500 = vrot.lane.b32.xlu0 %v2497, 126
        %v2501 = vpop.permute.xlu0 %2500
        %2502 = vrot.lane.b32.xlu0 %v2499, 126
        %v2503 = vpop.permute.xlu0 %2502
        %v2506 = vadd.f32 %v2484, %v2501
        %v2507 = vadd.f32 %v2485, %v2503
        %v2508 = vstv %s2487
        %v2509 = vmul.f32 %v2508, %v797
        %v2510 = vmul.f32 %v2508, %v798
        %v2511 = vmul.f32 %v2508, %v799
        %v2515 = vrot.slane %v2509, 6
        %v2516 = vrot.slane %v2510, 6
        %v2517 = vsel %vm638, %v2515, %v2516
        %v2518 = vrot.slane %v2511, 6
        %v2519 = vsel %vm638, %v2516, %v2518
        %2520 = vrot.lane.b32.xlu0 %v2517, 126
        %v2521 = vpop.permute.xlu0 %2520
        %2522 = vrot.lane.b32.xlu0 %v2519, 126
        %v2523 = vpop.permute.xlu0 %2522
        %v2526 = vadd.f32 %v2506, %v2521
        %v2527 = vadd.f32 %v2507, %v2523
        %s2528 = sld [smem:[#allocation2 + $0x2d]]
        %s2529 = sld [smem:[#allocation2 + $0x5e]]
        %v2530 = vstv %s2528
        %v2531 = vmul.f32 %v2530, %v771
        %v2532 = vmul.f32 %v2530, %v772
        %v2533 = vmul.f32 %v2530, %v773
        %v2537 = vrot.slane %v2531, 6
        %v2538 = vrot.slane %v2532, 6
        %v2539 = vsel %vm638, %v2537, %v2538
        %v2540 = vrot.slane %v2533, 6
        %v2541 = vsel %vm638, %v2538, %v2540
        %2542 = vrot.lane.b32.xlu0 %v2539, 125
        %v2543 = vpop.permute.xlu0 %2542
        %2544 = vrot.lane.b32.xlu0 %v2541, 125
        %v2545 = vpop.permute.xlu0 %2544
        %v2548 = vadd.f32 %v2526, %v2543
        %v2549 = vadd.f32 %v2527, %v2545
        %v2550 = vstv %s2529
        %v2551 = vmul.f32 %v2550, %v797
        %v2552 = vmul.f32 %v2550, %v798
        %v2553 = vmul.f32 %v2550, %v799
        %v2557 = vrot.slane %v2551, 6
        %v2558 = vrot.slane %v2552, 6
        %v2559 = vsel %vm638, %v2557, %v2558
        %v2560 = vrot.slane %v2553, 6
        %v2561 = vsel %vm638, %v2558, %v2560
        %2562 = vrot.lane.b32.xlu0 %v2559, 125
        %v2563 = vpop.permute.xlu0 %2562
        %2564 = vrot.lane.b32.xlu0 %v2561, 125
        %v2565 = vpop.permute.xlu0 %2564
        %v2568 = vadd.f32 %v2548, %v2563
        %v2569 = vadd.f32 %v2549, %v2565
        %s2570 = sld [smem:[#allocation2 + $0x2e]]
        %s2571 = sld [smem:[#allocation2 + $0x5f]]
        %v2572 = vstv %s2570
        %v2573 = vmul.f32 %v2572, %v771
        %v2574 = vmul.f32 %v2572, %v772
        %v2575 = vmul.f32 %v2572, %v773
        %v2579 = vrot.slane %v2573, 6
        %v2580 = vrot.slane %v2574, 6
        %v2581 = vsel %vm638, %v2579, %v2580
        %v2582 = vrot.slane %v2575, 6
        %v2583 = vsel %vm638, %v2580, %v2582
        %2584 = vrot.lane.b32.xlu0 %v2581, 124
        %v2585 = vpop.permute.xlu0 %2584
        %2586 = vrot.lane.b32.xlu0 %v2583, 124
        %v2587 = vpop.permute.xlu0 %2586
        %v2590 = vadd.f32 %v2568, %v2585
        %v2591 = vadd.f32 %v2569, %v2587
        %v2592 = vstv %s2571
        %v2593 = vmul.f32 %v2592, %v797
        %v2594 = vmul.f32 %v2592, %v798
        %v2595 = vmul.f32 %v2592, %v799
        %v2599 = vrot.slane %v2593, 6
        %v2600 = vrot.slane %v2594, 6
        %v2601 = vsel %vm638, %v2599, %v2600
        %v2602 = vrot.slane %v2595, 6
        %v2603 = vsel %vm638, %v2600, %v2602
        %2604 = vrot.lane.b32.xlu0 %v2601, 124
        %v2605 = vpop.permute.xlu0 %2604
        %2606 = vrot.lane.b32.xlu0 %v2603, 124
        %v2607 = vpop.permute.xlu0 %2606
        %v2610 = vadd.f32 %v2590, %v2605
        %v2611 = vadd.f32 %v2591, %v2607
        %s2612 = sld [smem:[#allocation2 + $0x2f]]
        %s2613 = sld [smem:[#allocation2 + $0x60]]
        %v2614 = vstv %s2612
        %v2615 = vmul.f32 %v2614, %v771
        %v2616 = vmul.f32 %v2614, %v772
        %v2617 = vmul.f32 %v2614, %v773
        %v2621 = vrot.slane %v2615, 6
        %v2622 = vrot.slane %v2616, 6
        %v2623 = vsel %vm638, %v2621, %v2622
        %v2624 = vrot.slane %v2617, 6
        %v2625 = vsel %vm638, %v2622, %v2624
        %2626 = vrot.lane.b32.xlu0 %v2623, 123
        %v2627 = vpop.permute.xlu0 %2626
        %2628 = vrot.lane.b32.xlu0 %v2625, 123
        %v2629 = vpop.permute.xlu0 %2628
        %v2632 = vadd.f32 %v2610, %v2627
        %v2633 = vadd.f32 %v2611, %v2629
        %v2634 = vstv %s2613
        %v2635 = vmul.f32 %v2634, %v797
        %v2636 = vmul.f32 %v2634, %v798
        %v2637 = vmul.f32 %v2634, %v799
        %v2641 = vrot.slane %v2635, 6
        %v2642 = vrot.slane %v2636, 6
        %v2643 = vsel %vm638, %v2641, %v2642
        %v2644 = vrot.slane %v2637, 6
        %v2645 = vsel %vm638, %v2642, %v2644
        %2646 = vrot.lane.b32.xlu0 %v2643, 123
        %v2647 = vpop.permute.xlu0 %2646
        %2648 = vrot.lane.b32.xlu0 %v2645, 123
        %v2649 = vpop.permute.xlu0 %2648
        %v2652 = vadd.f32 %v2632, %v2647
        %v2653 = vadd.f32 %v2633, %v2649
        %s2654 = sld [smem:[#allocation2 + $0x30]]
        %s2655 = sld [smem:[#allocation2 + $0x61]]
        %v2656 = vstv %s2654
        %v2657 = vmul.f32 %v2656, %v771
        %v2658 = vmul.f32 %v2656, %v772
        %v2659 = vmul.f32 %v2656, %v773
        %v2663 = vrot.slane %v2657, 6
        %v2664 = vrot.slane %v2658, 6
        %v2665 = vsel %vm638, %v2663, %v2664
        %v2666 = vrot.slane %v2659, 6
        %v2667 = vsel %vm638, %v2664, %v2666
        %2668 = vrot.lane.b32.xlu0 %v2665, 122
        %v2669 = vpop.permute.xlu0 %2668
        %2670 = vrot.lane.b32.xlu0 %v2667, 122
        %v2671 = vpop.permute.xlu0 %2670
        %v2674 = vadd.f32 %v2652, %v2669
        %v2675 = vadd.f32 %v2653, %v2671
        %v2676 = vstv %s2655
        %v2677 = vmul.f32 %v2676, %v797
        %v2678 = vmul.f32 %v2676, %v798
        %v2679 = vmul.f32 %v2676, %v799
        %v2683 = vrot.slane %v2677, 6
        %v2684 = vrot.slane %v2678, 6
        %v2685 = vsel %vm638, %v2683, %v2684
        %v2686 = vrot.slane %v2679, 6
        %v2687 = vsel %vm638, %v2684, %v2686
        %2688 = vrot.lane.b32.xlu0 %v2685, 122
        %v2689 = vpop.permute.xlu0 %2688
        %2690 = vrot.lane.b32.xlu0 %v2687, 122
        %v2691 = vpop.permute.xlu0 %2690
        %v2694 = vadd.f32 %v2674, %v2689
        %v2695 = vadd.f32 %v2675, %v2691
        %s2696 = sld [smem:[#allocation7]]
        %v2697 = vstv %s2696
        %v2698 = vmul.f32 %v2694, %v2697
        %v2699 = vmul.f32 %v2695, %v2697
        %s2700 = sld [smem:[#allocation7 + $0x1]]
        %v2701 = vstv %s2700
        %v2702 = vadd.f32 %v2698, %v2701
        %v2703 = vadd.f32 %v2699, %v2701
        %v2704 = vxor.u32 %v2702, 2147483648
        %v2705 = vxor.u32 %v2703, 2147483648
        %v2706 = vmul.f32 %v2704, 1.442695
        %v2707 = vpow.pop %v2706
        %v2708 = vmul.f32 %v2705, 1.442695
        %v2709 = vpow.pop %v2708
        %v2710 = vadd.f32 %v2707, 1.0
        %v2711 = vadd.f32 %v2709, 1.0
        %v2712 = vrcp.pop %v2710
        %v2713 = vmul.f32 1.0, %v2712
        %v2714 = vrcp.pop %v2711
        %v2715 = vmul.f32 1.0, %v2714
        %v2716 = vmul.f32 %v2713, 0.33333334
        %v2717 = vmul.f32 %v2715, 0.33333334
        %v2719 = vrot.slane %v584, 5
        %v2721 = vsel %vm640, 0.0, %v2719
        %v2722 = vsel %vm648, %v2721, 0.0
        %2725 = vrot.lane.b32.xlu0 %v2722, 3
        %v2726 = vpop.permute.xlu0 %2725
        %2727 = vrot.lane.b32.xlu0 0.0, 3
        %v2728 = vpop.permute.xlu0 %2727
        %v2731 = vsel %vm705, 0.0, %v2726
        %v2732 = vsel %vm705, 0.0, %v2728
        %v2733 = vsel %vm770, %v2731, 0.0
        %v2734 = vsel %vm770, %v2732, 0.0
        %v2736 = vrot.slane %v607, 5
        %v2738 = vsel %vm640, 0.0, %v2736
        %v2739 = vsel %vm648, %v2738, 0.0
        %2741 = vrot.lane.b32.xlu0 %v2739, 3
        %v2742 = vpop.permute.xlu0 %2741
        %v2744 = vsel %vm705, 0.0, %v2742
        %v2745 = vsel %vm770, %v2744, 0.0
        %s2746 = sld [smem:[#allocation2 + $0x62]]
        %s2747 = sld [smem:[#allocation2 + $0x93]]
        %v2748 = vstv %s2746
        %v2749 = vmul.f32 %v2748, %v2733
        %v2750 = vadd.f32 %v2749, 0.0
        %v2751 = vstv %s2747
        %v2752 = vmul.f32 %v2751, %v2745
        %v2753 = vadd.f32 %v2750, %v2752
        %s2754 = sld [smem:[#allocation2 + $0x63]]
        %s2755 = sld [smem:[#allocation2 + $0x94]]
        %v2756 = vstv %s2754
        %v2757 = vmul.f32 %v2756, %v2733
        %2759 = vrot.lane.b32.xlu0 %v2757, 127
        %v2760 = vpop.permute.xlu0 %2759
        %v2762 = vadd.f32 %v2753, %v2760
        %v2763 = vstv %s2755
        %v2764 = vmul.f32 %v2763, %v2745
        %2766 = vrot.lane.b32.xlu0 %v2764, 127
        %v2767 = vpop.permute.xlu0 %2766
        %v2769 = vadd.f32 %v2762, %v2767
        %s2770 = sld [smem:[#allocation2 + $0x64]]
        %s2771 = sld [smem:[#allocation2 + $0x95]]
        %v2772 = vstv %s2770
        %v2773 = vmul.f32 %v2772, %v2733
        %2775 = vrot.lane.b32.xlu0 %v2773, 126
        %v2776 = vpop.permute.xlu0 %2775
        %v2778 = vadd.f32 %v2769, %v2776
        %v2779 = vstv %s2771
        %v2780 = vmul.f32 %v2779, %v2745
        %2782 = vrot.lane.b32.xlu0 %v2780, 126
        %v2783 = vpop.permute.xlu0 %2782
        %v2785 = vadd.f32 %v2778, %v2783
        %s2786 = sld [smem:[#allocation2 + $0x65]]
        %s2787 = sld [smem:[#allocation2 + $0x96]]
        %v2788 = vstv %s2786
        %v2789 = vmul.f32 %v2788, %v2733
        %2791 = vrot.lane.b32.xlu0 %v2789, 125
        %v2792 = vpop.permute.xlu0 %2791
        %v2794 = vadd.f32 %v2785, %v2792
        %v2795 = vstv %s2787
        %v2796 = vmul.f32 %v2795, %v2745
        %2798 = vrot.lane.b32.xlu0 %v2796, 125
        %v2799 = vpop.permute.xlu0 %2798
        %v2801 = vadd.f32 %v2794, %v2799
        %s2802 = sld [smem:[#allocation2 + $0x66]]
        %s2803 = sld [smem:[#allocation2 + $0x97]]
        %v2804 = vstv %s2802
        %v2805 = vmul.f32 %v2804, %v2733
        %2807 = vrot.lane.b32.xlu0 %v2805, 124
        %v2808 = vpop.permute.xlu0 %2807
        %v2810 = vadd.f32 %v2801, %v2808
        %v2811 = vstv %s2803
        %v2812 = vmul.f32 %v2811, %v2745
        %2814 = vrot.lane.b32.xlu0 %v2812, 124
        %v2815 = vpop.permute.xlu0 %2814
        %v2817 = vadd.f32 %v2810, %v2815
        %s2818 = sld [smem:[#allocation2 + $0x67]]
        %s2819 = sld [smem:[#allocation2 + $0x98]]
        %v2820 = vstv %s2818
        %v2821 = vmul.f32 %v2820, %v2733
        %2823 = vrot.lane.b32.xlu0 %v2821, 123
        %v2824 = vpop.permute.xlu0 %2823
        %v2826 = vadd.f32 %v2817, %v2824
        %v2827 = vstv %s2819
        %v2828 = vmul.f32 %v2827, %v2745
        %2830 = vrot.lane.b32.xlu0 %v2828, 123
        %v2831 = vpop.permute.xlu0 %2830
        %v2833 = vadd.f32 %v2826, %v2831
        %s2834 = sld [smem:[#allocation2 + $0x68]]
        %s2835 = sld [smem:[#allocation2 + $0x99]]
        %v2836 = vstv %s2834
        %v2837 = vmul.f32 %v2836, %v2733
        %2839 = vrot.lane.b32.xlu0 %v2837, 122
        %v2840 = vpop.permute.xlu0 %2839
        %v2842 = vadd.f32 %v2833, %v2840
        %v2843 = vstv %s2835
        %v2844 = vmul.f32 %v2843, %v2745
        %2846 = vrot.lane.b32.xlu0 %v2844, 122
        %v2847 = vpop.permute.xlu0 %2846
        %v2849 = vadd.f32 %v2842, %v2847
        %s2850 = sld [smem:[#allocation2 + $0x69]]
        %s2851 = sld [smem:[#allocation2 + $0x9a]]
        %v2852 = vstv %s2850
        %v2853 = vmul.f32 %v2852, %v2733
        %v2855 = vrot.slane %v2853, 1
        %v2857 = vadd.f32 %v2849, %v2855
        %v2858 = vstv %s2851
        %v2859 = vmul.f32 %v2858, %v2745
        %v2861 = vrot.slane %v2859, 1
        %v2863 = vadd.f32 %v2857, %v2861
        %s2864 = sld [smem:[#allocation2 + $0x6a]]
        %s2865 = sld [smem:[#allocation2 + $0x9b]]
        %v2866 = vstv %s2864
        %v2867 = vmul.f32 %v2866, %v2733
        %v2869 = vrot.slane %v2867, 1
        %2870 = vrot.lane.b32.xlu0 %v2869, 127
        %v2871 = vpop.permute.xlu0 %2870
        %v2873 = vadd.f32 %v2863, %v2871
        %v2874 = vstv %s2865
        %v2875 = vmul.f32 %v2874, %v2745
        %v2877 = vrot.slane %v2875, 1
        %2878 = vrot.lane.b32.xlu0 %v2877, 127
        %v2879 = vpop.permute.xlu0 %2878
        %v2881 = vadd.f32 %v2873, %v2879
        %s2882 = sld [smem:[#allocation2 + $0x6b]]
        %s2883 = sld [smem:[#allocation2 + $0x9c]]
        %v2884 = vstv %s2882
        %v2885 = vmul.f32 %v2884, %v2733
        %v2887 = vrot.slane %v2885, 1
        %2888 = vrot.lane.b32.xlu0 %v2887, 126
        %v2889 = vpop.permute.xlu0 %2888
        %v2891 = vadd.f32 %v2881, %v2889
        %v2892 = vstv %s2883
        %v2893 = vmul.f32 %v2892, %v2745
        %v2895 = vrot.slane %v2893, 1
        %2896 = vrot.lane.b32.xlu0 %v2895, 126
        %v2897 = vpop.permute.xlu0 %2896
        %v2899 = vadd.f32 %v2891, %v2897
        %s2900 = sld [smem:[#allocation2 + $0x6c]]
        %s2901 = sld [smem:[#allocation2 + $0x9d]]
        %v2902 = vstv %s2900
        %v2903 = vmul.f32 %v2902, %v2733
        %v2905 = vrot.slane %v2903, 1
        %2906 = vrot.lane.b32.xlu0 %v2905, 125
        %v2907 = vpop.permute.xlu0 %2906
        %v2909 = vadd.f32 %v2899, %v2907
        %v2910 = vstv %s2901
        %v2911 = vmul.f32 %v2910, %v2745
        %v2913 = vrot.slane %v2911, 1
        %2914 = vrot.lane.b32.xlu0 %v2913, 125
        %v2915 = vpop.permute.xlu0 %2914
        %v2917 = vadd.f32 %v2909, %v2915
        %s2918 = sld [smem:[#allocation2 + $0x6d]]
        %s2919 = sld [smem:[#allocation2 + $0x9e]]
        %v2920 = vstv %s2918
        %v2921 = vmul.f32 %v2920, %v2733
        %v2923 = vrot.slane %v2921, 1
        %2924 = vrot.lane.b32.xlu0 %v2923, 124
        %v2925 = vpop.permute.xlu0 %2924
        %v2927 = vadd.f32 %v2917, %v2925
        %v2928 = vstv %s2919
        %v2929 = vmul.f32 %v2928, %v2745
        %v2931 = vrot.slane %v2929, 1
        %2932 = vrot.lane.b32.xlu0 %v2931, 124
        %v2933 = vpop.permute.xlu0 %2932
        %v2935 = vadd.f32 %v2927, %v2933
        %s2936 = sld [smem:[#allocation2 + $0x6e]]
        %s2937 = sld [smem:[#allocation2 + $0x9f]]
        %v2938 = vstv %s2936
        %v2939 = vmul.f32 %v2938, %v2733
        %v2941 = vrot.slane %v2939, 1
        %2942 = vrot.lane.b32.xlu0 %v2941, 123
        %v2943 = vpop.permute.xlu0 %2942
        %v2945 = vadd.f32 %v2935, %v2943
        %v2946 = vstv %s2937
        %v2947 = vmul.f32 %v2946, %v2745
        %v2949 = vrot.slane %v2947, 1
        %2950 = vrot.lane.b32.xlu0 %v2949, 123
        %v2951 = vpop.permute.xlu0 %2950
        %v2953 = vadd.f32 %v2945, %v2951
        %s2954 = sld [smem:[#allocation2 + $0x6f]]
        %s2955 = sld [smem:[#allocation2 + $0xa0]]
        %v2956 = vstv %s2954
        %v2957 = vmul.f32 %v2956, %v2733
        %v2959 = vrot.slane %v2957, 1
        %2960 = vrot.lane.b32.xlu0 %v2959, 122
        %v2961 = vpop.permute.xlu0 %2960
        %v2963 = vadd.f32 %v2953, %v2961
        %v2964 = vstv %s2955
        %v2965 = vmul.f32 %v2964, %v2745
        %v2967 = vrot.slane %v2965, 1
        %2968 = vrot.lane.b32.xlu0 %v2967, 122
        %v2969 = vpop.permute.xlu0 %2968
        %v2971 = vadd.f32 %v2963, %v2969
        %s2972 = sld [smem:[#allocation2 + $0x70]]
        %s2973 = sld [smem:[#allocation2 + $0xa1]]
        %v2974 = vstv %s2972
        %v2975 = vmul.f32 %v2974, %v2733
        %v2977 = vrot.slane %v2975, 2
        %v2979 = vadd.f32 %v2971, %v2977
        %v2980 = vstv %s2973
        %v2981 = vmul.f32 %v2980, %v2745
        %v2983 = vrot.slane %v2981, 2
        %v2985 = vadd.f32 %v2979, %v2983
        %s2986 = sld [smem:[#allocation2 + $0x71]]
        %s2987 = sld [smem:[#allocation2 + $0xa2]]
        %v2988 = vstv %s2986
        %v2989 = vmul.f32 %v2988, %v2733
        %v2991 = vrot.slane %v2989, 2
        %2992 = vrot.lane.b32.xlu0 %v2991, 127
        %v2993 = vpop.permute.xlu0 %2992
        %v2995 = vadd.f32 %v2985, %v2993
        %v2996 = vstv %s2987
        %v2997 = vmul.f32 %v2996, %v2745
        %v2999 = vrot.slane %v2997, 2
        %3000 = vrot.lane.b32.xlu0 %v2999, 127
        %v3001 = vpop.permute.xlu0 %3000
        %v3003 = vadd.f32 %v2995, %v3001
        %s3004 = sld [smem:[#allocation2 + $0x72]]
        %s3005 = sld [smem:[#allocation2 + $0xa3]]
        %v3006 = vstv %s3004
        %v3007 = vmul.f32 %v3006, %v2733
        %v3009 = vrot.slane %v3007, 2
        %3010 = vrot.lane.b32.xlu0 %v3009, 126
        %v3011 = vpop.permute.xlu0 %3010
        %v3013 = vadd.f32 %v3003, %v3011
        %v3014 = vstv %s3005
        %v3015 = vmul.f32 %v3014, %v2745
        %v3017 = vrot.slane %v3015, 2
        %3018 = vrot.lane.b32.xlu0 %v3017, 126
        %v3019 = vpop.permute.xlu0 %3018
        %v3021 = vadd.f32 %v3013, %v3019
        %s3022 = sld [smem:[#allocation2 + $0x73]]
        %s3023 = sld [smem:[#allocation2 + $0xa4]]
        %v3024 = vstv %s3022
        %v3025 = vmul.f32 %v3024, %v2733
        %v3027 = vrot.slane %v3025, 2
        %3028 = vrot.lane.b32.xlu0 %v3027, 125
        %v3029 = vpop.permute.xlu0 %3028
        %v3031 = vadd.f32 %v3021, %v3029
        %v3032 = vstv %s3023
        %v3033 = vmul.f32 %v3032, %v2745
        %v3035 = vrot.slane %v3033, 2
        %3036 = vrot.lane.b32.xlu0 %v3035, 125
        %v3037 = vpop.permute.xlu0 %3036
        %v3039 = vadd.f32 %v3031, %v3037
        %s3040 = sld [smem:[#allocation2 + $0x74]]
        %s3041 = sld [smem:[#allocation2 + $0xa5]]
        %v3042 = vstv %s3040
        %v3043 = vmul.f32 %v3042, %v2733
        %v3045 = vrot.slane %v3043, 2
        %3046 = vrot.lane.b32.xlu0 %v3045, 124
        %v3047 = vpop.permute.xlu0 %3046
        %v3049 = vadd.f32 %v3039, %v3047
        %v3050 = vstv %s3041
        %v3051 = vmul.f32 %v3050, %v2745
        %v3053 = vrot.slane %v3051, 2
        %3054 = vrot.lane.b32.xlu0 %v3053, 124
        %v3055 = vpop.permute.xlu0 %3054
        %v3057 = vadd.f32 %v3049, %v3055
        %s3058 = sld [smem:[#allocation2 + $0x75]]
        %s3059 = sld [smem:[#allocation2 + $0xa6]]
        %v3060 = vstv %s3058
        %v3061 = vmul.f32 %v3060, %v2733
        %v3063 = vrot.slane %v3061, 2
        %3064 = vrot.lane.b32.xlu0 %v3063, 123
        %v3065 = vpop.permute.xlu0 %3064
        %v3067 = vadd.f32 %v3057, %v3065
        %v3068 = vstv %s3059
        %v3069 = vmul.f32 %v3068, %v2745
        %v3071 = vrot.slane %v3069, 2
        %3072 = vrot.lane.b32.xlu0 %v3071, 123
        %v3073 = vpop.permute.xlu0 %3072
        %v3075 = vadd.f32 %v3067, %v3073
        %s3076 = sld [smem:[#allocation2 + $0x76]]
        %s3077 = sld [smem:[#allocation2 + $0xa7]]
        %v3078 = vstv %s3076
        %v3079 = vmul.f32 %v3078, %v2733
        %v3081 = vrot.slane %v3079, 2
        %3082 = vrot.lane.b32.xlu0 %v3081, 122
        %v3083 = vpop.permute.xlu0 %3082
        %v3085 = vadd.f32 %v3075, %v3083
        %v3086 = vstv %s3077
        %v3087 = vmul.f32 %v3086, %v2745
        %v3089 = vrot.slane %v3087, 2
        %3090 = vrot.lane.b32.xlu0 %v3089, 122
        %v3091 = vpop.permute.xlu0 %3090
        %v3093 = vadd.f32 %v3085, %v3091
        %s3094 = sld [smem:[#allocation2 + $0x77]]
        %s3095 = sld [smem:[#allocation2 + $0xa8]]
        %v3096 = vstv %s3094
        %v3097 = vmul.f32 %v3096, %v2733
        %v3099 = vrot.slane %v3097, 3
        %v3101 = vadd.f32 %v3093, %v3099
        %v3102 = vstv %s3095
        %v3103 = vmul.f32 %v3102, %v2745
        %v3105 = vrot.slane %v3103, 3
        %v3107 = vadd.f32 %v3101, %v3105
        %s3108 = sld [smem:[#allocation2 + $0x78]]
        %s3109 = sld [smem:[#allocation2 + $0xa9]]
        %v3110 = vstv %s3108
        %v3111 = vmul.f32 %v3110, %v2733
        %v3113 = vrot.slane %v3111, 3
        %3114 = vrot.lane.b32.xlu0 %v3113, 127
        %v3115 = vpop.permute.xlu0 %3114
        %v3117 = vadd.f32 %v3107, %v3115
        %v3118 = vstv %s3109
        %v3119 = vmul.f32 %v3118, %v2745
        %v3121 = vrot.slane %v3119, 3
        %3122 = vrot.lane.b32.xlu0 %v3121, 127
        %v3123 = vpop.permute.xlu0 %3122
        %v3125 = vadd.f32 %v3117, %v3123
        %s3126 = sld [smem:[#allocation2 + $0x79]]
        %s3127 = sld [smem:[#allocation2 + $0xaa]]
        %v3128 = vstv %s3126
        %v3129 = vmul.f32 %v3128, %v2733
        %v3131 = vrot.slane %v3129, 3
        %3132 = vrot.lane.b32.xlu0 %v3131, 126
        %v3133 = vpop.permute.xlu0 %3132
        %v3135 = vadd.f32 %v3125, %v3133
        %v3136 = vstv %s3127
        %v3137 = vmul.f32 %v3136, %v2745
        %v3139 = vrot.slane %v3137, 3
        %3140 = vrot.lane.b32.xlu0 %v3139, 126
        %v3141 = vpop.permute.xlu0 %3140
        %v3143 = vadd.f32 %v3135, %v3141
        %s3144 = sld [smem:[#allocation2 + $0x7a]]
        %s3145 = sld [smem:[#allocation2 + $0xab]]
        %v3146 = vstv %s3144
        %v3147 = vmul.f32 %v3146, %v2733
        %v3149 = vrot.slane %v3147, 3
        %3150 = vrot.lane.b32.xlu0 %v3149, 125
        %v3151 = vpop.permute.xlu0 %3150
        %v3153 = vadd.f32 %v3143, %v3151
        %v3154 = vstv %s3145
        %v3155 = vmul.f32 %v3154, %v2745
        %v3157 = vrot.slane %v3155, 3
        %3158 = vrot.lane.b32.xlu0 %v3157, 125
        %v3159 = vpop.permute.xlu0 %3158
        %v3161 = vadd.f32 %v3153, %v3159
        %s3162 = sld [smem:[#allocation2 + $0x7b]]
        %s3163 = sld [smem:[#allocation2 + $0xac]]
        %v3164 = vstv %s3162
        %v3165 = vmul.f32 %v3164, %v2733
        %v3167 = vrot.slane %v3165, 3
        %3168 = vrot.lane.b32.xlu0 %v3167, 124
        %v3169 = vpop.permute.xlu0 %3168
        %v3171 = vadd.f32 %v3161, %v3169
        %v3172 = vstv %s3163
        %v3173 = vmul.f32 %v3172, %v2745
        %v3175 = vrot.slane %v3173, 3
        %3176 = vrot.lane.b32.xlu0 %v3175, 124
        %v3177 = vpop.permute.xlu0 %3176
        %v3179 = vadd.f32 %v3171, %v3177
        %s3180 = sld [smem:[#allocation2 + $0x7c]]
        %s3181 = sld [smem:[#allocation2 + $0xad]]
        %v3182 = vstv %s3180
        %v3183 = vmul.f32 %v3182, %v2733
        %v3185 = vrot.slane %v3183, 3
        %3186 = vrot.lane.b32.xlu0 %v3185, 123
        %v3187 = vpop.permute.xlu0 %3186
        %v3189 = vadd.f32 %v3179, %v3187
        %v3190 = vstv %s3181
        %v3191 = vmul.f32 %v3190, %v2745
        %v3193 = vrot.slane %v3191, 3
        %3194 = vrot.lane.b32.xlu0 %v3193, 123
        %v3195 = vpop.permute.xlu0 %3194
        %v3197 = vadd.f32 %v3189, %v3195
        %s3198 = sld [smem:[#allocation2 + $0x7d]]
        %s3199 = sld [smem:[#allocation2 + $0xae]]
        %v3200 = vstv %s3198
        %v3201 = vmul.f32 %v3200, %v2733
        %v3203 = vrot.slane %v3201, 3
        %3204 = vrot.lane.b32.xlu0 %v3203, 122
        %v3205 = vpop.permute.xlu0 %3204
        %v3207 = vadd.f32 %v3197, %v3205
        %v3208 = vstv %s3199
        %v3209 = vmul.f32 %v3208, %v2745
        %v3211 = vrot.slane %v3209, 3
        %3212 = vrot.lane.b32.xlu0 %v3211, 122
        %v3213 = vpop.permute.xlu0 %3212
        %v3215 = vadd.f32 %v3207, %v3213
        %s3216 = sld [smem:[#allocation2 + $0x7e]]
        %s3217 = sld [smem:[#allocation2 + $0xaf]]
        %v3218 = vstv %s3216
        %v3219 = vmul.f32 %v3218, %v2733
        %v3221 = vrot.slane %v3219, 4
        %v3223 = vadd.f32 %v3215, %v3221
        %v3224 = vstv %s3217
        %v3225 = vmul.f32 %v3224, %v2745
        %v3227 = vrot.slane %v3225, 4
        %v3229 = vadd.f32 %v3223, %v3227
        %s3230 = sld [smem:[#allocation2 + $0x7f]]
        %s3231 = sld [smem:[#allocation2 + $0xb0]]
        %v3232 = vstv %s3230
        %v3233 = vmul.f32 %v3232, %v2733
        %v3235 = vrot.slane %v3233, 4
        %3236 = vrot.lane.b32.xlu0 %v3235, 127
        %v3237 = vpop.permute.xlu0 %3236
        %v3239 = vadd.f32 %v3229, %v3237
        %v3240 = vstv %s3231
        %v3241 = vmul.f32 %v3240, %v2745
        %v3243 = vrot.slane %v3241, 4
        %3244 = vrot.lane.b32.xlu0 %v3243, 127
        %v3245 = vpop.permute.xlu0 %3244
        %v3247 = vadd.f32 %v3239, %v3245
        %s3248 = sld [smem:[#allocation2 + $0x80]]
        %s3249 = sld [smem:[#allocation2 + $0xb1]]
        %v3250 = vstv %s3248
        %v3251 = vmul.f32 %v3250, %v2733
        %v3253 = vrot.slane %v3251, 4
        %3254 = vrot.lane.b32.xlu0 %v3253, 126
        %v3255 = vpop.permute.xlu0 %3254
        %v3257 = vadd.f32 %v3247, %v3255
        %v3258 = vstv %s3249
        %v3259 = vmul.f32 %v3258, %v2745
        %v3261 = vrot.slane %v3259, 4
        %3262 = vrot.lane.b32.xlu0 %v3261, 126
        %v3263 = vpop.permute.xlu0 %3262
        %v3265 = vadd.f32 %v3257, %v3263
        %s3266 = sld [smem:[#allocation2 + $0x81]]
        %s3267 = sld [smem:[#allocation2 + $0xb2]]
        %v3268 = vstv %s3266
        %v3269 = vmul.f32 %v3268, %v2733
        %v3271 = vrot.slane %v3269, 4
        %3272 = vrot.lane.b32.xlu0 %v3271, 125
        %v3273 = vpop.permute.xlu0 %3272
        %v3275 = vadd.f32 %v3265, %v3273
        %v3276 = vstv %s3267
        %v3277 = vmul.f32 %v3276, %v2745
        %v3279 = vrot.slane %v3277, 4
        %3280 = vrot.lane.b32.xlu0 %v3279, 125
        %v3281 = vpop.permute.xlu0 %3280
        %v3283 = vadd.f32 %v3275, %v3281
        %s3284 = sld [smem:[#allocation2 + $0x82]]
        %s3285 = sld [smem:[#allocation2 + $0xb3]]
        %v3286 = vstv %s3284
        %v3287 = vmul.f32 %v3286, %v2733
        %v3289 = vrot.slane %v3287, 4
        %3290 = vrot.lane.b32.xlu0 %v3289, 124
        %v3291 = vpop.permute.xlu0 %3290
        %v3293 = vadd.f32 %v3283, %v3291
        %v3294 = vstv %s3285
        %v3295 = vmul.f32 %v3294, %v2745
        %v3297 = vrot.slane %v3295, 4
        %3298 = vrot.lane.b32.xlu0 %v3297, 124
        %v3299 = vpop.permute.xlu0 %3298
        %v3301 = vadd.f32 %v3293, %v3299
        %s3302 = sld [smem:[#allocation2 + $0x83]]
        %s3303 = sld [smem:[#allocation2 + $0xb4]]
        %v3304 = vstv %s3302
        %v3305 = vmul.f32 %v3304, %v2733
        %v3307 = vrot.slane %v3305, 4
        %3308 = vrot.lane.b32.xlu0 %v3307, 123
        %v3309 = vpop.permute.xlu0 %3308
        %v3311 = vadd.f32 %v3301, %v3309
        %v3312 = vstv %s3303
        %v3313 = vmul.f32 %v3312, %v2745
        %v3315 = vrot.slane %v3313, 4
        %3316 = vrot.lane.b32.xlu0 %v3315, 123
        %v3317 = vpop.permute.xlu0 %3316
        %v3319 = vadd.f32 %v3311, %v3317
        %s3320 = sld [smem:[#allocation2 + $0x84]]
        %s3321 = sld [smem:[#allocation2 + $0xb5]]
        %v3322 = vstv %s3320
        %v3323 = vmul.f32 %v3322, %v2733
        %v3325 = vrot.slane %v3323, 4
        %3326 = vrot.lane.b32.xlu0 %v3325, 122
        %v3327 = vpop.permute.xlu0 %3326
        %v3329 = vadd.f32 %v3319, %v3327
        %v3330 = vstv %s3321
        %v3331 = vmul.f32 %v3330, %v2745
        %v3333 = vrot.slane %v3331, 4
        %3334 = vrot.lane.b32.xlu0 %v3333, 122
        %v3335 = vpop.permute.xlu0 %3334
        %v3337 = vadd.f32 %v3329, %v3335
        %s3338 = sld [smem:[#allocation2 + $0x85]]
        %s3339 = sld [smem:[#allocation2 + $0xb6]]
        %v3340 = vstv %s3338
        %v3341 = vmul.f32 %v3340, %v2733
        %v3342 = vmul.f32 %v3340, %v2734
        %v3345 = vrot.slane %v3341, 5
        %v3346 = vrot.slane %v3342, 5
        %v3347 = vsel %vm640, %v3345, %v3346
        %v3349 = vadd.f32 %v3337, %v3347
        %v3350 = vstv %s3339
        %v3351 = vmul.f32 %v3350, %v2745
        %v3352 = vmul.f32 %v3350, %v2734
        %v3355 = vrot.slane %v3351, 5
        %v3356 = vrot.slane %v3352, 5
        %v3357 = vsel %vm640, %v3355, %v3356
        %v3359 = vadd.f32 %v3349, %v3357
        %s3360 = sld [smem:[#allocation2 + $0x86]]
        %s3361 = sld [smem:[#allocation2 + $0xb7]]
        %v3362 = vstv %s3360
        %v3363 = vmul.f32 %v3362, %v2733
        %v3364 = vmul.f32 %v3362, %v2734
        %v3367 = vrot.slane %v3363, 5
        %v3368 = vrot.slane %v3364, 5
        %v3369 = vsel %vm640, %v3367, %v3368
        %3370 = vrot.lane.b32.xlu0 %v3369, 127
        %v3371 = vpop.permute.xlu0 %3370
        %v3373 = vadd.f32 %v3359, %v3371
        %v3374 = vstv %s3361
        %v3375 = vmul.f32 %v3374, %v2745
        %v3376 = vmul.f32 %v3374, %v2734
        %v3379 = vrot.slane %v3375, 5
        %v3380 = vrot.slane %v3376, 5
        %v3381 = vsel %vm640, %v3379, %v3380
        %3382 = vrot.lane.b32.xlu0 %v3381, 127
        %v3383 = vpop.permute.xlu0 %3382
        %v3385 = vadd.f32 %v3373, %v3383
        %s3386 = sld [smem:[#allocation2 + $0x87]]
        %s3387 = sld [smem:[#allocation2 + $0xb8]]
        %v3388 = vstv %s3386
        %v3389 = vmul.f32 %v3388, %v2733
        %v3390 = vmul.f32 %v3388, %v2734
        %v3393 = vrot.slane %v3389, 5
        %v3394 = vrot.slane %v3390, 5
        %v3395 = vsel %vm640, %v3393, %v3394
        %3396 = vrot.lane.b32.xlu0 %v3395, 126
        %v3397 = vpop.permute.xlu0 %3396
        %v3399 = vadd.f32 %v3385, %v3397
        %v3400 = vstv %s3387
        %v3401 = vmul.f32 %v3400, %v2745
        %v3402 = vmul.f32 %v3400, %v2734
        %v3405 = vrot.slane %v3401, 5
        %v3406 = vrot.slane %v3402, 5
        %v3407 = vsel %vm640, %v3405, %v3406
        %3408 = vrot.lane.b32.xlu0 %v3407, 126
        %v3409 = vpop.permute.xlu0 %3408
        %v3411 = vadd.f32 %v3399, %v3409
        %s3412 = sld [smem:[#allocation2 + $0x88]]
        %s3413 = sld [smem:[#allocation2 + $0xb9]]
        %v3414 = vstv %s3412
        %v3415 = vmul.f32 %v3414, %v2733
        %v3416 = vmul.f32 %v3414, %v2734
        %v3419 = vrot.slane %v3415, 5
        %v3420 = vrot.slane %v3416, 5
        %v3421 = vsel %vm640, %v3419, %v3420
        %3422 = vrot.lane.b32.xlu0 %v3421, 125
        %v3423 = vpop.permute.xlu0 %3422
        %v3425 = vadd.f32 %v3411, %v3423
        %v3426 = vstv %s3413
        %v3427 = vmul.f32 %v3426, %v2745
        %v3428 = vmul.f32 %v3426, %v2734
        %v3431 = vrot.slane %v3427, 5
        %v3432 = vrot.slane %v3428, 5
        %v3433 = vsel %vm640, %v3431, %v3432
        %3434 = vrot.lane.b32.xlu0 %v3433, 125
        %v3435 = vpop.permute.xlu0 %3434
        %v3437 = vadd.f32 %v3425, %v3435
        %s3438 = sld [smem:[#allocation2 + $0x89]]
        %s3439 = sld [smem:[#allocation2 + $0xba]]
        %v3440 = vstv %s3438
        %v3441 = vmul.f32 %v3440, %v2733
        %v3442 = vmul.f32 %v3440, %v2734
        %v3445 = vrot.slane %v3441, 5
        %v3446 = vrot.slane %v3442, 5
        %v3447 = vsel %vm640, %v3445, %v3446
        %3448 = vrot.lane.b32.xlu0 %v3447, 124
        %v3449 = vpop.permute.xlu0 %3448
        %v3451 = vadd.f32 %v3437, %v3449
        %v3452 = vstv %s3439
        %v3453 = vmul.f32 %v3452, %v2745
        %v3454 = vmul.f32 %v3452, %v2734
        %v3457 = vrot.slane %v3453, 5
        %v3458 = vrot.slane %v3454, 5
        %v3459 = vsel %vm640, %v3457, %v3458
        %3460 = vrot.lane.b32.xlu0 %v3459, 124
        %v3461 = vpop.permute.xlu0 %3460
        %v3463 = vadd.f32 %v3451, %v3461
        %s3464 = sld [smem:[#allocation2 + $0x8a]]
        %s3465 = sld [smem:[#allocation2 + $0xbb]]
        %v3466 = vstv %s3464
        %v3467 = vmul.f32 %v3466, %v2733
        %v3468 = vmul.f32 %v3466, %v2734
        %v3471 = vrot.slane %v3467, 5
        %v3472 = vrot.slane %v3468, 5
        %v3473 = vsel %vm640, %v3471, %v3472
        %3474 = vrot.lane.b32.xlu0 %v3473, 123
        %v3475 = vpop.permute.xlu0 %3474
        %v3477 = vadd.f32 %v3463, %v3475
        %v3478 = vstv %s3465
        %v3479 = vmul.f32 %v3478, %v2745
        %v3480 = vmul.f32 %v3478, %v2734
        %v3483 = vrot.slane %v3479, 5
        %v3484 = vrot.slane %v3480, 5
        %v3485 = vsel %vm640, %v3483, %v3484
        %3486 = vrot.lane.b32.xlu0 %v3485, 123
        %v3487 = vpop.permute.xlu0 %3486
        %v3489 = vadd.f32 %v3477, %v3487
        %s3490 = sld [smem:[#allocation2 + $0x8b]]
        %s3491 = sld [smem:[#allocation2 + $0xbc]]
        %v3492 = vstv %s3490
        %v3493 = vmul.f32 %v3492, %v2733
        %v3494 = vmul.f32 %v3492, %v2734
        %v3497 = vrot.slane %v3493, 5
        %v3498 = vrot.slane %v3494, 5
        %v3499 = vsel %vm640, %v3497, %v3498
        %3500 = vrot.lane.b32.xlu0 %v3499, 122
        %v3501 = vpop.permute.xlu0 %3500
        %v3503 = vadd.f32 %v3489, %v3501
        %v3504 = vstv %s3491
        %v3505 = vmul.f32 %v3504, %v2745
        %v3506 = vmul.f32 %v3504, %v2734
        %v3509 = vrot.slane %v3505, 5
        %v3510 = vrot.slane %v3506, 5
        %v3511 = vsel %vm640, %v3509, %v3510
        %3512 = vrot.lane.b32.xlu0 %v3511, 122
        %v3513 = vpop.permute.xlu0 %3512
        %v3515 = vadd.f32 %v3503, %v3513
        %s3516 = sld [smem:[#allocation2 + $0x8c]]
        %s3517 = sld [smem:[#allocation2 + $0xbd]]
        %v3518 = vstv %s3516
        %v3519 = vmul.f32 %v3518, %v2733
        %v3520 = vmul.f32 %v3518, %v2734
        %v3523 = vrot.slane %v3519, 6
        %v3524 = vrot.slane %v3520, 6
        %v3525 = vsel %vm638, %v3523, %v3524
        %v3527 = vadd.f32 %v3515, %v3525
        %v3528 = vstv %s3517
        %v3529 = vmul.f32 %v3528, %v2745
        %v3530 = vmul.f32 %v3528, %v2734
        %v3533 = vrot.slane %v3529, 6
        %v3534 = vrot.slane %v3530, 6
        %v3535 = vsel %vm638, %v3533, %v3534
        %v3537 = vadd.f32 %v3527, %v3535
        %s3538 = sld [smem:[#allocation2 + $0x8d]]
        %s3539 = sld [smem:[#allocation2 + $0xbe]]
        %v3540 = vstv %s3538
        %v3541 = vmul.f32 %v3540, %v2733
        %v3542 = vmul.f32 %v3540, %v2734
        %v3545 = vrot.slane %v3541, 6
        %v3546 = vrot.slane %v3542, 6
        %v3547 = vsel %vm638, %v3545, %v3546
        %3548 = vrot.lane.b32.xlu0 %v3547, 127
        %v3549 = vpop.permute.xlu0 %3548
        %v3551 = vadd.f32 %v3537, %v3549
        %v3552 = vstv %s3539
        %v3553 = vmul.f32 %v3552, %v2745
        %v3554 = vmul.f32 %v3552, %v2734
        %v3557 = vrot.slane %v3553, 6
        %v3558 = vrot.slane %v3554, 6
        %v3559 = vsel %vm638, %v3557, %v3558
        %3560 = vrot.lane.b32.xlu0 %v3559, 127
        %v3561 = vpop.permute.xlu0 %3560
        %v3563 = vadd.f32 %v3551, %v3561
        %s3564 = sld [smem:[#allocation2 + $0x8e]]
        %s3565 = sld [smem:[#allocation2 + $0xbf]]
        %v3566 = vstv %s3564
        %v3567 = vmul.f32 %v3566, %v2733
        %v3568 = vmul.f32 %v3566, %v2734
        %v3571 = vrot.slane %v3567, 6
        %v3572 = vrot.slane %v3568, 6
        %v3573 = vsel %vm638, %v3571, %v3572
        %3574 = vrot.lane.b32.xlu0 %v3573, 126
        %v3575 = vpop.permute.xlu0 %3574
        %v3577 = vadd.f32 %v3563, %v3575
        %v3578 = vstv %s3565
        %v3579 = vmul.f32 %v3578, %v2745
        %v3580 = vmul.f32 %v3578, %v2734
        %v3583 = vrot.slane %v3579, 6
        %v3584 = vrot.slane %v3580, 6
        %v3585 = vsel %vm638, %v3583, %v3584
        %3586 = vrot.lane.b32.xlu0 %v3585, 126
        %v3587 = vpop.permute.xlu0 %3586
        %v3589 = vadd.f32 %v3577, %v3587
        %s3590 = sld [smem:[#allocation2 + $0x8f]]
        %s3591 = sld [smem:[#allocation2 + $0xc0]]
        %v3592 = vstv %s3590
        %v3593 = vmul.f32 %v3592, %v2733
        %v3594 = vmul.f32 %v3592, %v2734
        %v3597 = vrot.slane %v3593, 6
        %v3598 = vrot.slane %v3594, 6
        %v3599 = vsel %vm638, %v3597, %v3598
        %3600 = vrot.lane.b32.xlu0 %v3599, 125
        %v3601 = vpop.permute.xlu0 %3600
        %v3603 = vadd.f32 %v3589, %v3601
        %v3604 = vstv %s3591
        %v3605 = vmul.f32 %v3604, %v2745
        %v3606 = vmul.f32 %v3604, %v2734
        %v3609 = vrot.slane %v3605, 6
        %v3610 = vrot.slane %v3606, 6
        %v3611 = vsel %vm638, %v3609, %v3610
        %3612 = vrot.lane.b32.xlu0 %v3611, 125
        %v3613 = vpop.permute.xlu0 %3612
        %v3615 = vadd.f32 %v3603, %v3613
        %s3616 = sld [smem:[#allocation2 + $0x90]]
        %s3617 = sld [smem:[#allocation2 + $0xc1]]
        %v3618 = vstv %s3616
        %v3619 = vmul.f32 %v3618, %v2733
        %v3620 = vmul.f32 %v3618, %v2734
        %v3623 = vrot.slane %v3619, 6
        %v3624 = vrot.slane %v3620, 6
        %v3625 = vsel %vm638, %v3623, %v3624
        %3626 = vrot.lane.b32.xlu0 %v3625, 124
        %v3627 = vpop.permute.xlu0 %3626
        %v3629 = vadd.f32 %v3615, %v3627
        %v3630 = vstv %s3617
        %v3631 = vmul.f32 %v3630, %v2745
        %v3632 = vmul.f32 %v3630, %v2734
        %v3635 = vrot.slane %v3631, 6
        %v3636 = vrot.slane %v3632, 6
        %v3637 = vsel %vm638, %v3635, %v3636
        %3638 = vrot.lane.b32.xlu0 %v3637, 124
        %v3639 = vpop.permute.xlu0 %3638
        %v3641 = vadd.f32 %v3629, %v3639
        %s3642 = sld [smem:[#allocation2 + $0x91]]
        %s3643 = sld [smem:[#allocation2 + $0xc2]]
        %v3644 = vstv %s3642
        %v3645 = vmul.f32 %v3644, %v2733
        %v3646 = vmul.f32 %v3644, %v2734
        %v3649 = vrot.slane %v3645, 6
        %v3650 = vrot.slane %v3646, 6
        %v3651 = vsel %vm638, %v3649, %v3650
        %3652 = vrot.lane.b32.xlu0 %v3651, 123
        %v3653 = vpop.permute.xlu0 %3652
        %v3655 = vadd.f32 %v3641, %v3653
        %v3656 = vstv %s3643
        %v3657 = vmul.f32 %v3656, %v2745
        %v3658 = vmul.f32 %v3656, %v2734
        %v3661 = vrot.slane %v3657, 6
        %v3662 = vrot.slane %v3658, 6
        %v3663 = vsel %vm638, %v3661, %v3662
        %3664 = vrot.lane.b32.xlu0 %v3663, 123
        %v3665 = vpop.permute.xlu0 %3664
        %v3667 = vadd.f32 %v3655, %v3665
        %s3668 = sld [smem:[#allocation2 + $0x92]]
        %s3669 = sld [smem:[#allocation2 + $0xc3]]
        %v3670 = vstv %s3668
        %v3671 = vmul.f32 %v3670, %v2733
        %v3672 = vmul.f32 %v3670, %v2734
        %v3675 = vrot.slane %v3671, 6
        %v3676 = vrot.slane %v3672, 6
        %v3677 = vsel %vm638, %v3675, %v3676
        %3678 = vrot.lane.b32.xlu0 %v3677, 122
        %v3679 = vpop.permute.xlu0 %3678
        %v3681 = vadd.f32 %v3667, %v3679
        %v3682 = vstv %s3669
        %v3683 = vmul.f32 %v3682, %v2745
        %v3684 = vmul.f32 %v3682, %v2734
        %v3687 = vrot.slane %v3683, 6
        %v3688 = vrot.slane %v3684, 6
        %v3689 = vsel %vm638, %v3687, %v3688
        %3690 = vrot.lane.b32.xlu0 %v3689, 122
        %v3691 = vpop.permute.xlu0 %3690
        %v3693 = vadd.f32 %v3681, %v3691
        %s3694 = sld [smem:[#allocation7 + $0x2]]
        %v3695 = vstv %s3694
        %v3696 = vmul.f32 %v3693, %v3695
        %s3697 = sld [smem:[#allocation7 + $0x3]]
        %v3698 = vstv %s3697
        %v3699 = vadd.f32 %v3696, %v3698
        %v3700 = vxor.u32 %v3699, 2147483648
        %v3701 = vmul.f32 %v3700, 1.442695
        %v3702 = vpow.pop %v3701
        %v3703 = vadd.f32 %v3702, 1.0
        %v3704 = vrcp.pop %v3703
        %v3705 = vmul.f32 1.0, %v3704
        %v3706 = vmul.f32 %v3705, 0.33333334
        %v3708 = vrot.slane %v730, 5
        %v3710 = vsel %vm640, 0.0, %v3708
        %v3711 = vsel %vm648, %v3710, 0.0
        %3713 = vrot.lane.b32.xlu0 %v3711, 3
        %v3714 = vpop.permute.xlu0 %3713
        %v3716 = vsel %vm705, 0.0, %v3714
        %v3717 = vsel %vm770, %v3716, 0.0
        %v3719 = vrot.slane %v746, 5
        %v3721 = vsel %vm640, 0.0, %v3719
        %v3722 = vsel %vm648, %v3721, 0.0
        %3724 = vrot.lane.b32.xlu0 %v3722, 3
        %v3725 = vpop.permute.xlu0 %3724
        %v3727 = vsel %vm705, 0.0, %v3725
        %v3728 = vsel %vm770, %v3727, 0.0
        %s3729 = sld [smem:[#allocation2 + $0xc4]]
        %s3730 = sld [smem:[#allocation2 + $0xf5]]
        %v3731 = vstv %s3729
        %v3732 = vmul.f32 %v3731, %v3717
        %v3733 = vadd.f32 %v3732, 0.0
        %v3734 = vstv %s3730
        %v3735 = vmul.f32 %v3734, %v3728
        %v3736 = vadd.f32 %v3733, %v3735
        %s3737 = sld [smem:[#allocation2 + $0xcb]]
        %s3738 = sld [smem:[#allocation2 + $0xfc]]
        %v3739 = vstv %s3737
        %v3740 = vmul.f32 %v3739, %v3717
        %3742 = vrot.lane.b32.xlu0 %v3740, 127
        %v3743 = vpop.permute.xlu0 %3742
        %v3745 = vadd.f32 %v3736, %v3743
        %v3746 = vstv %s3738
        %v3747 = vmul.f32 %v3746, %v3728
        %3749 = vrot.lane.b32.xlu0 %v3747, 127
        %v3750 = vpop.permute.xlu0 %3749
        %v3752 = vadd.f32 %v3745, %v3750
        %s3753 = sld [smem:[#allocation2 + $0xd2]]
        %s3754 = sld [smem:[#allocation2 + $0x103]]
        %v3755 = vstv %s3753
        %v3756 = vmul.f32 %v3755, %v3717
        %3758 = vrot.lane.b32.xlu0 %v3756, 126
        %v3759 = vpop.permute.xlu0 %3758
        %v3761 = vadd.f32 %v3752, %v3759
        %v3762 = vstv %s3754
        %v3763 = vmul.f32 %v3762, %v3728
        %3765 = vrot.lane.b32.xlu0 %v3763, 126
        %v3766 = vpop.permute.xlu0 %3765
        %v3768 = vadd.f32 %v3761, %v3766
        %s3769 = sld [smem:[#allocation2 + $0xd9]]
        %s3770 = sld [smem:[#allocation2 + $0x10a]]
        %v3771 = vstv %s3769
        %v3772 = vmul.f32 %v3771, %v3717
        %3774 = vrot.lane.b32.xlu0 %v3772, 125
        %v3775 = vpop.permute.xlu0 %3774
        %v3777 = vadd.f32 %v3768, %v3775
        %v3778 = vstv %s3770
        %v3779 = vmul.f32 %v3778, %v3728
        %3781 = vrot.lane.b32.xlu0 %v3779, 125
        %v3782 = vpop.permute.xlu0 %3781
        %v3784 = vadd.f32 %v3777, %v3782
        %s3785 = sld [smem:[#allocation2 + $0xe0]]
        %s3786 = sld [smem:[#allocation2 + $0x111]]
        %v3787 = vstv %s3785
        %v3788 = vmul.f32 %v3787, %v3717
        %3790 = vrot.lane.b32.xlu0 %v3788, 124
        %v3791 = vpop.permute.xlu0 %3790
        %v3793 = vadd.f32 %v3784, %v3791
        %v3794 = vstv %s3786
        %v3795 = vmul.f32 %v3794, %v3728
        %3797 = vrot.lane.b32.xlu0 %v3795, 124
        %v3798 = vpop.permute.xlu0 %3797
        %v3800 = vadd.f32 %v3793, %v3798
        %s3801 = sld [smem:[#allocation2 + $0xe7]]
        %s3802 = sld [smem:[#allocation2 + $0x118]]
        %v3803 = vstv %s3801
        %v3804 = vmul.f32 %v3803, %v3717
        %3806 = vrot.lane.b32.xlu0 %v3804, 123
        %v3807 = vpop.permute.xlu0 %3806
        %v3809 = vadd.f32 %v3800, %v3807
        %v3810 = vstv %s3802
        %v3811 = vmul.f32 %v3810, %v3728
        %3813 = vrot.lane.b32.xlu0 %v3811, 123
        %v3814 = vpop.permute.xlu0 %3813
        %v3816 = vadd.f32 %v3809, %v3814
        %s3817 = sld [smem:[#allocation2 + $0xee]]
        %s3818 = sld [smem:[#allocation2 + $0x11f]]
        %v3819 = vstv %s3817
        %v3820 = vmul.f32 %v3819, %v3717
        %3822 = vrot.lane.b32.xlu0 %v3820, 122
        %v3823 = vpop.permute.xlu0 %3822
        %v3825 = vadd.f32 %v3816, %v3823
        %v3826 = vstv %s3818
        %v3827 = vmul.f32 %v3826, %v3728
        %3829 = vrot.lane.b32.xlu0 %v3827, 122
        %v3830 = vpop.permute.xlu0 %3829
        %v3832 = vadd.f32 %v3825, %v3830
        %s3833 = sld [smem:[#allocation2 + $0xc5]]
        %s3834 = sld [smem:[#allocation2 + $0xf6]]
        %v3835 = vstv %s3833
        %v3836 = vmul.f32 %v3835, %v3717
        %v3838 = vrot.slane %v3836, 1
        %v3840 = vadd.f32 %v3832, %v3838
        %v3841 = vstv %s3834
        %v3842 = vmul.f32 %v3841, %v3728
        %v3844 = vrot.slane %v3842, 1
        %v3846 = vadd.f32 %v3840, %v3844
        %s3847 = sld [smem:[#allocation2 + $0xcc]]
        %s3848 = sld [smem:[#allocation2 + $0xfd]]
        %v3849 = vstv %s3847
        %v3850 = vmul.f32 %v3849, %v3717
        %v3852 = vrot.slane %v3850, 1
        %3853 = vrot.lane.b32.xlu0 %v3852, 127
        %v3854 = vpop.permute.xlu0 %3853
        %v3856 = vadd.f32 %v3846, %v3854
        %v3857 = vstv %s3848
        %v3858 = vmul.f32 %v3857, %v3728
        %v3860 = vrot.slane %v3858, 1
        %3861 = vrot.lane.b32.xlu0 %v3860, 127
        %v3862 = vpop.permute.xlu0 %3861
        %v3864 = vadd.f32 %v3856, %v3862
        %s3865 = sld [smem:[#allocation2 + $0xd3]]
        %s3866 = sld [smem:[#allocation2 + $0x104]]
        %v3867 = vstv %s3865
        %v3868 = vmul.f32 %v3867, %v3717
        %v3870 = vrot.slane %v3868, 1
        %3871 = vrot.lane.b32.xlu0 %v3870, 126
        %v3872 = vpop.permute.xlu0 %3871
        %v3874 = vadd.f32 %v3864, %v3872
        %v3875 = vstv %s3866
        %v3876 = vmul.f32 %v3875, %v3728
        %v3878 = vrot.slane %v3876, 1
        %3879 = vrot.lane.b32.xlu0 %v3878, 126
        %v3880 = vpop.permute.xlu0 %3879
        %v3882 = vadd.f32 %v3874, %v3880
        %s3883 = sld [smem:[#allocation2 + $0xda]]
        %s3884 = sld [smem:[#allocation2 + $0x10b]]
        %v3885 = vstv %s3883
        %v3886 = vmul.f32 %v3885, %v3717
        %v3888 = vrot.slane %v3886, 1
        %3889 = vrot.lane.b32.xlu0 %v3888, 125
        %v3890 = vpop.permute.xlu0 %3889
        %v3892 = vadd.f32 %v3882, %v3890
        %v3893 = vstv %s3884
        %v3894 = vmul.f32 %v3893, %v3728
        %v3896 = vrot.slane %v3894, 1
        %3897 = vrot.lane.b32.xlu0 %v3896, 125
        %v3898 = vpop.permute.xlu0 %3897
        %v3900 = vadd.f32 %v3892, %v3898
        %s3901 = sld [smem:[#allocation2 + $0xe1]]
        %s3902 = sld [smem:[#allocation2 + $0x112]]
        %v3903 = vstv %s3901
        %v3904 = vmul.f32 %v3903, %v3717
        %v3906 = vrot.slane %v3904, 1
        %3907 = vrot.lane.b32.xlu0 %v3906, 124
        %v3908 = vpop.permute.xlu0 %3907
        %v3910 = vadd.f32 %v3900, %v3908
        %v3911 = vstv %s3902
        %v3912 = vmul.f32 %v3911, %v3728
        %v3914 = vrot.slane %v3912, 1
        %3915 = vrot.lane.b32.xlu0 %v3914, 124
        %v3916 = vpop.permute.xlu0 %3915
        %v3918 = vadd.f32 %v3910, %v3916
        %s3919 = sld [smem:[#allocation2 + $0xe8]]
        %s3920 = sld [smem:[#allocation2 + $0x119]]
        %v3921 = vstv %s3919
        %v3922 = vmul.f32 %v3921, %v3717
        %v3924 = vrot.slane %v3922, 1
        %3925 = vrot.lane.b32.xlu0 %v3924, 123
        %v3926 = vpop.permute.xlu0 %3925
        %v3928 = vadd.f32 %v3918, %v3926
        %v3929 = vstv %s3920
        %v3930 = vmul.f32 %v3929, %v3728
        %v3932 = vrot.slane %v3930, 1
        %3933 = vrot.lane.b32.xlu0 %v3932, 123
        %v3934 = vpop.permute.xlu0 %3933
        %v3936 = vadd.f32 %v3928, %v3934
        %s3937 = sld [smem:[#allocation2 + $0xef]]
        %s3938 = sld [smem:[#allocation2 + $0x120]]
        %v3939 = vstv %s3937
        %v3940 = vmul.f32 %v3939, %v3717
        %v3942 = vrot.slane %v3940, 1
        %3943 = vrot.lane.b32.xlu0 %v3942, 122
        %v3944 = vpop.permute.xlu0 %3943
        %v3946 = vadd.f32 %v3936, %v3944
        %v3947 = vstv %s3938
        %v3948 = vmul.f32 %v3947, %v3728
        %v3950 = vrot.slane %v3948, 1
        %3951 = vrot.lane.b32.xlu0 %v3950, 122
        %v3952 = vpop.permute.xlu0 %3951
        %v3954 = vadd.f32 %v3946, %v3952
        %s3955 = sld [smem:[#allocation2 + $0xc6]]
        %s3956 = sld [smem:[#allocation2 + $0xf7]]
        %v3957 = vstv %s3955
        %v3958 = vmul.f32 %v3957, %v3717
        %v3960 = vrot.slane %v3958, 2
        %v3962 = vadd.f32 %v3954, %v3960
        %v3963 = vstv %s3956
        %v3964 = vmul.f32 %v3963, %v3728
        %v3966 = vrot.slane %v3964, 2
        %v3968 = vadd.f32 %v3962, %v3966
        %s3969 = sld [smem:[#allocation2 + $0xcd]]
        %s3970 = sld [smem:[#allocation2 + $0xfe]]
        %v3971 = vstv %s3969
        %v3972 = vmul.f32 %v3971, %v3717
        %v3974 = vrot.slane %v3972, 2
        %3975 = vrot.lane.b32.xlu0 %v3974, 127
        %v3976 = vpop.permute.xlu0 %3975
        %v3978 = vadd.f32 %v3968, %v3976
        %v3979 = vstv %s3970
        %v3980 = vmul.f32 %v3979, %v3728
        %v3982 = vrot.slane %v3980, 2
        %3983 = vrot.lane.b32.xlu0 %v3982, 127
        %v3984 = vpop.permute.xlu0 %3983
        %v3986 = vadd.f32 %v3978, %v3984
        %s3987 = sld [smem:[#allocation2 + $0xd4]]
        %s3988 = sld [smem:[#allocation2 + $0x105]]
        %v3989 = vstv %s3987
        %v3990 = vmul.f32 %v3989, %v3717
        %v3992 = vrot.slane %v3990, 2
        %3993 = vrot.lane.b32.xlu0 %v3992, 126
        %v3994 = vpop.permute.xlu0 %3993
        %v3996 = vadd.f32 %v3986, %v3994
        %v3997 = vstv %s3988
        %v3998 = vmul.f32 %v3997, %v3728
        %v4000 = vrot.slane %v3998, 2
        %4001 = vrot.lane.b32.xlu0 %v4000, 126
        %v4002 = vpop.permute.xlu0 %4001
        %v4004 = vadd.f32 %v3996, %v4002
        %s4005 = sld [smem:[#allocation2 + $0xdb]]
        %s4006 = sld [smem:[#allocation2 + $0x10c]]
        %v4007 = vstv %s4005
        %v4008 = vmul.f32 %v4007, %v3717
        %v4010 = vrot.slane %v4008, 2
        %4011 = vrot.lane.b32.xlu0 %v4010, 125
        %v4012 = vpop.permute.xlu0 %4011
        %v4014 = vadd.f32 %v4004, %v4012
        %v4015 = vstv %s4006
        %v4016 = vmul.f32 %v4015, %v3728
        %v4018 = vrot.slane %v4016, 2
        %4019 = vrot.lane.b32.xlu0 %v4018, 125
        %v4020 = vpop.permute.xlu0 %4019
        %v4022 = vadd.f32 %v4014, %v4020
        %s4023 = sld [smem:[#allocation2 + $0xe2]]
        %s4024 = sld [smem:[#allocation2 + $0x113]]
        %v4025 = vstv %s4023
        %v4026 = vmul.f32 %v4025, %v3717
        %v4028 = vrot.slane %v4026, 2
        %4029 = vrot.lane.b32.xlu0 %v4028, 124
        %v4030 = vpop.permute.xlu0 %4029
        %v4032 = vadd.f32 %v4022, %v4030
        %v4033 = vstv %s4024
        %v4034 = vmul.f32 %v4033, %v3728
        %v4036 = vrot.slane %v4034, 2
        %4037 = vrot.lane.b32.xlu0 %v4036, 124
        %v4038 = vpop.permute.xlu0 %4037
        %v4040 = vadd.f32 %v4032, %v4038
        %s4041 = sld [smem:[#allocation2 + $0xe9]]
        %s4042 = sld [smem:[#allocation2 + $0x11a]]
        %v4043 = vstv %s4041
        %v4044 = vmul.f32 %v4043, %v3717
        %v4046 = vrot.slane %v4044, 2
        %4047 = vrot.lane.b32.xlu0 %v4046, 123
        %v4048 = vpop.permute.xlu0 %4047
        %v4050 = vadd.f32 %v4040, %v4048
        %v4051 = vstv %s4042
        %v4052 = vmul.f32 %v4051, %v3728
        %v4054 = vrot.slane %v4052, 2
        %4055 = vrot.lane.b32.xlu0 %v4054, 123
        %v4056 = vpop.permute.xlu0 %4055
        %v4058 = vadd.f32 %v4050, %v4056
        %s4059 = sld [smem:[#allocation2 + $0xf0]]
        %s4060 = sld [smem:[#allocation2 + $0x121]]
        %v4061 = vstv %s4059
        %v4062 = vmul.f32 %v4061, %v3717
        %v4064 = vrot.slane %v4062, 2
        %4065 = vrot.lane.b32.xlu0 %v4064, 122
        %v4066 = vpop.permute.xlu0 %4065
        %v4068 = vadd.f32 %v4058, %v4066
        %v4069 = vstv %s4060
        %v4070 = vmul.f32 %v4069, %v3728
        %v4072 = vrot.slane %v4070, 2
        %4073 = vrot.lane.b32.xlu0 %v4072, 122
        %v4074 = vpop.permute.xlu0 %4073
        %v4076 = vadd.f32 %v4068, %v4074
        %s4077 = sld [smem:[#allocation2 + $0xc7]]
        %s4078 = sld [smem:[#allocation2 + $0xf8]]
        %v4079 = vstv %s4077
        %v4080 = vmul.f32 %v4079, %v3717
        %v4082 = vrot.slane %v4080, 3
        %v4084 = vadd.f32 %v4076, %v4082
        %v4085 = vstv %s4078
        %v4086 = vmul.f32 %v4085, %v3728
        %v4088 = vrot.slane %v4086, 3
        %v4090 = vadd.f32 %v4084, %v4088
        %s4091 = sld [smem:[#allocation2 + $0xce]]
        %s4092 = sld [smem:[#allocation2 + $0xff]]
        %v4093 = vstv %s4091
        %v4094 = vmul.f32 %v4093, %v3717
        %v4096 = vrot.slane %v4094, 3
        %4097 = vrot.lane.b32.xlu0 %v4096, 127
        %v4098 = vpop.permute.xlu0 %4097
        %v4100 = vadd.f32 %v4090, %v4098
        %v4101 = vstv %s4092
        %v4102 = vmul.f32 %v4101, %v3728
        %v4104 = vrot.slane %v4102, 3
        %4105 = vrot.lane.b32.xlu0 %v4104, 127
        %v4106 = vpop.permute.xlu0 %4105
        %v4108 = vadd.f32 %v4100, %v4106
        %s4109 = sld [smem:[#allocation2 + $0xd5]]
        %s4110 = sld [smem:[#allocation2 + $0x106]]
        %v4111 = vstv %s4109
        %v4112 = vmul.f32 %v4111, %v3717
        %v4114 = vrot.slane %v4112, 3
        %4115 = vrot.lane.b32.xlu0 %v4114, 126
        %v4116 = vpop.permute.xlu0 %4115
        %v4118 = vadd.f32 %v4108, %v4116
        %v4119 = vstv %s4110
        %v4120 = vmul.f32 %v4119, %v3728
        %v4122 = vrot.slane %v4120, 3
        %4123 = vrot.lane.b32.xlu0 %v4122, 126
        %v4124 = vpop.permute.xlu0 %4123
        %v4126 = vadd.f32 %v4118, %v4124
        %s4127 = sld [smem:[#allocation2 + $0xdc]]
        %s4128 = sld [smem:[#allocation2 + $0x10d]]
        %v4129 = vstv %s4127
        %v4130 = vmul.f32 %v4129, %v3717
        %v4132 = vrot.slane %v4130, 3
        %4133 = vrot.lane.b32.xlu0 %v4132, 125
        %v4134 = vpop.permute.xlu0 %4133
        %v4136 = vadd.f32 %v4126, %v4134
        %v4137 = vstv %s4128
        %v4138 = vmul.f32 %v4137, %v3728
        %v4140 = vrot.slane %v4138, 3
        %4141 = vrot.lane.b32.xlu0 %v4140, 125
        %v4142 = vpop.permute.xlu0 %4141
        %v4144 = vadd.f32 %v4136, %v4142
        %s4145 = sld [smem:[#allocation2 + $0xe3]]
        %s4146 = sld [smem:[#allocation2 + $0x114]]
        %v4147 = vstv %s4145
        %v4148 = vmul.f32 %v4147, %v3717
        %v4150 = vrot.slane %v4148, 3
        %4151 = vrot.lane.b32.xlu0 %v4150, 124
        %v4152 = vpop.permute.xlu0 %4151
        %v4154 = vadd.f32 %v4144, %v4152
        %v4155 = vstv %s4146
        %v4156 = vmul.f32 %v4155, %v3728
        %v4158 = vrot.slane %v4156, 3
        %4159 = vrot.lane.b32.xlu0 %v4158, 124
        %v4160 = vpop.permute.xlu0 %4159
        %v4162 = vadd.f32 %v4154, %v4160
        %s4163 = sld [smem:[#allocation2 + $0xea]]
        %s4164 = sld [smem:[#allocation2 + $0x11b]]
        %v4165 = vstv %s4163
        %v4166 = vmul.f32 %v4165, %v3717
        %v4168 = vrot.slane %v4166, 3
        %4169 = vrot.lane.b32.xlu0 %v4168, 123
        %v4170 = vpop.permute.xlu0 %4169
        %v4172 = vadd.f32 %v4162, %v4170
        %v4173 = vstv %s4164
        %v4174 = vmul.f32 %v4173, %v3728
        %v4176 = vrot.slane %v4174, 3
        %4177 = vrot.lane.b32.xlu0 %v4176, 123
        %v4178 = vpop.permute.xlu0 %4177
        %v4180 = vadd.f32 %v4172, %v4178
        %s4181 = sld [smem:[#allocation2 + $0xf1]]
        %s4182 = sld [smem:[#allocation2 + $0x122]]
        %v4183 = vstv %s4181
        %v4184 = vmul.f32 %v4183, %v3717
        %v4186 = vrot.slane %v4184, 3
        %4187 = vrot.lane.b32.xlu0 %v4186, 122
        %v4188 = vpop.permute.xlu0 %4187
        %v4190 = vadd.f32 %v4180, %v4188
        %v4191 = vstv %s4182
        %v4192 = vmul.f32 %v4191, %v3728
        %v4194 = vrot.slane %v4192, 3
        %4195 = vrot.lane.b32.xlu0 %v4194, 122
        %v4196 = vpop.permute.xlu0 %4195
        %v4198 = vadd.f32 %v4190, %v4196
        %s4199 = sld [smem:[#allocation2 + $0xc8]]
        %s4200 = sld [smem:[#allocation2 + $0xf9]]
        %v4201 = vstv %s4199
        %v4202 = vmul.f32 %v4201, %v3717
        %v4204 = vrot.slane %v4202, 4
        %v4206 = vadd.f32 %v4198, %v4204
        %v4207 = vstv %s4200
        %v4208 = vmul.f32 %v4207, %v3728
        %v4210 = vrot.slane %v4208, 4
        %v4212 = vadd.f32 %v4206, %v4210
        %s4213 = sld [smem:[#allocation2 + $0xcf]]
        %s4214 = sld [smem:[#allocation2 + $0x100]]
        %v4215 = vstv %s4213
        %v4216 = vmul.f32 %v4215, %v3717
        %v4218 = vrot.slane %v4216, 4
        %4219 = vrot.lane.b32.xlu0 %v4218, 127
        %v4220 = vpop.permute.xlu0 %4219
        %v4222 = vadd.f32 %v4212, %v4220
        %v4223 = vstv %s4214
        %v4224 = vmul.f32 %v4223, %v3728
        %v4226 = vrot.slane %v4224, 4
        %4227 = vrot.lane.b32.xlu0 %v4226, 127
        %v4228 = vpop.permute.xlu0 %4227
        %v4230 = vadd.f32 %v4222, %v4228
        %s4231 = sld [smem:[#allocation2 + $0xd6]]
        %s4232 = sld [smem:[#allocation2 + $0x107]]
        %v4233 = vstv %s4231
        %v4234 = vmul.f32 %v4233, %v3717
        %v4236 = vrot.slane %v4234, 4
        %4237 = vrot.lane.b32.xlu0 %v4236, 126
        %v4238 = vpop.permute.xlu0 %4237
        %v4240 = vadd.f32 %v4230, %v4238
        %v4241 = vstv %s4232
        %v4242 = vmul.f32 %v4241, %v3728
        %v4244 = vrot.slane %v4242, 4
        %4245 = vrot.lane.b32.xlu0 %v4244, 126
        %v4246 = vpop.permute.xlu0 %4245
        %v4248 = vadd.f32 %v4240, %v4246
        %s4249 = sld [smem:[#allocation2 + $0xdd]]
        %s4250 = sld [smem:[#allocation2 + $0x10e]]
        %v4251 = vstv %s4249
        %v4252 = vmul.f32 %v4251, %v3717
        %v4254 = vrot.slane %v4252, 4
        %4255 = vrot.lane.b32.xlu0 %v4254, 125
        %v4256 = vpop.permute.xlu0 %4255
        %v4258 = vadd.f32 %v4248, %v4256
        %v4259 = vstv %s4250
        %v4260 = vmul.f32 %v4259, %v3728
        %v4262 = vrot.slane %v4260, 4
        %4263 = vrot.lane.b32.xlu0 %v4262, 125
        %v4264 = vpop.permute.xlu0 %4263
        %v4266 = vadd.f32 %v4258, %v4264
        %s4267 = sld [smem:[#allocation2 + $0xe4]]
        %s4268 = sld [smem:[#allocation2 + $0x115]]
        %v4269 = vstv %s4267
        %v4270 = vmul.f32 %v4269, %v3717
        %v4272 = vrot.slane %v4270, 4
        %4273 = vrot.lane.b32.xlu0 %v4272, 124
        %v4274 = vpop.permute.xlu0 %4273
        %v4276 = vadd.f32 %v4266, %v4274
        %v4277 = vstv %s4268
        %v4278 = vmul.f32 %v4277, %v3728
        %v4280 = vrot.slane %v4278, 4
        %4281 = vrot.lane.b32.xlu0 %v4280, 124
        %v4282 = vpop.permute.xlu0 %4281
        %v4284 = vadd.f32 %v4276, %v4282
        %s4285 = sld [smem:[#allocation2 + $0xeb]]
        %s4286 = sld [smem:[#allocation2 + $0x11c]]
        %v4287 = vstv %s4285
        %v4288 = vmul.f32 %v4287, %v3717
        %v4290 = vrot.slane %v4288, 4
        %4291 = vrot.lane.b32.xlu0 %v4290, 123
        %v4292 = vpop.permute.xlu0 %4291
        %v4294 = vadd.f32 %v4284, %v4292
        %v4295 = vstv %s4286
        %v4296 = vmul.f32 %v4295, %v3728
        %v4298 = vrot.slane %v4296, 4
        %4299 = vrot.lane.b32.xlu0 %v4298, 123
        %v4300 = vpop.permute.xlu0 %4299
        %v4302 = vadd.f32 %v4294, %v4300
        %s4303 = sld [smem:[#allocation2 + $0xf2]]
        %s4304 = sld [smem:[#allocation2 + $0x123]]
        %v4305 = vstv %s4303
        %v4306 = vmul.f32 %v4305, %v3717
        %v4308 = vrot.slane %v4306, 4
        %4309 = vrot.lane.b32.xlu0 %v4308, 122
        %v4310 = vpop.permute.xlu0 %4309
        %v4312 = vadd.f32 %v4302, %v4310
        %v4313 = vstv %s4304
        %v4314 = vmul.f32 %v4313, %v3728
        %v4316 = vrot.slane %v4314, 4
        %4317 = vrot.lane.b32.xlu0 %v4316, 122
        %v4318 = vpop.permute.xlu0 %4317
        %v4320 = vadd.f32 %v4312, %v4318
        %s4321 = sld [smem:[#allocation2 + $0xc9]]
        %s4322 = sld [smem:[#allocation2 + $0xfa]]
        %v4323 = vstv %s4321
        %v4324 = vmul.f32 %v4323, %v3717
        %v4325 = vmul.f32 %v4323, %v2734
        %v4328 = vrot.slane %v4324, 5
        %v4329 = vrot.slane %v4325, 5
        %v4330 = vsel %vm640, %v4328, %v4329
        %v4332 = vadd.f32 %v4320, %v4330
        %v4333 = vstv %s4322
        %v4334 = vmul.f32 %v4333, %v3728
        %v4335 = vmul.f32 %v4333, %v2734
        %v4338 = vrot.slane %v4334, 5
        %v4339 = vrot.slane %v4335, 5
        %v4340 = vsel %vm640, %v4338, %v4339
        %v4342 = vadd.f32 %v4332, %v4340
        %s4343 = sld [smem:[#allocation2 + $0xd0]]
        %s4344 = sld [smem:[#allocation2 + $0x101]]
        %v4345 = vstv %s4343
        %v4346 = vmul.f32 %v4345, %v3717
        %v4347 = vmul.f32 %v4345, %v2734
        %v4350 = vrot.slane %v4346, 5
        %v4351 = vrot.slane %v4347, 5
        %v4352 = vsel %vm640, %v4350, %v4351
        %4353 = vrot.lane.b32.xlu0 %v4352, 127
        %v4354 = vpop.permute.xlu0 %4353
        %v4356 = vadd.f32 %v4342, %v4354
        %v4357 = vstv %s4344
        %v4358 = vmul.f32 %v4357, %v3728
        %v4359 = vmul.f32 %v4357, %v2734
        %v4362 = vrot.slane %v4358, 5
        %v4363 = vrot.slane %v4359, 5
        %v4364 = vsel %vm640, %v4362, %v4363
        %4365 = vrot.lane.b32.xlu0 %v4364, 127
        %v4366 = vpop.permute.xlu0 %4365
        %v4368 = vadd.f32 %v4356, %v4366
        %s4369 = sld [smem:[#allocation2 + $0xd7]]
        %s4370 = sld [smem:[#allocation2 + $0x108]]
        %v4371 = vstv %s4369
        %v4372 = vmul.f32 %v4371, %v3717
        %v4373 = vmul.f32 %v4371, %v2734
        %v4376 = vrot.slane %v4372, 5
        %v4377 = vrot.slane %v4373, 5
        %v4378 = vsel %vm640, %v4376, %v4377
        %4379 = vrot.lane.b32.xlu0 %v4378, 126
        %v4380 = vpop.permute.xlu0 %4379
        %v4382 = vadd.f32 %v4368, %v4380
        %v4383 = vstv %s4370
        %v4384 = vmul.f32 %v4383, %v3728
        %v4385 = vmul.f32 %v4383, %v2734
        %v4388 = vrot.slane %v4384, 5
        %v4389 = vrot.slane %v4385, 5
        %v4390 = vsel %vm640, %v4388, %v4389
        %4391 = vrot.lane.b32.xlu0 %v4390, 126
        %v4392 = vpop.permute.xlu0 %4391
        %v4394 = vadd.f32 %v4382, %v4392
        %s4395 = sld [smem:[#allocation2 + $0xde]]
        %s4396 = sld [smem:[#allocation2 + $0x10f]]
        %v4397 = vstv %s4395
        %v4398 = vmul.f32 %v4397, %v3717
        %v4399 = vmul.f32 %v4397, %v2734
        %v4402 = vrot.slane %v4398, 5
        %v4403 = vrot.slane %v4399, 5
        %v4404 = vsel %vm640, %v4402, %v4403
        %4405 = vrot.lane.b32.xlu0 %v4404, 125
        %v4406 = vpop.permute.xlu0 %4405
        %v4408 = vadd.f32 %v4394, %v4406
        %v4409 = vstv %s4396
        %v4410 = vmul.f32 %v4409, %v3728
        %v4411 = vmul.f32 %v4409, %v2734
        %v4414 = vrot.slane %v4410, 5
        %v4415 = vrot.slane %v4411, 5
        %v4416 = vsel %vm640, %v4414, %v4415
        %4417 = vrot.lane.b32.xlu0 %v4416, 125
        %v4418 = vpop.permute.xlu0 %4417
        %v4420 = vadd.f32 %v4408, %v4418
        %s4421 = sld [smem:[#allocation2 + $0xe5]]
        %s4422 = sld [smem:[#allocation2 + $0x116]]
        %v4423 = vstv %s4421
        %v4424 = vmul.f32 %v4423, %v3717
        %v4425 = vmul.f32 %v4423, %v2734
        %v4428 = vrot.slane %v4424, 5
        %v4429 = vrot.slane %v4425, 5
        %v4430 = vsel %vm640, %v4428, %v4429
        %4431 = vrot.lane.b32.xlu0 %v4430, 124
        %v4432 = vpop.permute.xlu0 %4431
        %v4434 = vadd.f32 %v4420, %v4432
        %v4435 = vstv %s4422
        %v4436 = vmul.f32 %v4435, %v3728
        %v4437 = vmul.f32 %v4435, %v2734
        %v4440 = vrot.slane %v4436, 5
        %v4441 = vrot.slane %v4437, 5
        %v4442 = vsel %vm640, %v4440, %v4441
        %4443 = vrot.lane.b32.xlu0 %v4442, 124
        %v4444 = vpop.permute.xlu0 %4443
        %v4446 = vadd.f32 %v4434, %v4444
        %s4447 = sld [smem:[#allocation2 + $0xec]]
        %s4448 = sld [smem:[#allocation2 + $0x11d]]
        %v4449 = vstv %s4447
        %v4450 = vmul.f32 %v4449, %v3717
        %v4451 = vmul.f32 %v4449, %v2734
        %v4454 = vrot.slane %v4450, 5
        %v4455 = vrot.slane %v4451, 5
        %v4456 = vsel %vm640, %v4454, %v4455
        %4457 = vrot.lane.b32.xlu0 %v4456, 123
        %v4458 = vpop.permute.xlu0 %4457
        %v4460 = vadd.f32 %v4446, %v4458
        %v4461 = vstv %s4448
        %v4462 = vmul.f32 %v4461, %v3728
        %v4463 = vmul.f32 %v4461, %v2734
        %v4466 = vrot.slane %v4462, 5
        %v4467 = vrot.slane %v4463, 5
        %v4468 = vsel %vm640, %v4466, %v4467
        %4469 = vrot.lane.b32.xlu0 %v4468, 123
        %v4470 = vpop.permute.xlu0 %4469
        %v4472 = vadd.f32 %v4460, %v4470
        %s4473 = sld [smem:[#allocation2 + $0xf3]]
        %s4474 = sld [smem:[#allocation2 + $0x124]]
        %v4475 = vstv %s4473
        %v4476 = vmul.f32 %v4475, %v3717
        %v4477 = vmul.f32 %v4475, %v2734
        %v4480 = vrot.slane %v4476, 5
        %v4481 = vrot.slane %v4477, 5
        %v4482 = vsel %vm640, %v4480, %v4481
        %4483 = vrot.lane.b32.xlu0 %v4482, 122
        %v4484 = vpop.permute.xlu0 %4483
        %v4486 = vadd.f32 %v4472, %v4484
        %v4487 = vstv %s4474
        %v4488 = vmul.f32 %v4487, %v3728
        %v4489 = vmul.f32 %v4487, %v2734
        %v4492 = vrot.slane %v4488, 5
        %v4493 = vrot.slane %v4489, 5
        %v4494 = vsel %vm640, %v4492, %v4493
        %4495 = vrot.lane.b32.xlu0 %v4494, 122
        %v4496 = vpop.permute.xlu0 %4495
        %v4498 = vadd.f32 %v4486, %v4496
        %s4499 = sld [smem:[#allocation2 + $0xca]]
        %s4500 = sld [smem:[#allocation2 + $0xfb]]
        %v4501 = vstv %s4499
        %v4502 = vmul.f32 %v4501, %v3717
        %v4503 = vmul.f32 %v4501, %v2734
        %v4506 = vrot.slane %v4502, 6
        %v4507 = vrot.slane %v4503, 6
        %v4508 = vsel %vm638, %v4506, %v4507
        %v4510 = vadd.f32 %v4498, %v4508
        %v4511 = vstv %s4500
        %v4512 = vmul.f32 %v4511, %v3728
        %v4513 = vmul.f32 %v4511, %v2734
        %v4516 = vrot.slane %v4512, 6
        %v4517 = vrot.slane %v4513, 6
        %v4518 = vsel %vm638, %v4516, %v4517
        %v4520 = vadd.f32 %v4510, %v4518
        %s4521 = sld [smem:[#allocation2 + $0xd1]]
        %s4522 = sld [smem:[#allocation2 + $0x102]]
        %v4523 = vstv %s4521
        %v4524 = vmul.f32 %v4523, %v3717
        %v4525 = vmul.f32 %v4523, %v2734
        %v4528 = vrot.slane %v4524, 6
        %v4529 = vrot.slane %v4525, 6
        %v4530 = vsel %vm638, %v4528, %v4529
        %4531 = vrot.lane.b32.xlu0 %v4530, 127
        %v4532 = vpop.permute.xlu0 %4531
        %v4534 = vadd.f32 %v4520, %v4532
        %v4535 = vstv %s4522
        %v4536 = vmul.f32 %v4535, %v3728
        %v4537 = vmul.f32 %v4535, %v2734
        %v4540 = vrot.slane %v4536, 6
        %v4541 = vrot.slane %v4537, 6
        %v4542 = vsel %vm638, %v4540, %v4541
        %4543 = vrot.lane.b32.xlu0 %v4542, 127
        %v4544 = vpop.permute.xlu0 %4543
        %v4546 = vadd.f32 %v4534, %v4544
        %s4547 = sld [smem:[#allocation2 + $0xd8]]
        %s4548 = sld [smem:[#allocation2 + $0x109]]
        %v4549 = vstv %s4547
        %v4550 = vmul.f32 %v4549, %v3717
        %v4551 = vmul.f32 %v4549, %v2734
        %v4554 = vrot.slane %v4550, 6
        %v4555 = vrot.slane %v4551, 6
        %v4556 = vsel %vm638, %v4554, %v4555
        %4557 = vrot.lane.b32.xlu0 %v4556, 126
        %v4558 = vpop.permute.xlu0 %4557
        %v4560 = vadd.f32 %v4546, %v4558
        %v4561 = vstv %s4548
        %v4562 = vmul.f32 %v4561, %v3728
        %v4563 = vmul.f32 %v4561, %v2734
        %v4566 = vrot.slane %v4562, 6
        %v4567 = vrot.slane %v4563, 6
        %v4568 = vsel %vm638, %v4566, %v4567
        %4569 = vrot.lane.b32.xlu0 %v4568, 126
        %v4570 = vpop.permute.xlu0 %4569
        %v4572 = vadd.f32 %v4560, %v4570
        %s4573 = sld [smem:[#allocation2 + $0xdf]]
        %s4574 = sld [smem:[#allocation2 + $0x110]]
        %v4575 = vstv %s4573
        %v4576 = vmul.f32 %v4575, %v3717
        %v4577 = vmul.f32 %v4575, %v2734
        %v4580 = vrot.slane %v4576, 6
        %v4581 = vrot.slane %v4577, 6
        %v4582 = vsel %vm638, %v4580, %v4581
        %4583 = vrot.lane.b32.xlu0 %v4582, 125
        %v4584 = vpop.permute.xlu0 %4583
        %v4586 = vadd.f32 %v4572, %v4584
        %v4587 = vstv %s4574
        %v4588 = vmul.f32 %v4587, %v3728
        %v4589 = vmul.f32 %v4587, %v2734
        %v4592 = vrot.slane %v4588, 6
        %v4593 = vrot.slane %v4589, 6
        %v4594 = vsel %vm638, %v4592, %v4593
        %4595 = vrot.lane.b32.xlu0 %v4594, 125
        %v4596 = vpop.permute.xlu0 %4595
        %v4598 = vadd.f32 %v4586, %v4596
        %s4599 = sld [smem:[#allocation2 + $0xe6]]
        %s4600 = sld [smem:[#allocation2 + $0x117]]
        %v4601 = vstv %s4599
        %v4602 = vmul.f32 %v4601, %v3717
        %v4603 = vmul.f32 %v4601, %v2734
        %v4606 = vrot.slane %v4602, 6
        %v4607 = vrot.slane %v4603, 6
        %v4608 = vsel %vm638, %v4606, %v4607
        %4609 = vrot.lane.b32.xlu0 %v4608, 124
        %v4610 = vpop.permute.xlu0 %4609
        %v4612 = vadd.f32 %v4598, %v4610
        %v4613 = vstv %s4600
        %v4614 = vmul.f32 %v4613, %v3728
        %v4615 = vmul.f32 %v4613, %v2734
        %v4618 = vrot.slane %v4614, 6
        %v4619 = vrot.slane %v4615, 6
        %v4620 = vsel %vm638, %v4618, %v4619
        %4621 = vrot.lane.b32.xlu0 %v4620, 124
        %v4622 = vpop.permute.xlu0 %4621
        %v4624 = vadd.f32 %v4612, %v4622
        %s4625 = sld [smem:[#allocation2 + $0xed]]
        %s4626 = sld [smem:[#allocation2 + $0x11e]]
        %v4627 = vstv %s4625
        %v4628 = vmul.f32 %v4627, %v3717
        %v4629 = vmul.f32 %v4627, %v2734
        %v4632 = vrot.slane %v4628, 6
        %v4633 = vrot.slane %v4629, 6
        %v4634 = vsel %vm638, %v4632, %v4633
        %4635 = vrot.lane.b32.xlu0 %v4634, 123
        %v4636 = vpop.permute.xlu0 %4635
        %v4638 = vadd.f32 %v4624, %v4636
        %v4639 = vstv %s4626
        %v4640 = vmul.f32 %v4639, %v3728
        %v4641 = vmul.f32 %v4639, %v2734
        %v4644 = vrot.slane %v4640, 6
        %v4645 = vrot.slane %v4641, 6
        %v4646 = vsel %vm638, %v4644, %v4645
        %4647 = vrot.lane.b32.xlu0 %v4646, 123
        %v4648 = vpop.permute.xlu0 %4647
        %v4650 = vadd.f32 %v4638, %v4648
        %s4651 = sld [smem:[#allocation2 + $0xf4]]
        %s4652 = sld [smem:[#allocation2 + $0x125]]
        %v4653 = vstv %s4651
        %v4654 = vmul.f32 %v4653, %v3717
        %v4655 = vmul.f32 %v4653, %v2734
        %v4658 = vrot.slane %v4654, 6
        %v4659 = vrot.slane %v4655, 6
        %v4660 = vsel %vm638, %v4658, %v4659
        %4661 = vrot.lane.b32.xlu0 %v4660, 122
        %v4662 = vpop.permute.xlu0 %4661
        %v4664 = vadd.f32 %v4650, %v4662
        %v4665 = vstv %s4652
        %v4666 = vmul.f32 %v4665, %v3728
        %v4667 = vmul.f32 %v4665, %v2734
        %v4670 = vrot.slane %v4666, 6
        %v4671 = vrot.slane %v4667, 6
        %v4672 = vsel %vm638, %v4670, %v4671
        %4673 = vrot.lane.b32.xlu0 %v4672, 122
        %v4674 = vpop.permute.xlu0 %4673
        %v4676 = vadd.f32 %v4664, %v4674
        %s4677 = sld [smem:[#allocation7 + $0x4]]
        %v4678 = vstv %s4677
        %v4679 = vmul.f32 %v4676, %v4678
        %s4680 = sld [smem:[#allocation7 + $0x5]]
        %v4681 = vstv %s4680
        %v4682 = vadd.f32 %v4679, %v4681
        %v4683 = vxor.u32 %v4682, 2147483648
        %v4684 = vmul.f32 %v4683, 1.442695
        %v4685 = vpow.pop %v4684
        %v4686 = vadd.f32 %v4685, 1.0
        %v4687 = vrcp.pop %v4686
        %v4688 = vmul.f32 1.0, %v4687
        %v4689 = vmul.f32 %v4688, 0.33333334
        %v4690 = vlaneseq
        %v4691 = vshrl.u32 %v4690, 7
        %v4692 = vsub.s32 0, %v4691
        %v4693 = vrot.slane %v2716, %v4692
        %v4694 = vadd.f32 %v4693, %v3706
        %4696 = vset.pattern.permute.xlu0 0
        %4697 = vperm.xlu0 %4696, %v4689
        %v4698 = vpop.permute.xlu0 %4697
        %v4700 = vadd.f32 %v4694, %v4698
        %v4701 = vlaneseq
        %v4702 = vshrl.u32 %v4701, 7
        %v4703 = vsub.s32 1, %v4702
        %v4704 = vrot.slane %v2716, %v4703
        %v4705 = vadd.f32 %v4704, %v3706
        %4706 = vset.pattern.permute.xlu0 1
        %4707 = vperm.xlu0 %4706, %v4689
        %v4708 = vpop.permute.xlu0 %4707
        %v4710 = vadd.f32 %v4705, %v4708
        %v4711 = vlaneseq
        %v4712 = vshrl.u32 %v4711, 7
        %v4713 = vsub.s32 2, %v4712
        %v4714 = vrot.slane %v2716, %v4713
        %v4715 = vadd.f32 %v4714, %v3706
        %4716 = vset.pattern.permute.xlu0 2
        %4717 = vperm.xlu0 %4716, %v4689
        %v4718 = vpop.permute.xlu0 %4717
        %v4720 = vadd.f32 %v4715, %v4718
        %v4721 = vlaneseq
        %v4722 = vshrl.u32 %v4721, 7
        %v4723 = vsub.s32 3, %v4722
        %v4724 = vrot.slane %v2716, %v4723
        %v4725 = vadd.f32 %v4724, %v3706
        %4726 = vset.pattern.permute.xlu0 3
        %4727 = vperm.xlu0 %4726, %v4689
        %v4728 = vpop.permute.xlu0 %4727
        %v4730 = vadd.f32 %v4725, %v4728
        %v4731 = vlaneseq
        %v4732 = vshrl.u32 %v4731, 7
        %v4733 = vsub.s32 4, %v4732
        %v4734 = vrot.slane %v2716, %v4733
        %v4735 = vadd.f32 %v4734, %v3706
        %4736 = vset.pattern.permute.xlu0 4
        %4737 = vperm.xlu0 %4736, %v4689
        %v4738 = vpop.permute.xlu0 %4737
        %v4740 = vadd.f32 %v4735, %v4738
        %v4741 = vlaneseq
        %v4742 = vshrl.u32 %v4741, 7
        %v4743 = vsub.s32 5, %v4742
        %v4744 = vrot.slane %v2716, %v4743
        %v4745 = vadd.f32 %v4744, %v3706
        %4746 = vset.pattern.permute.xlu0 5
        %4747 = vperm.xlu0 %4746, %v4689
        %v4748 = vpop.permute.xlu0 %4747
        %v4750 = vadd.f32 %v4745, %v4748
        %v4751 = vlaneseq
        %v4752 = vshrl.u32 %v4751, 7
        %v4753 = vsub.s32 6, %v4752
        %v4754 = vrot.slane %v2716, %v4753
        %v4755 = vadd.f32 %v4754, %v3706
        %4756 = vset.pattern.permute.xlu0 6
        %4757 = vperm.xlu0 %4756, %v4689
        %v4758 = vpop.permute.xlu0 %4757
        %v4760 = vadd.f32 %v4755, %v4758
        %v4761 = vlaneseq
        %v4762 = vshrl.u32 %v4761, 7
        %v4763 = vsub.s32 7, %v4762
        %v4764 = vrot.slane %v2716, %v4763
        %v4765 = vadd.f32 %v4764, %v3706
        %4766 = vset.pattern.permute.xlu0 7
        %4767 = vperm.xlu0 %4766, %v4689
        %v4768 = vpop.permute.xlu0 %4767
        %v4770 = vadd.f32 %v4765, %v4768
        %v4771 = vlaneseq
        %v4772 = vshrl.u32 %v4771, 7
        %v4773 = vsub.s32 0, %v4772
        %v4774 = vrot.slane %v2717, %v4773
        %v4775 = vadd.f32 %v4774, %v3706
        %4776 = vset.pattern.permute.xlu0 8
        %4777 = vperm.xlu0 %4776, %v4689
        %v4778 = vpop.permute.xlu0 %4777
        %v4780 = vadd.f32 %v4775, %v4778
        %v4781 = vlaneseq
        %v4782 = vshrl.u32 %v4781, 7
        %v4783 = vsub.s32 1, %v4782
        %v4784 = vrot.slane %v2717, %v4783
        %v4785 = vadd.f32 %v4784, %v3706
        %4786 = vset.pattern.permute.xlu0 9
        %4787 = vperm.xlu0 %4786, %v4689
        %v4788 = vpop.permute.xlu0 %4787
        %v4790 = vadd.f32 %v4785, %v4788
        %v4791 = vlaneseq
        %v4792 = vshrl.u32 %v4791, 7
        %v4793 = vsub.s32 2, %v4792
        %v4794 = vrot.slane %v2717, %v4793
        %v4795 = vadd.f32 %v4794, %v3706
        %4796 = vset.pattern.permute.xlu0 10
        %4797 = vperm.xlu0 %4796, %v4689
        %v4798 = vpop.permute.xlu0 %4797
        %v4800 = vadd.f32 %v4795, %v4798
        %v4801 = vlaneseq
        %v4802 = vshrl.u32 %v4801, 7
        %v4803 = vsub.s32 3, %v4802
        %v4804 = vrot.slane %v2717, %v4803
        %v4805 = vadd.f32 %v4804, %v3706
        %4806 = vset.pattern.permute.xlu0 11
        %4807 = vperm.xlu0 %4806, %v4689
        %v4808 = vpop.permute.xlu0 %4807
        %v4810 = vadd.f32 %v4805, %v4808
        %v4811 = vlaneseq
        %v4812 = vshrl.u32 %v4811, 7
        %v4813 = vsub.s32 4, %v4812
        %v4814 = vrot.slane %v2717, %v4813
        %v4815 = vadd.f32 %v4814, %v3706
        %4816 = vset.pattern.permute.xlu0 12
        %4817 = vperm.xlu0 %4816, %v4689
        %v4818 = vpop.permute.xlu0 %4817
        %v4820 = vadd.f32 %v4815, %v4818
        %v4821 = vlaneseq
        %v4822 = vshrl.u32 %v4821, 7
        %v4823 = vsub.s32 5, %v4822
        %v4824 = vrot.slane %v2717, %v4823
        %v4825 = vadd.f32 %v4824, %v3706
        %4826 = vset.pattern.permute.xlu0 13
        %4827 = vperm.xlu0 %4826, %v4689
        %v4828 = vpop.permute.xlu0 %4827
        %v4830 = vadd.f32 %v4825, %v4828
        %v4831 = vlaneseq
        %v4832 = vshrl.u32 %v4831, 7
        %v4833 = vsub.s32 6, %v4832
        %v4834 = vrot.slane %v2717, %v4833
        %v4835 = vadd.f32 %v4834, %v3706
        %4836 = vset.pattern.permute.xlu0 14
        %4837 = vperm.xlu0 %4836, %v4689
        %v4838 = vpop.permute.xlu0 %4837
        %v4840 = vadd.f32 %v4835, %v4838
        %v4841 = vlaneseq
        %v4842 = vshrl.u32 %v4841, 7
        %v4843 = vsub.s32 7, %v4842
        %v4844 = vrot.slane %v2717, %v4843
        %v4845 = vadd.f32 %v4844, %v3706
        %4846 = vset.pattern.permute.xlu0 15
        %4847 = vperm.xlu0 %4846, %v4689
        %v4848 = vpop.permute.xlu0 %4847
        %v4850 = vadd.f32 %v4845, %v4848
        %4852 = vrot.lane.b32.xlu0 %v4710, 16
        %v4853 = vpop.permute.xlu0 %4852
        %4856 = vrot.lane.b32.xlu0 %v4720, 32
        %v4857 = vpop.permute.xlu0 %4856
        %4860 = vrot.lane.b32.xlu0 %v4730, 48
        %v4861 = vpop.permute.xlu0 %4860
        %4864 = vrot.lane.b32.xlu0 %v4740, 64
        %v4865 = vpop.permute.xlu0 %4864
        %4868 = vrot.lane.b32.xlu0 %v4750, 80
        %v4869 = vpop.permute.xlu0 %4868
        %4872 = vrot.lane.b32.xlu0 %v4760, 96
        %v4873 = vpop.permute.xlu0 %4872
        %4876 = vrot.lane.b32.xlu0 %v4770, 112
        %v4877 = vpop.permute.xlu0 %4876
        %4880 = vrot.lane.b32.xlu0 %v4790, 16
        %v4881 = vpop.permute.xlu0 %4880
        %4884 = vrot.lane.b32.xlu0 %v4800, 32
        %v4885 = vpop.permute.xlu0 %4884
        %4888 = vrot.lane.b32.xlu0 %v4810, 48
        %v4889 = vpop.permute.xlu0 %4888
        %4892 = vrot.lane.b32.xlu0 %v4820, 64
        %v4893 = vpop.permute.xlu0 %4892
        %4896 = vrot.lane.b32.xlu0 %v4830, 80
        %v4897 = vpop.permute.xlu0 %4896
        %4900 = vrot.lane.b32.xlu0 %v4840, 96
        %v4901 = vpop.permute.xlu0 %4900
        %4904 = vrot.lane.b32.xlu0 %v4850, 112
        %v4905 = vpop.permute.xlu0 %4904
        %vm4907 = vcmask 130048
        %v4908 = vsel %vm4907, %v4700, %v4853
        %vm4909 = vcmask 261120
        %v4910 = vsel %vm4909, %v4908, %v4857
        %vm4911 = vcmask 392192
        %v4912 = vsel %vm4911, %v4910, %v4861
        %vm4913 = vcmask 523264
        %v4914 = vsel %vm4913, %v4912, %v4865
        %vm4915 = vcmask 654336
        %v4916 = vsel %vm4915, %v4914, %v4869
        %vm4917 = vcmask 785408
        %v4918 = vsel %vm4917, %v4916, %v4873
        %vm4919 = vcmask 916480
        %v4920 = vsel %vm4919, %v4918, %v4877
        %v4921 = vsel %vm4907, %v4780, %v4881
        %v4922 = vsel %vm4909, %v4921, %v4885
        %v4923 = vsel %vm4911, %v4922, %v4889
        %v4924 = vsel %vm4913, %v4923, %v4893
        %v4925 = vsel %vm4915, %v4924, %v4897
        %v4926 = vsel %vm4917, %v4925, %v4901
        %v4927 = vsel %vm4919, %v4926, %v4905
        %v4930 = vcombine.low %v4920, %v4927
        %v4932 = vmul.f32 %v212, %v4930
        %4933 = vst [vmem:[%s211] sm:$0xff] %v4932
        %s4934 = sand.u32 %s98, 1
        %s4935 = scalar_lea.sflag [#allocation4], %s4934
        %s4936 = sand.u32 %s98, 1
        %s4937 = smul.addr %s4936, 8
        %s4938 = scalar_lea.vmem [#allocation9], %s4937
        // Predicated region
        $region45: #{tpu_custom_call.1} parent=31 // pred_check
          %p4939 = pneg %p108
        $region46: #{tpu_custom_call.1} parent=31 // pred_check_branch
          %4941 = sbr.rel (%p4939) target = $region48
        $region47: #{tpu_custom_call.1} parent=31 // pred_region
          %s4943 = ssub.s32 128, 128
          %4944 = vsyncadd %s4935, %s4943
          %s4945 = smul.addr %s22, 2
          %s4946 = smul.addr %s4945, 64
          %s4947 = scalar_lea.hbm %s3, %s4946
          %s4949 = sshll.u32 %s4938, 4
          %s4950 = int_to_ptr.vmem [resolvable:$true] %s4949
          %4952 = dma.vmem_to_hbm [thread:$0]  %s4950, 128, %s4947, %s4935
        $region48: #{tpu_custom_call.1} parent=31 // pred_fallthru
          _
      $region32: #{tpu_custom_call.1} parent=5 // pred_fallthru
        _
      %p4953 = scmp.le.s32.totalorder 2, %s17
      // Predicated region
      $region49: #{tpu_custom_call.1} parent=5 // pred_check
        %p4954 = pneg %p4953
      $region50: #{tpu_custom_call.1} parent=5 // pred_check_branch
        %4956 = sbr.rel (%p4954) target = $region52
      $region51: #{tpu_custom_call.1} parent=5 // pred_region
        %s4957 = ssub.s32 %s17, 2
        // Predicated region
        $region53: #{tpu_custom_call.1} parent=51 // pred_check
          %p4958 = pneg %p114
        $region54: #{tpu_custom_call.1} parent=51 // pred_check_branch
          %4960 = sbr.rel (%p4958) target = $region56
        $region55: #{tpu_custom_call.1} parent=51 // pred_region
          %s4961 = sand.u32 %s99, 1
          %s4962 = scalar_lea.sflag [#allocation4], %s4961
          %s4963 = sand.u32 %s99, 1
          %s4964 = smul.addr %s4963, 8
          %s4965 = scalar_lea.vmem [#allocation9], %s4964
          %4966 = dma.done %s4962, 128
        $region56: #{tpu_custom_call.1} parent=51 // pred_fallthru
          _
      $region52: #{tpu_custom_call.1} parent=5 // pred_fallthru
        _
    $region6: #{tpu_custom_call.1} parent=1 // loop_footer
      %s21 = sadd.s32 1, %s17
    $region7: #{tpu_custom_call.1} parent=1 // loop_footer_branch
      %16 = sbr.rel target = $region3
    $region8: #{tpu_custom_call.1} parent=1 // loop_exit
      _
    %4967 = vsyncpa [#allocation3], 1
    %s4968 = scalar_lea.sflag [#allocation3], 1
    %4969 = vsyncpa %s4968, 1
    %4970 = vsyncpa [#allocation4], 1
    %s4971 = scalar_lea.sflag [#allocation4], 1
    %4972 = vsyncpa %s4971, 1
    %4973 = vsyncpa [#allocation5], 1
    %s4974 = scalar_lea.sflag [#allocation5], 1
    %4975 = vsyncpa %s4974, 1
    %4976 = vsyncpa [#allocation6], 1
    %s4977 = scalar_lea.sflag [#allocation6], 1
    %4978 = vsyncpa %s4977, 1

</llo_original>
